<compile_context>
chip_gen: v6e
topology: v6e:2x2x1
jax: 0.10.0
libtpu: 0.0.40
codegen_flags: <defaults>
</compile_context>

<pallas_src>
import functools

import jax
import jax.numpy as jnp
from jax.experimental import pallas as pl
from jax.experimental.pallas import tpu as pltpu

_NEG = -1e30   # effectively -inf after softmax (exp underflows to 0)
_EPS = 1e-5    # torch.nn.LayerNorm default


# ----------------------------- in-kernel helpers ------------------------------

def _layernorm(x, g, b, eps=_EPS):
    """Row-wise LayerNorm. x: (L, D) f32, g/b: (1, D) f32."""
    mu = jnp.mean(x, axis=-1, keepdims=True)
    var = jnp.mean(jnp.square(x - mu), axis=-1, keepdims=True)
    return (x - mu) * jax.lax.rsqrt(var + eps) * g + b


def _mha(xq, xkv, wqkv_ref, bqkv_ref, wo_ref, bo_ref, bias, num_heads):
    """Multi-head attention on one batch element, entirely in VMEM/vregs.

    xq:   (Lq, D) f32 normalized queries
    xkv:  (Lk, D) f32 normalized keys == values (always identical in this model)
    wqkv_ref: (3, H, D, Dh) bf16  -- wqkv[0] pre-scaled by 1/sqrt(Dh)
    bqkv_ref: (3, H, 1, Dh) f32   -- bqkv[0] pre-scaled by 1/sqrt(Dh)
    wo_ref:   (H, Dh, D) bf16     -- row-block h of the output projection
    bo_ref:   (1, D) f32
    bias:     (1, Lk) f32 key-padding additive bias (0 or -1e30)
    """
    xq_b = xq.astype(jnp.bfloat16)
    xkv_b = xkv.astype(jnp.bfloat16)
    out = None
    for h in range(num_heads):            # static unrolled loop (H is small)
        qh = jnp.dot(xq_b, wqkv_ref[0, h],
                     preferred_element_type=jnp.float32) + bqkv_ref[0, h]
        kh = jnp.dot(xkv_b, wqkv_ref[1, h],
                     preferred_element_type=jnp.float32) + bqkv_ref[1, h]
        vh = jnp.dot(xkv_b, wqkv_ref[2, h],
                     preferred_element_type=jnp.float32) + bqkv_ref[2, h]
        # scores (scale already folded into the q projection)
        s = jax.lax.dot_general(qh, kh, (((1,), (1,)), ((), ())),
                                preferred_element_type=jnp.float32)
        s = s + bias
        s = s - jnp.max(s, axis=-1, keepdims=True)
        p = jnp.exp(s)
        p = p * pl.reciprocal(jnp.sum(p, axis=-1, keepdims=True), approx=True)
        oh = jnp.dot(p, vh, preferred_element_type=jnp.float32)          # (Lq, Dh)
        # out-projection contribution of head h: oh @ Wo[h*Dh:(h+1)*Dh, :]
        contrib = jnp.dot(oh.astype(jnp.bfloat16), wo_ref[h],
                          preferred_element_type=jnp.float32)            # (Lq, D)
        out = contrib if out is None else out + contrib
    return out + bo_ref[...]


# -------------------------------- kernel bodies --------------------------------

def _embed_kernel(tcr_ref, epi_ref, wt_ref, bt_ref, post_ref,
                  we_ref, be_ref, pose_ref, comb_ref):
    """1024->D embeddings + bias + positional add + concat, one batch element."""
    t = jnp.dot(tcr_ref[0].astype(jnp.bfloat16), wt_ref[...],
                preferred_element_type=jnp.float32) + bt_ref[...] + post_ref[...]
    e = jnp.dot(epi_ref[0].astype(jnp.bfloat16), we_ref[...],
                preferred_element_type=jnp.float32) + be_ref[...] + pose_ref[...]
    comb_ref[0] = jnp.concatenate([t, e], axis=0)          # single lane-dense store


def _self_block_kernel(x_ref, mask_ref,
                       n1g_ref, n1b_ref, wqkv_ref, bqkv_ref, wo_ref, bo_ref,
                       n2g_ref, n2b_ref, w1_ref, b1_ref, w2_ref, b2_ref,
                       o_ref, *, num_heads):
    """Fused SelfAttentionBlock: LN1 + MHA + residual + LN2 + FFN + residual."""
    x = x_ref[0]                                                          # (L, D)
    bias = jnp.where(mask_ref[0] > 0, _NEG, 0.0).astype(jnp.float32)      # (1, L)

    xn = _layernorm(x, n1g_ref[...], n1b_ref[...])
    attn = _mha(xn, xn, wqkv_ref, bqkv_ref, wo_ref, bo_ref, bias, num_heads)
    x1 = x + attn

    x1n = _layernorm(x1, n2g_ref[...], n2b_ref[...])
    h = jnp.dot(x1n.astype(jnp.bfloat16), w1_ref[...],
                preferred_element_type=jnp.float32) + b1_ref[...]
    h = jnp.maximum(h, 0.0)
    f = jnp.dot(h.astype(jnp.bfloat16), w2_ref[...],
                preferred_element_type=jnp.float32) + b2_ref[...]
    # TODO(synk): nn.Dropout inside the attention and FFN is identity in eval mode.
    o_ref[0] = x1 + f


def _cross_block_kernel(q_ref, kv_ref, mask_ref,
                        ng_ref, nb_ref, wqkv_ref, bqkv_ref, wo_ref, bo_ref,
                        o_ref, *, num_heads):
    """Fused CrossAttentionBlock: shared LayerNorm on q and k(==v), MHA, out-proj."""
    bias = jnp.where(mask_ref[0] > 0, _NEG, 0.0).astype(jnp.float32)      # (1, Lk)
    qn = _layernorm(q_ref[0], ng_ref[...], nb_ref[...])
    kvn = _layernorm(kv_ref[0], ng_ref[...], nb_ref[...])
    o_ref[0] = _mha(qn, kvn, wqkv_ref, bqkv_ref, wo_ref, bo_ref, bias, num_heads)


# ------------------------------ pallas_call wrappers ---------------------------

def _full(shape):
    """BlockSpec for an un-tiled (grid-invariant) parameter array."""
    zero = (0,) * len(shape)
    return pl.BlockSpec(shape, lambda b, _z=zero: _z)


def embed_and_concat(tcr, epi, p):
    """tcr: (B,Lt,1024), epi: (B,Le,1024) -> combined (B, Lt+Le, D) f32."""
    B, Lt, F = tcr.shape
    Le = epi.shape[1]
    D = p["tcr_b"].shape[-1]
    L = Lt + Le
    pos_t = p["tcr_pos"][:Lt]
    pos_e = p["epi_pos"][:Le]
    return pl.pallas_call(
        _embed_kernel,
        out_shape=jax.ShapeDtypeStruct((B, L, D), jnp.float32),
        grid=(B,),
        in_specs=[
            pl.BlockSpec((1, Lt, F), lambda b: (b, 0, 0)),
            pl.BlockSpec((1, Le, F), lambda b: (b, 0, 0)),
            _full((F, D)), _full((1, D)), _full((Lt, D)),
            _full((F, D)), _full((1, D)), _full((Le, D)),
        ],
        out_specs=pl.BlockSpec((1, L, D), lambda b: (b, 0, 0)),
        compiler_params=pltpu.CompilerParams(dimension_semantics=("parallel",)),
    )(tcr, epi, p["tcr_w"], p["tcr_b"], pos_t, p["epi_w"], p["epi_b"], pos_e)


def self_attention_block(x, mask, p, *, num_heads):
    """x: (B,L,D) f32, mask: (B,1,L) int32 (1 == padded key)."""
    B, L, D = x.shape
    H = num_heads
    Dh = D // H
    Dff = 4 * D
    return pl.pallas_call(
        functools.partial(_self_block_kernel, num_heads=H),
        out_shape=jax.ShapeDtypeStruct((B, L, D), jnp.float32),
        grid=(B,),
        in_specs=[
            pl.BlockSpec((1, L, D), lambda b: (b, 0, 0)),
            pl.BlockSpec((1, 1, L), lambda b: (b, 0, 0)),
            _full((1, D)), _full((1, D)),
            _full((3, H, D, Dh)), _full((3, H, 1, Dh)),
            _full((H, Dh, D)), _full((1, D)),
            _full((1, D)), _full((1, D)),
            _full((D, Dff)), _full((1, Dff)),
            _full((Dff, D)), _full((1, D)),
        ],
        out_specs=pl.BlockSpec((1, L, D), lambda b: (b, 0, 0)),
        compiler_params=pltpu.CompilerParams(dimension_semantics=("parallel",)),
    )(x, mask, p["n1_g"], p["n1_b"], p["wqkv"], p["bqkv"], p["wo"], p["bo"],
      p["n2_g"], p["n2_b"], p["w1"], p["b1"], p["w2"], p["b2"])


def cross_attention_block(q, kv, key_mask, p, *, num_heads):
    """q: (B,Lq,D), kv: (B,Lk,D) (keys == values), key_mask: (B,1,Lk) int32."""
    B, Lq, D = q.shape
    Lk = kv.shape[1]
    H = num_heads
    Dh = D // H
    return pl.pallas_call(
        functools.partial(_cross_block_kernel, num_heads=H),
        out_shape=jax.ShapeDtypeStruct((B, Lq, D), jnp.float32),
        grid=(B,),
        in_specs=[
            pl.BlockSpec((1, Lq, D), lambda b: (b, 0, 0)),
            pl.BlockSpec((1, Lk, D), lambda b: (b, 0, 0)),
            pl.BlockSpec((1, 1, Lk), lambda b: (b, 0, 0)),
            _full((1, D)), _full((1, D)),
            _full((3, H, D, Dh)), _full((3, H, 1, Dh)),
            _full((H, Dh, D)), _full((1, D)),
        ],
        out_specs=pl.BlockSpec((1, Lq, D), lambda b: (b, 0, 0)),
        compiler_params=pltpu.CompilerParams(dimension_semantics=("parallel",)),
    )(q, kv, key_mask, p["n_g"], p["n_b"], p["wqkv"], p["bqkv"], p["wo"], p["bo"])


# ---------------------------------- forward ------------------------------------

def tcr_epitope_transformer(params, tcr, epitope, *, num_heads):
    """tcr: (B, Lt, 1024) f32, epitope: (B, Le, 1024) f32 -> (B,) f32."""
    B, Lt, _ = tcr.shape
    Le = epitope.shape[1]

    # key-padding masks (1 == ignore this key position); tiny int32 arrays.
    tcr_mask = (jnp.sum(tcr, axis=-1) == 0).astype(jnp.int32)[:, None, :]      # (B,1,Lt)
    epi_mask = (jnp.sum(epitope, axis=-1) == 0).astype(jnp.int32)[:, None, :]  # (B,1,Le)
    comb_mask = jnp.concatenate([tcr_mask, epi_mask], axis=2)                  # (B,1,Lt+Le)

    # fused embeddings + positional add + concat
    combined = embed_and_concat(tcr, epitope, params["embed"])                 # (B,Lt+Le,D)
    tcr_x = combined[:, :Lt]
    epi_x = combined[:, Lt:]

    for lp in params["self_layers"]:
        combined = self_attention_block(combined, comb_mask, lp, num_heads=num_heads)
    # NOTE: epitope_self_attention exists in the PyTorch __init__ but is unused
    # in forward(), so it is intentionally not instantiated here.

    tcr_c = cross_attention_block(tcr_x, epi_x, epi_mask, params["cross"],
                                  num_heads=num_heads)
    epi_c = cross_attention_block(epi_x, tcr_c, tcr_mask, params["cross"],
                                  num_heads=num_heads)

    # mean over cat(combined, cat(tcr_c, epi_c)) along seq, then (D -> 1) head.
    # Kept in plain JAX: ~B*D flops, a pallas_call here is pure dispatch overhead.
    total = (jnp.sum(combined, axis=1) + jnp.sum(tcr_c, axis=1)
             + jnp.sum(epi_c, axis=1))                                         # (B, D)
    pooled = total / jnp.float32(2 * (Lt + Le))
    out = pooled @ params["out_w"] + params["out_b"]                           # (B, 1)
    return out[:, 0]


# ------------------------------- parameter init --------------------------------

def init_params(key, embed_dim, num_heads, num_layers,
                max_tcr_len, max_epi_len, in_dim=1024):
    """Kernel-ready parameters.

    Conventions (vs torch): Linear weights stored as (in, out) so y = x @ W + b.
    Attention projections are stacked per head and stored in bf16; the 1/sqrt(Dh)
    attention scale is folded into the q projection (weight and bias).
    """
    D, H = embed_dim, num_heads
    Dh = D // H
    scale = 1.0 / float(Dh) ** 0.5
    keys = iter(jax.random.split(key, 256))

    def nrm(shape, s=0.02):
        return (s * jax.random.normal(next(keys), shape)).astype(jnp.float32)

    def zeros(shape):
        return jnp.zeros(shape, jnp.float32)

    def ones(shape):
        return jnp.ones(shape, jnp.float32)

    def attn_params():
        wq, wk, wv, wo = (nrm((D, D)) for _ in range(4))

        def cols(w):                     # (D, D) -> (H, D, Dh): per-head column block
            return w.reshape(D, H, Dh).transpose(1, 0, 2)

        wqkv = jnp.stack([cols(wq) * scale,              # scale folded into W_q
                          cols(wk), cols(wv)]).astype(jnp.bfloat16)   # (3,H,D,Dh)
        bqkv = zeros((3, H, 1, Dh))                      # zero bias (scale*0 == 0)
        wo_h = wo.reshape(H, Dh, D).astype(jnp.bfloat16)  # per-head row block of W_o
        return dict(wqkv=wqkv, bqkv=bqkv, wo=wo_h, bo=zeros((1, D)))

    def self_layer():
        d = dict(
            n1_g=ones((1, D)), n1_b=zeros((1, D)),
            n2_g=ones((1, D)), n2_b=zeros((1, D)),
            w1=nrm((D, 4 * D)).astype(jnp.bfloat16), b1=zeros((1, 4 * D)),
            w2=nrm((4 * D, D)).astype(jnp.bfloat16), b2=zeros((1, D)),
        )
        d.update(attn_params())
        return d

    embed = dict(
        tcr_w=nrm((in_dim, D)).astype(jnp.bfloat16), tcr_b=zeros((1, D)),
        epi_w=nrm((in_dim, D)).astype(jnp.bfloat16), epi_b=zeros((1, D)),
        tcr_pos=jax.random.normal(next(keys), (max_tcr_len, D), dtype=jnp.float32),
        epi_pos=jax.random.normal(next(keys), (max_epi_len, D), dtype=jnp.float32),
    )
    cross = dict(n_g=ones((1, D)), n_b=zeros((1, D)))
    cross.update(attn_params())

    return dict(
        embed=embed,
        self_layers=[self_layer() for _ in range(num_layers)],
        cross=cross,
        out_w=nrm((D, 1)), out_b=zeros((1,)),
    )


# ----------------------------------- main ---------------------------------------

if __name__ == "__main__":
    EMBED_DIM = 32
    NUM_HEADS = 4
    NUM_LAYERS = 2
    MAX_TCR_LEN = 8
    MAX_EPI_LEN = 8
    IN_DIM = 1024
    B = 2

    key = jax.random.PRNGKey(0)
    pkey, tkey, ekey = jax.random.split(key, 3)
    params = init_params(pkey, EMBED_DIM, NUM_HEADS, NUM_LAYERS,
                         MAX_TCR_LEN, MAX_EPI_LEN, IN_DIM)
    tcr = jax.random.normal(tkey, (B, MAX_TCR_LEN, IN_DIM), dtype=jnp.float32)
    epitope = jax.random.normal(ekey, (B, MAX_EPI_LEN, IN_DIM), dtype=jnp.float32)

    fwd = jax.jit(functools.partial(tcr_epitope_transformer, num_heads=NUM_HEADS))
    out = jax.block_until_ready(fwd(params, tcr, epitope))

    assert out.shape == (B,), out.shape
    assert bool(jnp.all(jnp.isfinite(out)))
    print("KERNEL_OK")
</pallas_src>

<mosaic_0001>
module attributes {stable_mosaic.version = 11 : i64} {
  func.func @_embed_kernel(%arg0: i32, %arg1: memref<1x8x1024xf32, #tpu.memory_space<vmem>>, %arg2: memref<1x8x1024xf32, #tpu.memory_space<vmem>>, %arg3: memref<1024x32xbf16, #tpu.memory_space<vmem>>, %arg4: memref<1x32xf32, #tpu.memory_space<vmem>>, %arg5: memref<8x32xf32, #tpu.memory_space<vmem>>, %arg6: memref<1024x32xbf16, #tpu.memory_space<vmem>>, %arg7: memref<1x32xf32, #tpu.memory_space<vmem>>, %arg8: memref<8x32xf32, #tpu.memory_space<vmem>>, %arg9: memref<1x16x32xf32, #tpu.memory_space<vmem>>) attributes {dimension_semantics = [#tpu.dimension_semantics<parallel>], iteration_bounds = array<i64: 2>, scalar_prefetch = 0 : i64, scratch_operands = 0 : i64, tpu.core_type = #tpu.core_type<tc>, window_params = [{transform_indices = @transform_0, window_bounds = array<i64: 1, 8, 1024>}, {transform_indices = @transform_1, window_bounds = array<i64: 1, 8, 1024>}, {pipeline_mode = #tpu.pipeline_mode<synchronous>, transform_indices = @transform_2, window_bounds = array<i64: 1024, 32>}, {pipeline_mode = #tpu.pipeline_mode<synchronous>, transform_indices = @transform_3, window_bounds = array<i64: 1, 32>}, {pipeline_mode = #tpu.pipeline_mode<synchronous>, transform_indices = @transform_4, window_bounds = array<i64: 8, 32>}, {pipeline_mode = #tpu.pipeline_mode<synchronous>, transform_indices = @transform_5, window_bounds = array<i64: 1024, 32>}, {pipeline_mode = #tpu.pipeline_mode<synchronous>, transform_indices = @transform_6, window_bounds = array<i64: 1, 32>}, {pipeline_mode = #tpu.pipeline_mode<synchronous>, transform_indices = @transform_7, window_bounds = array<i64: 8, 32>}, {transform_indices = @transform_8, window_bounds = array<i64: 1, 16, 32>}]} {
    %c0 = arith.constant 0 : index
    %c0_0 = arith.constant 0 : index
    %c0_1 = arith.constant 0 : index
    %0 = vector.load %arg1[%c0, %c0_0, %c0_1] : memref<1x8x1024xf32, #tpu.memory_space<vmem>>, vector<1x8x1024xf32>
    %1 = vector.shape_cast %0 : vector<1x8x1024xf32> to vector<8x1024xf32>
    %2 = arith.truncf %1 : vector<8x1024xf32> to vector<8x1024xbf16>
    %c0_2 = arith.constant 0 : index
    %c0_3 = arith.constant 0 : index
    %3 = vector.load %arg3[%c0_2, %c0_3] : memref<1024x32xbf16, #tpu.memory_space<vmem>>, vector<1024x32xbf16>
    %cst = arith.constant dense<0.000000e+00> : vector<8x32xf32>
    %4 = tpu.matmul %2, %3, %cst {dimension_numbers = #tpu.dot_dimension_numbers<[1], [0], [0], [1], [0, 0, 1, 1], [], []>} : vector<8x1024xbf16>, vector<1024x32xbf16>, vector<8x32xf32> -> vector<8x32xf32>
    %c0_4 = arith.constant 0 : index
    %c0_5 = arith.constant 0 : index
    %5 = vector.load %arg4[%c0_4, %c0_5] : memref<1x32xf32, #tpu.memory_space<vmem>>, vector<1x32xf32>
    %6 = vector.broadcast %5 : vector<1x32xf32> to vector<8x32xf32>
    %7 = arith.addf %4, %6 : vector<8x32xf32>
    %c0_6 = arith.constant 0 : index
    %c0_7 = arith.constant 0 : index
    %8 = vector.load %arg5[%c0_6, %c0_7] : memref<8x32xf32, #tpu.memory_space<vmem>>, vector<8x32xf32>
    %9 = arith.addf %7, %8 : vector<8x32xf32>
    %c0_8 = arith.constant 0 : index
    %c0_9 = arith.constant 0 : index
    %c0_10 = arith.constant 0 : index
    %10 = vector.load %arg2[%c0_8, %c0_9, %c0_10] : memref<1x8x1024xf32, #tpu.memory_space<vmem>>, vector<1x8x1024xf32>
    %11 = vector.shape_cast %10 : vector<1x8x1024xf32> to vector<8x1024xf32>
    %12 = arith.truncf %11 : vector<8x1024xf32> to vector<8x1024xbf16>
    %c0_11 = arith.constant 0 : index
    %c0_12 = arith.constant 0 : index
    %13 = vector.load %arg6[%c0_11, %c0_12] : memref<1024x32xbf16, #tpu.memory_space<vmem>>, vector<1024x32xbf16>
    %cst_13 = arith.constant dense<0.000000e+00> : vector<8x32xf32>
    %14 = tpu.matmul %12, %13, %cst_13 {dimension_numbers = #tpu.dot_dimension_numbers<[1], [0], [0], [1], [0, 0, 1, 1], [], []>} : vector<8x1024xbf16>, vector<1024x32xbf16>, vector<8x32xf32> -> vector<8x32xf32>
    %c0_14 = arith.constant 0 : index
    %c0_15 = arith.constant 0 : index
    %15 = vector.load %arg7[%c0_14, %c0_15] : memref<1x32xf32, #tpu.memory_space<vmem>>, vector<1x32xf32>
    %16 = vector.broadcast %15 : vector<1x32xf32> to vector<8x32xf32>
    %17 = arith.addf %14, %16 : vector<8x32xf32>
    %c0_16 = arith.constant 0 : index
    %c0_17 = arith.constant 0 : index
    %18 = vector.load %arg8[%c0_16, %c0_17] : memref<8x32xf32, #tpu.memory_space<vmem>>, vector<8x32xf32>
    %19 = arith.addf %17, %18 : vector<8x32xf32>
    %20 = tpu.concatenate %9, %19 in 0 : vector<8x32xf32>, vector<8x32xf32> -> vector<16x32xf32>
    %c0_18 = arith.constant 0 : index
    %c0_19 = arith.constant 0 : index
    %c0_20 = arith.constant 0 : index
    %21 = vector.load %arg9[%c0_18, %c0_19, %c0_20] : memref<1x16x32xf32, #tpu.memory_space<vmem>>, vector<1x16x32xf32>
    %22 = vector.shape_cast %21 : vector<1x16x32xf32> to vector<16x32xf32>
    %23 = vector.shape_cast %20 : vector<16x32xf32> to vector<1x16x32xf32>
    tpu.vector_store %arg9[%c0_18, %c0_19, %c0_20], %23 {strides = array<i32>} : memref<1x16x32xf32, #tpu.memory_space<vmem>>, vector<1x16x32xf32>,
    return
  }
  func.func @transform_0(%arg0: i32) -> (i32, i32, i32) {
    %c0_i32 = arith.constant 0 : i32
    %c0_i32_0 = arith.constant 0 : i32
    %c0_i32_1 = arith.constant 0 : i32
    return %arg0, %c0_i32, %c0_i32_0 : i32, i32, i32
  }
  func.func @transform_1(%arg0: i32) -> (i32, i32, i32) {
    %c0_i32 = arith.constant 0 : i32
    %c0_i32_0 = arith.constant 0 : i32
    %c0_i32_1 = arith.constant 0 : i32
    return %arg0, %c0_i32, %c0_i32_0 : i32, i32, i32
  }
  func.func @transform_2(%arg0: i32) -> (i32, i32) {
    %c0_i32 = arith.constant 0 : i32
    %c0_i32_0 = arith.constant 0 : i32
    %c0_i32_1 = arith.constant 0 : i32
    return %c0_i32, %c0_i32_0 : i32, i32
  }
  func.func @transform_3(%arg0: i32) -> (i32, i32) {
    %c0_i32 = arith.constant 0 : i32
    %c0_i32_0 = arith.constant 0 : i32
    %c0_i32_1 = arith.constant 0 : i32
    return %c0_i32, %c0_i32_0 : i32, i32
  }
  func.func @transform_4(%arg0: i32) -> (i32, i32) {
    %c0_i32 = arith.constant 0 : i32
    %c0_i32_0 = arith.constant 0 : i32
    %c0_i32_1 = arith.constant 0 : i32
    return %c0_i32, %c0_i32_0 : i32, i32
  }
  func.func @transform_5(%arg0: i32) -> (i32, i32) {
    %c0_i32 = arith.constant 0 : i32
    %c0_i32_0 = arith.constant 0 : i32
    %c0_i32_1 = arith.constant 0 : i32
    return %c0_i32, %c0_i32_0 : i32, i32
  }
  func.func @transform_6(%arg0: i32) -> (i32, i32) {
    %c0_i32 = arith.constant 0 : i32
    %c0_i32_0 = arith.constant 0 : i32
    %c0_i32_1 = arith.constant 0 : i32
    return %c0_i32, %c0_i32_0 : i32, i32
  }
  func.func @transform_7(%arg0: i32) -> (i32, i32) {
    %c0_i32 = arith.constant 0 : i32
    %c0_i32_0 = arith.constant 0 : i32
    %c0_i32_1 = arith.constant 0 : i32
    return %c0_i32, %c0_i32_0 : i32, i32
  }
  func.func @transform_8(%arg0: i32) -> (i32, i32, i32) {
    %c0_i32 = arith.constant 0 : i32
    %c0_i32_0 = arith.constant 0 : i32
    %c0_i32_1 = arith.constant 0 : i32
    return %arg0, %c0_i32, %c0_i32_0 : i32, i32, i32
  }
}

module attributes {stable_mosaic.version = 11 : i64} {
  func.func @_cross_block_kernel(%arg0: i32, %arg1: memref<1x8x32xf32, #tpu.memory_space<vmem>>, %arg2: memref<1x8x32xf32, #tpu.memory_space<vmem>>, %arg3: memref<1x1x8xi32, #tpu.memory_space<vmem>>, %arg4: memref<1x32xf32, #tpu.memory_space<vmem>>, %arg5: memref<1x32xf32, #tpu.memory_space<vmem>>, %arg6: memref<3x4x32x8xbf16, #tpu.memory_space<vmem>>, %arg7: memref<3x4x1x8xf32, #tpu.memory_space<vmem>>, %arg8: memref<4x8x32xbf16, #tpu.memory_space<vmem>>, %arg9: memref<1x32xf32, #tpu.memory_space<vmem>>, %arg10: memref<1x8x32xf32, #tpu.memory_space<vmem>>) attributes {dimension_semantics = [#tpu.dimension_semantics<parallel>], iteration_bounds = array<i64: 2>, scalar_prefetch = 0 : i64, scratch_operands = 0 : i64, tpu.core_type = #tpu.core_type<tc>, window_params = [{transform_indices = @transform_0, window_bounds = array<i64: 1, 8, 32>}, {transform_indices = @transform_1, window_bounds = array<i64: 1, 8, 32>}, {transform_indices = @transform_2, window_bounds = array<i64: 1, 1, 8>}, {pipeline_mode = #tpu.pipeline_mode<synchronous>, transform_indices = @transform_3, window_bounds = array<i64: 1, 32>}, {pipeline_mode = #tpu.pipeline_mode<synchronous>, transform_indices = @transform_4, window_bounds = array<i64: 1, 32>}, {pipeline_mode = #tpu.pipeline_mode<synchronous>, transform_indices = @transform_5, window_bounds = array<i64: 3, 4, 32, 8>}, {pipeline_mode = #tpu.pipeline_mode<synchronous>, transform_indices = @transform_6, window_bounds = array<i64: 3, 4, 1, 8>}, {pipeline_mode = #tpu.pipeline_mode<synchronous>, transform_indices = @transform_7, window_bounds = array<i64: 4, 8, 32>}, {pipeline_mode = #tpu.pipeline_mode<synchronous>, transform_indices = @transform_8, window_bounds = array<i64: 1, 32>}, {transform_indices = @transform_9, window_bounds = array<i64: 1, 8, 32>}]} {
    %c0 = arith.constant 0 : index
    %c0_0 = arith.constant 0 : index
    %c0_1 = arith.constant 0 : index
    %0 = vector.load %arg3[%c0, %c0_0, %c0_1] : memref<1x1x8xi32, #tpu.memory_space<vmem>>, vector<1x1x8xi32>
    %1 = vector.shape_cast %0 : vector<1x1x8xi32> to vector<1x8xi32>
    %c0_i32 = arith.constant 0 : i32
    %2 = vector.broadcast %c0_i32 : i32 to vector<1x8xi32>
    %3 = arith.cmpi sgt, %1, %2 : vector<1x8xi32>
    %cst = arith.constant -1.000000e+30 : f32
    %cst_2 = arith.constant 0.000000e+00 : f32
    %4 = vector.broadcast %cst : f32 to vector<1x8xf32>
    %5 = vector.broadcast %cst_2 : f32 to vector<1x8xf32>
    %6 = arith.select %3, %4, %5 : vector<1x8xi1>, vector<1x8xf32>
    %c0_3 = arith.constant 0 : index
    %c0_4 = arith.constant 0 : index
    %c0_5 = arith.constant 0 : index
    %7 = vector.load %arg1[%c0_3, %c0_4, %c0_5] : memref<1x8x32xf32, #tpu.memory_space<vmem>>, vector<1x8x32xf32>
    %8 = vector.shape_cast %7 : vector<1x8x32xf32> to vector<8x32xf32>
    %c0_6 = arith.constant 0 : index
    %c0_7 = arith.constant 0 : index
    %9 = vector.load %arg4[%c0_6, %c0_7] : memref<1x32xf32, #tpu.memory_space<vmem>>, vector<1x32xf32>
    %c0_8 = arith.constant 0 : index
    %c0_9 = arith.constant 0 : index
    %10 = vector.load %arg5[%c0_8, %c0_9] : memref<1x32xf32, #tpu.memory_space<vmem>>, vector<1x32xf32>
    %cst_10 = arith.constant dense<0.000000e+00> : vector<8xf32>
    %11 = vector.multi_reduction <add>, %8, %cst_10 [1] : vector<8x32xf32> to vector<8xf32>
    %12 = vector.shape_cast %11 : vector<8xf32> to vector<8x1xf32>
    %cst_11 = arith.constant 3.200000e+01 : f32
    %13 = vector.broadcast %cst_11 : f32 to vector<8x1xf32>
    %14 = arith.divf %12, %13 : vector<8x1xf32>
    %15 = vector.broadcast %14 : vector<8x1xf32> to vector<8x32xf32>
    %16 = arith.subf %8, %15 : vector<8x32xf32>
    %17 = arith.mulf %16, %16 : vector<8x32xf32>
    %cst_12 = arith.constant dense<0.000000e+00> : vector<8xf32>
    %18 = vector.multi_reduction <add>, %17, %cst_12 [1] : vector<8x32xf32> to vector<8xf32>
    %19 = vector.shape_cast %18 : vector<8xf32> to vector<8x1xf32>
    %cst_13 = arith.constant 3.200000e+01 : f32
    %20 = vector.broadcast %cst_13 : f32 to vector<8x1xf32>
    %21 = arith.divf %19, %20 : vector<8x1xf32>
    %22 = vector.broadcast %14 : vector<8x1xf32> to vector<8x32xf32>
    %23 = arith.subf %8, %22 : vector<8x32xf32>
    %cst_14 = arith.constant 9.99999974E-6 : f32
    %24 = vector.broadcast %cst_14 : f32 to vector<8x1xf32>
    %25 = arith.addf %21, %24 : vector<8x1xf32>
    %26 = math.rsqrt %25 : vector<8x1xf32>
    %27 = vector.broadcast %26 : vector<8x1xf32> to vector<8x32xf32>
    %28 = arith.mulf %23, %27 : vector<8x32xf32>
    %29 = vector.broadcast %9 : vector<1x32xf32> to vector<8x32xf32>
    %30 = arith.mulf %28, %29 : vector<8x32xf32>
    %31 = vector.broadcast %10 : vector<1x32xf32> to vector<8x32xf32>
    %32 = arith.addf %30, %31 : vector<8x32xf32>
    %c0_15 = arith.constant 0 : index
    %c0_16 = arith.constant 0 : index
    %c0_17 = arith.constant 0 : index
    %33 = vector.load %arg2[%c0_15, %c0_16, %c0_17] : memref<1x8x32xf32, #tpu.memory_space<vmem>>, vector<1x8x32xf32>
    %34 = vector.shape_cast %33 : vector<1x8x32xf32> to vector<8x32xf32>
    %c0_18 = arith.constant 0 : index
    %c0_19 = arith.constant 0 : index
    %35 = vector.load %arg4[%c0_18, %c0_19] : memref<1x32xf32, #tpu.memory_space<vmem>>, vector<1x32xf32>
    %c0_20 = arith.constant 0 : index
    %c0_21 = arith.constant 0 : index
    %36 = vector.load %arg5[%c0_20, %c0_21] : memref<1x32xf32, #tpu.memory_space<vmem>>, vector<1x32xf32>
    %cst_22 = arith.constant dense<0.000000e+00> : vector<8xf32>
    %37 = vector.multi_reduction <add>, %34, %cst_22 [1] : vector<8x32xf32> to vector<8xf32>
    %38 = vector.shape_cast %37 : vector<8xf32> to vector<8x1xf32>
    %cst_23 = arith.constant 3.200000e+01 : f32
    %39 = vector.broadcast %cst_23 : f32 to vector<8x1xf32>
    %40 = arith.divf %38, %39 : vector<8x1xf32>
    %41 = vector.broadcast %40 : vector<8x1xf32> to vector<8x32xf32>
    %42 = arith.subf %34, %41 : vector<8x32xf32>
    %43 = arith.mulf %42, %42 : vector<8x32xf32>
    %cst_24 = arith.constant dense<0.000000e+00> : vector<8xf32>
    %44 = vector.multi_reduction <add>, %43, %cst_24 [1] : vector<8x32xf32> to vector<8xf32>
    %45 = vector.shape_cast %44 : vector<8xf32> to vector<8x1xf32>
    %cst_25 = arith.constant 3.200000e+01 : f32
    %46 = vector.broadcast %cst_25 : f32 to vector<8x1xf32>
    %47 = arith.divf %45, %46 : vector<8x1xf32>
    %48 = vector.broadcast %40 : vector<8x1xf32> to vector<8x32xf32>
    %49 = arith.subf %34, %48 : vector<8x32xf32>
    %cst_26 = arith.constant 9.99999974E-6 : f32
    %50 = vector.broadcast %cst_26 : f32 to vector<8x1xf32>
    %51 = arith.addf %47, %50 : vector<8x1xf32>
    %52 = math.rsqrt %51 : vector<8x1xf32>
    %53 = vector.broadcast %52 : vector<8x1xf32> to vector<8x32xf32>
    %54 = arith.mulf %49, %53 : vector<8x32xf32>
    %55 = vector.broadcast %35 : vector<1x32xf32> to vector<8x32xf32>
    %56 = arith.mulf %54, %55 : vector<8x32xf32>
    %57 = vector.broadcast %36 : vector<1x32xf32> to vector<8x32xf32>
    %58 = arith.addf %56, %57 : vector<8x32xf32>
    %59 = arith.truncf %32 : vector<8x32xf32> to vector<8x32xbf16>
    %60 = arith.truncf %58 : vector<8x32xf32> to vector<8x32xbf16>
    %c0_27 = arith.constant 0 : index
    %c0_28 = arith.constant 0 : index
    %c0_29 = arith.constant 0 : index
    %c0_30 = arith.constant 0 : index
    %61 = vector.load %arg6[%c0_27, %c0_28, %c0_29, %c0_30] : memref<3x4x32x8xbf16, #tpu.memory_space<vmem>>, vector<1x1x32x8xbf16>
    %62 = vector.shape_cast %61 : vector<1x1x32x8xbf16> to vector<32x8xbf16>
    %cst_31 = arith.constant dense<0.000000e+00> : vector<8x8xf32>
    %63 = tpu.matmul %59, %62, %cst_31 {dimension_numbers = #tpu.dot_dimension_numbers<[1], [0], [0], [1], [0, 0, 1, 1], [], []>} : vector<8x32xbf16>, vector<32x8xbf16>, vector<8x8xf32> -> vector<8x8xf32>
    %c0_32 = arith.constant 0 : index
    %c0_33 = arith.constant 0 : index
    %c0_34 = arith.constant 0 : index
    %c0_35 = arith.constant 0 : index
    %64 = vector.load %arg7[%c0_32, %c0_33, %c0_34, %c0_35] : memref<3x4x1x8xf32, #tpu.memory_space<vmem>>, vector<1x1x1x8xf32>
    %65 = vector.shape_cast %64 : vector<1x1x1x8xf32> to vector<1x8xf32>
    %66 = vector.broadcast %65 : vector<1x8xf32> to vector<8x8xf32>
    %67 = arith.addf %63, %66 : vector<8x8xf32>
    %c1 = arith.constant 1 : index
    %c0_36 = arith.constant 0 : index
    %c0_37 = arith.constant 0 : index
    %c0_38 = arith.constant 0 : index
    %68 = vector.load %arg6[%c1, %c0_36, %c0_37, %c0_38] : memref<3x4x32x8xbf16, #tpu.memory_space<vmem>>, vector<1x1x32x8xbf16>
    %69 = vector.shape_cast %68 : vector<1x1x32x8xbf16> to vector<32x8xbf16>
    %cst_39 = arith.constant dense<0.000000e+00> : vector<8x8xf32>
    %70 = tpu.matmul %60, %69, %cst_39 {dimension_numbers = #tpu.dot_dimension_numbers<[1], [0], [0], [1], [0, 0, 1, 1], [], []>} : vector<8x32xbf16>, vector<32x8xbf16>, vector<8x8xf32> -> vector<8x8xf32>
    %c1_40 = arith.constant 1 : index
    %c0_41 = arith.constant 0 : index
    %c0_42 = arith.constant 0 : index
    %c0_43 = arith.constant 0 : index
    %71 = vector.load %arg7[%c1_40, %c0_41, %c0_42, %c0_43] : memref<3x4x1x8xf32, #tpu.memory_space<vmem>>, vector<1x1x1x8xf32>
    %72 = vector.shape_cast %71 : vector<1x1x1x8xf32> to vector<1x8xf32>
    %73 = vector.broadcast %72 : vector<1x8xf32> to vector<8x8xf32>
    %74 = arith.addf %70, %73 : vector<8x8xf32>
    %c2 = arith.constant 2 : index
    %c0_44 = arith.constant 0 : index
    %c0_45 = arith.constant 0 : index
    %c0_46 = arith.constant 0 : index
    %75 = vector.load %arg6[%c2, %c0_44, %c0_45, %c0_46] : memref<3x4x32x8xbf16, #tpu.memory_space<vmem>>, vector<1x1x32x8xbf16>
    %76 = vector.shape_cast %75 : vector<1x1x32x8xbf16> to vector<32x8xbf16>
    %cst_47 = arith.constant dense<0.000000e+00> : vector<8x8xf32>
    %77 = tpu.matmul %60, %76, %cst_47 {dimension_numbers = #tpu.dot_dimension_numbers<[1], [0], [0], [1], [0, 0, 1, 1], [], []>} : vector<8x32xbf16>, vector<32x8xbf16>, vector<8x8xf32> -> vector<8x8xf32>
    %c2_48 = arith.constant 2 : index
    %c0_49 = arith.constant 0 : index
    %c0_50 = arith.constant 0 : index
    %c0_51 = arith.constant 0 : index
    %78 = vector.load %arg7[%c2_48, %c0_49, %c0_50, %c0_51] : memref<3x4x1x8xf32, #tpu.memory_space<vmem>>, vector<1x1x1x8xf32>
    %79 = vector.shape_cast %78 : vector<1x1x1x8xf32> to vector<1x8xf32>
    %80 = vector.broadcast %79 : vector<1x8xf32> to vector<8x8xf32>
    %81 = arith.addf %77, %80 : vector<8x8xf32>
    %cst_52 = arith.constant dense<0.000000e+00> : vector<8x8xf32>
    %82 = tpu.matmul %67, %74, %cst_52 {dimension_numbers = #tpu.dot_dimension_numbers<[1], [1], [0], [0], [0, 0, 1, 0], [], []>} : vector<8x8xf32>, vector<8x8xf32>, vector<8x8xf32> -> vector<8x8xf32>
    %83 = vector.broadcast %6 : vector<1x8xf32> to vector<8x8xf32>
    %84 = arith.addf %82, %83 : vector<8x8xf32>
    %cst_53 = arith.constant dense<0xFF800000> : vector<8xf32>
    %85 = vector.multi_reduction <maximumf>, %84, %cst_53 [1] : vector<8x8xf32> to vector<8xf32>
    %86 = vector.shape_cast %85 : vector<8xf32> to vector<8x1xf32>
    %87 = vector.broadcast %86 : vector<8x1xf32> to vector<8x8xf32>
    %88 = arith.subf %84, %87 : vector<8x8xf32>
    %89 = math.exp %88 : vector<8x8xf32>
    %cst_54 = arith.constant dense<0.000000e+00> : vector<8xf32>
    %90 = vector.multi_reduction <add>, %89, %cst_54 [1] : vector<8x8xf32> to vector<8xf32>
    %91 = vector.shape_cast %90 : vector<8xf32> to vector<8x1xf32>
    %92 = tpu.reciprocal %91 {approx = true} : vector<8x1xf32> -> vector<8x1xf32>
    %93 = vector.broadcast %92 : vector<8x1xf32> to vector<8x8xf32>
    %94 = arith.mulf %89, %93 : vector<8x8xf32>
    %cst_55 = arith.constant dense<0.000000e+00> : vector<8x8xf32>
    %95 = tpu.matmul %94, %81, %cst_55 {dimension_numbers = #tpu.dot_dimension_numbers<[1], [0], [0], [1], [0, 0, 1, 1], [], []>} : vector<8x8xf32>, vector<8x8xf32>, vector<8x8xf32> -> vector<8x8xf32>
    %96 = arith.truncf %95 : vector<8x8xf32> to vector<8x8xbf16>
    %c0_56 = arith.constant 0 : index
    %c0_57 = arith.constant 0 : index
    %c0_58 = arith.constant 0 : index
    %97 = vector.load %arg8[%c0_56, %c0_57, %c0_58] : memref<4x8x32xbf16, #tpu.memory_space<vmem>>, vector<1x8x32xbf16>
    %98 = vector.shape_cast %97 : vector<1x8x32xbf16> to vector<8x32xbf16>
    %cst_59 = arith.constant dense<0.000000e+00> : vector<8x32xf32>
    %99 = tpu.matmul %96, %98, %cst_59 {dimension_numbers = #tpu.dot_dimension_numbers<[1], [0], [0], [1], [0, 0, 1, 1], [], []>} : vector<8x8xbf16>, vector<8x32xbf16>, vector<8x32xf32> -> vector<8x32xf32>
    %c0_60 = arith.constant 0 : index
    %c1_61 = arith.constant 1 : index
    %c0_62 = arith.constant 0 : index
    %c0_63 = arith.constant 0 : index
    %100 = vector.load %arg6[%c0_60, %c1_61, %c0_62, %c0_63] : memref<3x4x32x8xbf16, #tpu.memory_space<vmem>>, vector<1x1x32x8xbf16>
    %101 = vector.shape_cast %100 : vector<1x1x32x8xbf16> to vector<32x8xbf16>
    %cst_64 = arith.constant dense<0.000000e+00> : vector<8x8xf32>
    %102 = tpu.matmul %59, %101, %cst_64 {dimension_numbers = #tpu.dot_dimension_numbers<[1], [0], [0], [1], [0, 0, 1, 1], [], []>} : vector<8x32xbf16>, vector<32x8xbf16>, vector<8x8xf32> -> vector<8x8xf32>
    %c0_65 = arith.constant 0 : index
    %c1_66 = arith.constant 1 : index
    %c0_67 = arith.constant 0 : index
    %c0_68 = arith.constant 0 : index
    %103 = vector.load %arg7[%c0_65, %c1_66, %c0_67, %c0_68] : memref<3x4x1x8xf32, #tpu.memory_space<vmem>>, vector<1x1x1x8xf32>
    %104 = vector.shape_cast %103 : vector<1x1x1x8xf32> to vector<1x8xf32>
    %105 = vector.broadcast %104 : vector<1x8xf32> to vector<8x8xf32>
    %106 = arith.addf %102, %105 : vector<8x8xf32>
    %c1_69 = arith.constant 1 : index
    %c1_70 = arith.constant 1 : index
    %c0_71 = arith.constant 0 : index
    %c0_72 = arith.constant 0 : index
    %107 = vector.load %arg6[%c1_69, %c1_70, %c0_71, %c0_72] : memref<3x4x32x8xbf16, #tpu.memory_space<vmem>>, vector<1x1x32x8xbf16>
    %108 = vector.shape_cast %107 : vector<1x1x32x8xbf16> to vector<32x8xbf16>
    %cst_73 = arith.constant dense<0.000000e+00> : vector<8x8xf32>
    %109 = tpu.matmul %60, %108, %cst_73 {dimension_numbers = #tpu.dot_dimension_numbers<[1], [0], [0], [1], [0, 0, 1, 1], [], []>} : vector<8x32xbf16>, vector<32x8xbf16>, vector<8x8xf32> -> vector<8x8xf32>
    %c1_74 = arith.constant 1 : index
    %c1_75 = arith.constant 1 : index
    %c0_76 = arith.constant 0 : index
    %c0_77 = arith.constant 0 : index
    %110 = vector.load %arg7[%c1_74, %c1_75, %c0_76, %c0_77] : memref<3x4x1x8xf32, #tpu.memory_space<vmem>>, vector<1x1x1x8xf32>
    %111 = vector.shape_cast %110 : vector<1x1x1x8xf32> to vector<1x8xf32>
    %112 = vector.broadcast %111 : vector<1x8xf32> to vector<8x8xf32>
    %113 = arith.addf %109, %112 : vector<8x8xf32>
    %c2_78 = arith.constant 2 : index
    %c1_79 = arith.constant 1 : index
    %c0_80 = arith.constant 0 : index
    %c0_81 = arith.constant 0 : index
    %114 = vector.load %arg6[%c2_78, %c1_79, %c0_80, %c0_81] : memref<3x4x32x8xbf16, #tpu.memory_space<vmem>>, vector<1x1x32x8xbf16>
    %115 = vector.shape_cast %114 : vector<1x1x32x8xbf16> to vector<32x8xbf16>
    %cst_82 = arith.constant dense<0.000000e+00> : vector<8x8xf32>
    %116 = tpu.matmul %60, %115, %cst_82 {dimension_numbers = #tpu.dot_dimension_numbers<[1], [0], [0], [1], [0, 0, 1, 1], [], []>} : vector<8x32xbf16>, vector<32x8xbf16>, vector<8x8xf32> -> vector<8x8xf32>
    %c2_83 = arith.constant 2 : index
    %c1_84 = arith.constant 1 : index
    %c0_85 = arith.constant 0 : index
    %c0_86 = arith.constant 0 : index
    %117 = vector.load %arg7[%c2_83, %c1_84, %c0_85, %c0_86] : memref<3x4x1x8xf32, #tpu.memory_space<vmem>>, vector<1x1x1x8xf32>
    %118 = vector.shape_cast %117 : vector<1x1x1x8xf32> to vector<1x8xf32>
    %119 = vector.broadcast %118 : vector<1x8xf32> to vector<8x8xf32>
    %120 = arith.addf %116, %119 : vector<8x8xf32>
    %cst_87 = arith.constant dense<0.000000e+00> : vector<8x8xf32>
    %121 = tpu.matmul %106, %113, %cst_87 {dimension_numbers = #tpu.dot_dimension_numbers<[1], [1], [0], [0], [0, 0, 1, 0], [], []>} : vector<8x8xf32>, vector<8x8xf32>, vector<8x8xf32> -> vector<8x8xf32>
    %122 = vector.broadcast %6 : vector<1x8xf32> to vector<8x8xf32>
    %123 = arith.addf %121, %122 : vector<8x8xf32>
    %cst_88 = arith.constant dense<0xFF800000> : vector<8xf32>
    %124 = vector.multi_reduction <maximumf>, %123, %cst_88 [1] : vector<8x8xf32> to vector<8xf32>
    %125 = vector.shape_cast %124 : vector<8xf32> to vector<8x1xf32>
    %126 = vector.broadcast %125 : vector<8x1xf32> to vector<8x8xf32>
    %127 = arith.subf %123, %126 : vector<8x8xf32>
    %128 = math.exp %127 : vector<8x8xf32>
    %cst_89 = arith.constant dense<0.000000e+00> : vector<8xf32>
    %129 = vector.multi_reduction <add>, %128, %cst_89 [1] : vector<8x8xf32> to vector<8xf32>
    %130 = vector.shape_cast %129 : vector<8xf32> to vector<8x1xf32>
    %131 = tpu.reciprocal %130 {approx = true} : vector<8x1xf32> -> vector<8x1xf32>
    %132 = vector.broadcast %131 : vector<8x1xf32> to vector<8x8xf32>
    %133 = arith.mulf %128, %132 : vector<8x8xf32>
    %cst_90 = arith.constant dense<0.000000e+00> : vector<8x8xf32>
    %134 = tpu.matmul %133, %120, %cst_90 {dimension_numbers = #tpu.dot_dimension_numbers<[1], [0], [0], [1], [0, 0, 1, 1], [], []>} : vector<8x8xf32>, vector<8x8xf32>, vector<8x8xf32> -> vector<8x8xf32>
    %135 = arith.truncf %134 : vector<8x8xf32> to vector<8x8xbf16>
    %c1_91 = arith.constant 1 : index
    %c0_92 = arith.constant 0 : index
    %c0_93 = arith.constant 0 : index
    %136 = vector.load %arg8[%c1_91, %c0_92, %c0_93] : memref<4x8x32xbf16, #tpu.memory_space<vmem>>, vector<1x8x32xbf16>
    %137 = vector.shape_cast %136 : vector<1x8x32xbf16> to vector<8x32xbf16>
    %cst_94 = arith.constant dense<0.000000e+00> : vector<8x32xf32>
    %138 = tpu.matmul %135, %137, %cst_94 {dimension_numbers = #tpu.dot_dimension_numbers<[1], [0], [0], [1], [0, 0, 1, 1], [], []>} : vector<8x8xbf16>, vector<8x32xbf16>, vector<8x32xf32> -> vector<8x32xf32>
    %139 = arith.addf %99, %138 : vector<8x32xf32>
    %c0_95 = arith.constant 0 : index
    %c2_96 = arith.constant 2 : index
    %c0_97 = arith.constant 0 : index
    %c0_98 = arith.constant 0 : index
    %140 = vector.load %arg6[%c0_95, %c2_96, %c0_97, %c0_98] : memref<3x4x32x8xbf16, #tpu.memory_space<vmem>>, vector<1x1x32x8xbf16>
    %141 = vector.shape_cast %140 : vector<1x1x32x8xbf16> to vector<32x8xbf16>
    %cst_99 = arith.constant dense<0.000000e+00> : vector<8x8xf32>
    %142 = tpu.matmul %59, %141, %cst_99 {dimension_numbers = #tpu.dot_dimension_numbers<[1], [0], [0], [1], [0, 0, 1, 1], [], []>} : vector<8x32xbf16>, vector<32x8xbf16>, vector<8x8xf32> -> vector<8x8xf32>
    %c0_100 = arith.constant 0 : index
    %c2_101 = arith.constant 2 : index
    %c0_102 = arith.constant 0 : index
    %c0_103 = arith.constant 0 : index
    %143 = vector.load %arg7[%c0_100, %c2_101, %c0_102, %c0_103] : memref<3x4x1x8xf32, #tpu.memory_space<vmem>>, vector<1x1x1x8xf32>
    %144 = vector.shape_cast %143 : vector<1x1x1x8xf32> to vector<1x8xf32>
    %145 = vector.broadcast %144 : vector<1x8xf32> to vector<8x8xf32>
    %146 = arith.addf %142, %145 : vector<8x8xf32>
    %c1_104 = arith.constant 1 : index
    %c2_105 = arith.constant 2 : index
    %c0_106 = arith.constant 0 : index
    %c0_107 = arith.constant 0 : index
    %147 = vector.load %arg6[%c1_104, %c2_105, %c0_106, %c0_107] : memref<3x4x32x8xbf16, #tpu.memory_space<vmem>>, vector<1x1x32x8xbf16>
    %148 = vector.shape_cast %147 : vector<1x1x32x8xbf16> to vector<32x8xbf16>
    %cst_108 = arith.constant dense<0.000000e+00> : vector<8x8xf32>
    %149 = tpu.matmul %60, %148, %cst_108 {dimension_numbers = #tpu.dot_dimension_numbers<[1], [0], [0], [1], [0, 0, 1, 1], [], []>} : vector<8x32xbf16>, vector<32x8xbf16>, vector<8x8xf32> -> vector<8x8xf32>
    %c1_109 = arith.constant 1 : index
    %c2_110 = arith.constant 2 : index
    %c0_111 = arith.constant 0 : index
    %c0_112 = arith.constant 0 : index
    %150 = vector.load %arg7[%c1_109, %c2_110, %c0_111, %c0_112] : memref<3x4x1x8xf32, #tpu.memory_space<vmem>>, vector<1x1x1x8xf32>
    %151 = vector.shape_cast %150 : vector<1x1x1x8xf32> to vector<1x8xf32>
    %152 = vector.broadcast %151 : vector<1x8xf32> to vector<8x8xf32>
    %153 = arith.addf %149, %152 : vector<8x8xf32>
    %c2_113 = arith.constant 2 : index
    %c2_114 = arith.constant 2 : index
    %c0_115 = arith.constant 0 : index
    %c0_116 = arith.constant 0 : index
    %154 = vector.load %arg6[%c2_113, %c2_114, %c0_115, %c0_116] : memref<3x4x32x8xbf16, #tpu.memory_space<vmem>>, vector<1x1x32x8xbf16>
    %155 = vector.shape_cast %154 : vector<1x1x32x8xbf16> to vector<32x8xbf16>
    %cst_117 = arith.constant dense<0.000000e+00> : vector<8x8xf32>
    %156 = tpu.matmul %60, %155, %cst_117 {dimension_numbers = #tpu.dot_dimension_numbers<[1], [0], [0], [1], [0, 0, 1, 1], [], []>} : vector<8x32xbf16>, vector<32x8xbf16>, vector<8x8xf32> -> vector<8x8xf32>
    %c2_118 = arith.constant 2 : index
    %c2_119 = arith.constant 2 : index
    %c0_120 = arith.constant 0 : index
    %c0_121 = arith.constant 0 : index
    %157 = vector.load %arg7[%c2_118, %c2_119, %c0_120, %c0_121] : memref<3x4x1x8xf32, #tpu.memory_space<vmem>>, vector<1x1x1x8xf32>
    %158 = vector.shape_cast %157 : vector<1x1x1x8xf32> to vector<1x8xf32>
    %159 = vector.broadcast %158 : vector<1x8xf32> to vector<8x8xf32>
    %160 = arith.addf %156, %159 : vector<8x8xf32>
    %cst_122 = arith.constant dense<0.000000e+00> : vector<8x8xf32>
    %161 = tpu.matmul %146, %153, %cst_122 {dimension_numbers = #tpu.dot_dimension_numbers<[1], [1], [0], [0], [0, 0, 1, 0], [], []>} : vector<8x8xf32>, vector<8x8xf32>, vector<8x8xf32> -> vector<8x8xf32>
    %162 = vector.broadcast %6 : vector<1x8xf32> to vector<8x8xf32>
    %163 = arith.addf %161, %162 : vector<8x8xf32>
    %cst_123 = arith.constant dense<0xFF800000> : vector<8xf32>
    %164 = vector.multi_reduction <maximumf>, %163, %cst_123 [1] : vector<8x8xf32> to vector<8xf32>
    %165 = vector.shape_cast %164 : vector<8xf32> to vector<8x1xf32>
    %166 = vector.broadcast %165 : vector<8x1xf32> to vector<8x8xf32>
    %167 = arith.subf %163, %166 : vector<8x8xf32>
    %168 = math.exp %167 : vector<8x8xf32>
    %cst_124 = arith.constant dense<0.000000e+00> : vector<8xf32>
    %169 = vector.multi_reduction <add>, %168, %cst_124 [1] : vector<8x8xf32> to vector<8xf32>
    %170 = vector.shape_cast %169 : vector<8xf32> to vector<8x1xf32>
    %171 = tpu.reciprocal %170 {approx = true} : vector<8x1xf32> -> vector<8x1xf32>
    %172 = vector.broadcast %171 : vector<8x1xf32> to vector<8x8xf32>
    %173 = arith.mulf %168, %172 : vector<8x8xf32>
    %cst_125 = arith.constant dense<0.000000e+00> : vector<8x8xf32>
    %174 = tpu.matmul %173, %160, %cst_125 {dimension_numbers = #tpu.dot_dimension_numbers<[1], [0], [0], [1], [0, 0, 1, 1], [], []>} : vector<8x8xf32>, vector<8x8xf32>, vector<8x8xf32> -> vector<8x8xf32>
    %175 = arith.truncf %174 : vector<8x8xf32> to vector<8x8xbf16>
    %c2_126 = arith.constant 2 : index
    %c0_127 = arith.constant 0 : index
    %c0_128 = arith.constant 0 : index
    %176 = vector.load %arg8[%c2_126, %c0_127, %c0_128] : memref<4x8x32xbf16, #tpu.memory_space<vmem>>, vector<1x8x32xbf16>
    %177 = vector.shape_cast %176 : vector<1x8x32xbf16> to vector<8x32xbf16>
    %cst_129 = arith.constant dense<0.000000e+00> : vector<8x32xf32>
    %178 = tpu.matmul %175, %177, %cst_129 {dimension_numbers = #tpu.dot_dimension_numbers<[1], [0], [0], [1], [0, 0, 1, 1], [], []>} : vector<8x8xbf16>, vector<8x32xbf16>, vector<8x32xf32> -> vector<8x32xf32>
    %179 = arith.addf %139, %178 : vector<8x32xf32>
    %c0_130 = arith.constant 0 : index
    %c3 = arith.constant 3 : index
    %c0_131 = arith.constant 0 : index
    %c0_132 = arith.constant 0 : index
    %180 = vector.load %arg6[%c0_130, %c3, %c0_131, %c0_132] : memref<3x4x32x8xbf16, #tpu.memory_space<vmem>>, vector<1x1x32x8xbf16>
    %181 = vector.shape_cast %180 : vector<1x1x32x8xbf16> to vector<32x8xbf16>
    %cst_133 = arith.constant dense<0.000000e+00> : vector<8x8xf32>
    %182 = tpu.matmul %59, %181, %cst_133 {dimension_numbers = #tpu.dot_dimension_numbers<[1], [0], [0], [1], [0, 0, 1, 1], [], []>} : vector<8x32xbf16>, vector<32x8xbf16>, vector<8x8xf32> -> vector<8x8xf32>
    %c0_134 = arith.constant 0 : index
    %c3_135 = arith.constant 3 : index
    %c0_136 = arith.constant 0 : index
    %c0_137 = arith.constant 0 : index
    %183 = vector.load %arg7[%c0_134, %c3_135, %c0_136, %c0_137] : memref<3x4x1x8xf32, #tpu.memory_space<vmem>>, vector<1x1x1x8xf32>
    %184 = vector.shape_cast %183 : vector<1x1x1x8xf32> to vector<1x8xf32>
    %185 = vector.broadcast %184 : vector<1x8xf32> to vector<8x8xf32>
    %186 = arith.addf %182, %185 : vector<8x8xf32>
    %c1_138 = arith.constant 1 : index
    %c3_139 = arith.constant 3 : index
    %c0_140 = arith.constant 0 : index
    %c0_141 = arith.constant 0 : index
    %187 = vector.load %arg6[%c1_138, %c3_139, %c0_140, %c0_141] : memref<3x4x32x8xbf16, #tpu.memory_space<vmem>>, vector<1x1x32x8xbf16>
    %188 = vector.shape_cast %187 : vector<1x1x32x8xbf16> to vector<32x8xbf16>
    %cst_142 = arith.constant dense<0.000000e+00> : vector<8x8xf32>
    %189 = tpu.matmul %60, %188, %cst_142 {dimension_numbers = #tpu.dot_dimension_numbers<[1], [0], [0], [1], [0, 0, 1, 1], [], []>} : vector<8x32xbf16>, vector<32x8xbf16>, vector<8x8xf32> -> vector<8x8xf32>
    %c1_143 = arith.constant 1 : index
    %c3_144 = arith.constant 3 : index
    %c0_145 = arith.constant 0 : index
    %c0_146 = arith.constant 0 : index
    %190 = vector.load %arg7[%c1_143, %c3_144, %c0_145, %c0_146] : memref<3x4x1x8xf32, #tpu.memory_space<vmem>>, vector<1x1x1x8xf32>
    %191 = vector.shape_cast %190 : vector<1x1x1x8xf32> to vector<1x8xf32>
    %192 = vector.broadcast %191 : vector<1x8xf32> to vector<8x8xf32>
    %193 = arith.addf %189, %192 : vector<8x8xf32>
    %c2_147 = arith.constant 2 : index
    %c3_148 = arith.constant 3 : index
    %c0_149 = arith.constant 0 : index
    %c0_150 = arith.constant 0 : index
    %194 = vector.load %arg6[%c2_147, %c3_148, %c0_149, %c0_150] : memref<3x4x32x8xbf16, #tpu.memory_space<vmem>>, vector<1x1x32x8xbf16>
    %195 = vector.shape_cast %194 : vector<1x1x32x8xbf16> to vector<32x8xbf16>
    %cst_151 = arith.constant dense<0.000000e+00> : vector<8x8xf32>
    %196 = tpu.matmul %60, %195, %cst_151 {dimension_numbers = #tpu.dot_dimension_numbers<[1], [0], [0], [1], [0, 0, 1, 1], [], []>} : vector<8x32xbf16>, vector<32x8xbf16>, vector<8x8xf32> -> vector<8x8xf32>
    %c2_152 = arith.constant 2 : index
    %c3_153 = arith.constant 3 : index
    %c0_154 = arith.constant 0 : index
    %c0_155 = arith.constant 0 : index
    %197 = vector.load %arg7[%c2_152, %c3_153, %c0_154, %c0_155] : memref<3x4x1x8xf32, #tpu.memory_space<vmem>>, vector<1x1x1x8xf32>
    %198 = vector.shape_cast %197 : vector<1x1x1x8xf32> to vector<1x8xf32>
    %199 = vector.broadcast %198 : vector<1x8xf32> to vector<8x8xf32>
    %200 = arith.addf %196, %199 : vector<8x8xf32>
    %cst_156 = arith.constant dense<0.000000e+00> : vector<8x8xf32>
    %201 = tpu.matmul %186, %193, %cst_156 {dimension_numbers = #tpu.dot_dimension_numbers<[1], [1], [0], [0], [0, 0, 1, 0], [], []>} : vector<8x8xf32>, vector<8x8xf32>, vector<8x8xf32> -> vector<8x8xf32>
    %202 = vector.broadcast %6 : vector<1x8xf32> to vector<8x8xf32>
    %203 = arith.addf %201, %202 : vector<8x8xf32>
    %cst_157 = arith.constant dense<0xFF800000> : vector<8xf32>
    %204 = vector.multi_reduction <maximumf>, %203, %cst_157 [1] : vector<8x8xf32> to vector<8xf32>
    %205 = vector.shape_cast %204 : vector<8xf32> to vector<8x1xf32>
    %206 = vector.broadcast %205 : vector<8x1xf32> to vector<8x8xf32>
    %207 = arith.subf %203, %206 : vector<8x8xf32>
    %208 = math.exp %207 : vector<8x8xf32>
    %cst_158 = arith.constant dense<0.000000e+00> : vector<8xf32>
    %209 = vector.multi_reduction <add>, %208, %cst_158 [1] : vector<8x8xf32> to vector<8xf32>
    %210 = vector.shape_cast %209 : vector<8xf32> to vector<8x1xf32>
    %211 = tpu.reciprocal %210 {approx = true} : vector<8x1xf32> -> vector<8x1xf32>
    %212 = vector.broadcast %211 : vector<8x1xf32> to vector<8x8xf32>
    %213 = arith.mulf %208, %212 : vector<8x8xf32>
    %cst_159 = arith.constant dense<0.000000e+00> : vector<8x8xf32>
    %214 = tpu.matmul %213, %200, %cst_159 {dimension_numbers = #tpu.dot_dimension_numbers<[1], [0], [0], [1], [0, 0, 1, 1], [], []>} : vector<8x8xf32>, vector<8x8xf32>, vector<8x8xf32> -> vector<8x8xf32>
    %215 = arith.truncf %214 : vector<8x8xf32> to vector<8x8xbf16>
    %c3_160 = arith.constant 3 : index
    %c0_161 = arith.constant 0 : index
    %c0_162 = arith.constant 0 : index
    %216 = vector.load %arg8[%c3_160, %c0_161, %c0_162] : memref<4x8x32xbf16, #tpu.memory_space<vmem>>, vector<1x8x32xbf16>
    %217 = vector.shape_cast %216 : vector<1x8x32xbf16> to vector<8x32xbf16>
    %cst_163 = arith.constant dense<0.000000e+00> : vector<8x32xf32>
    %218 = tpu.matmul %215, %217, %cst_163 {dimension_numbers = #tpu.dot_dimension_numbers<[1], [0], [0], [1], [0, 0, 1, 1], [], []>} : vector<8x8xbf16>, vector<8x32xbf16>, vector<8x32xf32> -> vector<8x32xf32>
    %219 = arith.addf %179, %218 : vector<8x32xf32>
    %c0_164 = arith.constant 0 : index
    %c0_165 = arith.constant 0 : index
    %220 = vector.load %arg9[%c0_164, %c0_165] : memref<1x32xf32, #tpu.memory_space<vmem>>, vector<1x32xf32>
    %221 = vector.broadcast %220 : vector<1x32xf32> to vector<8x32xf32>
    %222 = arith.addf %219, %221 : vector<8x32xf32>
    %c0_166 = arith.constant 0 : index
    %c0_167 = arith.constant 0 : index
    %c0_168 = arith.constant 0 : index
    %223 = vector.load %arg10[%c0_166, %c0_167, %c0_168] : memref<1x8x32xf32, #tpu.memory_space<vmem>>, vector<1x8x32xf32>
    %224 = vector.shape_cast %223 : vector<1x8x32xf32> to vector<8x32xf32>
    %225 = vector.shape_cast %222 : vector<8x32xf32> to vector<1x8x32xf32>
    tpu.vector_store %arg10[%c0_166, %c0_167, %c0_168], %225 {strides = array<i32>} : memref<1x8x32xf32, #tpu.memory_space<vmem>>, vector<1x8x32xf32>,
    return
  }
  func.func @transform_0(%arg0: i32) -> (i32, i32, i32) {
    %c0_i32 = arith.constant 0 : i32
    %c0_i32_0 = arith.constant 0 : i32
    %c0_i32_1 = arith.constant 0 : i32
    return %arg0, %c0_i32, %c0_i32_0 : i32, i32, i32
  }
  func.func @transform_1(%arg0: i32) -> (i32, i32, i32) {
    %c0_i32 = arith.constant 0 : i32
    %c0_i32_0 = arith.constant 0 : i32
    %c0_i32_1 = arith.constant 0 : i32
    return %arg0, %c0_i32, %c0_i32_0 : i32, i32, i32
  }
  func.func @transform_2(%arg0: i32) -> (i32, i32, i32) {
    %c0_i32 = arith.constant 0 : i32
    %c0_i32_0 = arith.constant 0 : i32
    %c0_i32_1 = arith.constant 0 : i32
    return %arg0, %c0_i32, %c0_i32_0 : i32, i32, i32
  }
  func.func @transform_3(%arg0: i32) -> (i32, i32) {
    %c0_i32 = arith.constant 0 : i32
    %c0_i32_0 = arith.constant 0 : i32
    %c0_i32_1 = arith.constant 0 : i32
    return %c0_i32, %c0_i32_0 : i32, i32
  }
  func.func @transform_4(%arg0: i32) -> (i32, i32) {
    %c0_i32 = arith.constant 0 : i32
    %c0_i32_0 = arith.constant 0 : i32
    %c0_i32_1 = arith.constant 0 : i32
    return %c0_i32, %c0_i32_0 : i32, i32
  }
  func.func @transform_5(%arg0: i32) -> (i32, i32, i32, i32) {
    %c0_i32 = arith.constant 0 : i32
    %c0_i32_0 = arith.constant 0 : i32
    %c0_i32_1 = arith.constant 0 : i32
    %c0_i32_2 = arith.constant 0 : i32
    %c0_i32_3 = arith.constant 0 : i32
    return %c0_i32, %c0_i32_0, %c0_i32_1, %c0_i32_2 : i32, i32, i32, i32
  }
  func.func @transform_6(%arg0: i32) -> (i32, i32, i32, i32) {
    %c0_i32 = arith.constant 0 : i32
    %c0_i32_0 = arith.constant 0 : i32
    %c0_i32_1 = arith.constant 0 : i32
    %c0_i32_2 = arith.constant 0 : i32
    %c0_i32_3 = arith.constant 0 : i32
    return %c0_i32, %c0_i32_0, %c0_i32_1, %c0_i32_2 : i32, i32, i32, i32
  }
  func.func @transform_7(%arg0: i32) -> (i32, i32, i32) {
    %c0_i32 = arith.constant 0 : i32
    %c0_i32_0 = arith.constant 0 : i32
    %c0_i32_1 = arith.constant 0 : i32
    %c0_i32_2 = arith.constant 0 : i32
    return %c0_i32, %c0_i32_0, %c0_i32_1 : i32, i32, i32
  }
  func.func @transform_8(%arg0: i32) -> (i32, i32) {
    %c0_i32 = arith.constant 0 : i32
    %c0_i32_0 = arith.constant 0 : i32
    %c0_i32_1 = arith.constant 0 : i32
    return %c0_i32, %c0_i32_0 : i32, i32
  }
  func.func @transform_9(%arg0: i32) -> (i32, i32, i32) {
    %c0_i32 = arith.constant 0 : i32
    %c0_i32_0 = arith.constant 0 : i32
    %c0_i32_1 = arith.constant 0 : i32
    return %arg0, %c0_i32, %c0_i32_0 : i32, i32, i32
  }
}

module attributes {stable_mosaic.version = 11 : i64} {
  func.func @_self_block_kernel(%arg0: i32, %arg1: memref<1x16x32xf32, #tpu.memory_space<vmem>>, %arg2: memref<1x1x16xi32, #tpu.memory_space<vmem>>, %arg3: memref<1x32xf32, #tpu.memory_space<vmem>>, %arg4: memref<1x32xf32, #tpu.memory_space<vmem>>, %arg5: memref<3x4x32x8xbf16, #tpu.memory_space<vmem>>, %arg6: memref<3x4x1x8xf32, #tpu.memory_space<vmem>>, %arg7: memref<4x8x32xbf16, #tpu.memory_space<vmem>>, %arg8: memref<1x32xf32, #tpu.memory_space<vmem>>, %arg9: memref<1x32xf32, #tpu.memory_space<vmem>>, %arg10: memref<1x32xf32, #tpu.memory_space<vmem>>, %arg11: memref<32x128xbf16, #tpu.memory_space<vmem>>, %arg12: memref<1x128xf32, #tpu.memory_space<vmem>>, %arg13: memref<128x32xbf16, #tpu.memory_space<vmem>>, %arg14: memref<1x32xf32, #tpu.memory_space<vmem>>, %arg15: memref<1x16x32xf32, #tpu.memory_space<vmem>>) attributes {dimension_semantics = [#tpu.dimension_semantics<parallel>], iteration_bounds = array<i64: 2>, scalar_prefetch = 0 : i64, scratch_operands = 0 : i64, tpu.core_type = #tpu.core_type<tc>, window_params = [{transform_indices = @transform_0, window_bounds = array<i64: 1, 16, 32>}, {transform_indices = @transform_1, window_bounds = array<i64: 1, 1, 16>}, {pipeline_mode = #tpu.pipeline_mode<synchronous>, transform_indices = @transform_2, window_bounds = array<i64: 1, 32>}, {pipeline_mode = #tpu.pipeline_mode<synchronous>, transform_indices = @transform_3, window_bounds = array<i64: 1, 32>}, {pipeline_mode = #tpu.pipeline_mode<synchronous>, transform_indices = @transform_4, window_bounds = array<i64: 3, 4, 32, 8>}, {pipeline_mode = #tpu.pipeline_mode<synchronous>, transform_indices = @transform_5, window_bounds = array<i64: 3, 4, 1, 8>}, {pipeline_mode = #tpu.pipeline_mode<synchronous>, transform_indices = @transform_6, window_bounds = array<i64: 4, 8, 32>}, {pipeline_mode = #tpu.pipeline_mode<synchronous>, transform_indices = @transform_7, window_bounds = array<i64: 1, 32>}, {pipeline_mode = #tpu.pipeline_mode<synchronous>, transform_indices = @transform_8, window_bounds = array<i64: 1, 32>}, {pipeline_mode = #tpu.pipeline_mode<synchronous>, transform_indices = @transform_9, window_bounds = array<i64: 1, 32>}, {pipeline_mode = #tpu.pipeline_mode<synchronous>, transform_indices = @transform_10, window_bounds = array<i64: 32, 128>}, {pipeline_mode = #tpu.pipeline_mode<synchronous>, transform_indices = @transform_11, window_bounds = array<i64: 1, 128>}, {pipeline_mode = #tpu.pipeline_mode<synchronous>, transform_indices = @transform_12, window_bounds = array<i64: 128, 32>}, {pipeline_mode = #tpu.pipeline_mode<synchronous>, transform_indices = @transform_13, window_bounds = array<i64: 1, 32>}, {transform_indices = @transform_14, window_bounds = array<i64: 1, 16, 32>}]} {
    %c0 = arith.constant 0 : index
    %c0_0 = arith.constant 0 : index
    %c0_1 = arith.constant 0 : index
    %0 = vector.load %arg1[%c0, %c0_0, %c0_1] : memref<1x16x32xf32, #tpu.memory_space<vmem>>, vector<1x16x32xf32>
    %1 = vector.shape_cast %0 : vector<1x16x32xf32> to vector<16x32xf32>
    %c0_2 = arith.constant 0 : index
    %c0_3 = arith.constant 0 : index
    %c0_4 = arith.constant 0 : index
    %2 = vector.load %arg2[%c0_2, %c0_3, %c0_4] : memref<1x1x16xi32, #tpu.memory_space<vmem>>, vector<1x1x16xi32>
    %3 = vector.shape_cast %2 : vector<1x1x16xi32> to vector<1x16xi32>
    %c0_i32 = arith.constant 0 : i32
    %4 = vector.broadcast %c0_i32 : i32 to vector<1x16xi32>
    %5 = arith.cmpi sgt, %3, %4 : vector<1x16xi32>
    %cst = arith.constant -1.000000e+30 : f32
    %cst_5 = arith.constant 0.000000e+00 : f32
    %6 = vector.broadcast %cst : f32 to vector<1x16xf32>
    %7 = vector.broadcast %cst_5 : f32 to vector<1x16xf32>
    %8 = arith.select %5, %6, %7 : vector<1x16xi1>, vector<1x16xf32>
    %c0_6 = arith.constant 0 : index
    %c0_7 = arith.constant 0 : index
    %9 = vector.load %arg3[%c0_6, %c0_7] : memref<1x32xf32, #tpu.memory_space<vmem>>, vector<1x32xf32>
    %c0_8 = arith.constant 0 : index
    %c0_9 = arith.constant 0 : index
    %10 = vector.load %arg4[%c0_8, %c0_9] : memref<1x32xf32, #tpu.memory_space<vmem>>, vector<1x32xf32>
    %cst_10 = arith.constant dense<0.000000e+00> : vector<16xf32>
    %11 = vector.multi_reduction <add>, %1, %cst_10 [1] : vector<16x32xf32> to vector<16xf32>
    %12 = vector.shape_cast %11 : vector<16xf32> to vector<16x1xf32>
    %cst_11 = arith.constant 3.200000e+01 : f32
    %13 = vector.broadcast %cst_11 : f32 to vector<16x1xf32>
    %14 = arith.divf %12, %13 : vector<16x1xf32>
    %15 = vector.broadcast %14 : vector<16x1xf32> to vector<16x32xf32>
    %16 = arith.subf %1, %15 : vector<16x32xf32>
    %17 = arith.mulf %16, %16 : vector<16x32xf32>
    %cst_12 = arith.constant dense<0.000000e+00> : vector<16xf32>
    %18 = vector.multi_reduction <add>, %17, %cst_12 [1] : vector<16x32xf32> to vector<16xf32>
    %19 = vector.shape_cast %18 : vector<16xf32> to vector<16x1xf32>
    %cst_13 = arith.constant 3.200000e+01 : f32
    %20 = vector.broadcast %cst_13 : f32 to vector<16x1xf32>
    %21 = arith.divf %19, %20 : vector<16x1xf32>
    %22 = vector.broadcast %14 : vector<16x1xf32> to vector<16x32xf32>
    %23 = arith.subf %1, %22 : vector<16x32xf32>
    %cst_14 = arith.constant 9.99999974E-6 : f32
    %24 = vector.broadcast %cst_14 : f32 to vector<16x1xf32>
    %25 = arith.addf %21, %24 : vector<16x1xf32>
    %26 = math.rsqrt %25 : vector<16x1xf32>
    %27 = vector.broadcast %26 : vector<16x1xf32> to vector<16x32xf32>
    %28 = arith.mulf %23, %27 : vector<16x32xf32>
    %29 = vector.broadcast %9 : vector<1x32xf32> to vector<16x32xf32>
    %30 = arith.mulf %28, %29 : vector<16x32xf32>
    %31 = vector.broadcast %10 : vector<1x32xf32> to vector<16x32xf32>
    %32 = arith.addf %30, %31 : vector<16x32xf32>
    %33 = arith.truncf %32 : vector<16x32xf32> to vector<16x32xbf16>
    %34 = arith.truncf %32 : vector<16x32xf32> to vector<16x32xbf16>
    %c0_15 = arith.constant 0 : index
    %c0_16 = arith.constant 0 : index
    %c0_17 = arith.constant 0 : index
    %c0_18 = arith.constant 0 : index
    %35 = vector.load %arg5[%c0_15, %c0_16, %c0_17, %c0_18] : memref<3x4x32x8xbf16, #tpu.memory_space<vmem>>, vector<1x1x32x8xbf16>
    %36 = vector.shape_cast %35 : vector<1x1x32x8xbf16> to vector<32x8xbf16>
    %cst_19 = arith.constant dense<0.000000e+00> : vector<16x8xf32>
    %37 = tpu.matmul %33, %36, %cst_19 {dimension_numbers = #tpu.dot_dimension_numbers<[1], [0], [0], [1], [0, 0, 1, 1], [], []>} : vector<16x32xbf16>, vector<32x8xbf16>, vector<16x8xf32> -> vector<16x8xf32>
    %c0_20 = arith.constant 0 : index
    %c0_21 = arith.constant 0 : index
    %c0_22 = arith.constant 0 : index
    %c0_23 = arith.constant 0 : index
    %38 = vector.load %arg6[%c0_20, %c0_21, %c0_22, %c0_23] : memref<3x4x1x8xf32, #tpu.memory_space<vmem>>, vector<1x1x1x8xf32>
    %39 = vector.shape_cast %38 : vector<1x1x1x8xf32> to vector<1x8xf32>
    %40 = vector.broadcast %39 : vector<1x8xf32> to vector<16x8xf32>
    %41 = arith.addf %37, %40 : vector<16x8xf32>
    %c1 = arith.constant 1 : index
    %c0_24 = arith.constant 0 : index
    %c0_25 = arith.constant 0 : index
    %c0_26 = arith.constant 0 : index
    %42 = vector.load %arg5[%c1, %c0_24, %c0_25, %c0_26] : memref<3x4x32x8xbf16, #tpu.memory_space<vmem>>, vector<1x1x32x8xbf16>
    %43 = vector.shape_cast %42 : vector<1x1x32x8xbf16> to vector<32x8xbf16>
    %cst_27 = arith.constant dense<0.000000e+00> : vector<16x8xf32>
    %44 = tpu.matmul %34, %43, %cst_27 {dimension_numbers = #tpu.dot_dimension_numbers<[1], [0], [0], [1], [0, 0, 1, 1], [], []>} : vector<16x32xbf16>, vector<32x8xbf16>, vector<16x8xf32> -> vector<16x8xf32>
    %c1_28 = arith.constant 1 : index
    %c0_29 = arith.constant 0 : index
    %c0_30 = arith.constant 0 : index
    %c0_31 = arith.constant 0 : index
    %45 = vector.load %arg6[%c1_28, %c0_29, %c0_30, %c0_31] : memref<3x4x1x8xf32, #tpu.memory_space<vmem>>, vector<1x1x1x8xf32>
    %46 = vector.shape_cast %45 : vector<1x1x1x8xf32> to vector<1x8xf32>
    %47 = vector.broadcast %46 : vector<1x8xf32> to vector<16x8xf32>
    %48 = arith.addf %44, %47 : vector<16x8xf32>
    %c2 = arith.constant 2 : index
    %c0_32 = arith.constant 0 : index
    %c0_33 = arith.constant 0 : index
    %c0_34 = arith.constant 0 : index
    %49 = vector.load %arg5[%c2, %c0_32, %c0_33, %c0_34] : memref<3x4x32x8xbf16, #tpu.memory_space<vmem>>, vector<1x1x32x8xbf16>
    %50 = vector.shape_cast %49 : vector<1x1x32x8xbf16> to vector<32x8xbf16>
    %cst_35 = arith.constant dense<0.000000e+00> : vector<16x8xf32>
    %51 = tpu.matmul %34, %50, %cst_35 {dimension_numbers = #tpu.dot_dimension_numbers<[1], [0], [0], [1], [0, 0, 1, 1], [], []>} : vector<16x32xbf16>, vector<32x8xbf16>, vector<16x8xf32> -> vector<16x8xf32>
    %c2_36 = arith.constant 2 : index
    %c0_37 = arith.constant 0 : index
    %c0_38 = arith.constant 0 : index
    %c0_39 = arith.constant 0 : index
    %52 = vector.load %arg6[%c2_36, %c0_37, %c0_38, %c0_39] : memref<3x4x1x8xf32, #tpu.memory_space<vmem>>, vector<1x1x1x8xf32>
    %53 = vector.shape_cast %52 : vector<1x1x1x8xf32> to vector<1x8xf32>
    %54 = vector.broadcast %53 : vector<1x8xf32> to vector<16x8xf32>
    %55 = arith.addf %51, %54 : vector<16x8xf32>
    %cst_40 = arith.constant dense<0.000000e+00> : vector<16x16xf32>
    %56 = tpu.matmul %41, %48, %cst_40 {dimension_numbers = #tpu.dot_dimension_numbers<[1], [1], [0], [0], [0, 0, 1, 0], [], []>} : vector<16x8xf32>, vector<16x8xf32>, vector<16x16xf32> -> vector<16x16xf32>
    %57 = vector.broadcast %8 : vector<1x16xf32> to vector<16x16xf32>
    %58 = arith.addf %56, %57 : vector<16x16xf32>
    %cst_41 = arith.constant dense<0xFF800000> : vector<16xf32>
    %59 = vector.multi_reduction <maximumf>, %58, %cst_41 [1] : vector<16x16xf32> to vector<16xf32>
    %60 = vector.shape_cast %59 : vector<16xf32> to vector<16x1xf32>
    %61 = vector.broadcast %60 : vector<16x1xf32> to vector<16x16xf32>
    %62 = arith.subf %58, %61 : vector<16x16xf32>
    %63 = math.exp %62 : vector<16x16xf32>
    %cst_42 = arith.constant dense<0.000000e+00> : vector<16xf32>
    %64 = vector.multi_reduction <add>, %63, %cst_42 [1] : vector<16x16xf32> to vector<16xf32>
    %65 = vector.shape_cast %64 : vector<16xf32> to vector<16x1xf32>
    %66 = tpu.reciprocal %65 {approx = true} : vector<16x1xf32> -> vector<16x1xf32>
    %67 = vector.broadcast %66 : vector<16x1xf32> to vector<16x16xf32>
    %68 = arith.mulf %63, %67 : vector<16x16xf32>
    %cst_43 = arith.constant dense<0.000000e+00> : vector<16x8xf32>
    %69 = tpu.matmul %68, %55, %cst_43 {dimension_numbers = #tpu.dot_dimension_numbers<[1], [0], [0], [1], [0, 0, 1, 1], [], []>} : vector<16x16xf32>, vector<16x8xf32>, vector<16x8xf32> -> vector<16x8xf32>
    %70 = arith.truncf %69 : vector<16x8xf32> to vector<16x8xbf16>
    %c0_44 = arith.constant 0 : index
    %c0_45 = arith.constant 0 : index
    %c0_46 = arith.constant 0 : index
    %71 = vector.load %arg7[%c0_44, %c0_45, %c0_46] : memref<4x8x32xbf16, #tpu.memory_space<vmem>>, vector<1x8x32xbf16>
    %72 = vector.shape_cast %71 : vector<1x8x32xbf16> to vector<8x32xbf16>
    %cst_47 = arith.constant dense<0.000000e+00> : vector<16x32xf32>
    %73 = tpu.matmul %70, %72, %cst_47 {dimension_numbers = #tpu.dot_dimension_numbers<[1], [0], [0], [1], [0, 0, 1, 1], [], []>} : vector<16x8xbf16>, vector<8x32xbf16>, vector<16x32xf32> -> vector<16x32xf32>
    %c0_48 = arith.constant 0 : index
    %c1_49 = arith.constant 1 : index
    %c0_50 = arith.constant 0 : index
    %c0_51 = arith.constant 0 : index
    %74 = vector.load %arg5[%c0_48, %c1_49, %c0_50, %c0_51] : memref<3x4x32x8xbf16, #tpu.memory_space<vmem>>, vector<1x1x32x8xbf16>
    %75 = vector.shape_cast %74 : vector<1x1x32x8xbf16> to vector<32x8xbf16>
    %cst_52 = arith.constant dense<0.000000e+00> : vector<16x8xf32>
    %76 = tpu.matmul %33, %75, %cst_52 {dimension_numbers = #tpu.dot_dimension_numbers<[1], [0], [0], [1], [0, 0, 1, 1], [], []>} : vector<16x32xbf16>, vector<32x8xbf16>, vector<16x8xf32> -> vector<16x8xf32>
    %c0_53 = arith.constant 0 : index
    %c1_54 = arith.constant 1 : index
    %c0_55 = arith.constant 0 : index
    %c0_56 = arith.constant 0 : index
    %77 = vector.load %arg6[%c0_53, %c1_54, %c0_55, %c0_56] : memref<3x4x1x8xf32, #tpu.memory_space<vmem>>, vector<1x1x1x8xf32>
    %78 = vector.shape_cast %77 : vector<1x1x1x8xf32> to vector<1x8xf32>
    %79 = vector.broadcast %78 : vector<1x8xf32> to vector<16x8xf32>
    %80 = arith.addf %76, %79 : vector<16x8xf32>
    %c1_57 = arith.constant 1 : index
    %c1_58 = arith.constant 1 : index
    %c0_59 = arith.constant 0 : index
    %c0_60 = arith.constant 0 : index
    %81 = vector.load %arg5[%c1_57, %c1_58, %c0_59, %c0_60] : memref<3x4x32x8xbf16, #tpu.memory_space<vmem>>, vector<1x1x32x8xbf16>
    %82 = vector.shape_cast %81 : vector<1x1x32x8xbf16> to vector<32x8xbf16>
    %cst_61 = arith.constant dense<0.000000e+00> : vector<16x8xf32>
    %83 = tpu.matmul %34, %82, %cst_61 {dimension_numbers = #tpu.dot_dimension_numbers<[1], [0], [0], [1], [0, 0, 1, 1], [], []>} : vector<16x32xbf16>, vector<32x8xbf16>, vector<16x8xf32> -> vector<16x8xf32>
    %c1_62 = arith.constant 1 : index
    %c1_63 = arith.constant 1 : index
    %c0_64 = arith.constant 0 : index
    %c0_65 = arith.constant 0 : index
    %84 = vector.load %arg6[%c1_62, %c1_63, %c0_64, %c0_65] : memref<3x4x1x8xf32, #tpu.memory_space<vmem>>, vector<1x1x1x8xf32>
    %85 = vector.shape_cast %84 : vector<1x1x1x8xf32> to vector<1x8xf32>
    %86 = vector.broadcast %85 : vector<1x8xf32> to vector<16x8xf32>
    %87 = arith.addf %83, %86 : vector<16x8xf32>
    %c2_66 = arith.constant 2 : index
    %c1_67 = arith.constant 1 : index
    %c0_68 = arith.constant 0 : index
    %c0_69 = arith.constant 0 : index
    %88 = vector.load %arg5[%c2_66, %c1_67, %c0_68, %c0_69] : memref<3x4x32x8xbf16, #tpu.memory_space<vmem>>, vector<1x1x32x8xbf16>
    %89 = vector.shape_cast %88 : vector<1x1x32x8xbf16> to vector<32x8xbf16>
    %cst_70 = arith.constant dense<0.000000e+00> : vector<16x8xf32>
    %90 = tpu.matmul %34, %89, %cst_70 {dimension_numbers = #tpu.dot_dimension_numbers<[1], [0], [0], [1], [0, 0, 1, 1], [], []>} : vector<16x32xbf16>, vector<32x8xbf16>, vector<16x8xf32> -> vector<16x8xf32>
    %c2_71 = arith.constant 2 : index
    %c1_72 = arith.constant 1 : index
    %c0_73 = arith.constant 0 : index
    %c0_74 = arith.constant 0 : index
    %91 = vector.load %arg6[%c2_71, %c1_72, %c0_73, %c0_74] : memref<3x4x1x8xf32, #tpu.memory_space<vmem>>, vector<1x1x1x8xf32>
    %92 = vector.shape_cast %91 : vector<1x1x1x8xf32> to vector<1x8xf32>
    %93 = vector.broadcast %92 : vector<1x8xf32> to vector<16x8xf32>
    %94 = arith.addf %90, %93 : vector<16x8xf32>
    %cst_75 = arith.constant dense<0.000000e+00> : vector<16x16xf32>
    %95 = tpu.matmul %80, %87, %cst_75 {dimension_numbers = #tpu.dot_dimension_numbers<[1], [1], [0], [0], [0, 0, 1, 0], [], []>} : vector<16x8xf32>, vector<16x8xf32>, vector<16x16xf32> -> vector<16x16xf32>
    %96 = vector.broadcast %8 : vector<1x16xf32> to vector<16x16xf32>
    %97 = arith.addf %95, %96 : vector<16x16xf32>
    %cst_76 = arith.constant dense<0xFF800000> : vector<16xf32>
    %98 = vector.multi_reduction <maximumf>, %97, %cst_76 [1] : vector<16x16xf32> to vector<16xf32>
    %99 = vector.shape_cast %98 : vector<16xf32> to vector<16x1xf32>
    %100 = vector.broadcast %99 : vector<16x1xf32> to vector<16x16xf32>
    %101 = arith.subf %97, %100 : vector<16x16xf32>
    %102 = math.exp %101 : vector<16x16xf32>
    %cst_77 = arith.constant dense<0.000000e+00> : vector<16xf32>
    %103 = vector.multi_reduction <add>, %102, %cst_77 [1] : vector<16x16xf32> to vector<16xf32>
    %104 = vector.shape_cast %103 : vector<16xf32> to vector<16x1xf32>
    %105 = tpu.reciprocal %104 {approx = true} : vector<16x1xf32> -> vector<16x1xf32>
    %106 = vector.broadcast %105 : vector<16x1xf32> to vector<16x16xf32>
    %107 = arith.mulf %102, %106 : vector<16x16xf32>
    %cst_78 = arith.constant dense<0.000000e+00> : vector<16x8xf32>
    %108 = tpu.matmul %107, %94, %cst_78 {dimension_numbers = #tpu.dot_dimension_numbers<[1], [0], [0], [1], [0, 0, 1, 1], [], []>} : vector<16x16xf32>, vector<16x8xf32>, vector<16x8xf32> -> vector<16x8xf32>
    %109 = arith.truncf %108 : vector<16x8xf32> to vector<16x8xbf16>
    %c1_79 = arith.constant 1 : index
    %c0_80 = arith.constant 0 : index
    %c0_81 = arith.constant 0 : index
    %110 = vector.load %arg7[%c1_79, %c0_80, %c0_81] : memref<4x8x32xbf16, #tpu.memory_space<vmem>>, vector<1x8x32xbf16>
    %111 = vector.shape_cast %110 : vector<1x8x32xbf16> to vector<8x32xbf16>
    %cst_82 = arith.constant dense<0.000000e+00> : vector<16x32xf32>
    %112 = tpu.matmul %109, %111, %cst_82 {dimension_numbers = #tpu.dot_dimension_numbers<[1], [0], [0], [1], [0, 0, 1, 1], [], []>} : vector<16x8xbf16>, vector<8x32xbf16>, vector<16x32xf32> -> vector<16x32xf32>
    %113 = arith.addf %73, %112 : vector<16x32xf32>
    %c0_83 = arith.constant 0 : index
    %c2_84 = arith.constant 2 : index
    %c0_85 = arith.constant 0 : index
    %c0_86 = arith.constant 0 : index
    %114 = vector.load %arg5[%c0_83, %c2_84, %c0_85, %c0_86] : memref<3x4x32x8xbf16, #tpu.memory_space<vmem>>, vector<1x1x32x8xbf16>
    %115 = vector.shape_cast %114 : vector<1x1x32x8xbf16> to vector<32x8xbf16>
    %cst_87 = arith.constant dense<0.000000e+00> : vector<16x8xf32>
    %116 = tpu.matmul %33, %115, %cst_87 {dimension_numbers = #tpu.dot_dimension_numbers<[1], [0], [0], [1], [0, 0, 1, 1], [], []>} : vector<16x32xbf16>, vector<32x8xbf16>, vector<16x8xf32> -> vector<16x8xf32>
    %c0_88 = arith.constant 0 : index
    %c2_89 = arith.constant 2 : index
    %c0_90 = arith.constant 0 : index
    %c0_91 = arith.constant 0 : index
    %117 = vector.load %arg6[%c0_88, %c2_89, %c0_90, %c0_91] : memref<3x4x1x8xf32, #tpu.memory_space<vmem>>, vector<1x1x1x8xf32>
    %118 = vector.shape_cast %117 : vector<1x1x1x8xf32> to vector<1x8xf32>
    %119 = vector.broadcast %118 : vector<1x8xf32> to vector<16x8xf32>
    %120 = arith.addf %116, %119 : vector<16x8xf32>
    %c1_92 = arith.constant 1 : index
    %c2_93 = arith.constant 2 : index
    %c0_94 = arith.constant 0 : index
    %c0_95 = arith.constant 0 : index
    %121 = vector.load %arg5[%c1_92, %c2_93, %c0_94, %c0_95] : memref<3x4x32x8xbf16, #tpu.memory_space<vmem>>, vector<1x1x32x8xbf16>
    %122 = vector.shape_cast %121 : vector<1x1x32x8xbf16> to vector<32x8xbf16>
    %cst_96 = arith.constant dense<0.000000e+00> : vector<16x8xf32>
    %123 = tpu.matmul %34, %122, %cst_96 {dimension_numbers = #tpu.dot_dimension_numbers<[1], [0], [0], [1], [0, 0, 1, 1], [], []>} : vector<16x32xbf16>, vector<32x8xbf16>, vector<16x8xf32> -> vector<16x8xf32>
    %c1_97 = arith.constant 1 : index
    %c2_98 = arith.constant 2 : index
    %c0_99 = arith.constant 0 : index
    %c0_100 = arith.constant 0 : index
    %124 = vector.load %arg6[%c1_97, %c2_98, %c0_99, %c0_100] : memref<3x4x1x8xf32, #tpu.memory_space<vmem>>, vector<1x1x1x8xf32>
    %125 = vector.shape_cast %124 : vector<1x1x1x8xf32> to vector<1x8xf32>
    %126 = vector.broadcast %125 : vector<1x8xf32> to vector<16x8xf32>
    %127 = arith.addf %123, %126 : vector<16x8xf32>
    %c2_101 = arith.constant 2 : index
    %c2_102 = arith.constant 2 : index
    %c0_103 = arith.constant 0 : index
    %c0_104 = arith.constant 0 : index
    %128 = vector.load %arg5[%c2_101, %c2_102, %c0_103, %c0_104] : memref<3x4x32x8xbf16, #tpu.memory_space<vmem>>, vector<1x1x32x8xbf16>
    %129 = vector.shape_cast %128 : vector<1x1x32x8xbf16> to vector<32x8xbf16>
    %cst_105 = arith.constant dense<0.000000e+00> : vector<16x8xf32>
    %130 = tpu.matmul %34, %129, %cst_105 {dimension_numbers = #tpu.dot_dimension_numbers<[1], [0], [0], [1], [0, 0, 1, 1], [], []>} : vector<16x32xbf16>, vector<32x8xbf16>, vector<16x8xf32> -> vector<16x8xf32>
    %c2_106 = arith.constant 2 : index
    %c2_107 = arith.constant 2 : index
    %c0_108 = arith.constant 0 : index
    %c0_109 = arith.constant 0 : index
    %131 = vector.load %arg6[%c2_106, %c2_107, %c0_108, %c0_109] : memref<3x4x1x8xf32, #tpu.memory_space<vmem>>, vector<1x1x1x8xf32>
    %132 = vector.shape_cast %131 : vector<1x1x1x8xf32> to vector<1x8xf32>
    %133 = vector.broadcast %132 : vector<1x8xf32> to vector<16x8xf32>
    %134 = arith.addf %130, %133 : vector<16x8xf32>
    %cst_110 = arith.constant dense<0.000000e+00> : vector<16x16xf32>
    %135 = tpu.matmul %120, %127, %cst_110 {dimension_numbers = #tpu.dot_dimension_numbers<[1], [1], [0], [0], [0, 0, 1, 0], [], []>} : vector<16x8xf32>, vector<16x8xf32>, vector<16x16xf32> -> vector<16x16xf32>
    %136 = vector.broadcast %8 : vector<1x16xf32> to vector<16x16xf32>
    %137 = arith.addf %135, %136 : vector<16x16xf32>
    %cst_111 = arith.constant dense<0xFF800000> : vector<16xf32>
    %138 = vector.multi_reduction <maximumf>, %137, %cst_111 [1] : vector<16x16xf32> to vector<16xf32>
    %139 = vector.shape_cast %138 : vector<16xf32> to vector<16x1xf32>
    %140 = vector.broadcast %139 : vector<16x1xf32> to vector<16x16xf32>
    %141 = arith.subf %137, %140 : vector<16x16xf32>
    %142 = math.exp %141 : vector<16x16xf32>
    %cst_112 = arith.constant dense<0.000000e+00> : vector<16xf32>
    %143 = vector.multi_reduction <add>, %142, %cst_112 [1] : vector<16x16xf32> to vector<16xf32>
    %144 = vector.shape_cast %143 : vector<16xf32> to vector<16x1xf32>
    %145 = tpu.reciprocal %144 {approx = true} : vector<16x1xf32> -> vector<16x1xf32>
    %146 = vector.broadcast %145 : vector<16x1xf32> to vector<16x16xf32>
    %147 = arith.mulf %142, %146 : vector<16x16xf32>
    %cst_113 = arith.constant dense<0.000000e+00> : vector<16x8xf32>
    %148 = tpu.matmul %147, %134, %cst_113 {dimension_numbers = #tpu.dot_dimension_numbers<[1], [0], [0], [1], [0, 0, 1, 1], [], []>} : vector<16x16xf32>, vector<16x8xf32>, vector<16x8xf32> -> vector<16x8xf32>
    %149 = arith.truncf %148 : vector<16x8xf32> to vector<16x8xbf16>
    %c2_114 = arith.constant 2 : index
    %c0_115 = arith.constant 0 : index
    %c0_116 = arith.constant 0 : index
    %150 = vector.load %arg7[%c2_114, %c0_115, %c0_116] : memref<4x8x32xbf16, #tpu.memory_space<vmem>>, vector<1x8x32xbf16>
    %151 = vector.shape_cast %150 : vector<1x8x32xbf16> to vector<8x32xbf16>
    %cst_117 = arith.constant dense<0.000000e+00> : vector<16x32xf32>
    %152 = tpu.matmul %149, %151, %cst_117 {dimension_numbers = #tpu.dot_dimension_numbers<[1], [0], [0], [1], [0, 0, 1, 1], [], []>} : vector<16x8xbf16>, vector<8x32xbf16>, vector<16x32xf32> -> vector<16x32xf32>
    %153 = arith.addf %113, %152 : vector<16x32xf32>
    %c0_118 = arith.constant 0 : index
    %c3 = arith.constant 3 : index
    %c0_119 = arith.constant 0 : index
    %c0_120 = arith.constant 0 : index
    %154 = vector.load %arg5[%c0_118, %c3, %c0_119, %c0_120] : memref<3x4x32x8xbf16, #tpu.memory_space<vmem>>, vector<1x1x32x8xbf16>
    %155 = vector.shape_cast %154 : vector<1x1x32x8xbf16> to vector<32x8xbf16>
    %cst_121 = arith.constant dense<0.000000e+00> : vector<16x8xf32>
    %156 = tpu.matmul %33, %155, %cst_121 {dimension_numbers = #tpu.dot_dimension_numbers<[1], [0], [0], [1], [0, 0, 1, 1], [], []>} : vector<16x32xbf16>, vector<32x8xbf16>, vector<16x8xf32> -> vector<16x8xf32>
    %c0_122 = arith.constant 0 : index
    %c3_123 = arith.constant 3 : index
    %c0_124 = arith.constant 0 : index
    %c0_125 = arith.constant 0 : index
    %157 = vector.load %arg6[%c0_122, %c3_123, %c0_124, %c0_125] : memref<3x4x1x8xf32, #tpu.memory_space<vmem>>, vector<1x1x1x8xf32>
    %158 = vector.shape_cast %157 : vector<1x1x1x8xf32> to vector<1x8xf32>
    %159 = vector.broadcast %158 : vector<1x8xf32> to vector<16x8xf32>
    %160 = arith.addf %156, %159 : vector<16x8xf32>
    %c1_126 = arith.constant 1 : index
    %c3_127 = arith.constant 3 : index
    %c0_128 = arith.constant 0 : index
    %c0_129 = arith.constant 0 : index
    %161 = vector.load %arg5[%c1_126, %c3_127, %c0_128, %c0_129] : memref<3x4x32x8xbf16, #tpu.memory_space<vmem>>, vector<1x1x32x8xbf16>
    %162 = vector.shape_cast %161 : vector<1x1x32x8xbf16> to vector<32x8xbf16>
    %cst_130 = arith.constant dense<0.000000e+00> : vector<16x8xf32>
    %163 = tpu.matmul %34, %162, %cst_130 {dimension_numbers = #tpu.dot_dimension_numbers<[1], [0], [0], [1], [0, 0, 1, 1], [], []>} : vector<16x32xbf16>, vector<32x8xbf16>, vector<16x8xf32> -> vector<16x8xf32>
    %c1_131 = arith.constant 1 : index
    %c3_132 = arith.constant 3 : index
    %c0_133 = arith.constant 0 : index
    %c0_134 = arith.constant 0 : index
    %164 = vector.load %arg6[%c1_131, %c3_132, %c0_133, %c0_134] : memref<3x4x1x8xf32, #tpu.memory_space<vmem>>, vector<1x1x1x8xf32>
    %165 = vector.shape_cast %164 : vector<1x1x1x8xf32> to vector<1x8xf32>
    %166 = vector.broadcast %165 : vector<1x8xf32> to vector<16x8xf32>
    %167 = arith.addf %163, %166 : vector<16x8xf32>
    %c2_135 = arith.constant 2 : index
    %c3_136 = arith.constant 3 : index
    %c0_137 = arith.constant 0 : index
    %c0_138 = arith.constant 0 : index
    %168 = vector.load %arg5[%c2_135, %c3_136, %c0_137, %c0_138] : memref<3x4x32x8xbf16, #tpu.memory_space<vmem>>, vector<1x1x32x8xbf16>
    %169 = vector.shape_cast %168 : vector<1x1x32x8xbf16> to vector<32x8xbf16>
    %cst_139 = arith.constant dense<0.000000e+00> : vector<16x8xf32>
    %170 = tpu.matmul %34, %169, %cst_139 {dimension_numbers = #tpu.dot_dimension_numbers<[1], [0], [0], [1], [0, 0, 1, 1], [], []>} : vector<16x32xbf16>, vector<32x8xbf16>, vector<16x8xf32> -> vector<16x8xf32>
    %c2_140 = arith.constant 2 : index
    %c3_141 = arith.constant 3 : index
    %c0_142 = arith.constant 0 : index
    %c0_143 = arith.constant 0 : index
    %171 = vector.load %arg6[%c2_140, %c3_141, %c0_142, %c0_143] : memref<3x4x1x8xf32, #tpu.memory_space<vmem>>, vector<1x1x1x8xf32>
    %172 = vector.shape_cast %171 : vector<1x1x1x8xf32> to vector<1x8xf32>
    %173 = vector.broadcast %172 : vector<1x8xf32> to vector<16x8xf32>
    %174 = arith.addf %170, %173 : vector<16x8xf32>
    %cst_144 = arith.constant dense<0.000000e+00> : vector<16x16xf32>
    %175 = tpu.matmul %160, %167, %cst_144 {dimension_numbers = #tpu.dot_dimension_numbers<[1], [1], [0], [0], [0, 0, 1, 0], [], []>} : vector<16x8xf32>, vector<16x8xf32>, vector<16x16xf32> -> vector<16x16xf32>
    %176 = vector.broadcast %8 : vector<1x16xf32> to vector<16x16xf32>
    %177 = arith.addf %175, %176 : vector<16x16xf32>
    %cst_145 = arith.constant dense<0xFF800000> : vector<16xf32>
    %178 = vector.multi_reduction <maximumf>, %177, %cst_145 [1] : vector<16x16xf32> to vector<16xf32>
    %179 = vector.shape_cast %178 : vector<16xf32> to vector<16x1xf32>
    %180 = vector.broadcast %179 : vector<16x1xf32> to vector<16x16xf32>
    %181 = arith.subf %177, %180 : vector<16x16xf32>
    %182 = math.exp %181 : vector<16x16xf32>
    %cst_146 = arith.constant dense<0.000000e+00> : vector<16xf32>
    %183 = vector.multi_reduction <add>, %182, %cst_146 [1] : vector<16x16xf32> to vector<16xf32>
    %184 = vector.shape_cast %183 : vector<16xf32> to vector<16x1xf32>
    %185 = tpu.reciprocal %184 {approx = true} : vector<16x1xf32> -> vector<16x1xf32>
    %186 = vector.broadcast %185 : vector<16x1xf32> to vector<16x16xf32>
    %187 = arith.mulf %182, %186 : vector<16x16xf32>
    %cst_147 = arith.constant dense<0.000000e+00> : vector<16x8xf32>
    %188 = tpu.matmul %187, %174, %cst_147 {dimension_numbers = #tpu.dot_dimension_numbers<[1], [0], [0], [1], [0, 0, 1, 1], [], []>} : vector<16x16xf32>, vector<16x8xf32>, vector<16x8xf32> -> vector<16x8xf32>
    %189 = arith.truncf %188 : vector<16x8xf32> to vector<16x8xbf16>
    %c3_148 = arith.constant 3 : index
    %c0_149 = arith.constant 0 : index
    %c0_150 = arith.constant 0 : index
    %190 = vector.load %arg7[%c3_148, %c0_149, %c0_150] : memref<4x8x32xbf16, #tpu.memory_space<vmem>>, vector<1x8x32xbf16>
    %191 = vector.shape_cast %190 : vector<1x8x32xbf16> to vector<8x32xbf16>
    %cst_151 = arith.constant dense<0.000000e+00> : vector<16x32xf32>
    %192 = tpu.matmul %189, %191, %cst_151 {dimension_numbers = #tpu.dot_dimension_numbers<[1], [0], [0], [1], [0, 0, 1, 1], [], []>} : vector<16x8xbf16>, vector<8x32xbf16>, vector<16x32xf32> -> vector<16x32xf32>
    %193 = arith.addf %153, %192 : vector<16x32xf32>
    %c0_152 = arith.constant 0 : index
    %c0_153 = arith.constant 0 : index
    %194 = vector.load %arg8[%c0_152, %c0_153] : memref<1x32xf32, #tpu.memory_space<vmem>>, vector<1x32xf32>
    %195 = vector.broadcast %194 : vector<1x32xf32> to vector<16x32xf32>
    %196 = arith.addf %193, %195 : vector<16x32xf32>
    %197 = arith.addf %1, %196 : vector<16x32xf32>
    %c0_154 = arith.constant 0 : index
    %c0_155 = arith.constant 0 : index
    %198 = vector.load %arg9[%c0_154, %c0_155] : memref<1x32xf32, #tpu.memory_space<vmem>>, vector<1x32xf32>
    %c0_156 = arith.constant 0 : index
    %c0_157 = arith.constant 0 : index
    %199 = vector.load %arg10[%c0_156, %c0_157] : memref<1x32xf32, #tpu.memory_space<vmem>>, vector<1x32xf32>
    %cst_158 = arith.constant dense<0.000000e+00> : vector<16xf32>
    %200 = vector.multi_reduction <add>, %197, %cst_158 [1] : vector<16x32xf32> to vector<16xf32>
    %201 = vector.shape_cast %200 : vector<16xf32> to vector<16x1xf32>
    %cst_159 = arith.constant 3.200000e+01 : f32
    %202 = vector.broadcast %cst_159 : f32 to vector<16x1xf32>
    %203 = arith.divf %201, %202 : vector<16x1xf32>
    %204 = vector.broadcast %203 : vector<16x1xf32> to vector<16x32xf32>
    %205 = arith.subf %197, %204 : vector<16x32xf32>
    %206 = arith.mulf %205, %205 : vector<16x32xf32>
    %cst_160 = arith.constant dense<0.000000e+00> : vector<16xf32>
    %207 = vector.multi_reduction <add>, %206, %cst_160 [1] : vector<16x32xf32> to vector<16xf32>
    %208 = vector.shape_cast %207 : vector<16xf32> to vector<16x1xf32>
    %cst_161 = arith.constant 3.200000e+01 : f32
    %209 = vector.broadcast %cst_161 : f32 to vector<16x1xf32>
    %210 = arith.divf %208, %209 : vector<16x1xf32>
    %211 = vector.broadcast %203 : vector<16x1xf32> to vector<16x32xf32>
    %212 = arith.subf %197, %211 : vector<16x32xf32>
    %cst_162 = arith.constant 9.99999974E-6 : f32
    %213 = vector.broadcast %cst_162 : f32 to vector<16x1xf32>
    %214 = arith.addf %210, %213 : vector<16x1xf32>
    %215 = math.rsqrt %214 : vector<16x1xf32>
    %216 = vector.broadcast %215 : vector<16x1xf32> to vector<16x32xf32>
    %217 = arith.mulf %212, %216 : vector<16x32xf32>
    %218 = vector.broadcast %198 : vector<1x32xf32> to vector<16x32xf32>
    %219 = arith.mulf %217, %218 : vector<16x32xf32>
    %220 = vector.broadcast %199 : vector<1x32xf32> to vector<16x32xf32>
    %221 = arith.addf %219, %220 : vector<16x32xf32>
    %222 = arith.truncf %221 : vector<16x32xf32> to vector<16x32xbf16>
    %c0_163 = arith.constant 0 : index
    %c0_164 = arith.constant 0 : index
    %223 = vector.load %arg11[%c0_163, %c0_164] : memref<32x128xbf16, #tpu.memory_space<vmem>>, vector<32x128xbf16>
    %cst_165 = arith.constant dense<0.000000e+00> : vector<16x128xf32>
    %224 = tpu.matmul %222, %223, %cst_165 {dimension_numbers = #tpu.dot_dimension_numbers<[1], [0], [0], [1], [0, 0, 1, 1], [], []>} : vector<16x32xbf16>, vector<32x128xbf16>, vector<16x128xf32> -> vector<16x128xf32>
    %c0_166 = arith.constant 0 : index
    %c0_167 = arith.constant 0 : index
    %225 = vector.load %arg12[%c0_166, %c0_167] : memref<1x128xf32, #tpu.memory_space<vmem>>, vector<1x128xf32>
    %226 = vector.broadcast %225 : vector<1x128xf32> to vector<16x128xf32>
    %227 = arith.addf %224, %226 : vector<16x128xf32>
    %cst_168 = arith.constant 0.000000e+00 : f32
    %228 = vector.broadcast %cst_168 : f32 to vector<16x128xf32>
    %229 = arith.maximumf %227, %228 : vector<16x128xf32>
    %230 = arith.truncf %229 : vector<16x128xf32> to vector<16x128xbf16>
    %c0_169 = arith.constant 0 : index
    %c0_170 = arith.constant 0 : index
    %231 = vector.load %arg13[%c0_169, %c0_170] : memref<128x32xbf16, #tpu.memory_space<vmem>>, vector<128x32xbf16>
    %cst_171 = arith.constant dense<0.000000e+00> : vector<16x32xf32>
    %232 = tpu.matmul %230, %231, %cst_171 {dimension_numbers = #tpu.dot_dimension_numbers<[1], [0], [0], [1], [0, 0, 1, 1], [], []>} : vector<16x128xbf16>, vector<128x32xbf16>, vector<16x32xf32> -> vector<16x32xf32>
    %c0_172 = arith.constant 0 : index
    %c0_173 = arith.constant 0 : index
    %233 = vector.load %arg14[%c0_172, %c0_173] : memref<1x32xf32, #tpu.memory_space<vmem>>, vector<1x32xf32>
    %234 = vector.broadcast %233 : vector<1x32xf32> to vector<16x32xf32>
    %235 = arith.addf %232, %234 : vector<16x32xf32>
    %236 = arith.addf %197, %235 : vector<16x32xf32>
    %c0_174 = arith.constant 0 : index
    %c0_175 = arith.constant 0 : index
    %c0_176 = arith.constant 0 : index
    %237 = vector.load %arg15[%c0_174, %c0_175, %c0_176] : memref<1x16x32xf32, #tpu.memory_space<vmem>>, vector<1x16x32xf32>
    %238 = vector.shape_cast %237 : vector<1x16x32xf32> to vector<16x32xf32>
    %239 = vector.shape_cast %236 : vector<16x32xf32> to vector<1x16x32xf32>
    tpu.vector_store %arg15[%c0_174, %c0_175, %c0_176], %239 {strides = array<i32>} : memref<1x16x32xf32, #tpu.memory_space<vmem>>, vector<1x16x32xf32>,
    return
  }
  func.func @transform_0(%arg0: i32) -> (i32, i32, i32) {
    %c0_i32 = arith.constant 0 : i32
    %c0_i32_0 = arith.constant 0 : i32
    %c0_i32_1 = arith.constant 0 : i32
    return %arg0, %c0_i32, %c0_i32_0 : i32, i32, i32
  }
  func.func @transform_1(%arg0: i32) -> (i32, i32, i32) {
    %c0_i32 = arith.constant 0 : i32
    %c0_i32_0 = arith.constant 0 : i32
    %c0_i32_1 = arith.constant 0 : i32
    return %arg0, %c0_i32, %c0_i32_0 : i32, i32, i32
  }
  func.func @transform_2(%arg0: i32) -> (i32, i32) {
    %c0_i32 = arith.constant 0 : i32
    %c0_i32_0 = arith.constant 0 : i32
    %c0_i32_1 = arith.constant 0 : i32
    return %c0_i32, %c0_i32_0 : i32, i32
  }
  func.func @transform_3(%arg0: i32) -> (i32, i32) {
    %c0_i32 = arith.constant 0 : i32
    %c0_i32_0 = arith.constant 0 : i32
    %c0_i32_1 = arith.constant 0 : i32
    return %c0_i32, %c0_i32_0 : i32, i32
  }
  func.func @transform_4(%arg0: i32) -> (i32, i32, i32, i32) {
    %c0_i32 = arith.constant 0 : i32
    %c0_i32_0 = arith.constant 0 : i32
    %c0_i32_1 = arith.constant 0 : i32
    %c0_i32_2 = arith.constant 0 : i32
    %c0_i32_3 = arith.constant 0 : i32
    return %c0_i32, %c0_i32_0, %c0_i32_1, %c0_i32_2 : i32, i32, i32, i32
  }
  func.func @transform_5(%arg0: i32) -> (i32, i32, i32, i32) {
    %c0_i32 = arith.constant 0 : i32
    %c0_i32_0 = arith.constant 0 : i32
    %c0_i32_1 = arith.constant 0 : i32
    %c0_i32_2 = arith.constant 0 : i32
    %c0_i32_3 = arith.constant 0 : i32
    return %c0_i32, %c0_i32_0, %c0_i32_1, %c0_i32_2 : i32, i32, i32, i32
  }
  func.func @transform_6(%arg0: i32) -> (i32, i32, i32) {
    %c0_i32 = arith.constant 0 : i32
    %c0_i32_0 = arith.constant 0 : i32
    %c0_i32_1 = arith.constant 0 : i32
    %c0_i32_2 = arith.constant 0 : i32
    return %c0_i32, %c0_i32_0, %c0_i32_1 : i32, i32, i32
  }
  func.func @transform_7(%arg0: i32) -> (i32, i32) {
    %c0_i32 = arith.constant 0 : i32
    %c0_i32_0 = arith.constant 0 : i32
    %c0_i32_1 = arith.constant 0 : i32
    return %c0_i32, %c0_i32_0 : i32, i32
  }
  func.func @transform_8(%arg0: i32) -> (i32, i32) {
    %c0_i32 = arith.constant 0 : i32
    %c0_i32_0 = arith.constant 0 : i32
    %c0_i32_1 = arith.constant 0 : i32
    return %c0_i32, %c0_i32_0 : i32, i32
  }
  func.func @transform_9(%arg0: i32) -> (i32, i32) {
    %c0_i32 = arith.constant 0 : i32
    %c0_i32_0 = arith.constant 0 : i32
    %c0_i32_1 = arith.constant 0 : i32
    return %c0_i32, %c0_i32_0 : i32, i32
  }
  func.func @transform_10(%arg0: i32) -> (i32, i32) {
    %c0_i32 = arith.constant 0 : i32
    %c0_i32_0 = arith.constant 0 : i32
    %c0_i32_1 = arith.constant 0 : i32
    return %c0_i32, %c0_i32_0 : i32, i32
  }
  func.func @transform_11(%arg0: i32) -> (i32, i32) {
    %c0_i32 = arith.constant 0 : i32
    %c0_i32_0 = arith.constant 0 : i32
    %c0_i32_1 = arith.constant 0 : i32
    return %c0_i32, %c0_i32_0 : i32, i32
  }
  func.func @transform_12(%arg0: i32) -> (i32, i32) {
    %c0_i32 = arith.constant 0 : i32
    %c0_i32_0 = arith.constant 0 : i32
    %c0_i32_1 = arith.constant 0 : i32
    return %c0_i32, %c0_i32_0 : i32, i32
  }
  func.func @transform_13(%arg0: i32) -> (i32, i32) {
    %c0_i32 = arith.constant 0 : i32
    %c0_i32_0 = arith.constant 0 : i32
    %c0_i32_1 = arith.constant 0 : i32
    return %c0_i32, %c0_i32_0 : i32, i32
  }
  func.func @transform_14(%arg0: i32) -> (i32, i32, i32) {
    %c0_i32 = arith.constant 0 : i32
    %c0_i32_0 = arith.constant 0 : i32
    %c0_i32_1 = arith.constant 0 : i32
    return %arg0, %c0_i32, %c0_i32_0 : i32, i32, i32
  }
}

</mosaic_0001>

<llo_original>
// kernel: tcr_epitope_transformer.5
$region0: #{tcr_epitope_transformer.5}
  #allocation0 [shape = 'u32[]', space=smem, size = 0x4, offset = 0x4, fixed_abs, tag = 'smem constant byte address 0x4 - core index']
  #allocation1 [shape = 'u32[144,128]{1,0:T(1,128)}', space=vmem, size = 0x12000, scoped, tag = 'internal scratch']
  %s0 = inlined_call_operand.vmem [shape: f32[2,8,1024], index: 0, kind: input, shape index: {}]
  %s1 = inlined_call_operand.vmem [shape: f32[2,8,1024], index: 1, kind: input, shape index: {}]
  %s2 = inlined_call_operand.vmem [shape: bf16[1024,32], index: 2, kind: input, shape index: {}]
  %s3 = inlined_call_operand.vmem [shape: f32[1,32], index: 3, kind: input, shape index: {}]
  %s4 = inlined_call_operand.vmem [shape: f32[8,32], index: 4, kind: input, shape index: {}]
  %s5 = inlined_call_operand.vmem [shape: bf16[1024,32], index: 5, kind: input, shape index: {}]
  %s6 = inlined_call_operand.vmem [shape: f32[1,32], index: 6, kind: input, shape index: {}]
  %s7 = inlined_call_operand.vmem [shape: f32[8,32], index: 7, kind: input, shape index: {}]
  %s8 = inlined_call_operand.vmem [shape: f32[2,16,32], index: 8, kind: output, shape index: {}]
  %s9 = sld [smem:[#allocation0]]
  $region65: #{tcr_epitope_transformer.5} parent=0
    _
  %s11 = ssub.s32 1, %s9
  %s12 = scalar_select 0, %s11, %s9
  loop: start=0, step=1, limit=4
  $region2: #{tcr_epitope_transformer.5} parent=0 // loop_pre_header
    _
  $region3: #{tcr_epitope_transformer.5} parent=0 // loop_header
    %s14 = sphi 0, %s18
    %p15 = scmp.ge.s32.totalorder %s14, 4
    %s24 = sphi 0, %s26
    %s27 = sphi 0, %s24
    %s28 = sphi 0, %s27
    %s44 = sphi 0, %s28
    %s50 = sphi 0, %s52
    %s53 = sphi 0, %s50
    %s54 = sphi 0, %s53
    %s70 = sphi 0, %s54
    %s74 = sphi 0, %s74
    %s76 = sphi 0, %s74
    %s77 = sphi 0, %s76
    %s91 = sphi 0, %s77
    %s95 = sphi 0, %s95
    %s97 = sphi 0, %s95
    %s98 = sphi 0, %s97
    %s112 = sphi 0, %s98
    %s116 = sphi 0, %s116
    %s118 = sphi 0, %s116
    %s119 = sphi 0, %s118
    %s133 = sphi 0, %s119
    %s137 = sphi 0, %s137
    %s139 = sphi 0, %s137
    %s140 = sphi 0, %s139
    %s154 = sphi 0, %s140
    %s158 = sphi 0, %s158
    %s160 = sphi 0, %s158
    %s161 = sphi 0, %s160
    %s175 = sphi 0, %s161
    %s179 = sphi 0, %s179
    %s181 = sphi 0, %s179
    %s182 = sphi 0, %s181
    %s196 = sphi 0, %s182
    %s202 = sphi 0, %s204
    %s205 = sphi 0, %s202
    %s206 = sphi 0, %s205
    %s222 = sphi 0, %s206
  $region4: #{tcr_epitope_transformer.5} parent=0 // loop_header_branch
    %17 = sbr.rel (%p15) target = $region8
  $region5: #{tcr_epitope_transformer.5} parent=0 // loop_body
    %s19 = ssub.s32 %s14, 1
    %s20 = ssub.s32 %s14, 2
    %s21 = sadd.s32 %s14, 1
    %s22 = ssub.s32 %s14, %s21
    %p23 = scmp.eq.s32.totalorder %s22, 0
    %s25 = sadd.s32 %s24, 1
    %s26 = scalar_select %p23, %s24, %s25
    %p29 = pneg %p23
    %p30 = scmp.eq.s32.totalorder %s14, 1
    %p31 = por %p29, %p30
    %p32 = scmp.ne.s32.totalorder %s24, %s27
    %p33 = scmp.eq.s32.totalorder %s14, 0
    %p34 = por %p32, %p33
    %p35 = scmp.ne.s32.totalorder %s24, %s27
    %p36 = scmp.eq.s32.totalorder %s19, 1
    %p37 = por %p35, %p36
    %p38 = scmp.ne.s32.totalorder %s27, %s28
    %p39 = scmp.eq.s32.totalorder %s19, 0
    %p40 = por %p38, %p39
    %p41 = scmp.ne.s32.totalorder %s27, %s28
    %p42 = scmp.eq.s32.totalorder %s20, 1
    %p43 = por %p41, %p42
    %p45 = scmp.ne.s32.totalorder %s28, %s44
    %p46 = scmp.eq.s32.totalorder %s20, 0
    %p47 = por %p45, %p46
    %s48 = ssub.s32 %s14, %s21
    %p49 = scmp.eq.s32.totalorder %s48, 0
    %s51 = sadd.s32 %s50, 1
    %s52 = scalar_select %p49, %s50, %s51
    %p55 = pneg %p49
    %p56 = scmp.eq.s32.totalorder %s14, 1
    %p57 = por %p55, %p56
    %p58 = scmp.ne.s32.totalorder %s50, %s53
    %p59 = scmp.eq.s32.totalorder %s14, 0
    %p60 = por %p58, %p59
    %p61 = scmp.ne.s32.totalorder %s50, %s53
    %p62 = scmp.eq.s32.totalorder %s19, 1
    %p63 = por %p61, %p62
    %p64 = scmp.ne.s32.totalorder %s53, %s54
    %p65 = scmp.eq.s32.totalorder %s19, 0
    %p66 = por %p64, %p65
    %p67 = scmp.ne.s32.totalorder %s53, %s54
    %p68 = scmp.eq.s32.totalorder %s20, 1
    %p69 = por %p67, %p68
    %p71 = scmp.ne.s32.totalorder %s54, %s70
    %p72 = scmp.eq.s32.totalorder %s20, 0
    %p73 = por %p71, %p72
    %s75 = sadd.s32 %s74, 1
    %p78 = scmp.eq.s32.totalorder %s14, 1
    %p79 = scmp.ne.s32.totalorder %s74, %s76
    %p80 = scmp.eq.s32.totalorder %s14, 0
    %p81 = por %p79, %p80
    %p82 = scmp.ne.s32.totalorder %s74, %s76
    %p83 = scmp.eq.s32.totalorder %s19, 1
    %p84 = por %p82, %p83
    %p85 = scmp.ne.s32.totalorder %s76, %s77
    %p86 = scmp.eq.s32.totalorder %s19, 0
    %p87 = por %p85, %p86
    %p88 = scmp.ne.s32.totalorder %s76, %s77
    %p89 = scmp.eq.s32.totalorder %s20, 1
    %p90 = por %p88, %p89
    %p92 = scmp.ne.s32.totalorder %s77, %s91
    %p93 = scmp.eq.s32.totalorder %s20, 0
    %p94 = por %p92, %p93
    %s96 = sadd.s32 %s95, 1
    %p99 = scmp.eq.s32.totalorder %s14, 1
    %p100 = scmp.ne.s32.totalorder %s95, %s97
    %p101 = scmp.eq.s32.totalorder %s14, 0
    %p102 = por %p100, %p101
    %p103 = scmp.ne.s32.totalorder %s95, %s97
    %p104 = scmp.eq.s32.totalorder %s19, 1
    %p105 = por %p103, %p104
    %p106 = scmp.ne.s32.totalorder %s97, %s98
    %p107 = scmp.eq.s32.totalorder %s19, 0
    %p108 = por %p106, %p107
    %p109 = scmp.ne.s32.totalorder %s97, %s98
    %p110 = scmp.eq.s32.totalorder %s20, 1
    %p111 = por %p109, %p110
    %p113 = scmp.ne.s32.totalorder %s98, %s112
    %p114 = scmp.eq.s32.totalorder %s20, 0
    %p115 = por %p113, %p114
    %s117 = sadd.s32 %s116, 1
    %p120 = scmp.eq.s32.totalorder %s14, 1
    %p121 = scmp.ne.s32.totalorder %s116, %s118
    %p122 = scmp.eq.s32.totalorder %s14, 0
    %p123 = por %p121, %p122
    %p124 = scmp.ne.s32.totalorder %s116, %s118
    %p125 = scmp.eq.s32.totalorder %s19, 1
    %p126 = por %p124, %p125
    %p127 = scmp.ne.s32.totalorder %s118, %s119
    %p128 = scmp.eq.s32.totalorder %s19, 0
    %p129 = por %p127, %p128
    %p130 = scmp.ne.s32.totalorder %s118, %s119
    %p131 = scmp.eq.s32.totalorder %s20, 1
    %p132 = por %p130, %p131
    %p134 = scmp.ne.s32.totalorder %s119, %s133
    %p135 = scmp.eq.s32.totalorder %s20, 0
    %p136 = por %p134, %p135
    %s138 = sadd.s32 %s137, 1
    %p141 = scmp.eq.s32.totalorder %s14, 1
    %p142 = scmp.ne.s32.totalorder %s137, %s139
    %p143 = scmp.eq.s32.totalorder %s14, 0
    %p144 = por %p142, %p143
    %p145 = scmp.ne.s32.totalorder %s137, %s139
    %p146 = scmp.eq.s32.totalorder %s19, 1
    %p147 = por %p145, %p146
    %p148 = scmp.ne.s32.totalorder %s139, %s140
    %p149 = scmp.eq.s32.totalorder %s19, 0
    %p150 = por %p148, %p149
    %p151 = scmp.ne.s32.totalorder %s139, %s140
    %p152 = scmp.eq.s32.totalorder %s20, 1
    %p153 = por %p151, %p152
    %p155 = scmp.ne.s32.totalorder %s140, %s154
    %p156 = scmp.eq.s32.totalorder %s20, 0
    %p157 = por %p155, %p156
    %s159 = sadd.s32 %s158, 1
    %p162 = scmp.eq.s32.totalorder %s14, 1
    %p163 = scmp.ne.s32.totalorder %s158, %s160
    %p164 = scmp.eq.s32.totalorder %s14, 0
    %p165 = por %p163, %p164
    %p166 = scmp.ne.s32.totalorder %s158, %s160
    %p167 = scmp.eq.s32.totalorder %s19, 1
    %p168 = por %p166, %p167
    %p169 = scmp.ne.s32.totalorder %s160, %s161
    %p170 = scmp.eq.s32.totalorder %s19, 0
    %p171 = por %p169, %p170
    %p172 = scmp.ne.s32.totalorder %s160, %s161
    %p173 = scmp.eq.s32.totalorder %s20, 1
    %p174 = por %p172, %p173
    %p176 = scmp.ne.s32.totalorder %s161, %s175
    %p177 = scmp.eq.s32.totalorder %s20, 0
    %p178 = por %p176, %p177
    %s180 = sadd.s32 %s179, 1
    %p183 = scmp.eq.s32.totalorder %s14, 1
    %p184 = scmp.ne.s32.totalorder %s179, %s181
    %p185 = scmp.eq.s32.totalorder %s14, 0
    %p186 = por %p184, %p185
    %p187 = scmp.ne.s32.totalorder %s179, %s181
    %p188 = scmp.eq.s32.totalorder %s19, 1
    %p189 = por %p187, %p188
    %p190 = scmp.ne.s32.totalorder %s181, %s182
    %p191 = scmp.eq.s32.totalorder %s19, 0
    %p192 = por %p190, %p191
    %p193 = scmp.ne.s32.totalorder %s181, %s182
    %p194 = scmp.eq.s32.totalorder %s20, 1
    %p195 = por %p193, %p194
    %p197 = scmp.ne.s32.totalorder %s182, %s196
    %p198 = scmp.eq.s32.totalorder %s20, 0
    %p199 = por %p197, %p198
    %s200 = ssub.s32 %s14, %s21
    %p201 = scmp.eq.s32.totalorder %s200, 0
    %s203 = sadd.s32 %s202, 1
    %s204 = scalar_select %p201, %s202, %s203
    %p207 = pneg %p201
    %p208 = scmp.eq.s32.totalorder %s14, 1
    %p209 = por %p207, %p208
    %p210 = scmp.ne.s32.totalorder %s202, %s205
    %p211 = scmp.eq.s32.totalorder %s14, 0
    %p212 = por %p210, %p211
    %p213 = scmp.ne.s32.totalorder %s202, %s205
    %p214 = scmp.eq.s32.totalorder %s19, 1
    %p215 = por %p213, %p214
    %p216 = scmp.ne.s32.totalorder %s205, %s206
    %p217 = scmp.eq.s32.totalorder %s19, 0
    %p218 = por %p216, %p217
    %p219 = scmp.ne.s32.totalorder %s205, %s206
    %p220 = scmp.eq.s32.totalorder %s20, 1
    %p221 = por %p219, %p220
    %p223 = scmp.ne.s32.totalorder %s206, %s222
    %p224 = scmp.eq.s32.totalorder %s20, 0
    %p225 = por %p223, %p224
    %p226 = scmp.le.s32.totalorder 1, %s14
    %p227 = scmp.lt.s32.totalorder %s14, 3
    %p228 = pnand %p226, %p227
    %p229 = pneg %p228
    // Predicated region
    $region9: #{tcr_epitope_transformer.5} parent=5 // pred_check
      _
    $region10: #{tcr_epitope_transformer.5} parent=5 // pred_check_branch
      %231 = sbr.rel (%p228) target = $region12
    $region11: #{tcr_epitope_transformer.5} parent=5 // pred_region
      %s232 = ssub.s32 %s14, 1
      // Predicated region
      $region13: #{tcr_epitope_transformer.5} parent=11 // pred_check
        %p233 = pneg %p87
      $region14: #{tcr_epitope_transformer.5} parent=11 // pred_check_branch
        %235 = sbr.rel (%p233) target = $region16
      $region15: #{tcr_epitope_transformer.5} parent=11 // pred_region
        _
      $region16: #{tcr_epitope_transformer.5} parent=11 // pred_fallthru
        _
      // Predicated region
      $region17: #{tcr_epitope_transformer.5} parent=11 // pred_check
        %p236 = pneg %p108
      $region18: #{tcr_epitope_transformer.5} parent=11 // pred_check_branch
        %238 = sbr.rel (%p236) target = $region20
      $region19: #{tcr_epitope_transformer.5} parent=11 // pred_region
        _
      $region20: #{tcr_epitope_transformer.5} parent=11 // pred_fallthru
        _
      // Predicated region
      $region21: #{tcr_epitope_transformer.5} parent=11 // pred_check
        %p239 = pneg %p129
      $region22: #{tcr_epitope_transformer.5} parent=11 // pred_check_branch
        %241 = sbr.rel (%p239) target = $region24
      $region23: #{tcr_epitope_transformer.5} parent=11 // pred_region
        _
      $region24: #{tcr_epitope_transformer.5} parent=11 // pred_fallthru
        _
      // Predicated region
      $region25: #{tcr_epitope_transformer.5} parent=11 // pred_check
        %p242 = pneg %p150
      $region26: #{tcr_epitope_transformer.5} parent=11 // pred_check_branch
        %244 = sbr.rel (%p242) target = $region28
      $region27: #{tcr_epitope_transformer.5} parent=11 // pred_region
        _
      $region28: #{tcr_epitope_transformer.5} parent=11 // pred_fallthru
        _
      // Predicated region
      $region29: #{tcr_epitope_transformer.5} parent=11 // pred_check
        %p245 = pneg %p171
      $region30: #{tcr_epitope_transformer.5} parent=11 // pred_check_branch
        %247 = sbr.rel (%p245) target = $region32
      $region31: #{tcr_epitope_transformer.5} parent=11 // pred_region
        _
      $region32: #{tcr_epitope_transformer.5} parent=11 // pred_fallthru
        _
      // Predicated region
      $region33: #{tcr_epitope_transformer.5} parent=11 // pred_check
        %p248 = pneg %p192
      $region34: #{tcr_epitope_transformer.5} parent=11 // pred_check_branch
        %250 = sbr.rel (%p248) target = $region36
      $region35: #{tcr_epitope_transformer.5} parent=11 // pred_region
        _
      $region36: #{tcr_epitope_transformer.5} parent=11 // pred_fallthru
        _
    $region12: #{tcr_epitope_transformer.5} parent=5 // pred_fallthru
      _
    %p251 = scmp.lt.s32.totalorder %s14, 2
    // Predicated region
    $region37: #{tcr_epitope_transformer.5} parent=5 // pred_check
      %p252 = pneg %p251
    $region38: #{tcr_epitope_transformer.5} parent=5 // pred_check_branch
      %254 = sbr.rel (%p252) target = $region40
    $region39: #{tcr_epitope_transformer.5} parent=5 // pred_region
      // Predicated region
      $region41: #{tcr_epitope_transformer.5} parent=39 // pred_check
        %p255 = pneg %p34
      $region42: #{tcr_epitope_transformer.5} parent=39 // pred_check_branch
        %257 = sbr.rel (%p255) target = $region44
      $region43: #{tcr_epitope_transformer.5} parent=39 // pred_region
        %p258 = scmp.lt.s32.totalorder %s14, 1
        %s259 = scalar_select %p258, %s14, 1
        %s260 = smul.addr %s259, 8
        %s261 = smul.addr %s260, 8
        %s262 = scalar_lea.vmem %s0, %s261
      $region44: #{tcr_epitope_transformer.5} parent=39 // pred_fallthru
        _
      // Predicated region
      $region45: #{tcr_epitope_transformer.5} parent=39 // pred_check
        %p263 = pneg %p60
      $region46: #{tcr_epitope_transformer.5} parent=39 // pred_check_branch
        %265 = sbr.rel (%p263) target = $region48
      $region47: #{tcr_epitope_transformer.5} parent=39 // pred_region
        %p266 = scmp.lt.s32.totalorder %s14, 1
        %s267 = scalar_select %p266, %s14, 1
        %s268 = smul.addr %s267, 8
        %s269 = smul.addr %s268, 8
        %s270 = scalar_lea.vmem %s1, %s269
      $region48: #{tcr_epitope_transformer.5} parent=39 // pred_fallthru
        _
    $region40: #{tcr_epitope_transformer.5} parent=5 // pred_fallthru
      _
    %p271 = scmp.le.s32.totalorder 1, %s14
    %p272 = scmp.lt.s32.totalorder %s14, 3
    %p273 = pnand %p271, %p272
    %p274 = pneg %p273
    // Predicated region
    $region49: #{tcr_epitope_transformer.5} parent=5 // pred_check
      _
    $region50: #{tcr_epitope_transformer.5} parent=5 // pred_check_branch
      %276 = sbr.rel (%p273) target = $region52
    $region51: #{tcr_epitope_transformer.5} parent=5 // pred_region
      %s277 = ssub.s32 %s14, 1
      %p278 = scmp.lt.s32.totalorder %s19, 1
      %s279 = scalar_select %p278, %s19, 1
      %s280 = smul.addr %s279, 8
      %s281 = smul.addr %s280, 8
      %s282 = scalar_lea.vmem %s0, %s281
      %p283 = pneg %p40
      %p284 = pneg %p37
      %p285 = scmp.lt.s32.totalorder %s19, 1
      %s286 = scalar_select %p285, %s19, 1
      %s287 = smul.addr %s286, 8
      %s288 = smul.addr %s287, 8
      %s289 = scalar_lea.vmem %s1, %s288
      %p290 = pneg %p66
      %p291 = pneg %p63
      %p292 = pneg %p87
      %p293 = pneg %p84
      %p294 = pneg %p108
      %p295 = pneg %p105
      %p296 = pneg %p129
      %p297 = pneg %p126
      %p298 = pneg %p150
      %p299 = pneg %p147
      %p300 = pneg %p171
      %p301 = pneg %p168
      %p302 = pneg %p192
      %p303 = pneg %p189
      %p304 = pneg %p218
      %p305 = pneg %p215
      %p306 = scmp.lt.s32.totalorder %s19, 1
      %s307 = scalar_select %p306, %s19, 1
      %s308 = smul.addr %s307, 2
      %s309 = smul.addr %s308, 8
      %s310 = scalar_lea.vmem %s8, %s309
      %p311 = scmp.lt.s32.totalorder %s19, 1
      %s312 = scalar_select %p311, %s19, 1
      %s313 = smul.addr %s312, 8
      %s314 = smul.addr %s313, 8
      %s315 = scalar_lea.vmem %s0, %s314
      %p316 = scmp.lt.s32.totalorder %s19, 1
      %s317 = scalar_select %p316, %s19, 1
      %s318 = smul.addr %s317, 8
      %s319 = smul.addr %s318, 8
      %s320 = scalar_lea.vmem %s1, %s319
      %p321 = scmp.lt.s32.totalorder %s19, 1
      %s322 = scalar_select %p321, %s19, 1
      %s323 = smul.addr %s322, 2
      %s324 = smul.addr %s323, 8
      %s325 = scalar_lea.vmem %s8, %s324
      %v327 = vld [vmem:[%s315] sm:$0xff]
      %v328 = vld [vmem:[%s315 + $0x8] sm:$0xff]
      %v329 = vld [vmem:[%s315 + $0x10] sm:$0xff]
      %v330 = vld [vmem:[%s315 + $0x18] sm:$0xff]
      %v331 = vld [vmem:[%s315 + $0x20] sm:$0xff]
      %v332 = vld [vmem:[%s315 + $0x28] sm:$0xff]
      %v333 = vld [vmem:[%s315 + $0x30] sm:$0xff]
      %v334 = vld [vmem:[%s315 + $0x38] sm:$0xff]
      %v335 = vpack.c.bf16 %v327, %v327
      %v336 = vpack.c.bf16 %v328, %v328
      %v337 = vpack.c.bf16 %v329, %v329
      %v338 = vpack.c.bf16 %v330, %v330
      %v339 = vpack.c.bf16 %v331, %v331
      %v340 = vpack.c.bf16 %v332, %v332
      %v341 = vpack.c.bf16 %v333, %v333
      %v342 = vpack.c.bf16 %v334, %v334
      %v343 = vld [vmem:[%s2] sm:$0xf]
      %v344 = vld [vmem:[%s2 + $0x4] sm:$0xf]
      %v345 = vld [vmem:[%s2 + $0x8] sm:$0xf]
      %v346 = vld [vmem:[%s2 + $0xc] sm:$0xf]
      %v347 = vld [vmem:[%s2 + $0x10] sm:$0xf]
      %v348 = vld [vmem:[%s2 + $0x14] sm:$0xf]
      %v349 = vld [vmem:[%s2 + $0x18] sm:$0xf]
      %v350 = vld [vmem:[%s2 + $0x1c] sm:$0xf]
      %v351 = vld [vmem:[%s2 + $0x20] sm:$0xf]
      %v352 = vld [vmem:[%s2 + $0x24] sm:$0xf]
      %v353 = vld [vmem:[%s2 + $0x28] sm:$0xf]
      %v354 = vld [vmem:[%s2 + $0x2c] sm:$0xf]
      %v355 = vld [vmem:[%s2 + $0x30] sm:$0xf]
      %v356 = vld [vmem:[%s2 + $0x34] sm:$0xf]
      %v357 = vld [vmem:[%s2 + $0x38] sm:$0xf]
      %v358 = vld [vmem:[%s2 + $0x3c] sm:$0xf]
      %v359 = vld [vmem:[%s2 + $0x40] sm:$0xf]
      %v360 = vld [vmem:[%s2 + $0x44] sm:$0xf]
      %v361 = vld [vmem:[%s2 + $0x48] sm:$0xf]
      %v362 = vld [vmem:[%s2 + $0x4c] sm:$0xf]
      %v363 = vld [vmem:[%s2 + $0x50] sm:$0xf]
      %v364 = vld [vmem:[%s2 + $0x54] sm:$0xf]
      %v365 = vld [vmem:[%s2 + $0x58] sm:$0xf]
      %v366 = vld [vmem:[%s2 + $0x5c] sm:$0xf]
      %v367 = vld [vmem:[%s2 + $0x60] sm:$0xf]
      %v368 = vld [vmem:[%s2 + $0x64] sm:$0xf]
      %v369 = vld [vmem:[%s2 + $0x68] sm:$0xf]
      %v370 = vld [vmem:[%s2 + $0x6c] sm:$0xf]
      %v371 = vld [vmem:[%s2 + $0x70] sm:$0xf]
      %v372 = vld [vmem:[%s2 + $0x74] sm:$0xf]
      %v373 = vld [vmem:[%s2 + $0x78] sm:$0xf]
      %v374 = vld [vmem:[%s2 + $0x7c] sm:$0xf]
      %v375 = vld [vmem:[%s2 + $0x80] sm:$0xf]
      %v376 = vld [vmem:[%s2 + $0x84] sm:$0xf]
      %v377 = vld [vmem:[%s2 + $0x88] sm:$0xf]
      %v378 = vld [vmem:[%s2 + $0x8c] sm:$0xf]
      %v379 = vld [vmem:[%s2 + $0x90] sm:$0xf]
      %v380 = vld [vmem:[%s2 + $0x94] sm:$0xf]
      %v381 = vld [vmem:[%s2 + $0x98] sm:$0xf]
      %v382 = vld [vmem:[%s2 + $0x9c] sm:$0xf]
      %v383 = vld [vmem:[%s2 + $0xa0] sm:$0xf]
      %v384 = vld [vmem:[%s2 + $0xa4] sm:$0xf]
      %v385 = vld [vmem:[%s2 + $0xa8] sm:$0xf]
      %v386 = vld [vmem:[%s2 + $0xac] sm:$0xf]
      %v387 = vld [vmem:[%s2 + $0xb0] sm:$0xf]
      %v388 = vld [vmem:[%s2 + $0xb4] sm:$0xf]
      %v389 = vld [vmem:[%s2 + $0xb8] sm:$0xf]
      %v390 = vld [vmem:[%s2 + $0xbc] sm:$0xf]
      %v391 = vld [vmem:[%s2 + $0xc0] sm:$0xf]
      %v392 = vld [vmem:[%s2 + $0xc4] sm:$0xf]
      %v393 = vld [vmem:[%s2 + $0xc8] sm:$0xf]
      %v394 = vld [vmem:[%s2 + $0xcc] sm:$0xf]
      %v395 = vld [vmem:[%s2 + $0xd0] sm:$0xf]
      %v396 = vld [vmem:[%s2 + $0xd4] sm:$0xf]
      %v397 = vld [vmem:[%s2 + $0xd8] sm:$0xf]
      %v398 = vld [vmem:[%s2 + $0xdc] sm:$0xf]
      %v399 = vld [vmem:[%s2 + $0xe0] sm:$0xf]
      %v400 = vld [vmem:[%s2 + $0xe4] sm:$0xf]
      %v401 = vld [vmem:[%s2 + $0xe8] sm:$0xf]
      %v402 = vld [vmem:[%s2 + $0xec] sm:$0xf]
      %v403 = vld [vmem:[%s2 + $0xf0] sm:$0xf]
      %v404 = vld [vmem:[%s2 + $0xf4] sm:$0xf]
      %v405 = vld [vmem:[%s2 + $0xf8] sm:$0xf]
      %v406 = vld [vmem:[%s2 + $0xfc] sm:$0xf]
      %v407 = vld [vmem:[%s2 + $0x100] sm:$0xf]
      %v408 = vld [vmem:[%s2 + $0x104] sm:$0xf]
      %v409 = vld [vmem:[%s2 + $0x108] sm:$0xf]
      %v410 = vld [vmem:[%s2 + $0x10c] sm:$0xf]
      %v411 = vld [vmem:[%s2 + $0x110] sm:$0xf]
      %v412 = vld [vmem:[%s2 + $0x114] sm:$0xf]
      %v413 = vld [vmem:[%s2 + $0x118] sm:$0xf]
      %v414 = vld [vmem:[%s2 + $0x11c] sm:$0xf]
      %v415 = vld [vmem:[%s2 + $0x120] sm:$0xf]
      %v416 = vld [vmem:[%s2 + $0x124] sm:$0xf]
      %v417 = vld [vmem:[%s2 + $0x128] sm:$0xf]
      %v418 = vld [vmem:[%s2 + $0x12c] sm:$0xf]
      %v419 = vld [vmem:[%s2 + $0x130] sm:$0xf]
      %v420 = vld [vmem:[%s2 + $0x134] sm:$0xf]
      %v421 = vld [vmem:[%s2 + $0x138] sm:$0xf]
      %v422 = vld [vmem:[%s2 + $0x13c] sm:$0xf]
      %v423 = vld [vmem:[%s2 + $0x140] sm:$0xf]
      %v424 = vld [vmem:[%s2 + $0x144] sm:$0xf]
      %v425 = vld [vmem:[%s2 + $0x148] sm:$0xf]
      %v426 = vld [vmem:[%s2 + $0x14c] sm:$0xf]
      %v427 = vld [vmem:[%s2 + $0x150] sm:$0xf]
      %v428 = vld [vmem:[%s2 + $0x154] sm:$0xf]
      %v429 = vld [vmem:[%s2 + $0x158] sm:$0xf]
      %v430 = vld [vmem:[%s2 + $0x15c] sm:$0xf]
      %v431 = vld [vmem:[%s2 + $0x160] sm:$0xf]
      %v432 = vld [vmem:[%s2 + $0x164] sm:$0xf]
      %v433 = vld [vmem:[%s2 + $0x168] sm:$0xf]
      %v434 = vld [vmem:[%s2 + $0x16c] sm:$0xf]
      %v435 = vld [vmem:[%s2 + $0x170] sm:$0xf]
      %v436 = vld [vmem:[%s2 + $0x174] sm:$0xf]
      %v437 = vld [vmem:[%s2 + $0x178] sm:$0xf]
      %v438 = vld [vmem:[%s2 + $0x17c] sm:$0xf]
      %v439 = vld [vmem:[%s2 + $0x180] sm:$0xf]
      %v440 = vld [vmem:[%s2 + $0x184] sm:$0xf]
      %v441 = vld [vmem:[%s2 + $0x188] sm:$0xf]
      %v442 = vld [vmem:[%s2 + $0x18c] sm:$0xf]
      %v443 = vld [vmem:[%s2 + $0x190] sm:$0xf]
      %v444 = vld [vmem:[%s2 + $0x194] sm:$0xf]
      %v445 = vld [vmem:[%s2 + $0x198] sm:$0xf]
      %v446 = vld [vmem:[%s2 + $0x19c] sm:$0xf]
      %v447 = vld [vmem:[%s2 + $0x1a0] sm:$0xf]
      %v448 = vld [vmem:[%s2 + $0x1a4] sm:$0xf]
      %v449 = vld [vmem:[%s2 + $0x1a8] sm:$0xf]
      %v450 = vld [vmem:[%s2 + $0x1ac] sm:$0xf]
      %v451 = vld [vmem:[%s2 + $0x1b0] sm:$0xf]
      %v452 = vld [vmem:[%s2 + $0x1b4] sm:$0xf]
      %v453 = vld [vmem:[%s2 + $0x1b8] sm:$0xf]
      %v454 = vld [vmem:[%s2 + $0x1bc] sm:$0xf]
      %v455 = vld [vmem:[%s2 + $0x1c0] sm:$0xf]
      %v456 = vld [vmem:[%s2 + $0x1c4] sm:$0xf]
      %v457 = vld [vmem:[%s2 + $0x1c8] sm:$0xf]
      %v458 = vld [vmem:[%s2 + $0x1cc] sm:$0xf]
      %v459 = vld [vmem:[%s2 + $0x1d0] sm:$0xf]
      %v460 = vld [vmem:[%s2 + $0x1d4] sm:$0xf]
      %v461 = vld [vmem:[%s2 + $0x1d8] sm:$0xf]
      %v462 = vld [vmem:[%s2 + $0x1dc] sm:$0xf]
      %v463 = vld [vmem:[%s2 + $0x1e0] sm:$0xf]
      %v464 = vld [vmem:[%s2 + $0x1e4] sm:$0xf]
      %v465 = vld [vmem:[%s2 + $0x1e8] sm:$0xf]
      %v466 = vld [vmem:[%s2 + $0x1ec] sm:$0xf]
      %v467 = vld [vmem:[%s2 + $0x1f0] sm:$0xf]
      %v468 = vld [vmem:[%s2 + $0x1f4] sm:$0xf]
      %v469 = vld [vmem:[%s2 + $0x1f8] sm:$0xf]
      %v470 = vld [vmem:[%s2 + $0x1fc] sm:$0xf]
      %v471 = vld [vmem:[%s3] sm:$0x1]
      %v473 = vlaneseq
      %v474 = vshrl.u32 %v473, 7
      %v475 = vsub.s32 0, %v474
      %v476 = vrot.slane %v471, %v475
      %v606 = vunpack.c.l.b16 %v343
      %v607 = vunpack.c.l.b16 %v344
      %v608 = vunpack.c.l.b16 %v345
      %v609 = vunpack.c.l.b16 %v346
      %v610 = vunpack.c.l.b16 %v347
      %v611 = vunpack.c.l.b16 %v348
      %v612 = vunpack.c.l.b16 %v349
      %v613 = vunpack.c.l.b16 %v350
      %v614 = vunpack.c.l.b16 %v351
      %v615 = vunpack.c.l.b16 %v352
      %v616 = vunpack.c.l.b16 %v353
      %v617 = vunpack.c.l.b16 %v354
      %v618 = vunpack.c.l.b16 %v355
      %v619 = vunpack.c.l.b16 %v356
      %v620 = vunpack.c.l.b16 %v357
      %v621 = vunpack.c.l.b16 %v358
      %v622 = vunpack.c.l.b16 %v359
      %v623 = vunpack.c.l.b16 %v360
      %v624 = vunpack.c.l.b16 %v361
      %v625 = vunpack.c.l.b16 %v362
      %v626 = vunpack.c.l.b16 %v363
      %v627 = vunpack.c.l.b16 %v364
      %v628 = vunpack.c.l.b16 %v365
      %v629 = vunpack.c.l.b16 %v366
      %v630 = vunpack.c.l.b16 %v367
      %v631 = vunpack.c.l.b16 %v368
      %v632 = vunpack.c.l.b16 %v369
      %v633 = vunpack.c.l.b16 %v370
      %v634 = vunpack.c.l.b16 %v371
      %v635 = vunpack.c.l.b16 %v372
      %v636 = vunpack.c.l.b16 %v373
      %v637 = vunpack.c.l.b16 %v374
      %v638 = vunpack.c.l.b16 %v375
      %v639 = vunpack.c.l.b16 %v376
      %v640 = vunpack.c.l.b16 %v377
      %v641 = vunpack.c.l.b16 %v378
      %v642 = vunpack.c.l.b16 %v379
      %v643 = vunpack.c.l.b16 %v380
      %v644 = vunpack.c.l.b16 %v381
      %v645 = vunpack.c.l.b16 %v382
      %v646 = vunpack.c.l.b16 %v383
      %v647 = vunpack.c.l.b16 %v384
      %v648 = vunpack.c.l.b16 %v385
      %v649 = vunpack.c.l.b16 %v386
      %v650 = vunpack.c.l.b16 %v387
      %v651 = vunpack.c.l.b16 %v388
      %v652 = vunpack.c.l.b16 %v389
      %v653 = vunpack.c.l.b16 %v390
      %v654 = vunpack.c.l.b16 %v391
      %v655 = vunpack.c.l.b16 %v392
      %v656 = vunpack.c.l.b16 %v393
      %v657 = vunpack.c.l.b16 %v394
      %v658 = vunpack.c.l.b16 %v395
      %v659 = vunpack.c.l.b16 %v396
      %v660 = vunpack.c.l.b16 %v397
      %v661 = vunpack.c.l.b16 %v398
      %v662 = vunpack.c.l.b16 %v399
      %v663 = vunpack.c.l.b16 %v400
      %v664 = vunpack.c.l.b16 %v401
      %v665 = vunpack.c.l.b16 %v402
      %v666 = vunpack.c.l.b16 %v403
      %v667 = vunpack.c.l.b16 %v404
      %v668 = vunpack.c.l.b16 %v405
      %v669 = vunpack.c.l.b16 %v406
      %v670 = vunpack.c.l.b16 %v407
      %v671 = vunpack.c.l.b16 %v408
      %v672 = vunpack.c.l.b16 %v409
      %v673 = vunpack.c.l.b16 %v410
      %v674 = vunpack.c.l.b16 %v411
      %v675 = vunpack.c.l.b16 %v412
      %v676 = vunpack.c.l.b16 %v413
      %v677 = vunpack.c.l.b16 %v414
      %v678 = vunpack.c.l.b16 %v415
      %v679 = vunpack.c.l.b16 %v416
      %v680 = vunpack.c.l.b16 %v417
      %v681 = vunpack.c.l.b16 %v418
      %v682 = vunpack.c.l.b16 %v419
      %v683 = vunpack.c.l.b16 %v420
      %v684 = vunpack.c.l.b16 %v421
      %v685 = vunpack.c.l.b16 %v422
      %v686 = vunpack.c.l.b16 %v423
      %v687 = vunpack.c.l.b16 %v424
      %v688 = vunpack.c.l.b16 %v425
      %v689 = vunpack.c.l.b16 %v426
      %v690 = vunpack.c.l.b16 %v427
      %v691 = vunpack.c.l.b16 %v428
      %v692 = vunpack.c.l.b16 %v429
      %v693 = vunpack.c.l.b16 %v430
      %v694 = vunpack.c.l.b16 %v431
      %v695 = vunpack.c.l.b16 %v432
      %v696 = vunpack.c.l.b16 %v433
      %v697 = vunpack.c.l.b16 %v434
      %v698 = vunpack.c.l.b16 %v435
      %v699 = vunpack.c.l.b16 %v436
      %v700 = vunpack.c.l.b16 %v437
      %v701 = vunpack.c.l.b16 %v438
      %v702 = vunpack.c.l.b16 %v439
      %v703 = vunpack.c.l.b16 %v440
      %v704 = vunpack.c.l.b16 %v441
      %v705 = vunpack.c.l.b16 %v442
      %v706 = vunpack.c.l.b16 %v443
      %v707 = vunpack.c.l.b16 %v444
      %v708 = vunpack.c.l.b16 %v445
      %v709 = vunpack.c.l.b16 %v446
      %v710 = vunpack.c.l.b16 %v447
      %v711 = vunpack.c.l.b16 %v448
      %v712 = vunpack.c.l.b16 %v449
      %v713 = vunpack.c.l.b16 %v450
      %v714 = vunpack.c.l.b16 %v451
      %v715 = vunpack.c.l.b16 %v452
      %v716 = vunpack.c.l.b16 %v453
      %v717 = vunpack.c.l.b16 %v454
      %v718 = vunpack.c.l.b16 %v455
      %v719 = vunpack.c.l.b16 %v456
      %v720 = vunpack.c.l.b16 %v457
      %v721 = vunpack.c.l.b16 %v458
      %v722 = vunpack.c.l.b16 %v459
      %v723 = vunpack.c.l.b16 %v460
      %v724 = vunpack.c.l.b16 %v461
      %v725 = vunpack.c.l.b16 %v462
      %v726 = vunpack.c.l.b16 %v463
      %v727 = vunpack.c.l.b16 %v464
      %v728 = vunpack.c.l.b16 %v465
      %v729 = vunpack.c.l.b16 %v466
      %v730 = vunpack.c.l.b16 %v467
      %v731 = vunpack.c.l.b16 %v468
      %v732 = vunpack.c.l.b16 %v469
      %v733 = vunpack.c.l.b16 %v470
      %v734 = vpack.c.b16 %v607, %v606
      %v735 = vpack.c.b16 %v609, %v608
      %v736 = vpack.c.b16 %v611, %v610
      %v737 = vpack.c.b16 %v613, %v612
      %v738 = vpack.c.b16 %v615, %v614
      %v739 = vpack.c.b16 %v617, %v616
      %v740 = vpack.c.b16 %v619, %v618
      %v741 = vpack.c.b16 %v621, %v620
      %v742 = vpack.c.b16 %v623, %v622
      %v743 = vpack.c.b16 %v625, %v624
      %v744 = vpack.c.b16 %v627, %v626
      %v745 = vpack.c.b16 %v629, %v628
      %v746 = vpack.c.b16 %v631, %v630
      %v747 = vpack.c.b16 %v633, %v632
      %v748 = vpack.c.b16 %v635, %v634
      %v749 = vpack.c.b16 %v637, %v636
      %v750 = vpack.c.b16 %v639, %v638
      %v751 = vpack.c.b16 %v641, %v640
      %v752 = vpack.c.b16 %v643, %v642
      %v753 = vpack.c.b16 %v645, %v644
      %v754 = vpack.c.b16 %v647, %v646
      %v755 = vpack.c.b16 %v649, %v648
      %v756 = vpack.c.b16 %v651, %v650
      %v757 = vpack.c.b16 %v653, %v652
      %v758 = vpack.c.b16 %v655, %v654
      %v759 = vpack.c.b16 %v657, %v656
      %v760 = vpack.c.b16 %v659, %v658
      %v761 = vpack.c.b16 %v661, %v660
      %v762 = vpack.c.b16 %v663, %v662
      %v763 = vpack.c.b16 %v665, %v664
      %v764 = vpack.c.b16 %v667, %v666
      %v765 = vpack.c.b16 %v669, %v668
      %v766 = vpack.c.b16 %v671, %v670
      %v767 = vpack.c.b16 %v673, %v672
      %v768 = vpack.c.b16 %v675, %v674
      %v769 = vpack.c.b16 %v677, %v676
      %v770 = vpack.c.b16 %v679, %v678
      %v771 = vpack.c.b16 %v681, %v680
      %v772 = vpack.c.b16 %v683, %v682
      %v773 = vpack.c.b16 %v685, %v684
      %v774 = vpack.c.b16 %v687, %v686
      %v775 = vpack.c.b16 %v689, %v688
      %v776 = vpack.c.b16 %v691, %v690
      %v777 = vpack.c.b16 %v693, %v692
      %v778 = vpack.c.b16 %v695, %v694
      %v779 = vpack.c.b16 %v697, %v696
      %v780 = vpack.c.b16 %v699, %v698
      %v781 = vpack.c.b16 %v701, %v700
      %v782 = vpack.c.b16 %v703, %v702
      %v783 = vpack.c.b16 %v705, %v704
      %v784 = vpack.c.b16 %v707, %v706
      %v785 = vpack.c.b16 %v709, %v708
      %v786 = vpack.c.b16 %v711, %v710
      %v787 = vpack.c.b16 %v713, %v712
      %v788 = vpack.c.b16 %v715, %v714
      %v789 = vpack.c.b16 %v717, %v716
      %v790 = vpack.c.b16 %v719, %v718
      %v791 = vpack.c.b16 %v721, %v720
      %v792 = vpack.c.b16 %v723, %v722
      %v793 = vpack.c.b16 %v725, %v724
      %v794 = vpack.c.b16 %v727, %v726
      %v795 = vpack.c.b16 %v729, %v728
      %v796 = vpack.c.b16 %v731, %v730
      %v797 = vpack.c.b16 %v733, %v732
      %862 = vmatprep.subr.bf16.mxu0 0
      %863 = vmatpush1.bf16.msra.mxu0 %v741
      %864 = vmatprep.subr.bf16.mxu0 0
      %865 = vmatpush1.bf16.msra.mxu0 %v740
      %866 = vmatprep.subr.bf16.mxu0 0
      %867 = vmatpush1.bf16.msra.mxu0 %v739
      %868 = vmatprep.subr.bf16.mxu0 0
      %869 = vmatpush1.bf16.msra.mxu0 %v738
      %870 = vmatprep.subr.bf16.mxu0 0
      %871 = vmatpush1.bf16.msra.mxu0 %v737
      %872 = vmatprep.subr.bf16.mxu0 0
      %873 = vmatpush1.bf16.msra.mxu0 %v736
      %874 = vmatprep.subr.bf16.mxu0 0
      %875 = vmatpush1.bf16.msra.mxu0 %v735
      %876 = vmatprep.subr.bf16.mxu0 0
      %877 = vmatpush1.bf16.msra.mxu0 %v734
      %878 = vmatprep.subr.bf16.mxu0 0
      %879 = vmatpush2.bf16.msra.mxu0 %v749
      %880 = vmatprep.subr.bf16.mxu0 0
      %881 = vmatpush2.bf16.msra.mxu0 %v748
      %882 = vmatprep.subr.bf16.mxu0 0
      %883 = vmatpush2.bf16.msra.mxu0 %v747
      %884 = vmatprep.subr.bf16.mxu0 0
      %885 = vmatpush2.bf16.msra.mxu0 %v746
      %886 = vmatprep.subr.bf16.mxu0 0
      %887 = vmatpush2.bf16.msra.mxu0 %v745
      %888 = vmatprep.subr.bf16.mxu0 0
      %889 = vmatpush2.bf16.msra.mxu0 %v744
      %890 = vmatprep.subr.bf16.mxu0 0
      %891 = vmatpush2.bf16.msra.mxu0 %v743
      %892 = vmatprep.subr.bf16.mxu0 0
      %893 = vmatpush2.bf16.msra.mxu0 %v742
      %894 = vmatprep.mubr.bf16.mxu0 %v336
      %895 = vmatmul.mubr.bf16.gmra.mxu0 %v335
      %v896 = vpop.f32.mrf.mxu0
      %v897 = vadd.f32 %v476, %v896
      %v898 = vpop.f32.mrf.mxu0
      %v899 = vpop.f32.mrf.mxu0
      %v900 = vpop.f32.mrf.mxu0
      %901 = vdwg.mxu0
      %902 = vmatprep.subr.bf16.mxu0 0
      %903 = vmatpush1.bf16.msra.mxu0 %v757
      %904 = vmatprep.subr.bf16.mxu0 0
      %905 = vmatpush1.bf16.msra.mxu0 %v756
      %906 = vmatprep.subr.bf16.mxu0 0
      %907 = vmatpush1.bf16.msra.mxu0 %v755
      %908 = vmatprep.subr.bf16.mxu0 0
      %909 = vmatpush1.bf16.msra.mxu0 %v754
      %910 = vmatprep.subr.bf16.mxu0 0
      %911 = vmatpush1.bf16.msra.mxu0 %v753
      %912 = vmatprep.subr.bf16.mxu0 0
      %913 = vmatpush1.bf16.msra.mxu0 %v752
      %914 = vmatprep.subr.bf16.mxu0 0
      %915 = vmatpush1.bf16.msra.mxu0 %v751
      %916 = vmatprep.subr.bf16.mxu0 0
      %917 = vmatpush1.bf16.msra.mxu0 %v750
      %918 = vmatprep.subr.bf16.mxu0 0
      %919 = vmatpush2.bf16.msra.mxu0 %v765
      %920 = vmatprep.subr.bf16.mxu0 0
      %921 = vmatpush2.bf16.msra.mxu0 %v764
      %922 = vmatprep.subr.bf16.mxu0 0
      %923 = vmatpush2.bf16.msra.mxu0 %v763
      %924 = vmatprep.subr.bf16.mxu0 0
      %925 = vmatpush2.bf16.msra.mxu0 %v762
      %926 = vmatprep.subr.bf16.mxu0 0
      %927 = vmatpush2.bf16.msra.mxu0 %v761
      %928 = vmatprep.subr.bf16.mxu0 0
      %929 = vmatpush2.bf16.msra.mxu0 %v760
      %930 = vmatprep.subr.bf16.mxu0 0
      %931 = vmatpush2.bf16.msra.mxu0 %v759
      %932 = vmatprep.subr.bf16.mxu0 0
      %933 = vmatpush2.bf16.msra.mxu0 %v758
      %934 = vmatprep.mubr.bf16.mxu0 %v338
      %935 = vmatmul.mubr.bf16.gmra.mxu0 %v337
      %v936 = vpop.f32.mrf.mxu0
      %v937 = vadd.f32 %v897, %v936
      %v938 = vpop.f32.mrf.mxu0
      %v939 = vpop.f32.mrf.mxu0
      %v940 = vpop.f32.mrf.mxu0
      %941 = vdwg.mxu0
      %942 = vmatprep.subr.bf16.mxu0 0
      %943 = vmatpush1.bf16.msra.mxu0 %v773
      %944 = vmatprep.subr.bf16.mxu0 0
      %945 = vmatpush1.bf16.msra.mxu0 %v772
      %946 = vmatprep.subr.bf16.mxu0 0
      %947 = vmatpush1.bf16.msra.mxu0 %v771
      %948 = vmatprep.subr.bf16.mxu0 0
      %949 = vmatpush1.bf16.msra.mxu0 %v770
      %950 = vmatprep.subr.bf16.mxu0 0
      %951 = vmatpush1.bf16.msra.mxu0 %v769
      %952 = vmatprep.subr.bf16.mxu0 0
      %953 = vmatpush1.bf16.msra.mxu0 %v768
      %954 = vmatprep.subr.bf16.mxu0 0
      %955 = vmatpush1.bf16.msra.mxu0 %v767
      %956 = vmatprep.subr.bf16.mxu0 0
      %957 = vmatpush1.bf16.msra.mxu0 %v766
      %958 = vmatprep.subr.bf16.mxu0 0
      %959 = vmatpush2.bf16.msra.mxu0 %v781
      %960 = vmatprep.subr.bf16.mxu0 0
      %961 = vmatpush2.bf16.msra.mxu0 %v780
      %962 = vmatprep.subr.bf16.mxu0 0
      %963 = vmatpush2.bf16.msra.mxu0 %v779
      %964 = vmatprep.subr.bf16.mxu0 0
      %965 = vmatpush2.bf16.msra.mxu0 %v778
      %966 = vmatprep.subr.bf16.mxu0 0
      %967 = vmatpush2.bf16.msra.mxu0 %v777
      %968 = vmatprep.subr.bf16.mxu0 0
      %969 = vmatpush2.bf16.msra.mxu0 %v776
      %970 = vmatprep.subr.bf16.mxu0 0
      %971 = vmatpush2.bf16.msra.mxu0 %v775
      %972 = vmatprep.subr.bf16.mxu0 0
      %973 = vmatpush2.bf16.msra.mxu0 %v774
      %974 = vmatprep.mubr.bf16.mxu0 %v340
      %975 = vmatmul.mubr.bf16.gmra.mxu0 %v339
      %v976 = vpop.f32.mrf.mxu0
      %v977 = vadd.f32 %v937, %v976
      %v978 = vpop.f32.mrf.mxu0
      %v979 = vpop.f32.mrf.mxu0
      %v980 = vpop.f32.mrf.mxu0
      %981 = vdwg.mxu0
      %982 = vmatprep.subr.bf16.mxu0 0
      %983 = vmatpush1.bf16.msra.mxu0 %v789
      %984 = vmatprep.subr.bf16.mxu0 0
      %985 = vmatpush1.bf16.msra.mxu0 %v788
      %986 = vmatprep.subr.bf16.mxu0 0
      %987 = vmatpush1.bf16.msra.mxu0 %v787
      %988 = vmatprep.subr.bf16.mxu0 0
      %989 = vmatpush1.bf16.msra.mxu0 %v786
      %990 = vmatprep.subr.bf16.mxu0 0
      %991 = vmatpush1.bf16.msra.mxu0 %v785
      %992 = vmatprep.subr.bf16.mxu0 0
      %993 = vmatpush1.bf16.msra.mxu0 %v784
      %994 = vmatprep.subr.bf16.mxu0 0
      %995 = vmatpush1.bf16.msra.mxu0 %v783
      %996 = vmatprep.subr.bf16.mxu0 0
      %997 = vmatpush1.bf16.msra.mxu0 %v782
      %998 = vmatprep.subr.bf16.mxu0 0
      %999 = vmatpush2.bf16.msra.mxu0 %v797
      %1000 = vmatprep.subr.bf16.mxu0 0
      %1001 = vmatpush2.bf16.msra.mxu0 %v796
      %1002 = vmatprep.subr.bf16.mxu0 0
      %1003 = vmatpush2.bf16.msra.mxu0 %v795
      %1004 = vmatprep.subr.bf16.mxu0 0
      %1005 = vmatpush2.bf16.msra.mxu0 %v794
      %1006 = vmatprep.subr.bf16.mxu0 0
      %1007 = vmatpush2.bf16.msra.mxu0 %v793
      %1008 = vmatprep.subr.bf16.mxu0 0
      %1009 = vmatpush2.bf16.msra.mxu0 %v792
      %1010 = vmatprep.subr.bf16.mxu0 0
      %1011 = vmatpush2.bf16.msra.mxu0 %v791
      %1012 = vmatprep.subr.bf16.mxu0 0
      %1013 = vmatpush2.bf16.msra.mxu0 %v790
      %1014 = vmatprep.mubr.bf16.mxu0 %v342
      %1015 = vmatmul.mubr.bf16.gmra.mxu0 %v341
      %v1016 = vpop.f32.mrf.mxu0
      %v1017 = vadd.f32 %v977, %v1016
      %v1018 = vpop.f32.mrf.mxu0
      %v1019 = vpop.f32.mrf.mxu0
      %v1020 = vpop.f32.mrf.mxu0
      %1021 = vdwg.mxu0
      %v1022 = vld [vmem:[%s4] sm:$0xff]
      %v1023 = vadd.f32 %v1017, %v1022
      %v1024 = vld [vmem:[%s320] sm:$0xff]
      %v1025 = vld [vmem:[%s320 + $0x8] sm:$0xff]
      %v1026 = vld [vmem:[%s320 + $0x10] sm:$0xff]
      %v1027 = vld [vmem:[%s320 + $0x18] sm:$0xff]
      %v1028 = vld [vmem:[%s320 + $0x20] sm:$0xff]
      %v1029 = vld [vmem:[%s320 + $0x28] sm:$0xff]
      %v1030 = vld [vmem:[%s320 + $0x30] sm:$0xff]
      %v1031 = vld [vmem:[%s320 + $0x38] sm:$0xff]
      %v1032 = vpack.c.bf16 %v1024, %v1024
      %v1033 = vpack.c.bf16 %v1025, %v1025
      %v1034 = vpack.c.bf16 %v1026, %v1026
      %v1035 = vpack.c.bf16 %v1027, %v1027
      %v1036 = vpack.c.bf16 %v1028, %v1028
      %v1037 = vpack.c.bf16 %v1029, %v1029
      %v1038 = vpack.c.bf16 %v1030, %v1030
      %v1039 = vpack.c.bf16 %v1031, %v1031
      %v1040 = vld [vmem:[%s5] sm:$0xf]
      %v1041 = vld [vmem:[%s5 + $0x4] sm:$0xf]
      %v1042 = vld [vmem:[%s5 + $0x8] sm:$0xf]
      %v1043 = vld [vmem:[%s5 + $0xc] sm:$0xf]
      %v1044 = vld [vmem:[%s5 + $0x10] sm:$0xf]
      %v1045 = vld [vmem:[%s5 + $0x14] sm:$0xf]
      %v1046 = vld [vmem:[%s5 + $0x18] sm:$0xf]
      %v1047 = vld [vmem:[%s5 + $0x1c] sm:$0xf]
      %v1048 = vld [vmem:[%s5 + $0x20] sm:$0xf]
      %v1049 = vld [vmem:[%s5 + $0x24] sm:$0xf]
      %v1050 = vld [vmem:[%s5 + $0x28] sm:$0xf]
      %v1051 = vld [vmem:[%s5 + $0x2c] sm:$0xf]
      %v1052 = vld [vmem:[%s5 + $0x30] sm:$0xf]
      %v1053 = vld [vmem:[%s5 + $0x34] sm:$0xf]
      %v1054 = vld [vmem:[%s5 + $0x38] sm:$0xf]
      %v1055 = vld [vmem:[%s5 + $0x3c] sm:$0xf]
      %v1056 = vld [vmem:[%s5 + $0x40] sm:$0xf]
      %v1057 = vld [vmem:[%s5 + $0x44] sm:$0xf]
      %v1058 = vld [vmem:[%s5 + $0x48] sm:$0xf]
      %v1059 = vld [vmem:[%s5 + $0x4c] sm:$0xf]
      %v1060 = vld [vmem:[%s5 + $0x50] sm:$0xf]
      %v1061 = vld [vmem:[%s5 + $0x54] sm:$0xf]
      %v1062 = vld [vmem:[%s5 + $0x58] sm:$0xf]
      %v1063 = vld [vmem:[%s5 + $0x5c] sm:$0xf]
      %v1064 = vld [vmem:[%s5 + $0x60] sm:$0xf]
      %v1065 = vld [vmem:[%s5 + $0x64] sm:$0xf]
      %v1066 = vld [vmem:[%s5 + $0x68] sm:$0xf]
      %v1067 = vld [vmem:[%s5 + $0x6c] sm:$0xf]
      %v1068 = vld [vmem:[%s5 + $0x70] sm:$0xf]
      %v1069 = vld [vmem:[%s5 + $0x74] sm:$0xf]
      %v1070 = vld [vmem:[%s5 + $0x78] sm:$0xf]
      %v1071 = vld [vmem:[%s5 + $0x7c] sm:$0xf]
      %v1072 = vld [vmem:[%s5 + $0x80] sm:$0xf]
      %v1073 = vld [vmem:[%s5 + $0x84] sm:$0xf]
      %v1074 = vld [vmem:[%s5 + $0x88] sm:$0xf]
      %v1075 = vld [vmem:[%s5 + $0x8c] sm:$0xf]
      %v1076 = vld [vmem:[%s5 + $0x90] sm:$0xf]
      %v1077 = vld [vmem:[%s5 + $0x94] sm:$0xf]
      %v1078 = vld [vmem:[%s5 + $0x98] sm:$0xf]
      %v1079 = vld [vmem:[%s5 + $0x9c] sm:$0xf]
      %v1080 = vld [vmem:[%s5 + $0xa0] sm:$0xf]
      %v1081 = vld [vmem:[%s5 + $0xa4] sm:$0xf]
      %v1082 = vld [vmem:[%s5 + $0xa8] sm:$0xf]
      %v1083 = vld [vmem:[%s5 + $0xac] sm:$0xf]
      %v1084 = vld [vmem:[%s5 + $0xb0] sm:$0xf]
      %v1085 = vld [vmem:[%s5 + $0xb4] sm:$0xf]
      %v1086 = vld [vmem:[%s5 + $0xb8] sm:$0xf]
      %v1087 = vld [vmem:[%s5 + $0xbc] sm:$0xf]
      %v1088 = vld [vmem:[%s5 + $0xc0] sm:$0xf]
      %v1089 = vld [vmem:[%s5 + $0xc4] sm:$0xf]
      %v1090 = vld [vmem:[%s5 + $0xc8] sm:$0xf]
      %v1091 = vld [vmem:[%s5 + $0xcc] sm:$0xf]
      %v1092 = vld [vmem:[%s5 + $0xd0] sm:$0xf]
      %v1093 = vld [vmem:[%s5 + $0xd4] sm:$0xf]
      %v1094 = vld [vmem:[%s5 + $0xd8] sm:$0xf]
      %v1095 = vld [vmem:[%s5 + $0xdc] sm:$0xf]
      %v1096 = vld [vmem:[%s5 + $0xe0] sm:$0xf]
      %v1097 = vld [vmem:[%s5 + $0xe4] sm:$0xf]
      %v1098 = vld [vmem:[%s5 + $0xe8] sm:$0xf]
      %v1099 = vld [vmem:[%s5 + $0xec] sm:$0xf]
      %v1100 = vld [vmem:[%s5 + $0xf0] sm:$0xf]
      %v1101 = vld [vmem:[%s5 + $0xf4] sm:$0xf]
      %v1102 = vld [vmem:[%s5 + $0xf8] sm:$0xf]
      %v1103 = vld [vmem:[%s5 + $0xfc] sm:$0xf]
      %v1104 = vld [vmem:[%s5 + $0x100] sm:$0xf]
      %v1105 = vld [vmem:[%s5 + $0x104] sm:$0xf]
      %v1106 = vld [vmem:[%s5 + $0x108] sm:$0xf]
      %v1107 = vld [vmem:[%s5 + $0x10c] sm:$0xf]
      %v1108 = vld [vmem:[%s5 + $0x110] sm:$0xf]
      %v1109 = vld [vmem:[%s5 + $0x114] sm:$0xf]
      %v1110 = vld [vmem:[%s5 + $0x118] sm:$0xf]
      %v1111 = vld [vmem:[%s5 + $0x11c] sm:$0xf]
      %v1112 = vld [vmem:[%s5 + $0x120] sm:$0xf]
      %v1113 = vld [vmem:[%s5 + $0x124] sm:$0xf]
      %v1114 = vld [vmem:[%s5 + $0x128] sm:$0xf]
      %v1115 = vld [vmem:[%s5 + $0x12c] sm:$0xf]
      %v1116 = vld [vmem:[%s5 + $0x130] sm:$0xf]
      %v1117 = vld [vmem:[%s5 + $0x134] sm:$0xf]
      %v1118 = vld [vmem:[%s5 + $0x138] sm:$0xf]
      %v1119 = vld [vmem:[%s5 + $0x13c] sm:$0xf]
      %v1120 = vld [vmem:[%s5 + $0x140] sm:$0xf]
      %v1121 = vld [vmem:[%s5 + $0x144] sm:$0xf]
      %v1122 = vld [vmem:[%s5 + $0x148] sm:$0xf]
      %v1123 = vld [vmem:[%s5 + $0x14c] sm:$0xf]
      %v1124 = vld [vmem:[%s5 + $0x150] sm:$0xf]
      %v1125 = vld [vmem:[%s5 + $0x154] sm:$0xf]
      %v1126 = vld [vmem:[%s5 + $0x158] sm:$0xf]
      %v1127 = vld [vmem:[%s5 + $0x15c] sm:$0xf]
      %v1128 = vld [vmem:[%s5 + $0x160] sm:$0xf]
      %v1129 = vld [vmem:[%s5 + $0x164] sm:$0xf]
      %v1130 = vld [vmem:[%s5 + $0x168] sm:$0xf]
      %v1131 = vld [vmem:[%s5 + $0x16c] sm:$0xf]
      %v1132 = vld [vmem:[%s5 + $0x170] sm:$0xf]
      %v1133 = vld [vmem:[%s5 + $0x174] sm:$0xf]
      %v1134 = vld [vmem:[%s5 + $0x178] sm:$0xf]
      %v1135 = vld [vmem:[%s5 + $0x17c] sm:$0xf]
      %v1136 = vld [vmem:[%s5 + $0x180] sm:$0xf]
      %v1137 = vld [vmem:[%s5 + $0x184] sm:$0xf]
      %v1138 = vld [vmem:[%s5 + $0x188] sm:$0xf]
      %v1139 = vld [vmem:[%s5 + $0x18c] sm:$0xf]
      %v1140 = vld [vmem:[%s5 + $0x190] sm:$0xf]
      %v1141 = vld [vmem:[%s5 + $0x194] sm:$0xf]
      %v1142 = vld [vmem:[%s5 + $0x198] sm:$0xf]
      %v1143 = vld [vmem:[%s5 + $0x19c] sm:$0xf]
      %v1144 = vld [vmem:[%s5 + $0x1a0] sm:$0xf]
      %v1145 = vld [vmem:[%s5 + $0x1a4] sm:$0xf]
      %v1146 = vld [vmem:[%s5 + $0x1a8] sm:$0xf]
      %v1147 = vld [vmem:[%s5 + $0x1ac] sm:$0xf]
      %v1148 = vld [vmem:[%s5 + $0x1b0] sm:$0xf]
      %v1149 = vld [vmem:[%s5 + $0x1b4] sm:$0xf]
      %v1150 = vld [vmem:[%s5 + $0x1b8] sm:$0xf]
      %v1151 = vld [vmem:[%s5 + $0x1bc] sm:$0xf]
      %v1152 = vld [vmem:[%s5 + $0x1c0] sm:$0xf]
      %v1153 = vld [vmem:[%s5 + $0x1c4] sm:$0xf]
      %v1154 = vld [vmem:[%s5 + $0x1c8] sm:$0xf]
      %v1155 = vld [vmem:[%s5 + $0x1cc] sm:$0xf]
      %v1156 = vld [vmem:[%s5 + $0x1d0] sm:$0xf]
      %v1157 = vld [vmem:[%s5 + $0x1d4] sm:$0xf]
      %v1158 = vld [vmem:[%s5 + $0x1d8] sm:$0xf]
      %v1159 = vld [vmem:[%s5 + $0x1dc] sm:$0xf]
      %v1160 = vld [vmem:[%s5 + $0x1e0] sm:$0xf]
      %v1161 = vld [vmem:[%s5 + $0x1e4] sm:$0xf]
      %v1162 = vld [vmem:[%s5 + $0x1e8] sm:$0xf]
      %v1163 = vld [vmem:[%s5 + $0x1ec] sm:$0xf]
      %v1164 = vld [vmem:[%s5 + $0x1f0] sm:$0xf]
      %v1165 = vld [vmem:[%s5 + $0x1f4] sm:$0xf]
      %v1166 = vld [vmem:[%s5 + $0x1f8] sm:$0xf]
      %v1167 = vld [vmem:[%s5 + $0x1fc] sm:$0xf]
      %v1168 = vld [vmem:[%s6] sm:$0x1]
      %v1170 = vlaneseq
      %v1171 = vshrl.u32 %v1170, 7
      %v1172 = vsub.s32 0, %v1171
      %v1173 = vrot.slane %v1168, %v1172
      %v1303 = vunpack.c.l.b16 %v1040
      %v1304 = vunpack.c.l.b16 %v1041
      %v1305 = vunpack.c.l.b16 %v1042
      %v1306 = vunpack.c.l.b16 %v1043
      %v1307 = vunpack.c.l.b16 %v1044
      %v1308 = vunpack.c.l.b16 %v1045
      %v1309 = vunpack.c.l.b16 %v1046
      %v1310 = vunpack.c.l.b16 %v1047
      %v1311 = vunpack.c.l.b16 %v1048
      %v1312 = vunpack.c.l.b16 %v1049
      %v1313 = vunpack.c.l.b16 %v1050
      %v1314 = vunpack.c.l.b16 %v1051
      %v1315 = vunpack.c.l.b16 %v1052
      %v1316 = vunpack.c.l.b16 %v1053
      %v1317 = vunpack.c.l.b16 %v1054
      %v1318 = vunpack.c.l.b16 %v1055
      %v1319 = vunpack.c.l.b16 %v1056
      %v1320 = vunpack.c.l.b16 %v1057
      %v1321 = vunpack.c.l.b16 %v1058
      %v1322 = vunpack.c.l.b16 %v1059
      %v1323 = vunpack.c.l.b16 %v1060
      %v1324 = vunpack.c.l.b16 %v1061
      %v1325 = vunpack.c.l.b16 %v1062
      %v1326 = vunpack.c.l.b16 %v1063
      %v1327 = vunpack.c.l.b16 %v1064
      %v1328 = vunpack.c.l.b16 %v1065
      %v1329 = vunpack.c.l.b16 %v1066
      %v1330 = vunpack.c.l.b16 %v1067
      %v1331 = vunpack.c.l.b16 %v1068
      %v1332 = vunpack.c.l.b16 %v1069
      %v1333 = vunpack.c.l.b16 %v1070
      %v1334 = vunpack.c.l.b16 %v1071
      %v1335 = vunpack.c.l.b16 %v1072
      %v1336 = vunpack.c.l.b16 %v1073
      %v1337 = vunpack.c.l.b16 %v1074
      %v1338 = vunpack.c.l.b16 %v1075
      %v1339 = vunpack.c.l.b16 %v1076
      %v1340 = vunpack.c.l.b16 %v1077
      %v1341 = vunpack.c.l.b16 %v1078
      %v1342 = vunpack.c.l.b16 %v1079
      %v1343 = vunpack.c.l.b16 %v1080
      %v1344 = vunpack.c.l.b16 %v1081
      %v1345 = vunpack.c.l.b16 %v1082
      %v1346 = vunpack.c.l.b16 %v1083
      %v1347 = vunpack.c.l.b16 %v1084
      %v1348 = vunpack.c.l.b16 %v1085
      %v1349 = vunpack.c.l.b16 %v1086
      %v1350 = vunpack.c.l.b16 %v1087
      %v1351 = vunpack.c.l.b16 %v1088
      %v1352 = vunpack.c.l.b16 %v1089
      %v1353 = vunpack.c.l.b16 %v1090
      %v1354 = vunpack.c.l.b16 %v1091
      %v1355 = vunpack.c.l.b16 %v1092
      %v1356 = vunpack.c.l.b16 %v1093
      %v1357 = vunpack.c.l.b16 %v1094
      %v1358 = vunpack.c.l.b16 %v1095
      %v1359 = vunpack.c.l.b16 %v1096
      %v1360 = vunpack.c.l.b16 %v1097
      %v1361 = vunpack.c.l.b16 %v1098
      %v1362 = vunpack.c.l.b16 %v1099
      %v1363 = vunpack.c.l.b16 %v1100
      %v1364 = vunpack.c.l.b16 %v1101
      %v1365 = vunpack.c.l.b16 %v1102
      %v1366 = vunpack.c.l.b16 %v1103
      %v1367 = vunpack.c.l.b16 %v1104
      %v1368 = vunpack.c.l.b16 %v1105
      %v1369 = vunpack.c.l.b16 %v1106
      %v1370 = vunpack.c.l.b16 %v1107
      %v1371 = vunpack.c.l.b16 %v1108
      %v1372 = vunpack.c.l.b16 %v1109
      %v1373 = vunpack.c.l.b16 %v1110
      %v1374 = vunpack.c.l.b16 %v1111
      %v1375 = vunpack.c.l.b16 %v1112
      %v1376 = vunpack.c.l.b16 %v1113
      %v1377 = vunpack.c.l.b16 %v1114
      %v1378 = vunpack.c.l.b16 %v1115
      %v1379 = vunpack.c.l.b16 %v1116
      %v1380 = vunpack.c.l.b16 %v1117
      %v1381 = vunpack.c.l.b16 %v1118
      %v1382 = vunpack.c.l.b16 %v1119
      %v1383 = vunpack.c.l.b16 %v1120
      %v1384 = vunpack.c.l.b16 %v1121
      %v1385 = vunpack.c.l.b16 %v1122
      %v1386 = vunpack.c.l.b16 %v1123
      %v1387 = vunpack.c.l.b16 %v1124
      %v1388 = vunpack.c.l.b16 %v1125
      %v1389 = vunpack.c.l.b16 %v1126
      %v1390 = vunpack.c.l.b16 %v1127
      %v1391 = vunpack.c.l.b16 %v1128
      %v1392 = vunpack.c.l.b16 %v1129
      %v1393 = vunpack.c.l.b16 %v1130
      %v1394 = vunpack.c.l.b16 %v1131
      %v1395 = vunpack.c.l.b16 %v1132
      %v1396 = vunpack.c.l.b16 %v1133
      %v1397 = vunpack.c.l.b16 %v1134
      %v1398 = vunpack.c.l.b16 %v1135
      %v1399 = vunpack.c.l.b16 %v1136
      %v1400 = vunpack.c.l.b16 %v1137
      %v1401 = vunpack.c.l.b16 %v1138
      %v1402 = vunpack.c.l.b16 %v1139
      %v1403 = vunpack.c.l.b16 %v1140
      %v1404 = vunpack.c.l.b16 %v1141
      %v1405 = vunpack.c.l.b16 %v1142
      %v1406 = vunpack.c.l.b16 %v1143
      %v1407 = vunpack.c.l.b16 %v1144
      %v1408 = vunpack.c.l.b16 %v1145
      %v1409 = vunpack.c.l.b16 %v1146
      %v1410 = vunpack.c.l.b16 %v1147
      %v1411 = vunpack.c.l.b16 %v1148
      %v1412 = vunpack.c.l.b16 %v1149
      %v1413 = vunpack.c.l.b16 %v1150
      %v1414 = vunpack.c.l.b16 %v1151
      %v1415 = vunpack.c.l.b16 %v1152
      %v1416 = vunpack.c.l.b16 %v1153
      %v1417 = vunpack.c.l.b16 %v1154
      %v1418 = vunpack.c.l.b16 %v1155
      %v1419 = vunpack.c.l.b16 %v1156
      %v1420 = vunpack.c.l.b16 %v1157
      %v1421 = vunpack.c.l.b16 %v1158
      %v1422 = vunpack.c.l.b16 %v1159
      %v1423 = vunpack.c.l.b16 %v1160
      %v1424 = vunpack.c.l.b16 %v1161
      %v1425 = vunpack.c.l.b16 %v1162
      %v1426 = vunpack.c.l.b16 %v1163
      %v1427 = vunpack.c.l.b16 %v1164
      %v1428 = vunpack.c.l.b16 %v1165
      %v1429 = vunpack.c.l.b16 %v1166
      %v1430 = vunpack.c.l.b16 %v1167
      %v1431 = vpack.c.b16 %v1304, %v1303
      %v1432 = vpack.c.b16 %v1306, %v1305
      %v1433 = vpack.c.b16 %v1308, %v1307
      %v1434 = vpack.c.b16 %v1310, %v1309
      %v1435 = vpack.c.b16 %v1312, %v1311
      %v1436 = vpack.c.b16 %v1314, %v1313
      %v1437 = vpack.c.b16 %v1316, %v1315
      %v1438 = vpack.c.b16 %v1318, %v1317
      %v1439 = vpack.c.b16 %v1320, %v1319
      %v1440 = vpack.c.b16 %v1322, %v1321
      %v1441 = vpack.c.b16 %v1324, %v1323
      %v1442 = vpack.c.b16 %v1326, %v1325
      %v1443 = vpack.c.b16 %v1328, %v1327
      %v1444 = vpack.c.b16 %v1330, %v1329
      %v1445 = vpack.c.b16 %v1332, %v1331
      %v1446 = vpack.c.b16 %v1334, %v1333
      %v1447 = vpack.c.b16 %v1336, %v1335
      %v1448 = vpack.c.b16 %v1338, %v1337
      %v1449 = vpack.c.b16 %v1340, %v1339
      %v1450 = vpack.c.b16 %v1342, %v1341
      %v1451 = vpack.c.b16 %v1344, %v1343
      %v1452 = vpack.c.b16 %v1346, %v1345
      %v1453 = vpack.c.b16 %v1348, %v1347
      %v1454 = vpack.c.b16 %v1350, %v1349
      %v1455 = vpack.c.b16 %v1352, %v1351
      %v1456 = vpack.c.b16 %v1354, %v1353
      %v1457 = vpack.c.b16 %v1356, %v1355
      %v1458 = vpack.c.b16 %v1358, %v1357
      %v1459 = vpack.c.b16 %v1360, %v1359
      %v1460 = vpack.c.b16 %v1362, %v1361
      %v1461 = vpack.c.b16 %v1364, %v1363
      %v1462 = vpack.c.b16 %v1366, %v1365
      %v1463 = vpack.c.b16 %v1368, %v1367
      %v1464 = vpack.c.b16 %v1370, %v1369
      %v1465 = vpack.c.b16 %v1372, %v1371
      %v1466 = vpack.c.b16 %v1374, %v1373
      %v1467 = vpack.c.b16 %v1376, %v1375
      %v1468 = vpack.c.b16 %v1378, %v1377
      %v1469 = vpack.c.b16 %v1380, %v1379
      %v1470 = vpack.c.b16 %v1382, %v1381
      %v1471 = vpack.c.b16 %v1384, %v1383
      %v1472 = vpack.c.b16 %v1386, %v1385
      %v1473 = vpack.c.b16 %v1388, %v1387
      %v1474 = vpack.c.b16 %v1390, %v1389
      %v1475 = vpack.c.b16 %v1392, %v1391
      %v1476 = vpack.c.b16 %v1394, %v1393
      %v1477 = vpack.c.b16 %v1396, %v1395
      %v1478 = vpack.c.b16 %v1398, %v1397
      %v1479 = vpack.c.b16 %v1400, %v1399
      %v1480 = vpack.c.b16 %v1402, %v1401
      %v1481 = vpack.c.b16 %v1404, %v1403
      %v1482 = vpack.c.b16 %v1406, %v1405
      %v1483 = vpack.c.b16 %v1408, %v1407
      %v1484 = vpack.c.b16 %v1410, %v1409
      %v1485 = vpack.c.b16 %v1412, %v1411
      %v1486 = vpack.c.b16 %v1414, %v1413
      %v1487 = vpack.c.b16 %v1416, %v1415
      %v1488 = vpack.c.b16 %v1418, %v1417
      %v1489 = vpack.c.b16 %v1420, %v1419
      %v1490 = vpack.c.b16 %v1422, %v1421
      %v1491 = vpack.c.b16 %v1424, %v1423
      %v1492 = vpack.c.b16 %v1426, %v1425
      %v1493 = vpack.c.b16 %v1428, %v1427
      %v1494 = vpack.c.b16 %v1430, %v1429
      %1559 = vmatprep.subr.bf16.mxu0 0
      %1560 = vmatpush1.bf16.msra.mxu0 %v1438
      %1561 = vmatprep.subr.bf16.mxu0 0
      %1562 = vmatpush1.bf16.msra.mxu0 %v1437
      %1563 = vmatprep.subr.bf16.mxu0 0
      %1564 = vmatpush1.bf16.msra.mxu0 %v1436
      %1565 = vmatprep.subr.bf16.mxu0 0
      %1566 = vmatpush1.bf16.msra.mxu0 %v1435
      %1567 = vmatprep.subr.bf16.mxu0 0
      %1568 = vmatpush1.bf16.msra.mxu0 %v1434
      %1569 = vmatprep.subr.bf16.mxu0 0
      %1570 = vmatpush1.bf16.msra.mxu0 %v1433
      %1571 = vmatprep.subr.bf16.mxu0 0
      %1572 = vmatpush1.bf16.msra.mxu0 %v1432
      %1573 = vmatprep.subr.bf16.mxu0 0
      %1574 = vmatpush1.bf16.msra.mxu0 %v1431
      %1575 = vmatprep.subr.bf16.mxu0 0
      %1576 = vmatpush2.bf16.msra.mxu0 %v1446
      %1577 = vmatprep.subr.bf16.mxu0 0
      %1578 = vmatpush2.bf16.msra.mxu0 %v1445
      %1579 = vmatprep.subr.bf16.mxu0 0
      %1580 = vmatpush2.bf16.msra.mxu0 %v1444
      %1581 = vmatprep.subr.bf16.mxu0 0
      %1582 = vmatpush2.bf16.msra.mxu0 %v1443
      %1583 = vmatprep.subr.bf16.mxu0 0
      %1584 = vmatpush2.bf16.msra.mxu0 %v1442
      %1585 = vmatprep.subr.bf16.mxu0 0
      %1586 = vmatpush2.bf16.msra.mxu0 %v1441
      %1587 = vmatprep.subr.bf16.mxu0 0
      %1588 = vmatpush2.bf16.msra.mxu0 %v1440
      %1589 = vmatprep.subr.bf16.mxu0 0
      %1590 = vmatpush2.bf16.msra.mxu0 %v1439
      %1591 = vmatprep.mubr.bf16.mxu0 %v1033
      %1592 = vmatmul.mubr.bf16.gmra.mxu0 %v1032
      %v1593 = vpop.f32.mrf.mxu0
      %v1594 = vadd.f32 %v1173, %v1593
      %v1595 = vpop.f32.mrf.mxu0
      %v1596 = vpop.f32.mrf.mxu0
      %v1597 = vpop.f32.mrf.mxu0
      %1598 = vdwg.mxu0
      %1599 = vmatprep.subr.bf16.mxu0 0
      %1600 = vmatpush1.bf16.msra.mxu0 %v1454
      %1601 = vmatprep.subr.bf16.mxu0 0
      %1602 = vmatpush1.bf16.msra.mxu0 %v1453
      %1603 = vmatprep.subr.bf16.mxu0 0
      %1604 = vmatpush1.bf16.msra.mxu0 %v1452
      %1605 = vmatprep.subr.bf16.mxu0 0
      %1606 = vmatpush1.bf16.msra.mxu0 %v1451
      %1607 = vmatprep.subr.bf16.mxu0 0
      %1608 = vmatpush1.bf16.msra.mxu0 %v1450
      %1609 = vmatprep.subr.bf16.mxu0 0
      %1610 = vmatpush1.bf16.msra.mxu0 %v1449
      %1611 = vmatprep.subr.bf16.mxu0 0
      %1612 = vmatpush1.bf16.msra.mxu0 %v1448
      %1613 = vmatprep.subr.bf16.mxu0 0
      %1614 = vmatpush1.bf16.msra.mxu0 %v1447
      %1615 = vmatprep.subr.bf16.mxu0 0
      %1616 = vmatpush2.bf16.msra.mxu0 %v1462
      %1617 = vmatprep.subr.bf16.mxu0 0
      %1618 = vmatpush2.bf16.msra.mxu0 %v1461
      %1619 = vmatprep.subr.bf16.mxu0 0
      %1620 = vmatpush2.bf16.msra.mxu0 %v1460
      %1621 = vmatprep.subr.bf16.mxu0 0
      %1622 = vmatpush2.bf16.msra.mxu0 %v1459
      %1623 = vmatprep.subr.bf16.mxu0 0
      %1624 = vmatpush2.bf16.msra.mxu0 %v1458
      %1625 = vmatprep.subr.bf16.mxu0 0
      %1626 = vmatpush2.bf16.msra.mxu0 %v1457
      %1627 = vmatprep.subr.bf16.mxu0 0
      %1628 = vmatpush2.bf16.msra.mxu0 %v1456
      %1629 = vmatprep.subr.bf16.mxu0 0
      %1630 = vmatpush2.bf16.msra.mxu0 %v1455
      %1631 = vmatprep.mubr.bf16.mxu0 %v1035
      %1632 = vmatmul.mubr.bf16.gmra.mxu0 %v1034
      %v1633 = vpop.f32.mrf.mxu0
      %v1634 = vadd.f32 %v1594, %v1633
      %v1635 = vpop.f32.mrf.mxu0
      %v1636 = vpop.f32.mrf.mxu0
      %v1637 = vpop.f32.mrf.mxu0
      %1638 = vdwg.mxu0
      %1639 = vmatprep.subr.bf16.mxu0 0
      %1640 = vmatpush1.bf16.msra.mxu0 %v1470
      %1641 = vmatprep.subr.bf16.mxu0 0
      %1642 = vmatpush1.bf16.msra.mxu0 %v1469
      %1643 = vmatprep.subr.bf16.mxu0 0
      %1644 = vmatpush1.bf16.msra.mxu0 %v1468
      %1645 = vmatprep.subr.bf16.mxu0 0
      %1646 = vmatpush1.bf16.msra.mxu0 %v1467
      %1647 = vmatprep.subr.bf16.mxu0 0
      %1648 = vmatpush1.bf16.msra.mxu0 %v1466
      %1649 = vmatprep.subr.bf16.mxu0 0
      %1650 = vmatpush1.bf16.msra.mxu0 %v1465
      %1651 = vmatprep.subr.bf16.mxu0 0
      %1652 = vmatpush1.bf16.msra.mxu0 %v1464
      %1653 = vmatprep.subr.bf16.mxu0 0
      %1654 = vmatpush1.bf16.msra.mxu0 %v1463
      %1655 = vmatprep.subr.bf16.mxu0 0
      %1656 = vmatpush2.bf16.msra.mxu0 %v1478
      %1657 = vmatprep.subr.bf16.mxu0 0
      %1658 = vmatpush2.bf16.msra.mxu0 %v1477
      %1659 = vmatprep.subr.bf16.mxu0 0
      %1660 = vmatpush2.bf16.msra.mxu0 %v1476
      %1661 = vmatprep.subr.bf16.mxu0 0
      %1662 = vmatpush2.bf16.msra.mxu0 %v1475
      %1663 = vmatprep.subr.bf16.mxu0 0
      %1664 = vmatpush2.bf16.msra.mxu0 %v1474
      %1665 = vmatprep.subr.bf16.mxu0 0
      %1666 = vmatpush2.bf16.msra.mxu0 %v1473
      %1667 = vmatprep.subr.bf16.mxu0 0
      %1668 = vmatpush2.bf16.msra.mxu0 %v1472
      %1669 = vmatprep.subr.bf16.mxu0 0
      %1670 = vmatpush2.bf16.msra.mxu0 %v1471
      %1671 = vmatprep.mubr.bf16.mxu0 %v1037
      %1672 = vmatmul.mubr.bf16.gmra.mxu0 %v1036
      %v1673 = vpop.f32.mrf.mxu0
      %v1674 = vadd.f32 %v1634, %v1673
      %v1675 = vpop.f32.mrf.mxu0
      %v1676 = vpop.f32.mrf.mxu0
      %v1677 = vpop.f32.mrf.mxu0
      %1678 = vdwg.mxu0
      %1679 = vmatprep.subr.bf16.mxu0 0
      %1680 = vmatpush1.bf16.msra.mxu0 %v1486
      %1681 = vmatprep.subr.bf16.mxu0 0
      %1682 = vmatpush1.bf16.msra.mxu0 %v1485
      %1683 = vmatprep.subr.bf16.mxu0 0
      %1684 = vmatpush1.bf16.msra.mxu0 %v1484
      %1685 = vmatprep.subr.bf16.mxu0 0
      %1686 = vmatpush1.bf16.msra.mxu0 %v1483
      %1687 = vmatprep.subr.bf16.mxu0 0
      %1688 = vmatpush1.bf16.msra.mxu0 %v1482
      %1689 = vmatprep.subr.bf16.mxu0 0
      %1690 = vmatpush1.bf16.msra.mxu0 %v1481
      %1691 = vmatprep.subr.bf16.mxu0 0
      %1692 = vmatpush1.bf16.msra.mxu0 %v1480
      %1693 = vmatprep.subr.bf16.mxu0 0
      %1694 = vmatpush1.bf16.msra.mxu0 %v1479
      %1695 = vmatprep.subr.bf16.mxu0 0
      %1696 = vmatpush2.bf16.msra.mxu0 %v1494
      %1697 = vmatprep.subr.bf16.mxu0 0
      %1698 = vmatpush2.bf16.msra.mxu0 %v1493
      %1699 = vmatprep.subr.bf16.mxu0 0
      %1700 = vmatpush2.bf16.msra.mxu0 %v1492
      %1701 = vmatprep.subr.bf16.mxu0 0
      %1702 = vmatpush2.bf16.msra.mxu0 %v1491
      %1703 = vmatprep.subr.bf16.mxu0 0
      %1704 = vmatpush2.bf16.msra.mxu0 %v1490
      %1705 = vmatprep.subr.bf16.mxu0 0
      %1706 = vmatpush2.bf16.msra.mxu0 %v1489
      %1707 = vmatprep.subr.bf16.mxu0 0
      %1708 = vmatpush2.bf16.msra.mxu0 %v1488
      %1709 = vmatprep.subr.bf16.mxu0 0
      %1710 = vmatpush2.bf16.msra.mxu0 %v1487
      %1711 = vmatprep.mubr.bf16.mxu0 %v1039
      %1712 = vmatmul.mubr.bf16.gmra.mxu0 %v1038
      %v1713 = vpop.f32.mrf.mxu0
      %v1714 = vadd.f32 %v1674, %v1713
      %v1715 = vpop.f32.mrf.mxu0
      %v1716 = vpop.f32.mrf.mxu0
      %v1717 = vpop.f32.mrf.mxu0
      %1718 = vdwg.mxu0
      %v1719 = vld [vmem:[%s7] sm:$0xff]
      %v1720 = vadd.f32 %v1714, %v1719
      %vm1721 = vcmask 261120
      %1722 = vst.msk [vmem:[%s325] sm:$0xff] %vm1721, %v1023
      %1723 = vst.msk [vmem:[%s325 + $0x8] sm:$0xff] %vm1721, %v1720
      %p1724 = scmp.lt.s32.totalorder %s19, 1
      %s1725 = scalar_select %p1724, %s19, 1
      %s1726 = smul.addr %s1725, 2
      %s1727 = smul.addr %s1726, 8
      %s1728 = scalar_lea.vmem %s8, %s1727
      // Predicated region
      $region53: #{tcr_epitope_transformer.5} parent=51 // pred_check
        %p1729 = pneg %p215
      $region54: #{tcr_epitope_transformer.5} parent=51 // pred_check_branch
        %1731 = sbr.rel (%p1729) target = $region56
      $region55: #{tcr_epitope_transformer.5} parent=51 // pred_region
        _
      $region56: #{tcr_epitope_transformer.5} parent=51 // pred_fallthru
        _
    $region52: #{tcr_epitope_transformer.5} parent=5 // pred_fallthru
      _
    %p1732 = scmp.le.s32.totalorder 2, %s14
    // Predicated region
    $region57: #{tcr_epitope_transformer.5} parent=5 // pred_check
      %p1733 = pneg %p1732
    $region58: #{tcr_epitope_transformer.5} parent=5 // pred_check_branch
      %1735 = sbr.rel (%p1733) target = $region60
    $region59: #{tcr_epitope_transformer.5} parent=5 // pred_region
      %s1736 = ssub.s32 %s14, 2
      // Predicated region
      $region61: #{tcr_epitope_transformer.5} parent=59 // pred_check
        %p1737 = pneg %p221
      $region62: #{tcr_epitope_transformer.5} parent=59 // pred_check_branch
        %1739 = sbr.rel (%p1737) target = $region64
      $region63: #{tcr_epitope_transformer.5} parent=59 // pred_region
        %p1740 = scmp.lt.s32.totalorder %s20, 1
        %s1741 = scalar_select %p1740, %s20, 1
        %s1742 = smul.addr %s1741, 2
        %s1743 = smul.addr %s1742, 8
        %s1744 = scalar_lea.vmem %s8, %s1743
      $region64: #{tcr_epitope_transformer.5} parent=59 // pred_fallthru
        _
    $region60: #{tcr_epitope_transformer.5} parent=5 // pred_fallthru
      _
  $region6: #{tcr_epitope_transformer.5} parent=0 // loop_footer
    %s18 = sadd.s32 1, %s14
  $region7: #{tcr_epitope_transformer.5} parent=0 // loop_footer_branch
    %13 = sbr.rel target = $region3
  $region8: #{tcr_epitope_transformer.5} parent=0 // loop_exit
    _

// kernel: tcr_epitope_transformer.8
$region0: #{tcr_epitope_transformer.8}
  #allocation0 [shape = 'u32[]', space=smem, size = 0x4, offset = 0x4, fixed_abs, tag = 'smem constant byte address 0x4 - core index']
  #allocation1 [shape = 'u32[144,128]{1,0:T(1,128)}', space=vmem, size = 0x12000, scoped, tag = 'internal scratch']
  %s0 = inlined_call_operand.vmem [shape: f32[2,8,32], index: 0, kind: input, shape index: {}]
  %s1 = inlined_call_operand.vmem [shape: f32[2,8,32], index: 1, kind: input, shape index: {}]
  %s2 = inlined_call_operand.vmem [shape: s32[2,1,8], index: 2, kind: input, shape index: {}]
  %s3 = inlined_call_operand.vmem [shape: f32[1,32], index: 3, kind: input, shape index: {}]
  %s4 = inlined_call_operand.vmem [shape: f32[1,32], index: 4, kind: input, shape index: {}]
  %s5 = inlined_call_operand.vmem [shape: bf16[3,4,32,8], index: 5, kind: input, shape index: {}]
  %s6 = inlined_call_operand.vmem [shape: f32[3,4,1,8], index: 6, kind: input, shape index: {}]
  %s7 = inlined_call_operand.vmem [shape: bf16[4,8,32], index: 7, kind: input, shape index: {}]
  %s8 = inlined_call_operand.vmem [shape: f32[1,32], index: 8, kind: input, shape index: {}]
  %s9 = inlined_call_operand.vmem [shape: f32[2,8,32], index: 9, kind: output, shape index: {}]
  %s10 = sld [smem:[#allocation0]]
  $region69: #{tcr_epitope_transformer.8} parent=0
    _
  %s12 = ssub.s32 1, %s10
  %s13 = scalar_select 0, %s12, %s10
  loop: start=0, step=1, limit=4
  $region2: #{tcr_epitope_transformer.8} parent=0 // loop_pre_header
    _
  $region3: #{tcr_epitope_transformer.8} parent=0 // loop_header
    %s15 = sphi 0, %s19
    %p16 = scmp.ge.s32.totalorder %s15, 4
    %s25 = sphi 0, %s27
    %s28 = sphi 0, %s25
    %s29 = sphi 0, %s28
    %s45 = sphi 0, %s29
    %s51 = sphi 0, %s53
    %s54 = sphi 0, %s51
    %s55 = sphi 0, %s54
    %s71 = sphi 0, %s55
    %s77 = sphi 0, %s79
    %s80 = sphi 0, %s77
    %s81 = sphi 0, %s80
    %s97 = sphi 0, %s81
    %s101 = sphi 0, %s101
    %s103 = sphi 0, %s101
    %s104 = sphi 0, %s103
    %s118 = sphi 0, %s104
    %s122 = sphi 0, %s122
    %s124 = sphi 0, %s122
    %s125 = sphi 0, %s124
    %s139 = sphi 0, %s125
    %s143 = sphi 0, %s143
    %s145 = sphi 0, %s143
    %s146 = sphi 0, %s145
    %s160 = sphi 0, %s146
    %s164 = sphi 0, %s164
    %s166 = sphi 0, %s164
    %s167 = sphi 0, %s166
    %s181 = sphi 0, %s167
    %s185 = sphi 0, %s185
    %s187 = sphi 0, %s185
    %s188 = sphi 0, %s187
    %s202 = sphi 0, %s188
    %s206 = sphi 0, %s206
    %s208 = sphi 0, %s206
    %s209 = sphi 0, %s208
    %s223 = sphi 0, %s209
    %s229 = sphi 0, %s231
    %s232 = sphi 0, %s229
    %s233 = sphi 0, %s232
    %s249 = sphi 0, %s233
  $region4: #{tcr_epitope_transformer.8} parent=0 // loop_header_branch
    %18 = sbr.rel (%p16) target = $region8
  $region5: #{tcr_epitope_transformer.8} parent=0 // loop_body
    %s20 = ssub.s32 %s15, 1
    %s21 = ssub.s32 %s15, 2
    %s22 = sadd.s32 %s15, 1
    %s23 = ssub.s32 %s15, %s22
    %p24 = scmp.eq.s32.totalorder %s23, 0
    %s26 = sadd.s32 %s25, 1
    %s27 = scalar_select %p24, %s25, %s26
    %p30 = pneg %p24
    %p31 = scmp.eq.s32.totalorder %s15, 1
    %p32 = por %p30, %p31
    %p33 = scmp.ne.s32.totalorder %s25, %s28
    %p34 = scmp.eq.s32.totalorder %s15, 0
    %p35 = por %p33, %p34
    %p36 = scmp.ne.s32.totalorder %s25, %s28
    %p37 = scmp.eq.s32.totalorder %s20, 1
    %p38 = por %p36, %p37
    %p39 = scmp.ne.s32.totalorder %s28, %s29
    %p40 = scmp.eq.s32.totalorder %s20, 0
    %p41 = por %p39, %p40
    %p42 = scmp.ne.s32.totalorder %s28, %s29
    %p43 = scmp.eq.s32.totalorder %s21, 1
    %p44 = por %p42, %p43
    %p46 = scmp.ne.s32.totalorder %s29, %s45
    %p47 = scmp.eq.s32.totalorder %s21, 0
    %p48 = por %p46, %p47
    %s49 = ssub.s32 %s15, %s22
    %p50 = scmp.eq.s32.totalorder %s49, 0
    %s52 = sadd.s32 %s51, 1
    %s53 = scalar_select %p50, %s51, %s52
    %p56 = pneg %p50
    %p57 = scmp.eq.s32.totalorder %s15, 1
    %p58 = por %p56, %p57
    %p59 = scmp.ne.s32.totalorder %s51, %s54
    %p60 = scmp.eq.s32.totalorder %s15, 0
    %p61 = por %p59, %p60
    %p62 = scmp.ne.s32.totalorder %s51, %s54
    %p63 = scmp.eq.s32.totalorder %s20, 1
    %p64 = por %p62, %p63
    %p65 = scmp.ne.s32.totalorder %s54, %s55
    %p66 = scmp.eq.s32.totalorder %s20, 0
    %p67 = por %p65, %p66
    %p68 = scmp.ne.s32.totalorder %s54, %s55
    %p69 = scmp.eq.s32.totalorder %s21, 1
    %p70 = por %p68, %p69
    %p72 = scmp.ne.s32.totalorder %s55, %s71
    %p73 = scmp.eq.s32.totalorder %s21, 0
    %p74 = por %p72, %p73
    %s75 = ssub.s32 %s15, %s22
    %p76 = scmp.eq.s32.totalorder %s75, 0
    %s78 = sadd.s32 %s77, 1
    %s79 = scalar_select %p76, %s77, %s78
    %p82 = pneg %p76
    %p83 = scmp.eq.s32.totalorder %s15, 1
    %p84 = por %p82, %p83
    %p85 = scmp.ne.s32.totalorder %s77, %s80
    %p86 = scmp.eq.s32.totalorder %s15, 0
    %p87 = por %p85, %p86
    %p88 = scmp.ne.s32.totalorder %s77, %s80
    %p89 = scmp.eq.s32.totalorder %s20, 1
    %p90 = por %p88, %p89
    %p91 = scmp.ne.s32.totalorder %s80, %s81
    %p92 = scmp.eq.s32.totalorder %s20, 0
    %p93 = por %p91, %p92
    %p94 = scmp.ne.s32.totalorder %s80, %s81
    %p95 = scmp.eq.s32.totalorder %s21, 1
    %p96 = por %p94, %p95
    %p98 = scmp.ne.s32.totalorder %s81, %s97
    %p99 = scmp.eq.s32.totalorder %s21, 0
    %p100 = por %p98, %p99
    %s102 = sadd.s32 %s101, 1
    %p105 = scmp.eq.s32.totalorder %s15, 1
    %p106 = scmp.ne.s32.totalorder %s101, %s103
    %p107 = scmp.eq.s32.totalorder %s15, 0
    %p108 = por %p106, %p107
    %p109 = scmp.ne.s32.totalorder %s101, %s103
    %p110 = scmp.eq.s32.totalorder %s20, 1
    %p111 = por %p109, %p110
    %p112 = scmp.ne.s32.totalorder %s103, %s104
    %p113 = scmp.eq.s32.totalorder %s20, 0
    %p114 = por %p112, %p113
    %p115 = scmp.ne.s32.totalorder %s103, %s104
    %p116 = scmp.eq.s32.totalorder %s21, 1
    %p117 = por %p115, %p116
    %p119 = scmp.ne.s32.totalorder %s104, %s118
    %p120 = scmp.eq.s32.totalorder %s21, 0
    %p121 = por %p119, %p120
    %s123 = sadd.s32 %s122, 1
    %p126 = scmp.eq.s32.totalorder %s15, 1
    %p127 = scmp.ne.s32.totalorder %s122, %s124
    %p128 = scmp.eq.s32.totalorder %s15, 0
    %p129 = por %p127, %p128
    %p130 = scmp.ne.s32.totalorder %s122, %s124
    %p131 = scmp.eq.s32.totalorder %s20, 1
    %p132 = por %p130, %p131
    %p133 = scmp.ne.s32.totalorder %s124, %s125
    %p134 = scmp.eq.s32.totalorder %s20, 0
    %p135 = por %p133, %p134
    %p136 = scmp.ne.s32.totalorder %s124, %s125
    %p137 = scmp.eq.s32.totalorder %s21, 1
    %p138 = por %p136, %p137
    %p140 = scmp.ne.s32.totalorder %s125, %s139
    %p141 = scmp.eq.s32.totalorder %s21, 0
    %p142 = por %p140, %p141
    %s144 = sadd.s32 %s143, 1
    %p147 = scmp.eq.s32.totalorder %s15, 1
    %p148 = scmp.ne.s32.totalorder %s143, %s145
    %p149 = scmp.eq.s32.totalorder %s15, 0
    %p150 = por %p148, %p149
    %p151 = scmp.ne.s32.totalorder %s143, %s145
    %p152 = scmp.eq.s32.totalorder %s20, 1
    %p153 = por %p151, %p152
    %p154 = scmp.ne.s32.totalorder %s145, %s146
    %p155 = scmp.eq.s32.totalorder %s20, 0
    %p156 = por %p154, %p155
    %p157 = scmp.ne.s32.totalorder %s145, %s146
    %p158 = scmp.eq.s32.totalorder %s21, 1
    %p159 = por %p157, %p158
    %p161 = scmp.ne.s32.totalorder %s146, %s160
    %p162 = scmp.eq.s32.totalorder %s21, 0
    %p163 = por %p161, %p162
    %s165 = sadd.s32 %s164, 1
    %p168 = scmp.eq.s32.totalorder %s15, 1
    %p169 = scmp.ne.s32.totalorder %s164, %s166
    %p170 = scmp.eq.s32.totalorder %s15, 0
    %p171 = por %p169, %p170
    %p172 = scmp.ne.s32.totalorder %s164, %s166
    %p173 = scmp.eq.s32.totalorder %s20, 1
    %p174 = por %p172, %p173
    %p175 = scmp.ne.s32.totalorder %s166, %s167
    %p176 = scmp.eq.s32.totalorder %s20, 0
    %p177 = por %p175, %p176
    %p178 = scmp.ne.s32.totalorder %s166, %s167
    %p179 = scmp.eq.s32.totalorder %s21, 1
    %p180 = por %p178, %p179
    %p182 = scmp.ne.s32.totalorder %s167, %s181
    %p183 = scmp.eq.s32.totalorder %s21, 0
    %p184 = por %p182, %p183
    %s186 = sadd.s32 %s185, 1
    %p189 = scmp.eq.s32.totalorder %s15, 1
    %p190 = scmp.ne.s32.totalorder %s185, %s187
    %p191 = scmp.eq.s32.totalorder %s15, 0
    %p192 = por %p190, %p191
    %p193 = scmp.ne.s32.totalorder %s185, %s187
    %p194 = scmp.eq.s32.totalorder %s20, 1
    %p195 = por %p193, %p194
    %p196 = scmp.ne.s32.totalorder %s187, %s188
    %p197 = scmp.eq.s32.totalorder %s20, 0
    %p198 = por %p196, %p197
    %p199 = scmp.ne.s32.totalorder %s187, %s188
    %p200 = scmp.eq.s32.totalorder %s21, 1
    %p201 = por %p199, %p200
    %p203 = scmp.ne.s32.totalorder %s188, %s202
    %p204 = scmp.eq.s32.totalorder %s21, 0
    %p205 = por %p203, %p204
    %s207 = sadd.s32 %s206, 1
    %p210 = scmp.eq.s32.totalorder %s15, 1
    %p211 = scmp.ne.s32.totalorder %s206, %s208
    %p212 = scmp.eq.s32.totalorder %s15, 0
    %p213 = por %p211, %p212
    %p214 = scmp.ne.s32.totalorder %s206, %s208
    %p215 = scmp.eq.s32.totalorder %s20, 1
    %p216 = por %p214, %p215
    %p217 = scmp.ne.s32.totalorder %s208, %s209
    %p218 = scmp.eq.s32.totalorder %s20, 0
    %p219 = por %p217, %p218
    %p220 = scmp.ne.s32.totalorder %s208, %s209
    %p221 = scmp.eq.s32.totalorder %s21, 1
    %p222 = por %p220, %p221
    %p224 = scmp.ne.s32.totalorder %s209, %s223
    %p225 = scmp.eq.s32.totalorder %s21, 0
    %p226 = por %p224, %p225
    %s227 = ssub.s32 %s15, %s22
    %p228 = scmp.eq.s32.totalorder %s227, 0
    %s230 = sadd.s32 %s229, 1
    %s231 = scalar_select %p228, %s229, %s230
    %p234 = pneg %p228
    %p235 = scmp.eq.s32.totalorder %s15, 1
    %p236 = por %p234, %p235
    %p237 = scmp.ne.s32.totalorder %s229, %s232
    %p238 = scmp.eq.s32.totalorder %s15, 0
    %p239 = por %p237, %p238
    %p240 = scmp.ne.s32.totalorder %s229, %s232
    %p241 = scmp.eq.s32.totalorder %s20, 1
    %p242 = por %p240, %p241
    %p243 = scmp.ne.s32.totalorder %s232, %s233
    %p244 = scmp.eq.s32.totalorder %s20, 0
    %p245 = por %p243, %p244
    %p246 = scmp.ne.s32.totalorder %s232, %s233
    %p247 = scmp.eq.s32.totalorder %s21, 1
    %p248 = por %p246, %p247
    %p250 = scmp.ne.s32.totalorder %s233, %s249
    %p251 = scmp.eq.s32.totalorder %s21, 0
    %p252 = por %p250, %p251
    %p253 = scmp.le.s32.totalorder 1, %s15
    %p254 = scmp.lt.s32.totalorder %s15, 3
    %p255 = pnand %p253, %p254
    %p256 = pneg %p255
    // Predicated region
    $region9: #{tcr_epitope_transformer.8} parent=5 // pred_check
      _
    $region10: #{tcr_epitope_transformer.8} parent=5 // pred_check_branch
      %258 = sbr.rel (%p255) target = $region12
    $region11: #{tcr_epitope_transformer.8} parent=5 // pred_region
      %s259 = ssub.s32 %s15, 1
      // Predicated region
      $region13: #{tcr_epitope_transformer.8} parent=11 // pred_check
        %p260 = pneg %p114
      $region14: #{tcr_epitope_transformer.8} parent=11 // pred_check_branch
        %262 = sbr.rel (%p260) target = $region16
      $region15: #{tcr_epitope_transformer.8} parent=11 // pred_region
        _
      $region16: #{tcr_epitope_transformer.8} parent=11 // pred_fallthru
        _
      // Predicated region
      $region17: #{tcr_epitope_transformer.8} parent=11 // pred_check
        %p263 = pneg %p135
      $region18: #{tcr_epitope_transformer.8} parent=11 // pred_check_branch
        %265 = sbr.rel (%p263) target = $region20
      $region19: #{tcr_epitope_transformer.8} parent=11 // pred_region
        _
      $region20: #{tcr_epitope_transformer.8} parent=11 // pred_fallthru
        _
      // Predicated region
      $region21: #{tcr_epitope_transformer.8} parent=11 // pred_check
        %p266 = pneg %p156
      $region22: #{tcr_epitope_transformer.8} parent=11 // pred_check_branch
        %268 = sbr.rel (%p266) target = $region24
      $region23: #{tcr_epitope_transformer.8} parent=11 // pred_region
        _
      $region24: #{tcr_epitope_transformer.8} parent=11 // pred_fallthru
        _
      // Predicated region
      $region25: #{tcr_epitope_transformer.8} parent=11 // pred_check
        %p269 = pneg %p177
      $region26: #{tcr_epitope_transformer.8} parent=11 // pred_check_branch
        %271 = sbr.rel (%p269) target = $region28
      $region27: #{tcr_epitope_transformer.8} parent=11 // pred_region
        _
      $region28: #{tcr_epitope_transformer.8} parent=11 // pred_fallthru
        _
      // Predicated region
      $region29: #{tcr_epitope_transformer.8} parent=11 // pred_check
        %p272 = pneg %p198
      $region30: #{tcr_epitope_transformer.8} parent=11 // pred_check_branch
        %274 = sbr.rel (%p272) target = $region32
      $region31: #{tcr_epitope_transformer.8} parent=11 // pred_region
        _
      $region32: #{tcr_epitope_transformer.8} parent=11 // pred_fallthru
        _
      // Predicated region
      $region33: #{tcr_epitope_transformer.8} parent=11 // pred_check
        %p275 = pneg %p219
      $region34: #{tcr_epitope_transformer.8} parent=11 // pred_check_branch
        %277 = sbr.rel (%p275) target = $region36
      $region35: #{tcr_epitope_transformer.8} parent=11 // pred_region
        _
      $region36: #{tcr_epitope_transformer.8} parent=11 // pred_fallthru
        _
    $region12: #{tcr_epitope_transformer.8} parent=5 // pred_fallthru
      _
    %p278 = scmp.lt.s32.totalorder %s15, 2
    // Predicated region
    $region37: #{tcr_epitope_transformer.8} parent=5 // pred_check
      %p279 = pneg %p278
    $region38: #{tcr_epitope_transformer.8} parent=5 // pred_check_branch
      %281 = sbr.rel (%p279) target = $region40
    $region39: #{tcr_epitope_transformer.8} parent=5 // pred_region
      // Predicated region
      $region41: #{tcr_epitope_transformer.8} parent=39 // pred_check
        %p282 = pneg %p35
      $region42: #{tcr_epitope_transformer.8} parent=39 // pred_check_branch
        %284 = sbr.rel (%p282) target = $region44
      $region43: #{tcr_epitope_transformer.8} parent=39 // pred_region
        %p285 = scmp.lt.s32.totalorder %s15, 1
        %s286 = scalar_select %p285, %s15, 1
        %s287 = smul.addr %s286, 8
        %s288 = scalar_lea.vmem %s0, %s287
      $region44: #{tcr_epitope_transformer.8} parent=39 // pred_fallthru
        _
      // Predicated region
      $region45: #{tcr_epitope_transformer.8} parent=39 // pred_check
        %p289 = pneg %p61
      $region46: #{tcr_epitope_transformer.8} parent=39 // pred_check_branch
        %291 = sbr.rel (%p289) target = $region48
      $region47: #{tcr_epitope_transformer.8} parent=39 // pred_region
        %p292 = scmp.lt.s32.totalorder %s15, 1
        %s293 = scalar_select %p292, %s15, 1
        %s294 = smul.addr %s293, 8
        %s295 = scalar_lea.vmem %s1, %s294
      $region48: #{tcr_epitope_transformer.8} parent=39 // pred_fallthru
        _
      // Predicated region
      $region49: #{tcr_epitope_transformer.8} parent=39 // pred_check
        %p296 = pneg %p87
      $region50: #{tcr_epitope_transformer.8} parent=39 // pred_check_branch
        %298 = sbr.rel (%p296) target = $region52
      $region51: #{tcr_epitope_transformer.8} parent=39 // pred_region
        %p299 = scmp.lt.s32.totalorder %s15, 1
        %s300 = scalar_select %p299, %s15, 1
        %s301 = scalar_lea.vmem %s2, %s300
      $region52: #{tcr_epitope_transformer.8} parent=39 // pred_fallthru
        _
    $region40: #{tcr_epitope_transformer.8} parent=5 // pred_fallthru
      _
    %p302 = scmp.le.s32.totalorder 1, %s15
    %p303 = scmp.lt.s32.totalorder %s15, 3
    %p304 = pnand %p302, %p303
    %p305 = pneg %p304
    // Predicated region
    $region53: #{tcr_epitope_transformer.8} parent=5 // pred_check
      _
    $region54: #{tcr_epitope_transformer.8} parent=5 // pred_check_branch
      %307 = sbr.rel (%p304) target = $region56
    $region55: #{tcr_epitope_transformer.8} parent=5 // pred_region
      %s308 = ssub.s32 %s15, 1
      %p309 = scmp.lt.s32.totalorder %s20, 1
      %s310 = scalar_select %p309, %s20, 1
      %s311 = smul.addr %s310, 8
      %s312 = scalar_lea.vmem %s0, %s311
      %p313 = pneg %p41
      %p314 = pneg %p38
      %p315 = scmp.lt.s32.totalorder %s20, 1
      %s316 = scalar_select %p315, %s20, 1
      %s317 = smul.addr %s316, 8
      %s318 = scalar_lea.vmem %s1, %s317
      %p319 = pneg %p67
      %p320 = pneg %p64
      %p321 = scmp.lt.s32.totalorder %s20, 1
      %s322 = scalar_select %p321, %s20, 1
      %s323 = scalar_lea.vmem %s2, %s322
      %p324 = pneg %p93
      %p325 = pneg %p90
      %p326 = pneg %p114
      %p327 = pneg %p111
      %p328 = pneg %p135
      %p329 = pneg %p132
      %p330 = pneg %p156
      %p331 = pneg %p153
      %p332 = pneg %p177
      %p333 = pneg %p174
      %p334 = pneg %p198
      %p335 = pneg %p195
      %p336 = pneg %p219
      %p337 = pneg %p216
      %p338 = pneg %p245
      %p339 = pneg %p242
      %p340 = scmp.lt.s32.totalorder %s20, 1
      %s341 = scalar_select %p340, %s20, 1
      %s342 = smul.addr %s341, 8
      %s343 = scalar_lea.vmem %s9, %s342
      %p344 = scmp.lt.s32.totalorder %s20, 1
      %s345 = scalar_select %p344, %s20, 1
      %s346 = smul.addr %s345, 8
      %s347 = scalar_lea.vmem %s0, %s346
      %p348 = scmp.lt.s32.totalorder %s20, 1
      %s349 = scalar_select %p348, %s20, 1
      %s350 = smul.addr %s349, 8
      %s351 = scalar_lea.vmem %s1, %s350
      %p352 = scmp.lt.s32.totalorder %s20, 1
      %s353 = scalar_select %p352, %s20, 1
      %s354 = scalar_lea.vmem %s2, %s353
      %p355 = scmp.lt.s32.totalorder %s20, 1
      %s356 = scalar_select %p355, %s20, 1
      %s357 = smul.addr %s356, 8
      %s358 = scalar_lea.vmem %s9, %s357
      %v360 = vld [vmem:[%s354] sm:$0x1]
      %vm361 = vcmp.gt.s32.totalorder %v360, 0
      %v362 = vsel %vm361, -1e+30, 0.0
      %v363 = vld [vmem:[%s347] sm:$0xff]
      %v364 = vld [vmem:[%s3] sm:$0x1]
      %v365 = vld [vmem:[%s4] sm:$0x1]
      %vm366 = vcmask 261120
      %v367 = vsel %vm366, %v363, 0.0
      %368 = vadd.xlane.f32.xlu0 %v367
      %v369 = vpop.xlane.xlu0 %368
      %v370 = vrcp.pop 32.0
      %v371 = vmul.f32 %v369, %v370
      %v372 = vsub.f32 %v363, %v371
      %v373 = vmul.f32 %v372, %v372
      %v374 = vsel %vm366, %v373, 0.0
      %375 = vadd.xlane.f32.xlu0 %v374
      %v376 = vpop.xlane.xlu0 %375
      %v377 = vmul.f32 %v376, %v370
      %v378 = vadd.f32 %v377, 1e-05
      %v379 = vrsqrt.pop %v378
      %v380 = vmul.f32 %v372, %v379
      %v382 = vlaneseq
      %v383 = vshrl.u32 %v382, 7
      %v384 = vsub.s32 0, %v383
      %v385 = vrot.slane %v364, %v384
      %v387 = vmul.f32 %v380, %v385
      %v389 = vlaneseq
      %v390 = vshrl.u32 %v389, 7
      %v391 = vsub.s32 0, %v390
      %v392 = vrot.slane %v365, %v391
      %v394 = vadd.f32 %v387, %v392
      %v395 = vld [vmem:[%s351] sm:$0xff]
      %v396 = vsel %vm366, %v395, 0.0
      %397 = vadd.xlane.f32.xlu0 %v396
      %v398 = vpop.xlane.xlu0 %397
      %v399 = vmul.f32 %v398, %v370
      %v400 = vsub.f32 %v395, %v399
      %v401 = vmul.f32 %v400, %v400
      %v402 = vsel %vm366, %v401, 0.0
      %403 = vadd.xlane.f32.xlu0 %v402
      %v404 = vpop.xlane.xlu0 %403
      %v405 = vmul.f32 %v404, %v370
      %v406 = vadd.f32 %v405, 1e-05
      %v407 = vrsqrt.pop %v406
      %v408 = vmul.f32 %v400, %v407
      %v409 = vmul.f32 %v408, %v385
      %v410 = vadd.f32 %v409, %v392
      %v411 = vpack.c.bf16 %v394, %v394
      %v412 = vpack.c.bf16 %v410, %v410
      %v413 = vld [vmem:[%s5] sm:$0xf]
      %v414 = vld [vmem:[%s5 + $0x4] sm:$0xf]
      %v415 = vld [vmem:[%s5 + $0x8] sm:$0xf]
      %v416 = vld [vmem:[%s5 + $0xc] sm:$0xf]
      %v417 = vld [vmem:[%s6] sm:$0x1]
      %v419 = vlaneseq
      %v420 = vshrl.u32 %v419, 7
      %v421 = vsub.s32 0, %v420
      %v422 = vrot.slane %v417, %v421
      %v428 = vunpack.c.l.b16 %v413
      %v429 = vunpack.c.l.b16 %v414
      %v430 = vunpack.c.l.b16 %v415
      %v431 = vunpack.c.l.b16 %v416
      %v432 = vpack.c.b16 %v429, %v428
      %v433 = vpack.c.b16 %v431, %v430
      %v437 = vsel %vm366, %v411, 0
      %439 = vmatprep.subr.bf16.mxu0 0
      %440 = vmatpush1.bf16.msra.mxu0 0
      %441 = vmatprep.subr.bf16.mxu0 0
      %442 = vmatpush1.bf16.msra.mxu0 0
      %443 = vmatprep.subr.bf16.mxu0 0
      %444 = vmatpush1.bf16.msra.mxu0 0
      %445 = vmatprep.subr.bf16.mxu0 0
      %446 = vmatpush1.bf16.msra.mxu0 0
      %447 = vmatprep.subr.bf16.mxu0 0
      %448 = vmatpush1.bf16.msra.mxu0 0
      %449 = vmatprep.subr.bf16.mxu0 0
      %450 = vmatpush1.bf16.msra.mxu0 0
      %451 = vmatprep.subr.bf16.mxu0 0
      %452 = vmatpush1.bf16.msra.mxu0 %v433
      %453 = vmatprep.subr.bf16.mxu0 0
      %454 = vmatpush1.bf16.msra.mxu0 %v432
      %455 = vmatprep.subr.bf16.mxu0 0
      %456 = vmatpush2.bf16.msra.mxu0 0
      %457 = vmatprep.subr.bf16.mxu0 0
      %458 = vmatpush2.bf16.msra.mxu0 0
      %459 = vmatprep.subr.bf16.mxu0 0
      %460 = vmatpush2.bf16.msra.mxu0 0
      %461 = vmatprep.subr.bf16.mxu0 0
      %462 = vmatpush2.bf16.msra.mxu0 0
      %463 = vmatprep.subr.bf16.mxu0 0
      %464 = vmatpush2.bf16.msra.mxu0 0
      %465 = vmatprep.subr.bf16.mxu0 0
      %466 = vmatpush2.bf16.msra.mxu0 0
      %467 = vmatprep.subr.bf16.mxu0 0
      %468 = vmatpush2.bf16.msra.mxu0 0
      %469 = vmatprep.subr.bf16.mxu0 0
      %470 = vmatpush2.bf16.msra.mxu0 0
      %471 = vmatprep.mubr.bf16.mxu0 0
      %472 = vmatmul.mubr.bf16.gmra.mxu0 %v437
      %v473 = vpop.f32.mrf.mxu0
      %v474 = vadd.f32 %v422, %v473
      %v475 = vpop.f32.mrf.mxu0
      %v476 = vpop.f32.mrf.mxu0
      %v477 = vpop.f32.mrf.mxu0
      %478 = vdwg.mxu0
      %s479 = scalar_lea.vmem %s5, 64
      %v480 = vld [vmem:[%s479] sm:$0xf]
      %v481 = vld [vmem:[%s479 + $0x4] sm:$0xf]
      %v482 = vld [vmem:[%s479 + $0x8] sm:$0xf]
      %v483 = vld [vmem:[%s479 + $0xc] sm:$0xf]
      %s484 = scalar_lea.vmem %s6, 4
      %v485 = vld [vmem:[%s484] sm:$0x1]
      %v487 = vlaneseq
      %v488 = vshrl.u32 %v487, 7
      %v489 = vsub.s32 0, %v488
      %v490 = vrot.slane %v485, %v489
      %v496 = vunpack.c.l.b16 %v480
      %v497 = vunpack.c.l.b16 %v481
      %v498 = vunpack.c.l.b16 %v482
      %v499 = vunpack.c.l.b16 %v483
      %v500 = vpack.c.b16 %v497, %v496
      %v501 = vpack.c.b16 %v499, %v498
      %v505 = vsel %vm366, %v412, 0
      %507 = vmatprep.subr.bf16.mxu0 0
      %508 = vmatpush1.bf16.msra.mxu0 0
      %509 = vmatprep.subr.bf16.mxu0 0
      %510 = vmatpush1.bf16.msra.mxu0 0
      %511 = vmatprep.subr.bf16.mxu0 0
      %512 = vmatpush1.bf16.msra.mxu0 0
      %513 = vmatprep.subr.bf16.mxu0 0
      %514 = vmatpush1.bf16.msra.mxu0 0
      %515 = vmatprep.subr.bf16.mxu0 0
      %516 = vmatpush1.bf16.msra.mxu0 0
      %517 = vmatprep.subr.bf16.mxu0 0
      %518 = vmatpush1.bf16.msra.mxu0 0
      %519 = vmatprep.subr.bf16.mxu0 0
      %520 = vmatpush1.bf16.msra.mxu0 %v501
      %521 = vmatprep.subr.bf16.mxu0 0
      %522 = vmatpush1.bf16.msra.mxu0 %v500
      %523 = vmatprep.subr.bf16.mxu0 0
      %524 = vmatpush2.bf16.msra.mxu0 0
      %525 = vmatprep.subr.bf16.mxu0 0
      %526 = vmatpush2.bf16.msra.mxu0 0
      %527 = vmatprep.subr.bf16.mxu0 0
      %528 = vmatpush2.bf16.msra.mxu0 0
      %529 = vmatprep.subr.bf16.mxu0 0
      %530 = vmatpush2.bf16.msra.mxu0 0
      %531 = vmatprep.subr.bf16.mxu0 0
      %532 = vmatpush2.bf16.msra.mxu0 0
      %533 = vmatprep.subr.bf16.mxu0 0
      %534 = vmatpush2.bf16.msra.mxu0 0
      %535 = vmatprep.subr.bf16.mxu0 0
      %536 = vmatpush2.bf16.msra.mxu0 0
      %537 = vmatprep.subr.bf16.mxu0 0
      %538 = vmatpush2.bf16.msra.mxu0 0
      %539 = vmatprep.mubr.bf16.mxu0 0
      %540 = vmatmul.mubr.bf16.gmra.mxu0 %v505
      %v541 = vpop.f32.mrf.mxu0
      %v542 = vadd.f32 %v490, %v541
      %v543 = vpop.f32.mrf.mxu0
      %v544 = vpop.f32.mrf.mxu0
      %v545 = vpop.f32.mrf.mxu0
      %546 = vdwg.mxu0
      %s547 = scalar_lea.vmem %s5, 128
      %v548 = vld [vmem:[%s547] sm:$0xf]
      %v549 = vld [vmem:[%s547 + $0x4] sm:$0xf]
      %v550 = vld [vmem:[%s547 + $0x8] sm:$0xf]
      %v551 = vld [vmem:[%s547 + $0xc] sm:$0xf]
      %s552 = scalar_lea.vmem %s6, 8
      %v553 = vld [vmem:[%s552] sm:$0x1]
      %v555 = vlaneseq
      %v556 = vshrl.u32 %v555, 7
      %v557 = vsub.s32 0, %v556
      %v558 = vrot.slane %v553, %v557
      %v564 = vunpack.c.l.b16 %v548
      %v565 = vunpack.c.l.b16 %v549
      %v566 = vunpack.c.l.b16 %v550
      %v567 = vunpack.c.l.b16 %v551
      %v568 = vpack.c.b16 %v565, %v564
      %v569 = vpack.c.b16 %v567, %v566
      %572 = vmatprep.subr.bf16.mxu0 0
      %573 = vmatpush1.bf16.msra.mxu0 0
      %574 = vmatprep.subr.bf16.mxu0 0
      %575 = vmatpush1.bf16.msra.mxu0 0
      %576 = vmatprep.subr.bf16.mxu0 0
      %577 = vmatpush1.bf16.msra.mxu0 0
      %578 = vmatprep.subr.bf16.mxu0 0
      %579 = vmatpush1.bf16.msra.mxu0 0
      %580 = vmatprep.subr.bf16.mxu0 0
      %581 = vmatpush1.bf16.msra.mxu0 0
      %582 = vmatprep.subr.bf16.mxu0 0
      %583 = vmatpush1.bf16.msra.mxu0 0
      %584 = vmatprep.subr.bf16.mxu0 0
      %585 = vmatpush1.bf16.msra.mxu0 %v569
      %586 = vmatprep.subr.bf16.mxu0 0
      %587 = vmatpush1.bf16.msra.mxu0 %v568
      %588 = vmatprep.subr.bf16.mxu0 0
      %589 = vmatpush2.bf16.msra.mxu0 0
      %590 = vmatprep.subr.bf16.mxu0 0
      %591 = vmatpush2.bf16.msra.mxu0 0
      %592 = vmatprep.subr.bf16.mxu0 0
      %593 = vmatpush2.bf16.msra.mxu0 0
      %594 = vmatprep.subr.bf16.mxu0 0
      %595 = vmatpush2.bf16.msra.mxu0 0
      %596 = vmatprep.subr.bf16.mxu0 0
      %597 = vmatpush2.bf16.msra.mxu0 0
      %598 = vmatprep.subr.bf16.mxu0 0
      %599 = vmatpush2.bf16.msra.mxu0 0
      %600 = vmatprep.subr.bf16.mxu0 0
      %601 = vmatpush2.bf16.msra.mxu0 0
      %602 = vmatprep.subr.bf16.mxu0 0
      %603 = vmatpush2.bf16.msra.mxu0 0
      %604 = vmatprep.mubr.bf16.mxu0 0
      %605 = vmatmul.mubr.bf16.gmra.mxu0 %v505
      %v606 = vpop.f32.mrf.mxu0
      %v607 = vadd.f32 %v558, %v606
      %v608 = vpop.f32.mrf.mxu0
      %v609 = vpop.f32.mrf.mxu0
      %v610 = vpop.f32.mrf.mxu0
      %611 = vdwg.mxu0
      %v613 = vlaneseq
      %v614 = vshrl.u32 %v613, 7
      %v615 = vsub.s32 0, %v614
      %v616 = vrot.slane %v362, %v615
      %vm618 = vcmask 64512
      %v620 = vsel %vm618, %v474, 0
      %v623 = vsel %vm618, %v542, 0
      %625 = vmatprep.subr.mxu0 0.0
      %626 = vmatpush1.xpose.msra.mxu0 0.0
      %627 = vmatprep.subr.mxu0 0.0
      %628 = vmatpush1.xpose.msra.mxu0 0.0
      %629 = vmatprep.subr.mxu0 0.0
      %630 = vmatpush1.xpose.msra.mxu0 0.0
      %631 = vmatprep.subr.mxu0 0.0
      %632 = vmatpush1.xpose.msra.mxu0 0.0
      %633 = vmatprep.subr.mxu0 0.0
      %634 = vmatpush1.xpose.msra.mxu0 0.0
      %635 = vmatprep.subr.mxu0 0.0
      %636 = vmatpush1.xpose.msra.mxu0 0.0
      %637 = vmatprep.subr.mxu0 0.0
      %638 = vmatpush1.xpose.msra.mxu0 0.0
      %639 = vmatprep.subr.mxu0 0.0
      %640 = vmatpush1.xpose.msra.mxu0 0.0
      %641 = vmatprep.subr.mxu0 0.0
      %642 = vmatpush1.xpose.msra.mxu0 0.0
      %643 = vmatprep.subr.mxu0 0.0
      %644 = vmatpush1.xpose.msra.mxu0 0.0
      %645 = vmatprep.subr.mxu0 0.0
      %646 = vmatpush1.xpose.msra.mxu0 0.0
      %647 = vmatprep.subr.mxu0 0.0
      %648 = vmatpush1.xpose.msra.mxu0 0.0
      %649 = vmatprep.subr.mxu0 0.0
      %650 = vmatpush1.xpose.msra.mxu0 0.0
      %651 = vmatprep.subr.mxu0 0.0
      %652 = vmatpush1.xpose.msra.mxu0 0.0
      %653 = vmatprep.subr.mxu0 0.0
      %654 = vmatpush1.xpose.msra.mxu0 0.0
      %655 = vmatprep.subr.mxu0 0.0
      %656 = vmatpush1.xpose.msra.mxu0 %v623
      %657 = vmatprep.subr.mxu0 0.0
      %658 = vmatpush2.xpose.msra.mxu0 0.0
      %659 = vmatprep.subr.mxu0 0.0
      %660 = vmatpush2.xpose.msra.mxu0 0.0
      %661 = vmatprep.subr.mxu0 0.0
      %662 = vmatpush2.xpose.msra.mxu0 0.0
      %663 = vmatprep.subr.mxu0 0.0
      %664 = vmatpush2.xpose.msra.mxu0 0.0
      %665 = vmatprep.subr.mxu0 0.0
      %666 = vmatpush2.xpose.msra.mxu0 0.0
      %667 = vmatprep.subr.mxu0 0.0
      %668 = vmatpush2.xpose.msra.mxu0 0.0
      %669 = vmatprep.subr.mxu0 0.0
      %670 = vmatpush2.xpose.msra.mxu0 0.0
      %671 = vmatprep.subr.mxu0 0.0
      %672 = vmatpush2.xpose.msra.mxu0 0.0
      %673 = vmatprep.subr.mxu0 0.0
      %674 = vmatpush2.xpose.msra.mxu0 0.0
      %675 = vmatprep.subr.mxu0 0.0
      %676 = vmatpush2.xpose.msra.mxu0 0.0
      %677 = vmatprep.subr.mxu0 0.0
      %678 = vmatpush2.xpose.msra.mxu0 0.0
      %679 = vmatprep.subr.mxu0 0.0
      %680 = vmatpush2.xpose.msra.mxu0 0.0
      %681 = vmatprep.subr.mxu0 0.0
      %682 = vmatpush2.xpose.msra.mxu0 0.0
      %683 = vmatprep.subr.mxu0 0.0
      %684 = vmatpush2.xpose.msra.mxu0 0.0
      %685 = vmatprep.subr.mxu0 0.0
      %686 = vmatpush2.xpose.msra.mxu0 0.0
      %687 = vmatprep.subr.mxu0 0.0
      %688 = vmatpush2.xpose.msra.mxu0 0.0
      %689 = vmatprep.mubr.f32.mxu0 0.0
      %690 = vmatmul.mubr.f32.gmra.mxu0 %v620
      %v691 = vpop.f32.mrf.mxu0
      %v692 = vadd.f32 %v616, %v691
      %v693 = vpop.f32.mrf.mxu0
      %694 = vdwg.mxu0
      %v695 = vsel %vm618, %v692, -inf
      %696 = vmax.xlane.f32.xlu0 %v695
      %v697 = vpop.xlane.xlu0 %696
      %v698 = vsub.f32 %v692, %v697
      %v699 = vmul.f32 %v698, 1.442695
      %v700 = vpow.pop %v699
      %v701 = vsel %vm618, %v700, 0.0
      %702 = vadd.xlane.f32.xlu0 %v701
      %v703 = vpop.xlane.xlu0 %702
      %v704 = vrcp.pop %v703
      %v705 = vmul.f32 %v700, %v704
      %v707 = vsel %vm618, %v705, 0
      %709 = vmatprep.subr.mxu0 0.0
      %710 = vmatpush1.msra.mxu0 0.0
      %711 = vmatprep.subr.mxu0 0.0
      %712 = vmatpush1.msra.mxu0 0.0
      %713 = vmatprep.subr.mxu0 0.0
      %714 = vmatpush1.msra.mxu0 0.0
      %715 = vmatprep.subr.mxu0 0.0
      %716 = vmatpush1.msra.mxu0 0.0
      %717 = vmatprep.subr.mxu0 0.0
      %718 = vmatpush1.msra.mxu0 0.0
      %719 = vmatprep.subr.mxu0 0.0
      %720 = vmatpush1.msra.mxu0 0.0
      %721 = vmatprep.subr.mxu0 0.0
      %722 = vmatpush1.msra.mxu0 0.0
      %723 = vmatprep.subr.mxu0 0.0
      %724 = vmatpush1.msra.mxu0 0.0
      %725 = vmatprep.subr.mxu0 0.0
      %726 = vmatpush1.msra.mxu0 0.0
      %727 = vmatprep.subr.mxu0 0.0
      %728 = vmatpush1.msra.mxu0 0.0
      %729 = vmatprep.subr.mxu0 0.0
      %730 = vmatpush1.msra.mxu0 0.0
      %731 = vmatprep.subr.mxu0 0.0
      %732 = vmatpush1.msra.mxu0 0.0
      %733 = vmatprep.subr.mxu0 0.0
      %734 = vmatpush1.msra.mxu0 0.0
      %735 = vmatprep.subr.mxu0 0.0
      %736 = vmatpush1.msra.mxu0 0.0
      %737 = vmatprep.subr.mxu0 0.0
      %738 = vmatpush1.msra.mxu0 0.0
      %739 = vmatprep.subr.mxu0 0.0
      %740 = vmatpush1.msra.mxu0 %v607
      %741 = vmatprep.subr.mxu0 0.0
      %742 = vmatpush2.msra.mxu0 0.0
      %743 = vmatprep.subr.mxu0 0.0
      %744 = vmatpush2.msra.mxu0 0.0
      %745 = vmatprep.subr.mxu0 0.0
      %746 = vmatpush2.msra.mxu0 0.0
      %747 = vmatprep.subr.mxu0 0.0
      %748 = vmatpush2.msra.mxu0 0.0
      %749 = vmatprep.subr.mxu0 0.0
      %750 = vmatpush2.msra.mxu0 0.0
      %751 = vmatprep.subr.mxu0 0.0
      %752 = vmatpush2.msra.mxu0 0.0
      %753 = vmatprep.subr.mxu0 0.0
      %754 = vmatpush2.msra.mxu0 0.0
      %755 = vmatprep.subr.mxu0 0.0
      %756 = vmatpush2.msra.mxu0 0.0
      %757 = vmatprep.subr.mxu0 0.0
      %758 = vmatpush2.msra.mxu0 0.0
      %759 = vmatprep.subr.mxu0 0.0
      %760 = vmatpush2.msra.mxu0 0.0
      %761 = vmatprep.subr.mxu0 0.0
      %762 = vmatpush2.msra.mxu0 0.0
      %763 = vmatprep.subr.mxu0 0.0
      %764 = vmatpush2.msra.mxu0 0.0
      %765 = vmatprep.subr.mxu0 0.0
      %766 = vmatpush2.msra.mxu0 0.0
      %767 = vmatprep.subr.mxu0 0.0
      %768 = vmatpush2.msra.mxu0 0.0
      %769 = vmatprep.subr.mxu0 0.0
      %770 = vmatpush2.msra.mxu0 0.0
      %771 = vmatprep.subr.mxu0 0.0
      %772 = vmatpush2.msra.mxu0 0.0
      %773 = vmatprep.mubr.f32.mxu0 0.0
      %774 = vmatmul.mubr.f32.gmra.mxu0 %v707
      %v775 = vpop.f32.mrf.mxu0
      %v776 = vadd.f32 0.0, %v775
      %v777 = vpop.f32.mrf.mxu0
      %778 = vdwg.mxu0
      %v779 = vpack.c.bf16 %v776, %v776
      %v780 = vld [vmem:[%s7] sm:$0xf]
      %s781 = scalar_lea.vmem %s5, 16
      %v782 = vld [vmem:[%s781] sm:$0xf]
      %v783 = vld [vmem:[%s781 + $0x4] sm:$0xf]
      %v784 = vld [vmem:[%s781 + $0x8] sm:$0xf]
      %v785 = vld [vmem:[%s781 + $0xc] sm:$0xf]
      %s786 = scalar_lea.vmem %s6, 1
      %v787 = vld [vmem:[%s786] sm:$0x1]
      %v789 = vlaneseq
      %v790 = vshrl.u32 %v789, 7
      %v791 = vsub.s32 0, %v790
      %v792 = vrot.slane %v787, %v791
      %v798 = vunpack.c.l.b16 %v782
      %v799 = vunpack.c.l.b16 %v783
      %v800 = vunpack.c.l.b16 %v784
      %v801 = vunpack.c.l.b16 %v785
      %v802 = vpack.c.b16 %v799, %v798
      %v803 = vpack.c.b16 %v801, %v800
      %806 = vmatprep.subr.bf16.mxu0 0
      %807 = vmatpush1.bf16.msra.mxu0 0
      %808 = vmatprep.subr.bf16.mxu0 0
      %809 = vmatpush1.bf16.msra.mxu0 0
      %810 = vmatprep.subr.bf16.mxu0 0
      %811 = vmatpush1.bf16.msra.mxu0 0
      %812 = vmatprep.subr.bf16.mxu0 0
      %813 = vmatpush1.bf16.msra.mxu0 0
      %814 = vmatprep.subr.bf16.mxu0 0
      %815 = vmatpush1.bf16.msra.mxu0 0
      %816 = vmatprep.subr.bf16.mxu0 0
      %817 = vmatpush1.bf16.msra.mxu0 0
      %818 = vmatprep.subr.bf16.mxu0 0
      %819 = vmatpush1.bf16.msra.mxu0 %v803
      %820 = vmatprep.subr.bf16.mxu0 0
      %821 = vmatpush1.bf16.msra.mxu0 %v802
      %822 = vmatprep.subr.bf16.mxu0 0
      %823 = vmatpush2.bf16.msra.mxu0 0
      %824 = vmatprep.subr.bf16.mxu0 0
      %825 = vmatpush2.bf16.msra.mxu0 0
      %826 = vmatprep.subr.bf16.mxu0 0
      %827 = vmatpush2.bf16.msra.mxu0 0
      %828 = vmatprep.subr.bf16.mxu0 0
      %829 = vmatpush2.bf16.msra.mxu0 0
      %830 = vmatprep.subr.bf16.mxu0 0
      %831 = vmatpush2.bf16.msra.mxu0 0
      %832 = vmatprep.subr.bf16.mxu0 0
      %833 = vmatpush2.bf16.msra.mxu0 0
      %834 = vmatprep.subr.bf16.mxu0 0
      %835 = vmatpush2.bf16.msra.mxu0 0
      %836 = vmatprep.subr.bf16.mxu0 0
      %837 = vmatpush2.bf16.msra.mxu0 0
      %838 = vmatprep.mubr.bf16.mxu0 0
      %839 = vmatmul.mubr.bf16.gmra.mxu0 %v437
      %v840 = vpop.f32.mrf.mxu0
      %v841 = vadd.f32 %v792, %v840
      %v842 = vpop.f32.mrf.mxu0
      %v843 = vpop.f32.mrf.mxu0
      %v844 = vpop.f32.mrf.mxu0
      %845 = vdwg.mxu0
      %s846 = scalar_lea.vmem %s5, 80
      %v847 = vld [vmem:[%s846] sm:$0xf]
      %v848 = vld [vmem:[%s846 + $0x4] sm:$0xf]
      %v849 = vld [vmem:[%s846 + $0x8] sm:$0xf]
      %v850 = vld [vmem:[%s846 + $0xc] sm:$0xf]
      %s851 = scalar_lea.vmem %s6, 5
      %v852 = vld [vmem:[%s851] sm:$0x1]
      %v854 = vlaneseq
      %v855 = vshrl.u32 %v854, 7
      %v856 = vsub.s32 0, %v855
      %v857 = vrot.slane %v852, %v856
      %v863 = vunpack.c.l.b16 %v847
      %v864 = vunpack.c.l.b16 %v848
      %v865 = vunpack.c.l.b16 %v849
      %v866 = vunpack.c.l.b16 %v850
      %v867 = vpack.c.b16 %v864, %v863
      %v868 = vpack.c.b16 %v866, %v865
      %871 = vmatprep.subr.bf16.mxu0 0
      %872 = vmatpush1.bf16.msra.mxu0 0
      %873 = vmatprep.subr.bf16.mxu0 0
      %874 = vmatpush1.bf16.msra.mxu0 0
      %875 = vmatprep.subr.bf16.mxu0 0
      %876 = vmatpush1.bf16.msra.mxu0 0
      %877 = vmatprep.subr.bf16.mxu0 0
      %878 = vmatpush1.bf16.msra.mxu0 0
      %879 = vmatprep.subr.bf16.mxu0 0
      %880 = vmatpush1.bf16.msra.mxu0 0
      %881 = vmatprep.subr.bf16.mxu0 0
      %882 = vmatpush1.bf16.msra.mxu0 0
      %883 = vmatprep.subr.bf16.mxu0 0
      %884 = vmatpush1.bf16.msra.mxu0 %v868
      %885 = vmatprep.subr.bf16.mxu0 0
      %886 = vmatpush1.bf16.msra.mxu0 %v867
      %887 = vmatprep.subr.bf16.mxu0 0
      %888 = vmatpush2.bf16.msra.mxu0 0
      %889 = vmatprep.subr.bf16.mxu0 0
      %890 = vmatpush2.bf16.msra.mxu0 0
      %891 = vmatprep.subr.bf16.mxu0 0
      %892 = vmatpush2.bf16.msra.mxu0 0
      %893 = vmatprep.subr.bf16.mxu0 0
      %894 = vmatpush2.bf16.msra.mxu0 0
      %895 = vmatprep.subr.bf16.mxu0 0
      %896 = vmatpush2.bf16.msra.mxu0 0
      %897 = vmatprep.subr.bf16.mxu0 0
      %898 = vmatpush2.bf16.msra.mxu0 0
      %899 = vmatprep.subr.bf16.mxu0 0
      %900 = vmatpush2.bf16.msra.mxu0 0
      %901 = vmatprep.subr.bf16.mxu0 0
      %902 = vmatpush2.bf16.msra.mxu0 0
      %903 = vmatprep.mubr.bf16.mxu0 0
      %904 = vmatmul.mubr.bf16.gmra.mxu0 %v505
      %v905 = vpop.f32.mrf.mxu0
      %v906 = vadd.f32 %v857, %v905
      %v907 = vpop.f32.mrf.mxu0
      %v908 = vpop.f32.mrf.mxu0
      %v909 = vpop.f32.mrf.mxu0
      %910 = vdwg.mxu0
      %s911 = scalar_lea.vmem %s5, 144
      %v912 = vld [vmem:[%s911] sm:$0xf]
      %v913 = vld [vmem:[%s911 + $0x4] sm:$0xf]
      %v914 = vld [vmem:[%s911 + $0x8] sm:$0xf]
      %v915 = vld [vmem:[%s911 + $0xc] sm:$0xf]
      %s916 = scalar_lea.vmem %s6, 9
      %v917 = vld [vmem:[%s916] sm:$0x1]
      %v919 = vlaneseq
      %v920 = vshrl.u32 %v919, 7
      %v921 = vsub.s32 0, %v920
      %v922 = vrot.slane %v917, %v921
      %v928 = vunpack.c.l.b16 %v912
      %v929 = vunpack.c.l.b16 %v913
      %v930 = vunpack.c.l.b16 %v914
      %v931 = vunpack.c.l.b16 %v915
      %v932 = vpack.c.b16 %v929, %v928
      %v933 = vpack.c.b16 %v931, %v930
      %936 = vmatprep.subr.bf16.mxu0 0
      %937 = vmatpush1.bf16.msra.mxu0 0
      %938 = vmatprep.subr.bf16.mxu0 0
      %939 = vmatpush1.bf16.msra.mxu0 0
      %940 = vmatprep.subr.bf16.mxu0 0
      %941 = vmatpush1.bf16.msra.mxu0 0
      %942 = vmatprep.subr.bf16.mxu0 0
      %943 = vmatpush1.bf16.msra.mxu0 0
      %944 = vmatprep.subr.bf16.mxu0 0
      %945 = vmatpush1.bf16.msra.mxu0 0
      %946 = vmatprep.subr.bf16.mxu0 0
      %947 = vmatpush1.bf16.msra.mxu0 0
      %948 = vmatprep.subr.bf16.mxu0 0
      %949 = vmatpush1.bf16.msra.mxu0 %v933
      %950 = vmatprep.subr.bf16.mxu0 0
      %951 = vmatpush1.bf16.msra.mxu0 %v932
      %952 = vmatprep.subr.bf16.mxu0 0
      %953 = vmatpush2.bf16.msra.mxu0 0
      %954 = vmatprep.subr.bf16.mxu0 0
      %955 = vmatpush2.bf16.msra.mxu0 0
      %956 = vmatprep.subr.bf16.mxu0 0
      %957 = vmatpush2.bf16.msra.mxu0 0
      %958 = vmatprep.subr.bf16.mxu0 0
      %959 = vmatpush2.bf16.msra.mxu0 0
      %960 = vmatprep.subr.bf16.mxu0 0
      %961 = vmatpush2.bf16.msra.mxu0 0
      %962 = vmatprep.subr.bf16.mxu0 0
      %963 = vmatpush2.bf16.msra.mxu0 0
      %964 = vmatprep.subr.bf16.mxu0 0
      %965 = vmatpush2.bf16.msra.mxu0 0
      %966 = vmatprep.subr.bf16.mxu0 0
      %967 = vmatpush2.bf16.msra.mxu0 0
      %968 = vmatprep.mubr.bf16.mxu0 0
      %969 = vmatmul.mubr.bf16.gmra.mxu0 %v505
      %v970 = vpop.f32.mrf.mxu0
      %v971 = vadd.f32 %v922, %v970
      %v972 = vpop.f32.mrf.mxu0
      %v973 = vpop.f32.mrf.mxu0
      %v974 = vpop.f32.mrf.mxu0
      %975 = vdwg.mxu0
      %v977 = vsel %vm618, %v841, 0
      %v980 = vsel %vm618, %v906, 0
      %982 = vmatprep.subr.mxu0 0.0
      %983 = vmatpush1.xpose.msra.mxu0 0.0
      %984 = vmatprep.subr.mxu0 0.0
      %985 = vmatpush1.xpose.msra.mxu0 0.0
      %986 = vmatprep.subr.mxu0 0.0
      %987 = vmatpush1.xpose.msra.mxu0 0.0
      %988 = vmatprep.subr.mxu0 0.0
      %989 = vmatpush1.xpose.msra.mxu0 0.0
      %990 = vmatprep.subr.mxu0 0.0
      %991 = vmatpush1.xpose.msra.mxu0 0.0
      %992 = vmatprep.subr.mxu0 0.0
      %993 = vmatpush1.xpose.msra.mxu0 0.0
      %994 = vmatprep.subr.mxu0 0.0
      %995 = vmatpush1.xpose.msra.mxu0 0.0
      %996 = vmatprep.subr.mxu0 0.0
      %997 = vmatpush1.xpose.msra.mxu0 0.0
      %998 = vmatprep.subr.mxu0 0.0
      %999 = vmatpush1.xpose.msra.mxu0 0.0
      %1000 = vmatprep.subr.mxu0 0.0
      %1001 = vmatpush1.xpose.msra.mxu0 0.0
      %1002 = vmatprep.subr.mxu0 0.0
      %1003 = vmatpush1.xpose.msra.mxu0 0.0
      %1004 = vmatprep.subr.mxu0 0.0
      %1005 = vmatpush1.xpose.msra.mxu0 0.0
      %1006 = vmatprep.subr.mxu0 0.0
      %1007 = vmatpush1.xpose.msra.mxu0 0.0
      %1008 = vmatprep.subr.mxu0 0.0
      %1009 = vmatpush1.xpose.msra.mxu0 0.0
      %1010 = vmatprep.subr.mxu0 0.0
      %1011 = vmatpush1.xpose.msra.mxu0 0.0
      %1012 = vmatprep.subr.mxu0 0.0
      %1013 = vmatpush1.xpose.msra.mxu0 %v980
      %1014 = vmatprep.subr.mxu0 0.0
      %1015 = vmatpush2.xpose.msra.mxu0 0.0
      %1016 = vmatprep.subr.mxu0 0.0
      %1017 = vmatpush2.xpose.msra.mxu0 0.0
      %1018 = vmatprep.subr.mxu0 0.0
      %1019 = vmatpush2.xpose.msra.mxu0 0.0
      %1020 = vmatprep.subr.mxu0 0.0
      %1021 = vmatpush2.xpose.msra.mxu0 0.0
      %1022 = vmatprep.subr.mxu0 0.0
      %1023 = vmatpush2.xpose.msra.mxu0 0.0
      %1024 = vmatprep.subr.mxu0 0.0
      %1025 = vmatpush2.xpose.msra.mxu0 0.0
      %1026 = vmatprep.subr.mxu0 0.0
      %1027 = vmatpush2.xpose.msra.mxu0 0.0
      %1028 = vmatprep.subr.mxu0 0.0
      %1029 = vmatpush2.xpose.msra.mxu0 0.0
      %1030 = vmatprep.subr.mxu0 0.0
      %1031 = vmatpush2.xpose.msra.mxu0 0.0
      %1032 = vmatprep.subr.mxu0 0.0
      %1033 = vmatpush2.xpose.msra.mxu0 0.0
      %1034 = vmatprep.subr.mxu0 0.0
      %1035 = vmatpush2.xpose.msra.mxu0 0.0
      %1036 = vmatprep.subr.mxu0 0.0
      %1037 = vmatpush2.xpose.msra.mxu0 0.0
      %1038 = vmatprep.subr.mxu0 0.0
      %1039 = vmatpush2.xpose.msra.mxu0 0.0
      %1040 = vmatprep.subr.mxu0 0.0
      %1041 = vmatpush2.xpose.msra.mxu0 0.0
      %1042 = vmatprep.subr.mxu0 0.0
      %1043 = vmatpush2.xpose.msra.mxu0 0.0
      %1044 = vmatprep.subr.mxu0 0.0
      %1045 = vmatpush2.xpose.msra.mxu0 0.0
      %1046 = vmatprep.mubr.f32.mxu0 0.0
      %1047 = vmatmul.mubr.f32.gmra.mxu0 %v977
      %v1048 = vpop.f32.mrf.mxu0
      %v1049 = vadd.f32 %v616, %v1048
      %v1050 = vpop.f32.mrf.mxu0
      %1051 = vdwg.mxu0
      %v1052 = vsel %vm618, %v1049, -inf
      %1053 = vmax.xlane.f32.xlu0 %v1052
      %v1054 = vpop.xlane.xlu0 %1053
      %v1055 = vsub.f32 %v1049, %v1054
      %v1056 = vmul.f32 %v1055, 1.442695
      %v1057 = vpow.pop %v1056
      %v1058 = vsel %vm618, %v1057, 0.0
      %1059 = vadd.xlane.f32.xlu0 %v1058
      %v1060 = vpop.xlane.xlu0 %1059
      %v1061 = vrcp.pop %v1060
      %v1062 = vmul.f32 %v1057, %v1061
      %v1064 = vsel %vm618, %v1062, 0
      %1066 = vmatprep.subr.mxu0 0.0
      %1067 = vmatpush1.msra.mxu0 0.0
      %1068 = vmatprep.subr.mxu0 0.0
      %1069 = vmatpush1.msra.mxu0 0.0
      %1070 = vmatprep.subr.mxu0 0.0
      %1071 = vmatpush1.msra.mxu0 0.0
      %1072 = vmatprep.subr.mxu0 0.0
      %1073 = vmatpush1.msra.mxu0 0.0
      %1074 = vmatprep.subr.mxu0 0.0
      %1075 = vmatpush1.msra.mxu0 0.0
      %1076 = vmatprep.subr.mxu0 0.0
      %1077 = vmatpush1.msra.mxu0 0.0
      %1078 = vmatprep.subr.mxu0 0.0
      %1079 = vmatpush1.msra.mxu0 0.0
      %1080 = vmatprep.subr.mxu0 0.0
      %1081 = vmatpush1.msra.mxu0 0.0
      %1082 = vmatprep.subr.mxu0 0.0
      %1083 = vmatpush1.msra.mxu0 0.0
      %1084 = vmatprep.subr.mxu0 0.0
      %1085 = vmatpush1.msra.mxu0 0.0
      %1086 = vmatprep.subr.mxu0 0.0
      %1087 = vmatpush1.msra.mxu0 0.0
      %1088 = vmatprep.subr.mxu0 0.0
      %1089 = vmatpush1.msra.mxu0 0.0
      %1090 = vmatprep.subr.mxu0 0.0
      %1091 = vmatpush1.msra.mxu0 0.0
      %1092 = vmatprep.subr.mxu0 0.0
      %1093 = vmatpush1.msra.mxu0 0.0
      %1094 = vmatprep.subr.mxu0 0.0
      %1095 = vmatpush1.msra.mxu0 0.0
      %1096 = vmatprep.subr.mxu0 0.0
      %1097 = vmatpush1.msra.mxu0 %v971
      %1098 = vmatprep.subr.mxu0 0.0
      %1099 = vmatpush2.msra.mxu0 0.0
      %1100 = vmatprep.subr.mxu0 0.0
      %1101 = vmatpush2.msra.mxu0 0.0
      %1102 = vmatprep.subr.mxu0 0.0
      %1103 = vmatpush2.msra.mxu0 0.0
      %1104 = vmatprep.subr.mxu0 0.0
      %1105 = vmatpush2.msra.mxu0 0.0
      %1106 = vmatprep.subr.mxu0 0.0
      %1107 = vmatpush2.msra.mxu0 0.0
      %1108 = vmatprep.subr.mxu0 0.0
      %1109 = vmatpush2.msra.mxu0 0.0
      %1110 = vmatprep.subr.mxu0 0.0
      %1111 = vmatpush2.msra.mxu0 0.0
      %1112 = vmatprep.subr.mxu0 0.0
      %1113 = vmatpush2.msra.mxu0 0.0
      %1114 = vmatprep.subr.mxu0 0.0
      %1115 = vmatpush2.msra.mxu0 0.0
      %1116 = vmatprep.subr.mxu0 0.0
      %1117 = vmatpush2.msra.mxu0 0.0
      %1118 = vmatprep.subr.mxu0 0.0
      %1119 = vmatpush2.msra.mxu0 0.0
      %1120 = vmatprep.subr.mxu0 0.0
      %1121 = vmatpush2.msra.mxu0 0.0
      %1122 = vmatprep.subr.mxu0 0.0
      %1123 = vmatpush2.msra.mxu0 0.0
      %1124 = vmatprep.subr.mxu0 0.0
      %1125 = vmatpush2.msra.mxu0 0.0
      %1126 = vmatprep.subr.mxu0 0.0
      %1127 = vmatpush2.msra.mxu0 0.0
      %1128 = vmatprep.subr.mxu0 0.0
      %1129 = vmatpush2.msra.mxu0 0.0
      %1130 = vmatprep.mubr.f32.mxu0 0.0
      %1131 = vmatmul.mubr.f32.gmra.mxu0 %v1064
      %v1132 = vpop.f32.mrf.mxu0
      %v1133 = vadd.f32 0.0, %v1132
      %v1134 = vpop.f32.mrf.mxu0
      %1135 = vdwg.mxu0
      %v1136 = vpack.c.bf16 %v1133, %v1133
      %s1137 = scalar_lea.vmem %s7, 4
      %v1138 = vld [vmem:[%s1137] sm:$0xf]
      %v1140 = vsel %vm618, %v1136, 0
      %vm1142 = vcmask 1043456
      %v1144 = vsel %vm1142, %v1138, 0
      %1146 = vmatprep.subr.bf16.mxu0 0
      %1147 = vmatpush1.bf16.msra.mxu0 0
      %1148 = vmatprep.subr.bf16.mxu0 0
      %1149 = vmatpush1.bf16.msra.mxu0 0
      %1150 = vmatprep.subr.bf16.mxu0 0
      %1151 = vmatpush1.bf16.msra.mxu0 0
      %1152 = vmatprep.subr.bf16.mxu0 0
      %1153 = vmatpush1.bf16.msra.mxu0 0
      %1154 = vmatprep.subr.bf16.mxu0 0
      %1155 = vmatpush1.bf16.msra.mxu0 0
      %1156 = vmatprep.subr.bf16.mxu0 0
      %1157 = vmatpush1.bf16.msra.mxu0 0
      %1158 = vmatprep.subr.bf16.mxu0 0
      %1159 = vmatpush1.bf16.msra.mxu0 0
      %1160 = vmatprep.subr.bf16.mxu0 0
      %1161 = vmatpush1.bf16.msra.mxu0 %v1144
      %1162 = vmatprep.subr.bf16.mxu0 0
      %1163 = vmatpush2.bf16.msra.mxu0 0
      %1164 = vmatprep.subr.bf16.mxu0 0
      %1165 = vmatpush2.bf16.msra.mxu0 0
      %1166 = vmatprep.subr.bf16.mxu0 0
      %1167 = vmatpush2.bf16.msra.mxu0 0
      %1168 = vmatprep.subr.bf16.mxu0 0
      %1169 = vmatpush2.bf16.msra.mxu0 0
      %1170 = vmatprep.subr.bf16.mxu0 0
      %1171 = vmatpush2.bf16.msra.mxu0 0
      %1172 = vmatprep.subr.bf16.mxu0 0
      %1173 = vmatpush2.bf16.msra.mxu0 0
      %1174 = vmatprep.subr.bf16.mxu0 0
      %1175 = vmatpush2.bf16.msra.mxu0 0
      %1176 = vmatprep.subr.bf16.mxu0 0
      %1177 = vmatpush2.bf16.msra.mxu0 0
      %1178 = vmatprep.mubr.bf16.mxu0 0
      %1179 = vmatmul.mubr.bf16.gmra.mxu0 %v1140
      %v1180 = vpop.f32.mrf.mxu0
      %v1181 = vadd.f32 0.0, %v1180
      %v1182 = vpop.f32.mrf.mxu0
      %v1183 = vpop.f32.mrf.mxu0
      %v1184 = vpop.f32.mrf.mxu0
      %1185 = vdwg.mxu0
      %v1187 = vsel %vm618, %v779, 0
      %v1190 = vsel %vm1142, %v780, 0
      %1192 = vmatprep.subr.bf16.mxu0 0
      %1193 = vmatpush1.bf16.msra.mxu0 0
      %1194 = vmatprep.subr.bf16.mxu0 0
      %1195 = vmatpush1.bf16.msra.mxu0 0
      %1196 = vmatprep.subr.bf16.mxu0 0
      %1197 = vmatpush1.bf16.msra.mxu0 0
      %1198 = vmatprep.subr.bf16.mxu0 0
      %1199 = vmatpush1.bf16.msra.mxu0 0
      %1200 = vmatprep.subr.bf16.mxu0 0
      %1201 = vmatpush1.bf16.msra.mxu0 0
      %1202 = vmatprep.subr.bf16.mxu0 0
      %1203 = vmatpush1.bf16.msra.mxu0 0
      %1204 = vmatprep.subr.bf16.mxu0 0
      %1205 = vmatpush1.bf16.msra.mxu0 0
      %1206 = vmatprep.subr.bf16.mxu0 0
      %1207 = vmatpush1.bf16.msra.mxu0 %v1190
      %1208 = vmatprep.subr.bf16.mxu0 0
      %1209 = vmatpush2.bf16.msra.mxu0 0
      %1210 = vmatprep.subr.bf16.mxu0 0
      %1211 = vmatpush2.bf16.msra.mxu0 0
      %1212 = vmatprep.subr.bf16.mxu0 0
      %1213 = vmatpush2.bf16.msra.mxu0 0
      %1214 = vmatprep.subr.bf16.mxu0 0
      %1215 = vmatpush2.bf16.msra.mxu0 0
      %1216 = vmatprep.subr.bf16.mxu0 0
      %1217 = vmatpush2.bf16.msra.mxu0 0
      %1218 = vmatprep.subr.bf16.mxu0 0
      %1219 = vmatpush2.bf16.msra.mxu0 0
      %1220 = vmatprep.subr.bf16.mxu0 0
      %1221 = vmatpush2.bf16.msra.mxu0 0
      %1222 = vmatprep.subr.bf16.mxu0 0
      %1223 = vmatpush2.bf16.msra.mxu0 0
      %1224 = vmatprep.mubr.bf16.mxu0 0
      %1225 = vmatmul.mubr.bf16.gmra.mxu0 %v1187
      %v1226 = vpop.f32.mrf.mxu0
      %v1227 = vadd.f32 %v1181, %v1226
      %v1228 = vpop.f32.mrf.mxu0
      %v1229 = vpop.f32.mrf.mxu0
      %v1230 = vpop.f32.mrf.mxu0
      %1231 = vdwg.mxu0
      %s1232 = scalar_lea.vmem %s5, 32
      %v1233 = vld [vmem:[%s1232] sm:$0xf]
      %v1234 = vld [vmem:[%s1232 + $0x4] sm:$0xf]
      %v1235 = vld [vmem:[%s1232 + $0x8] sm:$0xf]
      %v1236 = vld [vmem:[%s1232 + $0xc] sm:$0xf]
      %s1237 = scalar_lea.vmem %s6, 2
      %v1238 = vld [vmem:[%s1237] sm:$0x1]
      %v1240 = vlaneseq
      %v1241 = vshrl.u32 %v1240, 7
      %v1242 = vsub.s32 0, %v1241
      %v1243 = vrot.slane %v1238, %v1242
      %v1249 = vunpack.c.l.b16 %v1233
      %v1250 = vunpack.c.l.b16 %v1234
      %v1251 = vunpack.c.l.b16 %v1235
      %v1252 = vunpack.c.l.b16 %v1236
      %v1253 = vpack.c.b16 %v1250, %v1249
      %v1254 = vpack.c.b16 %v1252, %v1251
      %1257 = vmatprep.subr.bf16.mxu0 0
      %1258 = vmatpush1.bf16.msra.mxu0 0
      %1259 = vmatprep.subr.bf16.mxu0 0
      %1260 = vmatpush1.bf16.msra.mxu0 0
      %1261 = vmatprep.subr.bf16.mxu0 0
      %1262 = vmatpush1.bf16.msra.mxu0 0
      %1263 = vmatprep.subr.bf16.mxu0 0
      %1264 = vmatpush1.bf16.msra.mxu0 0
      %1265 = vmatprep.subr.bf16.mxu0 0
      %1266 = vmatpush1.bf16.msra.mxu0 0
      %1267 = vmatprep.subr.bf16.mxu0 0
      %1268 = vmatpush1.bf16.msra.mxu0 0
      %1269 = vmatprep.subr.bf16.mxu0 0
      %1270 = vmatpush1.bf16.msra.mxu0 %v1254
      %1271 = vmatprep.subr.bf16.mxu0 0
      %1272 = vmatpush1.bf16.msra.mxu0 %v1253
      %1273 = vmatprep.subr.bf16.mxu0 0
      %1274 = vmatpush2.bf16.msra.mxu0 0
      %1275 = vmatprep.subr.bf16.mxu0 0
      %1276 = vmatpush2.bf16.msra.mxu0 0
      %1277 = vmatprep.subr.bf16.mxu0 0
      %1278 = vmatpush2.bf16.msra.mxu0 0
      %1279 = vmatprep.subr.bf16.mxu0 0
      %1280 = vmatpush2.bf16.msra.mxu0 0
      %1281 = vmatprep.subr.bf16.mxu0 0
      %1282 = vmatpush2.bf16.msra.mxu0 0
      %1283 = vmatprep.subr.bf16.mxu0 0
      %1284 = vmatpush2.bf16.msra.mxu0 0
      %1285 = vmatprep.subr.bf16.mxu0 0
      %1286 = vmatpush2.bf16.msra.mxu0 0
      %1287 = vmatprep.subr.bf16.mxu0 0
      %1288 = vmatpush2.bf16.msra.mxu0 0
      %1289 = vmatprep.mubr.bf16.mxu0 0
      %1290 = vmatmul.mubr.bf16.gmra.mxu0 %v437
      %v1291 = vpop.f32.mrf.mxu0
      %v1292 = vadd.f32 %v1243, %v1291
      %v1293 = vpop.f32.mrf.mxu0
      %v1294 = vpop.f32.mrf.mxu0
      %v1295 = vpop.f32.mrf.mxu0
      %1296 = vdwg.mxu0
      %s1297 = scalar_lea.vmem %s5, 96
      %v1298 = vld [vmem:[%s1297] sm:$0xf]
      %v1299 = vld [vmem:[%s1297 + $0x4] sm:$0xf]
      %v1300 = vld [vmem:[%s1297 + $0x8] sm:$0xf]
      %v1301 = vld [vmem:[%s1297 + $0xc] sm:$0xf]
      %s1302 = scalar_lea.vmem %s6, 6
      %v1303 = vld [vmem:[%s1302] sm:$0x1]
      %v1305 = vlaneseq
      %v1306 = vshrl.u32 %v1305, 7
      %v1307 = vsub.s32 0, %v1306
      %v1308 = vrot.slane %v1303, %v1307
      %v1314 = vunpack.c.l.b16 %v1298
      %v1315 = vunpack.c.l.b16 %v1299
      %v1316 = vunpack.c.l.b16 %v1300
      %v1317 = vunpack.c.l.b16 %v1301
      %v1318 = vpack.c.b16 %v1315, %v1314
      %v1319 = vpack.c.b16 %v1317, %v1316
      %1322 = vmatprep.subr.bf16.mxu0 0
      %1323 = vmatpush1.bf16.msra.mxu0 0
      %1324 = vmatprep.subr.bf16.mxu0 0
      %1325 = vmatpush1.bf16.msra.mxu0 0
      %1326 = vmatprep.subr.bf16.mxu0 0
      %1327 = vmatpush1.bf16.msra.mxu0 0
      %1328 = vmatprep.subr.bf16.mxu0 0
      %1329 = vmatpush1.bf16.msra.mxu0 0
      %1330 = vmatprep.subr.bf16.mxu0 0
      %1331 = vmatpush1.bf16.msra.mxu0 0
      %1332 = vmatprep.subr.bf16.mxu0 0
      %1333 = vmatpush1.bf16.msra.mxu0 0
      %1334 = vmatprep.subr.bf16.mxu0 0
      %1335 = vmatpush1.bf16.msra.mxu0 %v1319
      %1336 = vmatprep.subr.bf16.mxu0 0
      %1337 = vmatpush1.bf16.msra.mxu0 %v1318
      %1338 = vmatprep.subr.bf16.mxu0 0
      %1339 = vmatpush2.bf16.msra.mxu0 0
      %1340 = vmatprep.subr.bf16.mxu0 0
      %1341 = vmatpush2.bf16.msra.mxu0 0
      %1342 = vmatprep.subr.bf16.mxu0 0
      %1343 = vmatpush2.bf16.msra.mxu0 0
      %1344 = vmatprep.subr.bf16.mxu0 0
      %1345 = vmatpush2.bf16.msra.mxu0 0
      %1346 = vmatprep.subr.bf16.mxu0 0
      %1347 = vmatpush2.bf16.msra.mxu0 0
      %1348 = vmatprep.subr.bf16.mxu0 0
      %1349 = vmatpush2.bf16.msra.mxu0 0
      %1350 = vmatprep.subr.bf16.mxu0 0
      %1351 = vmatpush2.bf16.msra.mxu0 0
      %1352 = vmatprep.subr.bf16.mxu0 0
      %1353 = vmatpush2.bf16.msra.mxu0 0
      %1354 = vmatprep.mubr.bf16.mxu0 0
      %1355 = vmatmul.mubr.bf16.gmra.mxu0 %v505
      %v1356 = vpop.f32.mrf.mxu0
      %v1357 = vadd.f32 %v1308, %v1356
      %v1358 = vpop.f32.mrf.mxu0
      %v1359 = vpop.f32.mrf.mxu0
      %v1360 = vpop.f32.mrf.mxu0
      %1361 = vdwg.mxu0
      %s1362 = scalar_lea.vmem %s5, 160
      %v1363 = vld [vmem:[%s1362] sm:$0xf]
      %v1364 = vld [vmem:[%s1362 + $0x4] sm:$0xf]
      %v1365 = vld [vmem:[%s1362 + $0x8] sm:$0xf]
      %v1366 = vld [vmem:[%s1362 + $0xc] sm:$0xf]
      %s1367 = scalar_lea.vmem %s6, 10
      %v1368 = vld [vmem:[%s1367] sm:$0x1]
      %v1370 = vlaneseq
      %v1371 = vshrl.u32 %v1370, 7
      %v1372 = vsub.s32 0, %v1371
      %v1373 = vrot.slane %v1368, %v1372
      %v1379 = vunpack.c.l.b16 %v1363
      %v1380 = vunpack.c.l.b16 %v1364
      %v1381 = vunpack.c.l.b16 %v1365
      %v1382 = vunpack.c.l.b16 %v1366
      %v1383 = vpack.c.b16 %v1380, %v1379
      %v1384 = vpack.c.b16 %v1382, %v1381
      %1387 = vmatprep.subr.bf16.mxu0 0
      %1388 = vmatpush1.bf16.msra.mxu0 0
      %1389 = vmatprep.subr.bf16.mxu0 0
      %1390 = vmatpush1.bf16.msra.mxu0 0
      %1391 = vmatprep.subr.bf16.mxu0 0
      %1392 = vmatpush1.bf16.msra.mxu0 0
      %1393 = vmatprep.subr.bf16.mxu0 0
      %1394 = vmatpush1.bf16.msra.mxu0 0
      %1395 = vmatprep.subr.bf16.mxu0 0
      %1396 = vmatpush1.bf16.msra.mxu0 0
      %1397 = vmatprep.subr.bf16.mxu0 0
      %1398 = vmatpush1.bf16.msra.mxu0 0
      %1399 = vmatprep.subr.bf16.mxu0 0
      %1400 = vmatpush1.bf16.msra.mxu0 %v1384
      %1401 = vmatprep.subr.bf16.mxu0 0
      %1402 = vmatpush1.bf16.msra.mxu0 %v1383
      %1403 = vmatprep.subr.bf16.mxu0 0
      %1404 = vmatpush2.bf16.msra.mxu0 0
      %1405 = vmatprep.subr.bf16.mxu0 0
      %1406 = vmatpush2.bf16.msra.mxu0 0
      %1407 = vmatprep.subr.bf16.mxu0 0
      %1408 = vmatpush2.bf16.msra.mxu0 0
      %1409 = vmatprep.subr.bf16.mxu0 0
      %1410 = vmatpush2.bf16.msra.mxu0 0
      %1411 = vmatprep.subr.bf16.mxu0 0
      %1412 = vmatpush2.bf16.msra.mxu0 0
      %1413 = vmatprep.subr.bf16.mxu0 0
      %1414 = vmatpush2.bf16.msra.mxu0 0
      %1415 = vmatprep.subr.bf16.mxu0 0
      %1416 = vmatpush2.bf16.msra.mxu0 0
      %1417 = vmatprep.subr.bf16.mxu0 0
      %1418 = vmatpush2.bf16.msra.mxu0 0
      %1419 = vmatprep.mubr.bf16.mxu0 0
      %1420 = vmatmul.mubr.bf16.gmra.mxu0 %v505
      %v1421 = vpop.f32.mrf.mxu0
      %v1422 = vadd.f32 %v1373, %v1421
      %v1423 = vpop.f32.mrf.mxu0
      %v1424 = vpop.f32.mrf.mxu0
      %v1425 = vpop.f32.mrf.mxu0
      %1426 = vdwg.mxu0
      %v1428 = vsel %vm618, %v1292, 0
      %v1431 = vsel %vm618, %v1357, 0
      %1433 = vmatprep.subr.mxu0 0.0
      %1434 = vmatpush1.xpose.msra.mxu0 0.0
      %1435 = vmatprep.subr.mxu0 0.0
      %1436 = vmatpush1.xpose.msra.mxu0 0.0
      %1437 = vmatprep.subr.mxu0 0.0
      %1438 = vmatpush1.xpose.msra.mxu0 0.0
      %1439 = vmatprep.subr.mxu0 0.0
      %1440 = vmatpush1.xpose.msra.mxu0 0.0
      %1441 = vmatprep.subr.mxu0 0.0
      %1442 = vmatpush1.xpose.msra.mxu0 0.0
      %1443 = vmatprep.subr.mxu0 0.0
      %1444 = vmatpush1.xpose.msra.mxu0 0.0
      %1445 = vmatprep.subr.mxu0 0.0
      %1446 = vmatpush1.xpose.msra.mxu0 0.0
      %1447 = vmatprep.subr.mxu0 0.0
      %1448 = vmatpush1.xpose.msra.mxu0 0.0
      %1449 = vmatprep.subr.mxu0 0.0
      %1450 = vmatpush1.xpose.msra.mxu0 0.0
      %1451 = vmatprep.subr.mxu0 0.0
      %1452 = vmatpush1.xpose.msra.mxu0 0.0
      %1453 = vmatprep.subr.mxu0 0.0
      %1454 = vmatpush1.xpose.msra.mxu0 0.0
      %1455 = vmatprep.subr.mxu0 0.0
      %1456 = vmatpush1.xpose.msra.mxu0 0.0
      %1457 = vmatprep.subr.mxu0 0.0
      %1458 = vmatpush1.xpose.msra.mxu0 0.0
      %1459 = vmatprep.subr.mxu0 0.0
      %1460 = vmatpush1.xpose.msra.mxu0 0.0
      %1461 = vmatprep.subr.mxu0 0.0
      %1462 = vmatpush1.xpose.msra.mxu0 0.0
      %1463 = vmatprep.subr.mxu0 0.0
      %1464 = vmatpush1.xpose.msra.mxu0 %v1431
      %1465 = vmatprep.subr.mxu0 0.0
      %1466 = vmatpush2.xpose.msra.mxu0 0.0
      %1467 = vmatprep.subr.mxu0 0.0
      %1468 = vmatpush2.xpose.msra.mxu0 0.0
      %1469 = vmatprep.subr.mxu0 0.0
      %1470 = vmatpush2.xpose.msra.mxu0 0.0
      %1471 = vmatprep.subr.mxu0 0.0
      %1472 = vmatpush2.xpose.msra.mxu0 0.0
      %1473 = vmatprep.subr.mxu0 0.0
      %1474 = vmatpush2.xpose.msra.mxu0 0.0
      %1475 = vmatprep.subr.mxu0 0.0
      %1476 = vmatpush2.xpose.msra.mxu0 0.0
      %1477 = vmatprep.subr.mxu0 0.0
      %1478 = vmatpush2.xpose.msra.mxu0 0.0
      %1479 = vmatprep.subr.mxu0 0.0
      %1480 = vmatpush2.xpose.msra.mxu0 0.0
      %1481 = vmatprep.subr.mxu0 0.0
      %1482 = vmatpush2.xpose.msra.mxu0 0.0
      %1483 = vmatprep.subr.mxu0 0.0
      %1484 = vmatpush2.xpose.msra.mxu0 0.0
      %1485 = vmatprep.subr.mxu0 0.0
      %1486 = vmatpush2.xpose.msra.mxu0 0.0
      %1487 = vmatprep.subr.mxu0 0.0
      %1488 = vmatpush2.xpose.msra.mxu0 0.0
      %1489 = vmatprep.subr.mxu0 0.0
      %1490 = vmatpush2.xpose.msra.mxu0 0.0
      %1491 = vmatprep.subr.mxu0 0.0
      %1492 = vmatpush2.xpose.msra.mxu0 0.0
      %1493 = vmatprep.subr.mxu0 0.0
      %1494 = vmatpush2.xpose.msra.mxu0 0.0
      %1495 = vmatprep.subr.mxu0 0.0
      %1496 = vmatpush2.xpose.msra.mxu0 0.0
      %1497 = vmatprep.mubr.f32.mxu0 0.0
      %1498 = vmatmul.mubr.f32.gmra.mxu0 %v1428
      %v1499 = vpop.f32.mrf.mxu0
      %v1500 = vadd.f32 %v616, %v1499
      %v1501 = vpop.f32.mrf.mxu0
      %1502 = vdwg.mxu0
      %v1503 = vsel %vm618, %v1500, -inf
      %1504 = vmax.xlane.f32.xlu0 %v1503
      %v1505 = vpop.xlane.xlu0 %1504
      %v1506 = vsub.f32 %v1500, %v1505
      %v1507 = vmul.f32 %v1506, 1.442695
      %v1508 = vpow.pop %v1507
      %v1509 = vsel %vm618, %v1508, 0.0
      %1510 = vadd.xlane.f32.xlu0 %v1509
      %v1511 = vpop.xlane.xlu0 %1510
      %v1512 = vrcp.pop %v1511
      %v1513 = vmul.f32 %v1508, %v1512
      %v1515 = vsel %vm618, %v1513, 0
      %1517 = vmatprep.subr.mxu0 0.0
      %1518 = vmatpush1.msra.mxu0 0.0
      %1519 = vmatprep.subr.mxu0 0.0
      %1520 = vmatpush1.msra.mxu0 0.0
      %1521 = vmatprep.subr.mxu0 0.0
      %1522 = vmatpush1.msra.mxu0 0.0
      %1523 = vmatprep.subr.mxu0 0.0
      %1524 = vmatpush1.msra.mxu0 0.0
      %1525 = vmatprep.subr.mxu0 0.0
      %1526 = vmatpush1.msra.mxu0 0.0
      %1527 = vmatprep.subr.mxu0 0.0
      %1528 = vmatpush1.msra.mxu0 0.0
      %1529 = vmatprep.subr.mxu0 0.0
      %1530 = vmatpush1.msra.mxu0 0.0
      %1531 = vmatprep.subr.mxu0 0.0
      %1532 = vmatpush1.msra.mxu0 0.0
      %1533 = vmatprep.subr.mxu0 0.0
      %1534 = vmatpush1.msra.mxu0 0.0
      %1535 = vmatprep.subr.mxu0 0.0
      %1536 = vmatpush1.msra.mxu0 0.0
      %1537 = vmatprep.subr.mxu0 0.0
      %1538 = vmatpush1.msra.mxu0 0.0
      %1539 = vmatprep.subr.mxu0 0.0
      %1540 = vmatpush1.msra.mxu0 0.0
      %1541 = vmatprep.subr.mxu0 0.0
      %1542 = vmatpush1.msra.mxu0 0.0
      %1543 = vmatprep.subr.mxu0 0.0
      %1544 = vmatpush1.msra.mxu0 0.0
      %1545 = vmatprep.subr.mxu0 0.0
      %1546 = vmatpush1.msra.mxu0 0.0
      %1547 = vmatprep.subr.mxu0 0.0
      %1548 = vmatpush1.msra.mxu0 %v1422
      %1549 = vmatprep.subr.mxu0 0.0
      %1550 = vmatpush2.msra.mxu0 0.0
      %1551 = vmatprep.subr.mxu0 0.0
      %1552 = vmatpush2.msra.mxu0 0.0
      %1553 = vmatprep.subr.mxu0 0.0
      %1554 = vmatpush2.msra.mxu0 0.0
      %1555 = vmatprep.subr.mxu0 0.0
      %1556 = vmatpush2.msra.mxu0 0.0
      %1557 = vmatprep.subr.mxu0 0.0
      %1558 = vmatpush2.msra.mxu0 0.0
      %1559 = vmatprep.subr.mxu0 0.0
      %1560 = vmatpush2.msra.mxu0 0.0
      %1561 = vmatprep.subr.mxu0 0.0
      %1562 = vmatpush2.msra.mxu0 0.0
      %1563 = vmatprep.subr.mxu0 0.0
      %1564 = vmatpush2.msra.mxu0 0.0
      %1565 = vmatprep.subr.mxu0 0.0
      %1566 = vmatpush2.msra.mxu0 0.0
      %1567 = vmatprep.subr.mxu0 0.0
      %1568 = vmatpush2.msra.mxu0 0.0
      %1569 = vmatprep.subr.mxu0 0.0
      %1570 = vmatpush2.msra.mxu0 0.0
      %1571 = vmatprep.subr.mxu0 0.0
      %1572 = vmatpush2.msra.mxu0 0.0
      %1573 = vmatprep.subr.mxu0 0.0
      %1574 = vmatpush2.msra.mxu0 0.0
      %1575 = vmatprep.subr.mxu0 0.0
      %1576 = vmatpush2.msra.mxu0 0.0
      %1577 = vmatprep.subr.mxu0 0.0
      %1578 = vmatpush2.msra.mxu0 0.0
      %1579 = vmatprep.subr.mxu0 0.0
      %1580 = vmatpush2.msra.mxu0 0.0
      %1581 = vmatprep.mubr.f32.mxu0 0.0
      %1582 = vmatmul.mubr.f32.gmra.mxu0 %v1515
      %v1583 = vpop.f32.mrf.mxu0
      %v1584 = vadd.f32 0.0, %v1583
      %v1585 = vpop.f32.mrf.mxu0
      %1586 = vdwg.mxu0
      %v1587 = vpack.c.bf16 %v1584, %v1584
      %s1588 = scalar_lea.vmem %s7, 8
      %v1589 = vld [vmem:[%s1588] sm:$0xf]
      %v1591 = vsel %vm618, %v1587, 0
      %v1594 = vsel %vm1142, %v1589, 0
      %1596 = vmatprep.subr.bf16.mxu0 0
      %1597 = vmatpush1.bf16.msra.mxu0 0
      %1598 = vmatprep.subr.bf16.mxu0 0
      %1599 = vmatpush1.bf16.msra.mxu0 0
      %1600 = vmatprep.subr.bf16.mxu0 0
      %1601 = vmatpush1.bf16.msra.mxu0 0
      %1602 = vmatprep.subr.bf16.mxu0 0
      %1603 = vmatpush1.bf16.msra.mxu0 0
      %1604 = vmatprep.subr.bf16.mxu0 0
      %1605 = vmatpush1.bf16.msra.mxu0 0
      %1606 = vmatprep.subr.bf16.mxu0 0
      %1607 = vmatpush1.bf16.msra.mxu0 0
      %1608 = vmatprep.subr.bf16.mxu0 0
      %1609 = vmatpush1.bf16.msra.mxu0 0
      %1610 = vmatprep.subr.bf16.mxu0 0
      %1611 = vmatpush1.bf16.msra.mxu0 %v1594
      %1612 = vmatprep.subr.bf16.mxu0 0
      %1613 = vmatpush2.bf16.msra.mxu0 0
      %1614 = vmatprep.subr.bf16.mxu0 0
      %1615 = vmatpush2.bf16.msra.mxu0 0
      %1616 = vmatprep.subr.bf16.mxu0 0
      %1617 = vmatpush2.bf16.msra.mxu0 0
      %1618 = vmatprep.subr.bf16.mxu0 0
      %1619 = vmatpush2.bf16.msra.mxu0 0
      %1620 = vmatprep.subr.bf16.mxu0 0
      %1621 = vmatpush2.bf16.msra.mxu0 0
      %1622 = vmatprep.subr.bf16.mxu0 0
      %1623 = vmatpush2.bf16.msra.mxu0 0
      %1624 = vmatprep.subr.bf16.mxu0 0
      %1625 = vmatpush2.bf16.msra.mxu0 0
      %1626 = vmatprep.subr.bf16.mxu0 0
      %1627 = vmatpush2.bf16.msra.mxu0 0
      %1628 = vmatprep.mubr.bf16.mxu0 0
      %1629 = vmatmul.mubr.bf16.gmra.mxu0 %v1591
      %v1630 = vpop.f32.mrf.mxu0
      %v1631 = vadd.f32 0.0, %v1630
      %v1632 = vpop.f32.mrf.mxu0
      %v1633 = vpop.f32.mrf.mxu0
      %v1634 = vpop.f32.mrf.mxu0
      %1635 = vdwg.mxu0
      %v1636 = vadd.f32 %v1227, %v1631
      %s1637 = scalar_lea.vmem %s5, 48
      %v1638 = vld [vmem:[%s1637] sm:$0xf]
      %v1639 = vld [vmem:[%s1637 + $0x4] sm:$0xf]
      %v1640 = vld [vmem:[%s1637 + $0x8] sm:$0xf]
      %v1641 = vld [vmem:[%s1637 + $0xc] sm:$0xf]
      %s1642 = scalar_lea.vmem %s6, 3
      %v1643 = vld [vmem:[%s1642] sm:$0x1]
      %v1645 = vlaneseq
      %v1646 = vshrl.u32 %v1645, 7
      %v1647 = vsub.s32 0, %v1646
      %v1648 = vrot.slane %v1643, %v1647
      %v1654 = vunpack.c.l.b16 %v1638
      %v1655 = vunpack.c.l.b16 %v1639
      %v1656 = vunpack.c.l.b16 %v1640
      %v1657 = vunpack.c.l.b16 %v1641
      %v1658 = vpack.c.b16 %v1655, %v1654
      %v1659 = vpack.c.b16 %v1657, %v1656
      %1662 = vmatprep.subr.bf16.mxu0 0
      %1663 = vmatpush1.bf16.msra.mxu0 0
      %1664 = vmatprep.subr.bf16.mxu0 0
      %1665 = vmatpush1.bf16.msra.mxu0 0
      %1666 = vmatprep.subr.bf16.mxu0 0
      %1667 = vmatpush1.bf16.msra.mxu0 0
      %1668 = vmatprep.subr.bf16.mxu0 0
      %1669 = vmatpush1.bf16.msra.mxu0 0
      %1670 = vmatprep.subr.bf16.mxu0 0
      %1671 = vmatpush1.bf16.msra.mxu0 0
      %1672 = vmatprep.subr.bf16.mxu0 0
      %1673 = vmatpush1.bf16.msra.mxu0 0
      %1674 = vmatprep.subr.bf16.mxu0 0
      %1675 = vmatpush1.bf16.msra.mxu0 %v1659
      %1676 = vmatprep.subr.bf16.mxu0 0
      %1677 = vmatpush1.bf16.msra.mxu0 %v1658
      %1678 = vmatprep.subr.bf16.mxu0 0
      %1679 = vmatpush2.bf16.msra.mxu0 0
      %1680 = vmatprep.subr.bf16.mxu0 0
      %1681 = vmatpush2.bf16.msra.mxu0 0
      %1682 = vmatprep.subr.bf16.mxu0 0
      %1683 = vmatpush2.bf16.msra.mxu0 0
      %1684 = vmatprep.subr.bf16.mxu0 0
      %1685 = vmatpush2.bf16.msra.mxu0 0
      %1686 = vmatprep.subr.bf16.mxu0 0
      %1687 = vmatpush2.bf16.msra.mxu0 0
      %1688 = vmatprep.subr.bf16.mxu0 0
      %1689 = vmatpush2.bf16.msra.mxu0 0
      %1690 = vmatprep.subr.bf16.mxu0 0
      %1691 = vmatpush2.bf16.msra.mxu0 0
      %1692 = vmatprep.subr.bf16.mxu0 0
      %1693 = vmatpush2.bf16.msra.mxu0 0
      %1694 = vmatprep.mubr.bf16.mxu0 0
      %1695 = vmatmul.mubr.bf16.gmra.mxu0 %v437
      %v1696 = vpop.f32.mrf.mxu0
      %v1697 = vadd.f32 %v1648, %v1696
      %v1698 = vpop.f32.mrf.mxu0
      %v1699 = vpop.f32.mrf.mxu0
      %v1700 = vpop.f32.mrf.mxu0
      %1701 = vdwg.mxu0
      %s1702 = scalar_lea.vmem %s5, 112
      %v1703 = vld [vmem:[%s1702] sm:$0xf]
      %v1704 = vld [vmem:[%s1702 + $0x4] sm:$0xf]
      %v1705 = vld [vmem:[%s1702 + $0x8] sm:$0xf]
      %v1706 = vld [vmem:[%s1702 + $0xc] sm:$0xf]
      %s1707 = scalar_lea.vmem %s6, 7
      %v1708 = vld [vmem:[%s1707] sm:$0x1]
      %v1710 = vlaneseq
      %v1711 = vshrl.u32 %v1710, 7
      %v1712 = vsub.s32 0, %v1711
      %v1713 = vrot.slane %v1708, %v1712
      %v1719 = vunpack.c.l.b16 %v1703
      %v1720 = vunpack.c.l.b16 %v1704
      %v1721 = vunpack.c.l.b16 %v1705
      %v1722 = vunpack.c.l.b16 %v1706
      %v1723 = vpack.c.b16 %v1720, %v1719
      %v1724 = vpack.c.b16 %v1722, %v1721
      %1727 = vmatprep.subr.bf16.mxu0 0
      %1728 = vmatpush1.bf16.msra.mxu0 0
      %1729 = vmatprep.subr.bf16.mxu0 0
      %1730 = vmatpush1.bf16.msra.mxu0 0
      %1731 = vmatprep.subr.bf16.mxu0 0
      %1732 = vmatpush1.bf16.msra.mxu0 0
      %1733 = vmatprep.subr.bf16.mxu0 0
      %1734 = vmatpush1.bf16.msra.mxu0 0
      %1735 = vmatprep.subr.bf16.mxu0 0
      %1736 = vmatpush1.bf16.msra.mxu0 0
      %1737 = vmatprep.subr.bf16.mxu0 0
      %1738 = vmatpush1.bf16.msra.mxu0 0
      %1739 = vmatprep.subr.bf16.mxu0 0
      %1740 = vmatpush1.bf16.msra.mxu0 %v1724
      %1741 = vmatprep.subr.bf16.mxu0 0
      %1742 = vmatpush1.bf16.msra.mxu0 %v1723
      %1743 = vmatprep.subr.bf16.mxu0 0
      %1744 = vmatpush2.bf16.msra.mxu0 0
      %1745 = vmatprep.subr.bf16.mxu0 0
      %1746 = vmatpush2.bf16.msra.mxu0 0
      %1747 = vmatprep.subr.bf16.mxu0 0
      %1748 = vmatpush2.bf16.msra.mxu0 0
      %1749 = vmatprep.subr.bf16.mxu0 0
      %1750 = vmatpush2.bf16.msra.mxu0 0
      %1751 = vmatprep.subr.bf16.mxu0 0
      %1752 = vmatpush2.bf16.msra.mxu0 0
      %1753 = vmatprep.subr.bf16.mxu0 0
      %1754 = vmatpush2.bf16.msra.mxu0 0
      %1755 = vmatprep.subr.bf16.mxu0 0
      %1756 = vmatpush2.bf16.msra.mxu0 0
      %1757 = vmatprep.subr.bf16.mxu0 0
      %1758 = vmatpush2.bf16.msra.mxu0 0
      %1759 = vmatprep.mubr.bf16.mxu0 0
      %1760 = vmatmul.mubr.bf16.gmra.mxu0 %v505
      %v1761 = vpop.f32.mrf.mxu0
      %v1762 = vadd.f32 %v1713, %v1761
      %v1763 = vpop.f32.mrf.mxu0
      %v1764 = vpop.f32.mrf.mxu0
      %v1765 = vpop.f32.mrf.mxu0
      %1766 = vdwg.mxu0
      %s1767 = scalar_lea.vmem %s5, 176
      %v1768 = vld [vmem:[%s1767] sm:$0xf]
      %v1769 = vld [vmem:[%s1767 + $0x4] sm:$0xf]
      %v1770 = vld [vmem:[%s1767 + $0x8] sm:$0xf]
      %v1771 = vld [vmem:[%s1767 + $0xc] sm:$0xf]
      %s1772 = scalar_lea.vmem %s6, 11
      %v1773 = vld [vmem:[%s1772] sm:$0x1]
      %v1775 = vlaneseq
      %v1776 = vshrl.u32 %v1775, 7
      %v1777 = vsub.s32 0, %v1776
      %v1778 = vrot.slane %v1773, %v1777
      %v1784 = vunpack.c.l.b16 %v1768
      %v1785 = vunpack.c.l.b16 %v1769
      %v1786 = vunpack.c.l.b16 %v1770
      %v1787 = vunpack.c.l.b16 %v1771
      %v1788 = vpack.c.b16 %v1785, %v1784
      %v1789 = vpack.c.b16 %v1787, %v1786
      %1792 = vmatprep.subr.bf16.mxu0 0
      %1793 = vmatpush1.bf16.msra.mxu0 0
      %1794 = vmatprep.subr.bf16.mxu0 0
      %1795 = vmatpush1.bf16.msra.mxu0 0
      %1796 = vmatprep.subr.bf16.mxu0 0
      %1797 = vmatpush1.bf16.msra.mxu0 0
      %1798 = vmatprep.subr.bf16.mxu0 0
      %1799 = vmatpush1.bf16.msra.mxu0 0
      %1800 = vmatprep.subr.bf16.mxu0 0
      %1801 = vmatpush1.bf16.msra.mxu0 0
      %1802 = vmatprep.subr.bf16.mxu0 0
      %1803 = vmatpush1.bf16.msra.mxu0 0
      %1804 = vmatprep.subr.bf16.mxu0 0
      %1805 = vmatpush1.bf16.msra.mxu0 %v1789
      %1806 = vmatprep.subr.bf16.mxu0 0
      %1807 = vmatpush1.bf16.msra.mxu0 %v1788
      %1808 = vmatprep.subr.bf16.mxu0 0
      %1809 = vmatpush2.bf16.msra.mxu0 0
      %1810 = vmatprep.subr.bf16.mxu0 0
      %1811 = vmatpush2.bf16.msra.mxu0 0
      %1812 = vmatprep.subr.bf16.mxu0 0
      %1813 = vmatpush2.bf16.msra.mxu0 0
      %1814 = vmatprep.subr.bf16.mxu0 0
      %1815 = vmatpush2.bf16.msra.mxu0 0
      %1816 = vmatprep.subr.bf16.mxu0 0
      %1817 = vmatpush2.bf16.msra.mxu0 0
      %1818 = vmatprep.subr.bf16.mxu0 0
      %1819 = vmatpush2.bf16.msra.mxu0 0
      %1820 = vmatprep.subr.bf16.mxu0 0
      %1821 = vmatpush2.bf16.msra.mxu0 0
      %1822 = vmatprep.subr.bf16.mxu0 0
      %1823 = vmatpush2.bf16.msra.mxu0 0
      %1824 = vmatprep.mubr.bf16.mxu0 0
      %1825 = vmatmul.mubr.bf16.gmra.mxu0 %v505
      %v1826 = vpop.f32.mrf.mxu0
      %v1827 = vadd.f32 %v1778, %v1826
      %v1828 = vpop.f32.mrf.mxu0
      %v1829 = vpop.f32.mrf.mxu0
      %v1830 = vpop.f32.mrf.mxu0
      %1831 = vdwg.mxu0
      %v1833 = vsel %vm618, %v1697, 0
      %v1836 = vsel %vm618, %v1762, 0
      %1838 = vmatprep.subr.mxu0 0.0
      %1839 = vmatpush1.xpose.msra.mxu0 0.0
      %1840 = vmatprep.subr.mxu0 0.0
      %1841 = vmatpush1.xpose.msra.mxu0 0.0
      %1842 = vmatprep.subr.mxu0 0.0
      %1843 = vmatpush1.xpose.msra.mxu0 0.0
      %1844 = vmatprep.subr.mxu0 0.0
      %1845 = vmatpush1.xpose.msra.mxu0 0.0
      %1846 = vmatprep.subr.mxu0 0.0
      %1847 = vmatpush1.xpose.msra.mxu0 0.0
      %1848 = vmatprep.subr.mxu0 0.0
      %1849 = vmatpush1.xpose.msra.mxu0 0.0
      %1850 = vmatprep.subr.mxu0 0.0
      %1851 = vmatpush1.xpose.msra.mxu0 0.0
      %1852 = vmatprep.subr.mxu0 0.0
      %1853 = vmatpush1.xpose.msra.mxu0 0.0
      %1854 = vmatprep.subr.mxu0 0.0
      %1855 = vmatpush1.xpose.msra.mxu0 0.0
      %1856 = vmatprep.subr.mxu0 0.0
      %1857 = vmatpush1.xpose.msra.mxu0 0.0
      %1858 = vmatprep.subr.mxu0 0.0
      %1859 = vmatpush1.xpose.msra.mxu0 0.0
      %1860 = vmatprep.subr.mxu0 0.0
      %1861 = vmatpush1.xpose.msra.mxu0 0.0
      %1862 = vmatprep.subr.mxu0 0.0
      %1863 = vmatpush1.xpose.msra.mxu0 0.0
      %1864 = vmatprep.subr.mxu0 0.0
      %1865 = vmatpush1.xpose.msra.mxu0 0.0
      %1866 = vmatprep.subr.mxu0 0.0
      %1867 = vmatpush1.xpose.msra.mxu0 0.0
      %1868 = vmatprep.subr.mxu0 0.0
      %1869 = vmatpush1.xpose.msra.mxu0 %v1836
      %1870 = vmatprep.subr.mxu0 0.0
      %1871 = vmatpush2.xpose.msra.mxu0 0.0
      %1872 = vmatprep.subr.mxu0 0.0
      %1873 = vmatpush2.xpose.msra.mxu0 0.0
      %1874 = vmatprep.subr.mxu0 0.0
      %1875 = vmatpush2.xpose.msra.mxu0 0.0
      %1876 = vmatprep.subr.mxu0 0.0
      %1877 = vmatpush2.xpose.msra.mxu0 0.0
      %1878 = vmatprep.subr.mxu0 0.0
      %1879 = vmatpush2.xpose.msra.mxu0 0.0
      %1880 = vmatprep.subr.mxu0 0.0
      %1881 = vmatpush2.xpose.msra.mxu0 0.0
      %1882 = vmatprep.subr.mxu0 0.0
      %1883 = vmatpush2.xpose.msra.mxu0 0.0
      %1884 = vmatprep.subr.mxu0 0.0
      %1885 = vmatpush2.xpose.msra.mxu0 0.0
      %1886 = vmatprep.subr.mxu0 0.0
      %1887 = vmatpush2.xpose.msra.mxu0 0.0
      %1888 = vmatprep.subr.mxu0 0.0
      %1889 = vmatpush2.xpose.msra.mxu0 0.0
      %1890 = vmatprep.subr.mxu0 0.0
      %1891 = vmatpush2.xpose.msra.mxu0 0.0
      %1892 = vmatprep.subr.mxu0 0.0
      %1893 = vmatpush2.xpose.msra.mxu0 0.0
      %1894 = vmatprep.subr.mxu0 0.0
      %1895 = vmatpush2.xpose.msra.mxu0 0.0
      %1896 = vmatprep.subr.mxu0 0.0
      %1897 = vmatpush2.xpose.msra.mxu0 0.0
      %1898 = vmatprep.subr.mxu0 0.0
      %1899 = vmatpush2.xpose.msra.mxu0 0.0
      %1900 = vmatprep.subr.mxu0 0.0
      %1901 = vmatpush2.xpose.msra.mxu0 0.0
      %1902 = vmatprep.mubr.f32.mxu0 0.0
      %1903 = vmatmul.mubr.f32.gmra.mxu0 %v1833
      %v1904 = vpop.f32.mrf.mxu0
      %v1905 = vadd.f32 %v616, %v1904
      %v1906 = vpop.f32.mrf.mxu0
      %1907 = vdwg.mxu0
      %v1908 = vsel %vm618, %v1905, -inf
      %1909 = vmax.xlane.f32.xlu0 %v1908
      %v1910 = vpop.xlane.xlu0 %1909
      %v1911 = vsub.f32 %v1905, %v1910
      %v1912 = vmul.f32 %v1911, 1.442695
      %v1913 = vpow.pop %v1912
      %v1914 = vsel %vm618, %v1913, 0.0
      %1915 = vadd.xlane.f32.xlu0 %v1914
      %v1916 = vpop.xlane.xlu0 %1915
      %v1917 = vrcp.pop %v1916
      %v1918 = vmul.f32 %v1913, %v1917
      %v1920 = vsel %vm618, %v1918, 0
      %1922 = vmatprep.subr.mxu0 0.0
      %1923 = vmatpush1.msra.mxu0 0.0
      %1924 = vmatprep.subr.mxu0 0.0
      %1925 = vmatpush1.msra.mxu0 0.0
      %1926 = vmatprep.subr.mxu0 0.0
      %1927 = vmatpush1.msra.mxu0 0.0
      %1928 = vmatprep.subr.mxu0 0.0
      %1929 = vmatpush1.msra.mxu0 0.0
      %1930 = vmatprep.subr.mxu0 0.0
      %1931 = vmatpush1.msra.mxu0 0.0
      %1932 = vmatprep.subr.mxu0 0.0
      %1933 = vmatpush1.msra.mxu0 0.0
      %1934 = vmatprep.subr.mxu0 0.0
      %1935 = vmatpush1.msra.mxu0 0.0
      %1936 = vmatprep.subr.mxu0 0.0
      %1937 = vmatpush1.msra.mxu0 0.0
      %1938 = vmatprep.subr.mxu0 0.0
      %1939 = vmatpush1.msra.mxu0 0.0
      %1940 = vmatprep.subr.mxu0 0.0
      %1941 = vmatpush1.msra.mxu0 0.0
      %1942 = vmatprep.subr.mxu0 0.0
      %1943 = vmatpush1.msra.mxu0 0.0
      %1944 = vmatprep.subr.mxu0 0.0
      %1945 = vmatpush1.msra.mxu0 0.0
      %1946 = vmatprep.subr.mxu0 0.0
      %1947 = vmatpush1.msra.mxu0 0.0
      %1948 = vmatprep.subr.mxu0 0.0
      %1949 = vmatpush1.msra.mxu0 0.0
      %1950 = vmatprep.subr.mxu0 0.0
      %1951 = vmatpush1.msra.mxu0 0.0
      %1952 = vmatprep.subr.mxu0 0.0
      %1953 = vmatpush1.msra.mxu0 %v1827
      %1954 = vmatprep.subr.mxu0 0.0
      %1955 = vmatpush2.msra.mxu0 0.0
      %1956 = vmatprep.subr.mxu0 0.0
      %1957 = vmatpush2.msra.mxu0 0.0
      %1958 = vmatprep.subr.mxu0 0.0
      %1959 = vmatpush2.msra.mxu0 0.0
      %1960 = vmatprep.subr.mxu0 0.0
      %1961 = vmatpush2.msra.mxu0 0.0
      %1962 = vmatprep.subr.mxu0 0.0
      %1963 = vmatpush2.msra.mxu0 0.0
      %1964 = vmatprep.subr.mxu0 0.0
      %1965 = vmatpush2.msra.mxu0 0.0
      %1966 = vmatprep.subr.mxu0 0.0
      %1967 = vmatpush2.msra.mxu0 0.0
      %1968 = vmatprep.subr.mxu0 0.0
      %1969 = vmatpush2.msra.mxu0 0.0
      %1970 = vmatprep.subr.mxu0 0.0
      %1971 = vmatpush2.msra.mxu0 0.0
      %1972 = vmatprep.subr.mxu0 0.0
      %1973 = vmatpush2.msra.mxu0 0.0
      %1974 = vmatprep.subr.mxu0 0.0
      %1975 = vmatpush2.msra.mxu0 0.0
      %1976 = vmatprep.subr.mxu0 0.0
      %1977 = vmatpush2.msra.mxu0 0.0
      %1978 = vmatprep.subr.mxu0 0.0
      %1979 = vmatpush2.msra.mxu0 0.0
      %1980 = vmatprep.subr.mxu0 0.0
      %1981 = vmatpush2.msra.mxu0 0.0
      %1982 = vmatprep.subr.mxu0 0.0
      %1983 = vmatpush2.msra.mxu0 0.0
      %1984 = vmatprep.subr.mxu0 0.0
      %1985 = vmatpush2.msra.mxu0 0.0
      %1986 = vmatprep.mubr.f32.mxu0 0.0
      %1987 = vmatmul.mubr.f32.gmra.mxu0 %v1920
      %v1988 = vpop.f32.mrf.mxu0
      %v1989 = vadd.f32 0.0, %v1988
      %v1990 = vpop.f32.mrf.mxu0
      %1991 = vdwg.mxu0
      %v1992 = vpack.c.bf16 %v1989, %v1989
      %s1993 = scalar_lea.vmem %s7, 12
      %v1994 = vld [vmem:[%s1993] sm:$0xf]
      %v1996 = vsel %vm618, %v1992, 0
      %v1999 = vsel %vm1142, %v1994, 0
      %2001 = vmatprep.subr.bf16.mxu0 0
      %2002 = vmatpush1.bf16.msra.mxu0 0
      %2003 = vmatprep.subr.bf16.mxu0 0
      %2004 = vmatpush1.bf16.msra.mxu0 0
      %2005 = vmatprep.subr.bf16.mxu0 0
      %2006 = vmatpush1.bf16.msra.mxu0 0
      %2007 = vmatprep.subr.bf16.mxu0 0
      %2008 = vmatpush1.bf16.msra.mxu0 0
      %2009 = vmatprep.subr.bf16.mxu0 0
      %2010 = vmatpush1.bf16.msra.mxu0 0
      %2011 = vmatprep.subr.bf16.mxu0 0
      %2012 = vmatpush1.bf16.msra.mxu0 0
      %2013 = vmatprep.subr.bf16.mxu0 0
      %2014 = vmatpush1.bf16.msra.mxu0 0
      %2015 = vmatprep.subr.bf16.mxu0 0
      %2016 = vmatpush1.bf16.msra.mxu0 %v1999
      %2017 = vmatprep.subr.bf16.mxu0 0
      %2018 = vmatpush2.bf16.msra.mxu0 0
      %2019 = vmatprep.subr.bf16.mxu0 0
      %2020 = vmatpush2.bf16.msra.mxu0 0
      %2021 = vmatprep.subr.bf16.mxu0 0
      %2022 = vmatpush2.bf16.msra.mxu0 0
      %2023 = vmatprep.subr.bf16.mxu0 0
      %2024 = vmatpush2.bf16.msra.mxu0 0
      %2025 = vmatprep.subr.bf16.mxu0 0
      %2026 = vmatpush2.bf16.msra.mxu0 0
      %2027 = vmatprep.subr.bf16.mxu0 0
      %2028 = vmatpush2.bf16.msra.mxu0 0
      %2029 = vmatprep.subr.bf16.mxu0 0
      %2030 = vmatpush2.bf16.msra.mxu0 0
      %2031 = vmatprep.subr.bf16.mxu0 0
      %2032 = vmatpush2.bf16.msra.mxu0 0
      %2033 = vmatprep.mubr.bf16.mxu0 0
      %2034 = vmatmul.mubr.bf16.gmra.mxu0 %v1996
      %v2035 = vpop.f32.mrf.mxu0
      %v2036 = vadd.f32 0.0, %v2035
      %v2037 = vpop.f32.mrf.mxu0
      %v2038 = vpop.f32.mrf.mxu0
      %v2039 = vpop.f32.mrf.mxu0
      %2040 = vdwg.mxu0
      %v2041 = vadd.f32 %v1636, %v2036
      %v2042 = vld [vmem:[%s8] sm:$0x1]
      %v2044 = vlaneseq
      %v2045 = vshrl.u32 %v2044, 7
      %v2046 = vsub.s32 0, %v2045
      %v2047 = vrot.slane %v2042, %v2046
      %v2049 = vadd.f32 %v2041, %v2047
      %2050 = vst.msk [vmem:[%s358] sm:$0xff] %vm366, %v2049
      %p2051 = scmp.lt.s32.totalorder %s20, 1
      %s2052 = scalar_select %p2051, %s20, 1
      %s2053 = smul.addr %s2052, 8
      %s2054 = scalar_lea.vmem %s9, %s2053
      // Predicated region
      $region57: #{tcr_epitope_transformer.8} parent=55 // pred_check
        %p2055 = pneg %p242
      $region58: #{tcr_epitope_transformer.8} parent=55 // pred_check_branch
        %2057 = sbr.rel (%p2055) target = $region60
      $region59: #{tcr_epitope_transformer.8} parent=55 // pred_region
        _
      $region60: #{tcr_epitope_transformer.8} parent=55 // pred_fallthru
        _
    $region56: #{tcr_epitope_transformer.8} parent=5 // pred_fallthru
      _
    %p2058 = scmp.le.s32.totalorder 2, %s15
    // Predicated region
    $region61: #{tcr_epitope_transformer.8} parent=5 // pred_check
      %p2059 = pneg %p2058
    $region62: #{tcr_epitope_transformer.8} parent=5 // pred_check_branch
      %2061 = sbr.rel (%p2059) target = $region64
    $region63: #{tcr_epitope_transformer.8} parent=5 // pred_region
      %s2062 = ssub.s32 %s15, 2
      // Predicated region
      $region65: #{tcr_epitope_transformer.8} parent=63 // pred_check
        %p2063 = pneg %p248
      $region66: #{tcr_epitope_transformer.8} parent=63 // pred_check_branch
        %2065 = sbr.rel (%p2063) target = $region68
      $region67: #{tcr_epitope_transformer.8} parent=63 // pred_region
        %p2066 = scmp.lt.s32.totalorder %s21, 1
        %s2067 = scalar_select %p2066, %s21, 1
        %s2068 = smul.addr %s2067, 8
        %s2069 = scalar_lea.vmem %s9, %s2068
      $region68: #{tcr_epitope_transformer.8} parent=63 // pred_fallthru
        _
    $region64: #{tcr_epitope_transformer.8} parent=5 // pred_fallthru
      _
  $region6: #{tcr_epitope_transformer.8} parent=0 // loop_footer
    %s19 = sadd.s32 1, %s15
  $region7: #{tcr_epitope_transformer.8} parent=0 // loop_footer_branch
    %14 = sbr.rel target = $region3
  $region8: #{tcr_epitope_transformer.8} parent=0 // loop_exit
    _

// kernel: tcr_epitope_transformer.6
$region0: #{tcr_epitope_transformer.6}
  #allocation0 [shape = 'u32[]', space=smem, size = 0x4, offset = 0x4, fixed_abs, tag = 'smem constant byte address 0x4 - core index']
  #allocation1 [shape = 'u32[144,128]{1,0:T(1,128)}', space=vmem, size = 0x12000, scoped, tag = 'internal scratch']
  %s0 = inlined_call_operand.vmem [shape: f32[2,16,32], index: 0, kind: input, shape index: {}]
  %s1 = inlined_call_operand.vmem [shape: s32[2,1,16], index: 1, kind: input, shape index: {}]
  %s2 = inlined_call_operand.vmem [shape: f32[1,32], index: 2, kind: input, shape index: {}]
  %s3 = inlined_call_operand.vmem [shape: f32[1,32], index: 3, kind: input, shape index: {}]
  %s4 = inlined_call_operand.vmem [shape: bf16[3,4,32,8], index: 4, kind: input, shape index: {}]
  %s5 = inlined_call_operand.vmem [shape: f32[3,4,1,8], index: 5, kind: input, shape index: {}]
  %s6 = inlined_call_operand.vmem [shape: bf16[4,8,32], index: 6, kind: input, shape index: {}]
  %s7 = inlined_call_operand.vmem [shape: f32[1,32], index: 7, kind: input, shape index: {}]
  %s8 = inlined_call_operand.vmem [shape: f32[1,32], index: 8, kind: input, shape index: {}]
  %s9 = inlined_call_operand.vmem [shape: f32[1,32], index: 9, kind: input, shape index: {}]
  %s10 = inlined_call_operand.vmem [shape: bf16[32,128], index: 10, kind: input, shape index: {}]
  %s11 = inlined_call_operand.vmem [shape: f32[1,128], index: 11, kind: input, shape index: {}]
  %s12 = inlined_call_operand.vmem [shape: bf16[128,32], index: 12, kind: input, shape index: {}]
  %s13 = inlined_call_operand.vmem [shape: f32[1,32], index: 13, kind: input, shape index: {}]
  %s14 = inlined_call_operand.vmem [shape: f32[2,16,32], index: 14, kind: output, shape index: {}]
  %s15 = sld [smem:[#allocation0]]
  $region89: #{tcr_epitope_transformer.6} parent=0
    _
  %s17 = ssub.s32 1, %s15
  %s18 = scalar_select 0, %s17, %s15
  loop: start=0, step=1, limit=4
  $region2: #{tcr_epitope_transformer.6} parent=0 // loop_pre_header
    _
  $region3: #{tcr_epitope_transformer.6} parent=0 // loop_header
    %s20 = sphi 0, %s24
    %p21 = scmp.ge.s32.totalorder %s20, 4
    %s30 = sphi 0, %s32
    %s33 = sphi 0, %s30
    %s34 = sphi 0, %s33
    %s50 = sphi 0, %s34
    %s56 = sphi 0, %s58
    %s59 = sphi 0, %s56
    %s60 = sphi 0, %s59
    %s76 = sphi 0, %s60
    %s80 = sphi 0, %s80
    %s82 = sphi 0, %s80
    %s83 = sphi 0, %s82
    %s97 = sphi 0, %s83
    %s101 = sphi 0, %s101
    %s103 = sphi 0, %s101
    %s104 = sphi 0, %s103
    %s118 = sphi 0, %s104
    %s122 = sphi 0, %s122
    %s124 = sphi 0, %s122
    %s125 = sphi 0, %s124
    %s139 = sphi 0, %s125
    %s143 = sphi 0, %s143
    %s145 = sphi 0, %s143
    %s146 = sphi 0, %s145
    %s160 = sphi 0, %s146
    %s164 = sphi 0, %s164
    %s166 = sphi 0, %s164
    %s167 = sphi 0, %s166
    %s181 = sphi 0, %s167
    %s185 = sphi 0, %s185
    %s187 = sphi 0, %s185
    %s188 = sphi 0, %s187
    %s202 = sphi 0, %s188
    %s206 = sphi 0, %s206
    %s208 = sphi 0, %s206
    %s209 = sphi 0, %s208
    %s223 = sphi 0, %s209
    %s227 = sphi 0, %s227
    %s229 = sphi 0, %s227
    %s230 = sphi 0, %s229
    %s244 = sphi 0, %s230
    %s248 = sphi 0, %s248
    %s250 = sphi 0, %s248
    %s251 = sphi 0, %s250
    %s265 = sphi 0, %s251
    %s269 = sphi 0, %s269
    %s271 = sphi 0, %s269
    %s272 = sphi 0, %s271
    %s286 = sphi 0, %s272
    %s290 = sphi 0, %s290
    %s292 = sphi 0, %s290
    %s293 = sphi 0, %s292
    %s307 = sphi 0, %s293
    %s311 = sphi 0, %s311
    %s313 = sphi 0, %s311
    %s314 = sphi 0, %s313
    %s328 = sphi 0, %s314
    %s334 = sphi 0, %s336
    %s337 = sphi 0, %s334
    %s338 = sphi 0, %s337
    %s354 = sphi 0, %s338
  $region4: #{tcr_epitope_transformer.6} parent=0 // loop_header_branch
    %23 = sbr.rel (%p21) target = $region8
  $region5: #{tcr_epitope_transformer.6} parent=0 // loop_body
    %s25 = ssub.s32 %s20, 1
    %s26 = ssub.s32 %s20, 2
    %s27 = sadd.s32 %s20, 1
    %s28 = ssub.s32 %s20, %s27
    %p29 = scmp.eq.s32.totalorder %s28, 0
    %s31 = sadd.s32 %s30, 1
    %s32 = scalar_select %p29, %s30, %s31
    %p35 = pneg %p29
    %p36 = scmp.eq.s32.totalorder %s20, 1
    %p37 = por %p35, %p36
    %p38 = scmp.ne.s32.totalorder %s30, %s33
    %p39 = scmp.eq.s32.totalorder %s20, 0
    %p40 = por %p38, %p39
    %p41 = scmp.ne.s32.totalorder %s30, %s33
    %p42 = scmp.eq.s32.totalorder %s25, 1
    %p43 = por %p41, %p42
    %p44 = scmp.ne.s32.totalorder %s33, %s34
    %p45 = scmp.eq.s32.totalorder %s25, 0
    %p46 = por %p44, %p45
    %p47 = scmp.ne.s32.totalorder %s33, %s34
    %p48 = scmp.eq.s32.totalorder %s26, 1
    %p49 = por %p47, %p48
    %p51 = scmp.ne.s32.totalorder %s34, %s50
    %p52 = scmp.eq.s32.totalorder %s26, 0
    %p53 = por %p51, %p52
    %s54 = ssub.s32 %s20, %s27
    %p55 = scmp.eq.s32.totalorder %s54, 0
    %s57 = sadd.s32 %s56, 1
    %s58 = scalar_select %p55, %s56, %s57
    %p61 = pneg %p55
    %p62 = scmp.eq.s32.totalorder %s20, 1
    %p63 = por %p61, %p62
    %p64 = scmp.ne.s32.totalorder %s56, %s59
    %p65 = scmp.eq.s32.totalorder %s20, 0
    %p66 = por %p64, %p65
    %p67 = scmp.ne.s32.totalorder %s56, %s59
    %p68 = scmp.eq.s32.totalorder %s25, 1
    %p69 = por %p67, %p68
    %p70 = scmp.ne.s32.totalorder %s59, %s60
    %p71 = scmp.eq.s32.totalorder %s25, 0
    %p72 = por %p70, %p71
    %p73 = scmp.ne.s32.totalorder %s59, %s60
    %p74 = scmp.eq.s32.totalorder %s26, 1
    %p75 = por %p73, %p74
    %p77 = scmp.ne.s32.totalorder %s60, %s76
    %p78 = scmp.eq.s32.totalorder %s26, 0
    %p79 = por %p77, %p78
    %s81 = sadd.s32 %s80, 1
    %p84 = scmp.eq.s32.totalorder %s20, 1
    %p85 = scmp.ne.s32.totalorder %s80, %s82
    %p86 = scmp.eq.s32.totalorder %s20, 0
    %p87 = por %p85, %p86
    %p88 = scmp.ne.s32.totalorder %s80, %s82
    %p89 = scmp.eq.s32.totalorder %s25, 1
    %p90 = por %p88, %p89
    %p91 = scmp.ne.s32.totalorder %s82, %s83
    %p92 = scmp.eq.s32.totalorder %s25, 0
    %p93 = por %p91, %p92
    %p94 = scmp.ne.s32.totalorder %s82, %s83
    %p95 = scmp.eq.s32.totalorder %s26, 1
    %p96 = por %p94, %p95
    %p98 = scmp.ne.s32.totalorder %s83, %s97
    %p99 = scmp.eq.s32.totalorder %s26, 0
    %p100 = por %p98, %p99
    %s102 = sadd.s32 %s101, 1
    %p105 = scmp.eq.s32.totalorder %s20, 1
    %p106 = scmp.ne.s32.totalorder %s101, %s103
    %p107 = scmp.eq.s32.totalorder %s20, 0
    %p108 = por %p106, %p107
    %p109 = scmp.ne.s32.totalorder %s101, %s103
    %p110 = scmp.eq.s32.totalorder %s25, 1
    %p111 = por %p109, %p110
    %p112 = scmp.ne.s32.totalorder %s103, %s104
    %p113 = scmp.eq.s32.totalorder %s25, 0
    %p114 = por %p112, %p113
    %p115 = scmp.ne.s32.totalorder %s103, %s104
    %p116 = scmp.eq.s32.totalorder %s26, 1
    %p117 = por %p115, %p116
    %p119 = scmp.ne.s32.totalorder %s104, %s118
    %p120 = scmp.eq.s32.totalorder %s26, 0
    %p121 = por %p119, %p120
    %s123 = sadd.s32 %s122, 1
    %p126 = scmp.eq.s32.totalorder %s20, 1
    %p127 = scmp.ne.s32.totalorder %s122, %s124
    %p128 = scmp.eq.s32.totalorder %s20, 0
    %p129 = por %p127, %p128
    %p130 = scmp.ne.s32.totalorder %s122, %s124
    %p131 = scmp.eq.s32.totalorder %s25, 1
    %p132 = por %p130, %p131
    %p133 = scmp.ne.s32.totalorder %s124, %s125
    %p134 = scmp.eq.s32.totalorder %s25, 0
    %p135 = por %p133, %p134
    %p136 = scmp.ne.s32.totalorder %s124, %s125
    %p137 = scmp.eq.s32.totalorder %s26, 1
    %p138 = por %p136, %p137
    %p140 = scmp.ne.s32.totalorder %s125, %s139
    %p141 = scmp.eq.s32.totalorder %s26, 0
    %p142 = por %p140, %p141
    %s144 = sadd.s32 %s143, 1
    %p147 = scmp.eq.s32.totalorder %s20, 1
    %p148 = scmp.ne.s32.totalorder %s143, %s145
    %p149 = scmp.eq.s32.totalorder %s20, 0
    %p150 = por %p148, %p149
    %p151 = scmp.ne.s32.totalorder %s143, %s145
    %p152 = scmp.eq.s32.totalorder %s25, 1
    %p153 = por %p151, %p152
    %p154 = scmp.ne.s32.totalorder %s145, %s146
    %p155 = scmp.eq.s32.totalorder %s25, 0
    %p156 = por %p154, %p155
    %p157 = scmp.ne.s32.totalorder %s145, %s146
    %p158 = scmp.eq.s32.totalorder %s26, 1
    %p159 = por %p157, %p158
    %p161 = scmp.ne.s32.totalorder %s146, %s160
    %p162 = scmp.eq.s32.totalorder %s26, 0
    %p163 = por %p161, %p162
    %s165 = sadd.s32 %s164, 1
    %p168 = scmp.eq.s32.totalorder %s20, 1
    %p169 = scmp.ne.s32.totalorder %s164, %s166
    %p170 = scmp.eq.s32.totalorder %s20, 0
    %p171 = por %p169, %p170
    %p172 = scmp.ne.s32.totalorder %s164, %s166
    %p173 = scmp.eq.s32.totalorder %s25, 1
    %p174 = por %p172, %p173
    %p175 = scmp.ne.s32.totalorder %s166, %s167
    %p176 = scmp.eq.s32.totalorder %s25, 0
    %p177 = por %p175, %p176
    %p178 = scmp.ne.s32.totalorder %s166, %s167
    %p179 = scmp.eq.s32.totalorder %s26, 1
    %p180 = por %p178, %p179
    %p182 = scmp.ne.s32.totalorder %s167, %s181
    %p183 = scmp.eq.s32.totalorder %s26, 0
    %p184 = por %p182, %p183
    %s186 = sadd.s32 %s185, 1
    %p189 = scmp.eq.s32.totalorder %s20, 1
    %p190 = scmp.ne.s32.totalorder %s185, %s187
    %p191 = scmp.eq.s32.totalorder %s20, 0
    %p192 = por %p190, %p191
    %p193 = scmp.ne.s32.totalorder %s185, %s187
    %p194 = scmp.eq.s32.totalorder %s25, 1
    %p195 = por %p193, %p194
    %p196 = scmp.ne.s32.totalorder %s187, %s188
    %p197 = scmp.eq.s32.totalorder %s25, 0
    %p198 = por %p196, %p197
    %p199 = scmp.ne.s32.totalorder %s187, %s188
    %p200 = scmp.eq.s32.totalorder %s26, 1
    %p201 = por %p199, %p200
    %p203 = scmp.ne.s32.totalorder %s188, %s202
    %p204 = scmp.eq.s32.totalorder %s26, 0
    %p205 = por %p203, %p204
    %s207 = sadd.s32 %s206, 1
    %p210 = scmp.eq.s32.totalorder %s20, 1
    %p211 = scmp.ne.s32.totalorder %s206, %s208
    %p212 = scmp.eq.s32.totalorder %s20, 0
    %p213 = por %p211, %p212
    %p214 = scmp.ne.s32.totalorder %s206, %s208
    %p215 = scmp.eq.s32.totalorder %s25, 1
    %p216 = por %p214, %p215
    %p217 = scmp.ne.s32.totalorder %s208, %s209
    %p218 = scmp.eq.s32.totalorder %s25, 0
    %p219 = por %p217, %p218
    %p220 = scmp.ne.s32.totalorder %s208, %s209
    %p221 = scmp.eq.s32.totalorder %s26, 1
    %p222 = por %p220, %p221
    %p224 = scmp.ne.s32.totalorder %s209, %s223
    %p225 = scmp.eq.s32.totalorder %s26, 0
    %p226 = por %p224, %p225
    %s228 = sadd.s32 %s227, 1
    %p231 = scmp.eq.s32.totalorder %s20, 1
    %p232 = scmp.ne.s32.totalorder %s227, %s229
    %p233 = scmp.eq.s32.totalorder %s20, 0
    %p234 = por %p232, %p233
    %p235 = scmp.ne.s32.totalorder %s227, %s229
    %p236 = scmp.eq.s32.totalorder %s25, 1
    %p237 = por %p235, %p236
    %p238 = scmp.ne.s32.totalorder %s229, %s230
    %p239 = scmp.eq.s32.totalorder %s25, 0
    %p240 = por %p238, %p239
    %p241 = scmp.ne.s32.totalorder %s229, %s230
    %p242 = scmp.eq.s32.totalorder %s26, 1
    %p243 = por %p241, %p242
    %p245 = scmp.ne.s32.totalorder %s230, %s244
    %p246 = scmp.eq.s32.totalorder %s26, 0
    %p247 = por %p245, %p246
    %s249 = sadd.s32 %s248, 1
    %p252 = scmp.eq.s32.totalorder %s20, 1
    %p253 = scmp.ne.s32.totalorder %s248, %s250
    %p254 = scmp.eq.s32.totalorder %s20, 0
    %p255 = por %p253, %p254
    %p256 = scmp.ne.s32.totalorder %s248, %s250
    %p257 = scmp.eq.s32.totalorder %s25, 1
    %p258 = por %p256, %p257
    %p259 = scmp.ne.s32.totalorder %s250, %s251
    %p260 = scmp.eq.s32.totalorder %s25, 0
    %p261 = por %p259, %p260
    %p262 = scmp.ne.s32.totalorder %s250, %s251
    %p263 = scmp.eq.s32.totalorder %s26, 1
    %p264 = por %p262, %p263
    %p266 = scmp.ne.s32.totalorder %s251, %s265
    %p267 = scmp.eq.s32.totalorder %s26, 0
    %p268 = por %p266, %p267
    %s270 = sadd.s32 %s269, 1
    %p273 = scmp.eq.s32.totalorder %s20, 1
    %p274 = scmp.ne.s32.totalorder %s269, %s271
    %p275 = scmp.eq.s32.totalorder %s20, 0
    %p276 = por %p274, %p275
    %p277 = scmp.ne.s32.totalorder %s269, %s271
    %p278 = scmp.eq.s32.totalorder %s25, 1
    %p279 = por %p277, %p278
    %p280 = scmp.ne.s32.totalorder %s271, %s272
    %p281 = scmp.eq.s32.totalorder %s25, 0
    %p282 = por %p280, %p281
    %p283 = scmp.ne.s32.totalorder %s271, %s272
    %p284 = scmp.eq.s32.totalorder %s26, 1
    %p285 = por %p283, %p284
    %p287 = scmp.ne.s32.totalorder %s272, %s286
    %p288 = scmp.eq.s32.totalorder %s26, 0
    %p289 = por %p287, %p288
    %s291 = sadd.s32 %s290, 1
    %p294 = scmp.eq.s32.totalorder %s20, 1
    %p295 = scmp.ne.s32.totalorder %s290, %s292
    %p296 = scmp.eq.s32.totalorder %s20, 0
    %p297 = por %p295, %p296
    %p298 = scmp.ne.s32.totalorder %s290, %s292
    %p299 = scmp.eq.s32.totalorder %s25, 1
    %p300 = por %p298, %p299
    %p301 = scmp.ne.s32.totalorder %s292, %s293
    %p302 = scmp.eq.s32.totalorder %s25, 0
    %p303 = por %p301, %p302
    %p304 = scmp.ne.s32.totalorder %s292, %s293
    %p305 = scmp.eq.s32.totalorder %s26, 1
    %p306 = por %p304, %p305
    %p308 = scmp.ne.s32.totalorder %s293, %s307
    %p309 = scmp.eq.s32.totalorder %s26, 0
    %p310 = por %p308, %p309
    %s312 = sadd.s32 %s311, 1
    %p315 = scmp.eq.s32.totalorder %s20, 1
    %p316 = scmp.ne.s32.totalorder %s311, %s313
    %p317 = scmp.eq.s32.totalorder %s20, 0
    %p318 = por %p316, %p317
    %p319 = scmp.ne.s32.totalorder %s311, %s313
    %p320 = scmp.eq.s32.totalorder %s25, 1
    %p321 = por %p319, %p320
    %p322 = scmp.ne.s32.totalorder %s313, %s314
    %p323 = scmp.eq.s32.totalorder %s25, 0
    %p324 = por %p322, %p323
    %p325 = scmp.ne.s32.totalorder %s313, %s314
    %p326 = scmp.eq.s32.totalorder %s26, 1
    %p327 = por %p325, %p326
    %p329 = scmp.ne.s32.totalorder %s314, %s328
    %p330 = scmp.eq.s32.totalorder %s26, 0
    %p331 = por %p329, %p330
    %s332 = ssub.s32 %s20, %s27
    %p333 = scmp.eq.s32.totalorder %s332, 0
    %s335 = sadd.s32 %s334, 1
    %s336 = scalar_select %p333, %s334, %s335
    %p339 = pneg %p333
    %p340 = scmp.eq.s32.totalorder %s20, 1
    %p341 = por %p339, %p340
    %p342 = scmp.ne.s32.totalorder %s334, %s337
    %p343 = scmp.eq.s32.totalorder %s20, 0
    %p344 = por %p342, %p343
    %p345 = scmp.ne.s32.totalorder %s334, %s337
    %p346 = scmp.eq.s32.totalorder %s25, 1
    %p347 = por %p345, %p346
    %p348 = scmp.ne.s32.totalorder %s337, %s338
    %p349 = scmp.eq.s32.totalorder %s25, 0
    %p350 = por %p348, %p349
    %p351 = scmp.ne.s32.totalorder %s337, %s338
    %p352 = scmp.eq.s32.totalorder %s26, 1
    %p353 = por %p351, %p352
    %p355 = scmp.ne.s32.totalorder %s338, %s354
    %p356 = scmp.eq.s32.totalorder %s26, 0
    %p357 = por %p355, %p356
    %p358 = scmp.le.s32.totalorder 1, %s20
    %p359 = scmp.lt.s32.totalorder %s20, 3
    %p360 = pnand %p358, %p359
    %p361 = pneg %p360
    // Predicated region
    $region9: #{tcr_epitope_transformer.6} parent=5 // pred_check
      _
    $region10: #{tcr_epitope_transformer.6} parent=5 // pred_check_branch
      %363 = sbr.rel (%p360) target = $region12
    $region11: #{tcr_epitope_transformer.6} parent=5 // pred_region
      %s364 = ssub.s32 %s20, 1
      // Predicated region
      $region13: #{tcr_epitope_transformer.6} parent=11 // pred_check
        %p365 = pneg %p93
      $region14: #{tcr_epitope_transformer.6} parent=11 // pred_check_branch
        %367 = sbr.rel (%p365) target = $region16
      $region15: #{tcr_epitope_transformer.6} parent=11 // pred_region
        _
      $region16: #{tcr_epitope_transformer.6} parent=11 // pred_fallthru
        _
      // Predicated region
      $region17: #{tcr_epitope_transformer.6} parent=11 // pred_check
        %p368 = pneg %p114
      $region18: #{tcr_epitope_transformer.6} parent=11 // pred_check_branch
        %370 = sbr.rel (%p368) target = $region20
      $region19: #{tcr_epitope_transformer.6} parent=11 // pred_region
        _
      $region20: #{tcr_epitope_transformer.6} parent=11 // pred_fallthru
        _
      // Predicated region
      $region21: #{tcr_epitope_transformer.6} parent=11 // pred_check
        %p371 = pneg %p135
      $region22: #{tcr_epitope_transformer.6} parent=11 // pred_check_branch
        %373 = sbr.rel (%p371) target = $region24
      $region23: #{tcr_epitope_transformer.6} parent=11 // pred_region
        _
      $region24: #{tcr_epitope_transformer.6} parent=11 // pred_fallthru
        _
      // Predicated region
      $region25: #{tcr_epitope_transformer.6} parent=11 // pred_check
        %p374 = pneg %p156
      $region26: #{tcr_epitope_transformer.6} parent=11 // pred_check_branch
        %376 = sbr.rel (%p374) target = $region28
      $region27: #{tcr_epitope_transformer.6} parent=11 // pred_region
        _
      $region28: #{tcr_epitope_transformer.6} parent=11 // pred_fallthru
        _
      // Predicated region
      $region29: #{tcr_epitope_transformer.6} parent=11 // pred_check
        %p377 = pneg %p177
      $region30: #{tcr_epitope_transformer.6} parent=11 // pred_check_branch
        %379 = sbr.rel (%p377) target = $region32
      $region31: #{tcr_epitope_transformer.6} parent=11 // pred_region
        _
      $region32: #{tcr_epitope_transformer.6} parent=11 // pred_fallthru
        _
      // Predicated region
      $region33: #{tcr_epitope_transformer.6} parent=11 // pred_check
        %p380 = pneg %p198
      $region34: #{tcr_epitope_transformer.6} parent=11 // pred_check_branch
        %382 = sbr.rel (%p380) target = $region36
      $region35: #{tcr_epitope_transformer.6} parent=11 // pred_region
        _
      $region36: #{tcr_epitope_transformer.6} parent=11 // pred_fallthru
        _
      // Predicated region
      $region37: #{tcr_epitope_transformer.6} parent=11 // pred_check
        %p383 = pneg %p219
      $region38: #{tcr_epitope_transformer.6} parent=11 // pred_check_branch
        %385 = sbr.rel (%p383) target = $region40
      $region39: #{tcr_epitope_transformer.6} parent=11 // pred_region
        _
      $region40: #{tcr_epitope_transformer.6} parent=11 // pred_fallthru
        _
      // Predicated region
      $region41: #{tcr_epitope_transformer.6} parent=11 // pred_check
        %p386 = pneg %p240
      $region42: #{tcr_epitope_transformer.6} parent=11 // pred_check_branch
        %388 = sbr.rel (%p386) target = $region44
      $region43: #{tcr_epitope_transformer.6} parent=11 // pred_region
        _
      $region44: #{tcr_epitope_transformer.6} parent=11 // pred_fallthru
        _
      // Predicated region
      $region45: #{tcr_epitope_transformer.6} parent=11 // pred_check
        %p389 = pneg %p261
      $region46: #{tcr_epitope_transformer.6} parent=11 // pred_check_branch
        %391 = sbr.rel (%p389) target = $region48
      $region47: #{tcr_epitope_transformer.6} parent=11 // pred_region
        _
      $region48: #{tcr_epitope_transformer.6} parent=11 // pred_fallthru
        _
      // Predicated region
      $region49: #{tcr_epitope_transformer.6} parent=11 // pred_check
        %p392 = pneg %p282
      $region50: #{tcr_epitope_transformer.6} parent=11 // pred_check_branch
        %394 = sbr.rel (%p392) target = $region52
      $region51: #{tcr_epitope_transformer.6} parent=11 // pred_region
        _
      $region52: #{tcr_epitope_transformer.6} parent=11 // pred_fallthru
        _
      // Predicated region
      $region53: #{tcr_epitope_transformer.6} parent=11 // pred_check
        %p395 = pneg %p303
      $region54: #{tcr_epitope_transformer.6} parent=11 // pred_check_branch
        %397 = sbr.rel (%p395) target = $region56
      $region55: #{tcr_epitope_transformer.6} parent=11 // pred_region
        _
      $region56: #{tcr_epitope_transformer.6} parent=11 // pred_fallthru
        _
      // Predicated region
      $region57: #{tcr_epitope_transformer.6} parent=11 // pred_check
        %p398 = pneg %p324
      $region58: #{tcr_epitope_transformer.6} parent=11 // pred_check_branch
        %400 = sbr.rel (%p398) target = $region60
      $region59: #{tcr_epitope_transformer.6} parent=11 // pred_region
        _
      $region60: #{tcr_epitope_transformer.6} parent=11 // pred_fallthru
        _
    $region12: #{tcr_epitope_transformer.6} parent=5 // pred_fallthru
      _
    %p401 = scmp.lt.s32.totalorder %s20, 2
    // Predicated region
    $region61: #{tcr_epitope_transformer.6} parent=5 // pred_check
      %p402 = pneg %p401
    $region62: #{tcr_epitope_transformer.6} parent=5 // pred_check_branch
      %404 = sbr.rel (%p402) target = $region64
    $region63: #{tcr_epitope_transformer.6} parent=5 // pred_region
      // Predicated region
      $region65: #{tcr_epitope_transformer.6} parent=63 // pred_check
        %p405 = pneg %p40
      $region66: #{tcr_epitope_transformer.6} parent=63 // pred_check_branch
        %407 = sbr.rel (%p405) target = $region68
      $region67: #{tcr_epitope_transformer.6} parent=63 // pred_region
        %p408 = scmp.lt.s32.totalorder %s20, 1
        %s409 = scalar_select %p408, %s20, 1
        %s410 = smul.addr %s409, 2
        %s411 = smul.addr %s410, 8
        %s412 = scalar_lea.vmem %s0, %s411
      $region68: #{tcr_epitope_transformer.6} parent=63 // pred_fallthru
        _
      // Predicated region
      $region69: #{tcr_epitope_transformer.6} parent=63 // pred_check
        %p413 = pneg %p66
      $region70: #{tcr_epitope_transformer.6} parent=63 // pred_check_branch
        %415 = sbr.rel (%p413) target = $region72
      $region71: #{tcr_epitope_transformer.6} parent=63 // pred_region
        %p416 = scmp.lt.s32.totalorder %s20, 1
        %s417 = scalar_select %p416, %s20, 1
        %s418 = scalar_lea.vmem %s1, %s417
      $region72: #{tcr_epitope_transformer.6} parent=63 // pred_fallthru
        _
    $region64: #{tcr_epitope_transformer.6} parent=5 // pred_fallthru
      _
    %p419 = scmp.le.s32.totalorder 1, %s20
    %p420 = scmp.lt.s32.totalorder %s20, 3
    %p421 = pnand %p419, %p420
    %p422 = pneg %p421
    // Predicated region
    $region73: #{tcr_epitope_transformer.6} parent=5 // pred_check
      _
    $region74: #{tcr_epitope_transformer.6} parent=5 // pred_check_branch
      %424 = sbr.rel (%p421) target = $region76
    $region75: #{tcr_epitope_transformer.6} parent=5 // pred_region
      %s425 = ssub.s32 %s20, 1
      %p426 = scmp.lt.s32.totalorder %s25, 1
      %s427 = scalar_select %p426, %s25, 1
      %s428 = smul.addr %s427, 2
      %s429 = smul.addr %s428, 8
      %s430 = scalar_lea.vmem %s0, %s429
      %p431 = pneg %p46
      %p432 = pneg %p43
      %p433 = scmp.lt.s32.totalorder %s25, 1
      %s434 = scalar_select %p433, %s25, 1
      %s435 = scalar_lea.vmem %s1, %s434
      %p436 = pneg %p72
      %p437 = pneg %p69
      %p438 = pneg %p93
      %p439 = pneg %p90
      %p440 = pneg %p114
      %p441 = pneg %p111
      %p442 = pneg %p135
      %p443 = pneg %p132
      %p444 = pneg %p156
      %p445 = pneg %p153
      %p446 = pneg %p177
      %p447 = pneg %p174
      %p448 = pneg %p198
      %p449 = pneg %p195
      %p450 = pneg %p219
      %p451 = pneg %p216
      %p452 = pneg %p240
      %p453 = pneg %p237
      %p454 = pneg %p261
      %p455 = pneg %p258
      %p456 = pneg %p282
      %p457 = pneg %p279
      %p458 = pneg %p303
      %p459 = pneg %p300
      %p460 = pneg %p324
      %p461 = pneg %p321
      %p462 = pneg %p350
      %p463 = pneg %p347
      %p464 = scmp.lt.s32.totalorder %s25, 1
      %s465 = scalar_select %p464, %s25, 1
      %s466 = smul.addr %s465, 2
      %s467 = smul.addr %s466, 8
      %s468 = scalar_lea.vmem %s14, %s467
      %p469 = scmp.lt.s32.totalorder %s25, 1
      %s470 = scalar_select %p469, %s25, 1
      %s471 = smul.addr %s470, 2
      %s472 = smul.addr %s471, 8
      %s473 = scalar_lea.vmem %s0, %s472
      %p474 = scmp.lt.s32.totalorder %s25, 1
      %s475 = scalar_select %p474, %s25, 1
      %s476 = scalar_lea.vmem %s1, %s475
      %p477 = scmp.lt.s32.totalorder %s25, 1
      %s478 = scalar_select %p477, %s25, 1
      %s479 = smul.addr %s478, 2
      %s480 = smul.addr %s479, 8
      %s481 = scalar_lea.vmem %s14, %s480
      %v483 = vld [vmem:[%s473] sm:$0xff]
      %v484 = vld [vmem:[%s473 + $0x8] sm:$0xff]
      %v485 = vld [vmem:[%s476] sm:$0x1]
      %vm486 = vcmp.gt.s32.totalorder %v485, 0
      %v487 = vsel %vm486, -1e+30, 0.0
      %v488 = vld [vmem:[%s2] sm:$0x1]
      %v489 = vld [vmem:[%s3] sm:$0x1]
      %vm490 = vcmask 261120
      %v491 = vsel %vm490, %v483, 0.0
      %492 = vadd.xlane.f32.xlu0 %v491
      %v493 = vpop.xlane.xlu0 %492
      %v494 = vsel %vm490, %v484, 0.0
      %495 = vadd.xlane.f32.xlu0 %v494
      %v496 = vpop.xlane.xlu0 %495
      %v497 = vrcp.pop 32.0
      %v498 = vmul.f32 %v493, %v497
      %v499 = vmul.f32 %v496, %v497
      %v500 = vsub.f32 %v483, %v498
      %v501 = vsub.f32 %v484, %v499
      %v502 = vmul.f32 %v500, %v500
      %v503 = vmul.f32 %v501, %v501
      %v504 = vsel %vm490, %v502, 0.0
      %505 = vadd.xlane.f32.xlu0 %v504
      %v506 = vpop.xlane.xlu0 %505
      %v507 = vsel %vm490, %v503, 0.0
      %508 = vadd.xlane.f32.xlu0 %v507
      %v509 = vpop.xlane.xlu0 %508
      %v510 = vmul.f32 %v506, %v497
      %v511 = vmul.f32 %v509, %v497
      %v512 = vadd.f32 %v510, 1e-05
      %v513 = vadd.f32 %v511, 1e-05
      %v514 = vrsqrt.pop %v512
      %v515 = vrsqrt.pop %v513
      %v516 = vmul.f32 %v500, %v514
      %v517 = vmul.f32 %v501, %v515
      %v519 = vlaneseq
      %v520 = vshrl.u32 %v519, 7
      %v521 = vsub.s32 0, %v520
      %v522 = vrot.slane %v488, %v521
      %v524 = vmul.f32 %v516, %v522
      %v525 = vmul.f32 %v517, %v522
      %v527 = vlaneseq
      %v528 = vshrl.u32 %v527, 7
      %v529 = vsub.s32 0, %v528
      %v530 = vrot.slane %v489, %v529
      %v532 = vadd.f32 %v524, %v530
      %v533 = vadd.f32 %v525, %v530
      %v534 = vpack.c.bf16 %v533, %v532
      %v535 = vld [vmem:[%s4] sm:$0xf]
      %v536 = vld [vmem:[%s4 + $0x4] sm:$0xf]
      %v537 = vld [vmem:[%s4 + $0x8] sm:$0xf]
      %v538 = vld [vmem:[%s4 + $0xc] sm:$0xf]
      %v539 = vld [vmem:[%s5] sm:$0x1]
      %v541 = vlaneseq
      %v542 = vshrl.u32 %v541, 7
      %v543 = vsub.s32 0, %v542
      %v544 = vrot.slane %v539, %v543
      %v550 = vunpack.c.l.b16 %v535
      %v551 = vunpack.c.l.b16 %v536
      %v552 = vunpack.c.l.b16 %v537
      %v553 = vunpack.c.l.b16 %v538
      %v554 = vpack.c.b16 %v551, %v550
      %v555 = vpack.c.b16 %v553, %v552
      %v559 = vsel %vm490, %v534, 0
      %561 = vmatprep.subr.bf16.mxu0 0
      %562 = vmatpush1.bf16.msra.mxu0 0
      %563 = vmatprep.subr.bf16.mxu0 0
      %564 = vmatpush1.bf16.msra.mxu0 0
      %565 = vmatprep.subr.bf16.mxu0 0
      %566 = vmatpush1.bf16.msra.mxu0 0
      %567 = vmatprep.subr.bf16.mxu0 0
      %568 = vmatpush1.bf16.msra.mxu0 0
      %569 = vmatprep.subr.bf16.mxu0 0
      %570 = vmatpush1.bf16.msra.mxu0 0
      %571 = vmatprep.subr.bf16.mxu0 0
      %572 = vmatpush1.bf16.msra.mxu0 0
      %573 = vmatprep.subr.bf16.mxu0 0
      %574 = vmatpush1.bf16.msra.mxu0 %v555
      %575 = vmatprep.subr.bf16.mxu0 0
      %576 = vmatpush1.bf16.msra.mxu0 %v554
      %577 = vmatprep.subr.bf16.mxu0 0
      %578 = vmatpush2.bf16.msra.mxu0 0
      %579 = vmatprep.subr.bf16.mxu0 0
      %580 = vmatpush2.bf16.msra.mxu0 0
      %581 = vmatprep.subr.bf16.mxu0 0
      %582 = vmatpush2.bf16.msra.mxu0 0
      %583 = vmatprep.subr.bf16.mxu0 0
      %584 = vmatpush2.bf16.msra.mxu0 0
      %585 = vmatprep.subr.bf16.mxu0 0
      %586 = vmatpush2.bf16.msra.mxu0 0
      %587 = vmatprep.subr.bf16.mxu0 0
      %588 = vmatpush2.bf16.msra.mxu0 0
      %589 = vmatprep.subr.bf16.mxu0 0
      %590 = vmatpush2.bf16.msra.mxu0 0
      %591 = vmatprep.subr.bf16.mxu0 0
      %592 = vmatpush2.bf16.msra.mxu0 0
      %593 = vmatprep.mubr.bf16.mxu0 0
      %594 = vmatmul.mubr.bf16.gmra.mxu0 %v559
      %v595 = vpop.f32.mrf.mxu0
      %v596 = vadd.f32 %v544, %v595
      %v597 = vpop.f32.mrf.mxu0
      %v598 = vpop.f32.mrf.mxu0
      %v599 = vadd.f32 %v544, %v598
      %v600 = vpop.f32.mrf.mxu0
      %601 = vdwg.mxu0
      %s602 = scalar_lea.vmem %s4, 64
      %v603 = vld [vmem:[%s602] sm:$0xf]
      %v604 = vld [vmem:[%s602 + $0x4] sm:$0xf]
      %v605 = vld [vmem:[%s602 + $0x8] sm:$0xf]
      %v606 = vld [vmem:[%s602 + $0xc] sm:$0xf]
      %s607 = scalar_lea.vmem %s5, 4
      %v608 = vld [vmem:[%s607] sm:$0x1]
      %v610 = vlaneseq
      %v611 = vshrl.u32 %v610, 7
      %v612 = vsub.s32 0, %v611
      %v613 = vrot.slane %v608, %v612
      %v619 = vunpack.c.l.b16 %v603
      %v620 = vunpack.c.l.b16 %v604
      %v621 = vunpack.c.l.b16 %v605
      %v622 = vunpack.c.l.b16 %v606
      %v623 = vpack.c.b16 %v620, %v619
      %v624 = vpack.c.b16 %v622, %v621
      %627 = vmatprep.subr.bf16.mxu0 0
      %628 = vmatpush1.bf16.msra.mxu0 0
      %629 = vmatprep.subr.bf16.mxu0 0
      %630 = vmatpush1.bf16.msra.mxu0 0
      %631 = vmatprep.subr.bf16.mxu0 0
      %632 = vmatpush1.bf16.msra.mxu0 0
      %633 = vmatprep.subr.bf16.mxu0 0
      %634 = vmatpush1.bf16.msra.mxu0 0
      %635 = vmatprep.subr.bf16.mxu0 0
      %636 = vmatpush1.bf16.msra.mxu0 0
      %637 = vmatprep.subr.bf16.mxu0 0
      %638 = vmatpush1.bf16.msra.mxu0 0
      %639 = vmatprep.subr.bf16.mxu0 0
      %640 = vmatpush1.bf16.msra.mxu0 %v624
      %641 = vmatprep.subr.bf16.mxu0 0
      %642 = vmatpush1.bf16.msra.mxu0 %v623
      %643 = vmatprep.subr.bf16.mxu0 0
      %644 = vmatpush2.bf16.msra.mxu0 0
      %645 = vmatprep.subr.bf16.mxu0 0
      %646 = vmatpush2.bf16.msra.mxu0 0
      %647 = vmatprep.subr.bf16.mxu0 0
      %648 = vmatpush2.bf16.msra.mxu0 0
      %649 = vmatprep.subr.bf16.mxu0 0
      %650 = vmatpush2.bf16.msra.mxu0 0
      %651 = vmatprep.subr.bf16.mxu0 0
      %652 = vmatpush2.bf16.msra.mxu0 0
      %653 = vmatprep.subr.bf16.mxu0 0
      %654 = vmatpush2.bf16.msra.mxu0 0
      %655 = vmatprep.subr.bf16.mxu0 0
      %656 = vmatpush2.bf16.msra.mxu0 0
      %657 = vmatprep.subr.bf16.mxu0 0
      %658 = vmatpush2.bf16.msra.mxu0 0
      %659 = vmatprep.mubr.bf16.mxu0 0
      %660 = vmatmul.mubr.bf16.gmra.mxu0 %v559
      %v661 = vpop.f32.mrf.mxu0
      %v662 = vadd.f32 %v613, %v661
      %v663 = vpop.f32.mrf.mxu0
      %v664 = vpop.f32.mrf.mxu0
      %v665 = vadd.f32 %v613, %v664
      %v666 = vpop.f32.mrf.mxu0
      %667 = vdwg.mxu0
      %s668 = scalar_lea.vmem %s4, 128
      %v669 = vld [vmem:[%s668] sm:$0xf]
      %v670 = vld [vmem:[%s668 + $0x4] sm:$0xf]
      %v671 = vld [vmem:[%s668 + $0x8] sm:$0xf]
      %v672 = vld [vmem:[%s668 + $0xc] sm:$0xf]
      %s673 = scalar_lea.vmem %s5, 8
      %v674 = vld [vmem:[%s673] sm:$0x1]
      %v676 = vlaneseq
      %v677 = vshrl.u32 %v676, 7
      %v678 = vsub.s32 0, %v677
      %v679 = vrot.slane %v674, %v678
      %v685 = vunpack.c.l.b16 %v669
      %v686 = vunpack.c.l.b16 %v670
      %v687 = vunpack.c.l.b16 %v671
      %v688 = vunpack.c.l.b16 %v672
      %v689 = vpack.c.b16 %v686, %v685
      %v690 = vpack.c.b16 %v688, %v687
      %693 = vmatprep.subr.bf16.mxu0 0
      %694 = vmatpush1.bf16.msra.mxu0 0
      %695 = vmatprep.subr.bf16.mxu0 0
      %696 = vmatpush1.bf16.msra.mxu0 0
      %697 = vmatprep.subr.bf16.mxu0 0
      %698 = vmatpush1.bf16.msra.mxu0 0
      %699 = vmatprep.subr.bf16.mxu0 0
      %700 = vmatpush1.bf16.msra.mxu0 0
      %701 = vmatprep.subr.bf16.mxu0 0
      %702 = vmatpush1.bf16.msra.mxu0 0
      %703 = vmatprep.subr.bf16.mxu0 0
      %704 = vmatpush1.bf16.msra.mxu0 0
      %705 = vmatprep.subr.bf16.mxu0 0
      %706 = vmatpush1.bf16.msra.mxu0 %v690
      %707 = vmatprep.subr.bf16.mxu0 0
      %708 = vmatpush1.bf16.msra.mxu0 %v689
      %709 = vmatprep.subr.bf16.mxu0 0
      %710 = vmatpush2.bf16.msra.mxu0 0
      %711 = vmatprep.subr.bf16.mxu0 0
      %712 = vmatpush2.bf16.msra.mxu0 0
      %713 = vmatprep.subr.bf16.mxu0 0
      %714 = vmatpush2.bf16.msra.mxu0 0
      %715 = vmatprep.subr.bf16.mxu0 0
      %716 = vmatpush2.bf16.msra.mxu0 0
      %717 = vmatprep.subr.bf16.mxu0 0
      %718 = vmatpush2.bf16.msra.mxu0 0
      %719 = vmatprep.subr.bf16.mxu0 0
      %720 = vmatpush2.bf16.msra.mxu0 0
      %721 = vmatprep.subr.bf16.mxu0 0
      %722 = vmatpush2.bf16.msra.mxu0 0
      %723 = vmatprep.subr.bf16.mxu0 0
      %724 = vmatpush2.bf16.msra.mxu0 0
      %725 = vmatprep.mubr.bf16.mxu0 0
      %726 = vmatmul.mubr.bf16.gmra.mxu0 %v559
      %v727 = vpop.f32.mrf.mxu0
      %v728 = vadd.f32 %v679, %v727
      %v729 = vpop.f32.mrf.mxu0
      %v730 = vpop.f32.mrf.mxu0
      %v731 = vadd.f32 %v679, %v730
      %v732 = vpop.f32.mrf.mxu0
      %733 = vdwg.mxu0
      %v735 = vlaneseq
      %v736 = vshrl.u32 %v735, 7
      %v737 = vsub.s32 0, %v736
      %v738 = vrot.slane %v487, %v737
      %vm740 = vcmask 64512
      %v742 = vsel %vm740, %v596, 0
      %v745 = vsel %vm740, %v599, 0
      %v748 = vsel %vm740, %v662, 0
      %v751 = vsel %vm740, %v665, 0
      %753 = vmatprep.subr.mxu0 0.0
      %754 = vmatpush1.xpose.msra.mxu0 0.0
      %755 = vmatprep.subr.mxu0 0.0
      %756 = vmatpush1.xpose.msra.mxu0 0.0
      %757 = vmatprep.subr.mxu0 0.0
      %758 = vmatpush1.xpose.msra.mxu0 0.0
      %759 = vmatprep.subr.mxu0 0.0
      %760 = vmatpush1.xpose.msra.mxu0 0.0
      %761 = vmatprep.subr.mxu0 0.0
      %762 = vmatpush1.xpose.msra.mxu0 0.0
      %763 = vmatprep.subr.mxu0 0.0
      %764 = vmatpush1.xpose.msra.mxu0 0.0
      %765 = vmatprep.subr.mxu0 0.0
      %766 = vmatpush1.xpose.msra.mxu0 0.0
      %767 = vmatprep.subr.mxu0 0.0
      %768 = vmatpush1.xpose.msra.mxu0 0.0
      %769 = vmatprep.subr.mxu0 0.0
      %770 = vmatpush1.xpose.msra.mxu0 0.0
      %771 = vmatprep.subr.mxu0 0.0
      %772 = vmatpush1.xpose.msra.mxu0 0.0
      %773 = vmatprep.subr.mxu0 0.0
      %774 = vmatpush1.xpose.msra.mxu0 0.0
      %775 = vmatprep.subr.mxu0 0.0
      %776 = vmatpush1.xpose.msra.mxu0 0.0
      %777 = vmatprep.subr.mxu0 0.0
      %778 = vmatpush1.xpose.msra.mxu0 0.0
      %779 = vmatprep.subr.mxu0 0.0
      %780 = vmatpush1.xpose.msra.mxu0 0.0
      %781 = vmatprep.subr.mxu0 0.0
      %782 = vmatpush1.xpose.msra.mxu0 %v751
      %783 = vmatprep.subr.mxu0 0.0
      %784 = vmatpush1.xpose.msra.mxu0 %v748
      %785 = vmatprep.subr.mxu0 0.0
      %786 = vmatpush2.xpose.msra.mxu0 0.0
      %787 = vmatprep.subr.mxu0 0.0
      %788 = vmatpush2.xpose.msra.mxu0 0.0
      %789 = vmatprep.subr.mxu0 0.0
      %790 = vmatpush2.xpose.msra.mxu0 0.0
      %791 = vmatprep.subr.mxu0 0.0
      %792 = vmatpush2.xpose.msra.mxu0 0.0
      %793 = vmatprep.subr.mxu0 0.0
      %794 = vmatpush2.xpose.msra.mxu0 0.0
      %795 = vmatprep.subr.mxu0 0.0
      %796 = vmatpush2.xpose.msra.mxu0 0.0
      %797 = vmatprep.subr.mxu0 0.0
      %798 = vmatpush2.xpose.msra.mxu0 0.0
      %799 = vmatprep.subr.mxu0 0.0
      %800 = vmatpush2.xpose.msra.mxu0 0.0
      %801 = vmatprep.subr.mxu0 0.0
      %802 = vmatpush2.xpose.msra.mxu0 0.0
      %803 = vmatprep.subr.mxu0 0.0
      %804 = vmatpush2.xpose.msra.mxu0 0.0
      %805 = vmatprep.subr.mxu0 0.0
      %806 = vmatpush2.xpose.msra.mxu0 0.0
      %807 = vmatprep.subr.mxu0 0.0
      %808 = vmatpush2.xpose.msra.mxu0 0.0
      %809 = vmatprep.subr.mxu0 0.0
      %810 = vmatpush2.xpose.msra.mxu0 0.0
      %811 = vmatprep.subr.mxu0 0.0
      %812 = vmatpush2.xpose.msra.mxu0 0.0
      %813 = vmatprep.subr.mxu0 0.0
      %814 = vmatpush2.xpose.msra.mxu0 0.0
      %815 = vmatprep.subr.mxu0 0.0
      %816 = vmatpush2.xpose.msra.mxu0 0.0
      %817 = vmatprep.mubr.f32.mxu0 0.0
      %818 = vmatmul.mubr.f32.gmra.mxu0 %v742
      %v819 = vpop.f32.mrf.mxu0
      %v820 = vadd.f32 %v738, %v819
      %v821 = vpop.f32.mrf.mxu0
      %822 = vmatprep.mubr.f32.mxu0 0.0
      %823 = vmatmul.mubr.f32.gmra.mxu0 %v745
      %v824 = vpop.f32.mrf.mxu0
      %v825 = vadd.f32 %v738, %v824
      %v826 = vpop.f32.mrf.mxu0
      %827 = vdwg.mxu0
      %vm828 = vcmask 130048
      %v829 = vsel %vm828, %v820, -inf
      %830 = vmax.xlane.f32.xlu0 %v829
      %v831 = vpop.xlane.xlu0 %830
      %v832 = vsel %vm828, %v825, -inf
      %833 = vmax.xlane.f32.xlu0 %v832
      %v834 = vpop.xlane.xlu0 %833
      %v835 = vsub.f32 %v820, %v831
      %v836 = vsub.f32 %v825, %v834
      %v837 = vmul.f32 %v835, 1.442695
      %v838 = vpow.pop %v837
      %v839 = vmul.f32 %v836, 1.442695
      %v840 = vpow.pop %v839
      %v841 = vsel %vm828, %v838, 0.0
      %842 = vadd.xlane.f32.xlu0 %v841
      %v843 = vpop.xlane.xlu0 %842
      %v844 = vsel %vm828, %v840, 0.0
      %845 = vadd.xlane.f32.xlu0 %v844
      %v846 = vpop.xlane.xlu0 %845
      %v847 = vrcp.pop %v843
      %v848 = vrcp.pop %v846
      %v849 = vmul.f32 %v838, %v847
      %v850 = vmul.f32 %v840, %v848
      %v852 = vsel %vm828, %v849, 0
      %v855 = vsel %vm828, %v850, 0
      %857 = vmatprep.subr.mxu0 0.0
      %858 = vmatpush1.msra.mxu0 0.0
      %859 = vmatprep.subr.mxu0 0.0
      %860 = vmatpush1.msra.mxu0 0.0
      %861 = vmatprep.subr.mxu0 0.0
      %862 = vmatpush1.msra.mxu0 0.0
      %863 = vmatprep.subr.mxu0 0.0
      %864 = vmatpush1.msra.mxu0 0.0
      %865 = vmatprep.subr.mxu0 0.0
      %866 = vmatpush1.msra.mxu0 0.0
      %867 = vmatprep.subr.mxu0 0.0
      %868 = vmatpush1.msra.mxu0 0.0
      %869 = vmatprep.subr.mxu0 0.0
      %870 = vmatpush1.msra.mxu0 0.0
      %871 = vmatprep.subr.mxu0 0.0
      %872 = vmatpush1.msra.mxu0 0.0
      %873 = vmatprep.subr.mxu0 0.0
      %874 = vmatpush1.msra.mxu0 0.0
      %875 = vmatprep.subr.mxu0 0.0
      %876 = vmatpush1.msra.mxu0 0.0
      %877 = vmatprep.subr.mxu0 0.0
      %878 = vmatpush1.msra.mxu0 0.0
      %879 = vmatprep.subr.mxu0 0.0
      %880 = vmatpush1.msra.mxu0 0.0
      %881 = vmatprep.subr.mxu0 0.0
      %882 = vmatpush1.msra.mxu0 0.0
      %883 = vmatprep.subr.mxu0 0.0
      %884 = vmatpush1.msra.mxu0 0.0
      %885 = vmatprep.subr.mxu0 0.0
      %886 = vmatpush1.msra.mxu0 %v731
      %887 = vmatprep.subr.mxu0 0.0
      %888 = vmatpush1.msra.mxu0 %v728
      %889 = vmatprep.subr.mxu0 0.0
      %890 = vmatpush2.msra.mxu0 0.0
      %891 = vmatprep.subr.mxu0 0.0
      %892 = vmatpush2.msra.mxu0 0.0
      %893 = vmatprep.subr.mxu0 0.0
      %894 = vmatpush2.msra.mxu0 0.0
      %895 = vmatprep.subr.mxu0 0.0
      %896 = vmatpush2.msra.mxu0 0.0
      %897 = vmatprep.subr.mxu0 0.0
      %898 = vmatpush2.msra.mxu0 0.0
      %899 = vmatprep.subr.mxu0 0.0
      %900 = vmatpush2.msra.mxu0 0.0
      %901 = vmatprep.subr.mxu0 0.0
      %902 = vmatpush2.msra.mxu0 0.0
      %903 = vmatprep.subr.mxu0 0.0
      %904 = vmatpush2.msra.mxu0 0.0
      %905 = vmatprep.subr.mxu0 0.0
      %906 = vmatpush2.msra.mxu0 0.0
      %907 = vmatprep.subr.mxu0 0.0
      %908 = vmatpush2.msra.mxu0 0.0
      %909 = vmatprep.subr.mxu0 0.0
      %910 = vmatpush2.msra.mxu0 0.0
      %911 = vmatprep.subr.mxu0 0.0
      %912 = vmatpush2.msra.mxu0 0.0
      %913 = vmatprep.subr.mxu0 0.0
      %914 = vmatpush2.msra.mxu0 0.0
      %915 = vmatprep.subr.mxu0 0.0
      %916 = vmatpush2.msra.mxu0 0.0
      %917 = vmatprep.subr.mxu0 0.0
      %918 = vmatpush2.msra.mxu0 0.0
      %919 = vmatprep.subr.mxu0 0.0
      %920 = vmatpush2.msra.mxu0 0.0
      %921 = vmatprep.mubr.f32.mxu0 0.0
      %922 = vmatmul.mubr.f32.gmra.mxu0 %v852
      %v923 = vpop.f32.mrf.mxu0
      %v924 = vadd.f32 0.0, %v923
      %v925 = vpop.f32.mrf.mxu0
      %926 = vmatprep.mubr.f32.mxu0 0.0
      %927 = vmatmul.mubr.f32.gmra.mxu0 %v855
      %v928 = vpop.f32.mrf.mxu0
      %v929 = vadd.f32 0.0, %v928
      %v930 = vpop.f32.mrf.mxu0
      %931 = vdwg.mxu0
      %v932 = vpack.c.bf16 %v929, %v924
      %v933 = vld [vmem:[%s6] sm:$0xf]
      %s934 = scalar_lea.vmem %s4, 16
      %v935 = vld [vmem:[%s934] sm:$0xf]
      %v936 = vld [vmem:[%s934 + $0x4] sm:$0xf]
      %v937 = vld [vmem:[%s934 + $0x8] sm:$0xf]
      %v938 = vld [vmem:[%s934 + $0xc] sm:$0xf]
      %s939 = scalar_lea.vmem %s5, 1
      %v940 = vld [vmem:[%s939] sm:$0x1]
      %v942 = vlaneseq
      %v943 = vshrl.u32 %v942, 7
      %v944 = vsub.s32 0, %v943
      %v945 = vrot.slane %v940, %v944
      %v951 = vunpack.c.l.b16 %v935
      %v952 = vunpack.c.l.b16 %v936
      %v953 = vunpack.c.l.b16 %v937
      %v954 = vunpack.c.l.b16 %v938
      %v955 = vpack.c.b16 %v952, %v951
      %v956 = vpack.c.b16 %v954, %v953
      %959 = vmatprep.subr.bf16.mxu0 0
      %960 = vmatpush1.bf16.msra.mxu0 0
      %961 = vmatprep.subr.bf16.mxu0 0
      %962 = vmatpush1.bf16.msra.mxu0 0
      %963 = vmatprep.subr.bf16.mxu0 0
      %964 = vmatpush1.bf16.msra.mxu0 0
      %965 = vmatprep.subr.bf16.mxu0 0
      %966 = vmatpush1.bf16.msra.mxu0 0
      %967 = vmatprep.subr.bf16.mxu0 0
      %968 = vmatpush1.bf16.msra.mxu0 0
      %969 = vmatprep.subr.bf16.mxu0 0
      %970 = vmatpush1.bf16.msra.mxu0 0
      %971 = vmatprep.subr.bf16.mxu0 0
      %972 = vmatpush1.bf16.msra.mxu0 %v956
      %973 = vmatprep.subr.bf16.mxu0 0
      %974 = vmatpush1.bf16.msra.mxu0 %v955
      %975 = vmatprep.subr.bf16.mxu0 0
      %976 = vmatpush2.bf16.msra.mxu0 0
      %977 = vmatprep.subr.bf16.mxu0 0
      %978 = vmatpush2.bf16.msra.mxu0 0
      %979 = vmatprep.subr.bf16.mxu0 0
      %980 = vmatpush2.bf16.msra.mxu0 0
      %981 = vmatprep.subr.bf16.mxu0 0
      %982 = vmatpush2.bf16.msra.mxu0 0
      %983 = vmatprep.subr.bf16.mxu0 0
      %984 = vmatpush2.bf16.msra.mxu0 0
      %985 = vmatprep.subr.bf16.mxu0 0
      %986 = vmatpush2.bf16.msra.mxu0 0
      %987 = vmatprep.subr.bf16.mxu0 0
      %988 = vmatpush2.bf16.msra.mxu0 0
      %989 = vmatprep.subr.bf16.mxu0 0
      %990 = vmatpush2.bf16.msra.mxu0 0
      %991 = vmatprep.mubr.bf16.mxu0 0
      %992 = vmatmul.mubr.bf16.gmra.mxu0 %v559
      %v993 = vpop.f32.mrf.mxu0
      %v994 = vadd.f32 %v945, %v993
      %v995 = vpop.f32.mrf.mxu0
      %v996 = vpop.f32.mrf.mxu0
      %v997 = vadd.f32 %v945, %v996
      %v998 = vpop.f32.mrf.mxu0
      %999 = vdwg.mxu0
      %s1000 = scalar_lea.vmem %s4, 80
      %v1001 = vld [vmem:[%s1000] sm:$0xf]
      %v1002 = vld [vmem:[%s1000 + $0x4] sm:$0xf]
      %v1003 = vld [vmem:[%s1000 + $0x8] sm:$0xf]
      %v1004 = vld [vmem:[%s1000 + $0xc] sm:$0xf]
      %s1005 = scalar_lea.vmem %s5, 5
      %v1006 = vld [vmem:[%s1005] sm:$0x1]
      %v1008 = vlaneseq
      %v1009 = vshrl.u32 %v1008, 7
      %v1010 = vsub.s32 0, %v1009
      %v1011 = vrot.slane %v1006, %v1010
      %v1017 = vunpack.c.l.b16 %v1001
      %v1018 = vunpack.c.l.b16 %v1002
      %v1019 = vunpack.c.l.b16 %v1003
      %v1020 = vunpack.c.l.b16 %v1004
      %v1021 = vpack.c.b16 %v1018, %v1017
      %v1022 = vpack.c.b16 %v1020, %v1019
      %1025 = vmatprep.subr.bf16.mxu0 0
      %1026 = vmatpush1.bf16.msra.mxu0 0
      %1027 = vmatprep.subr.bf16.mxu0 0
      %1028 = vmatpush1.bf16.msra.mxu0 0
      %1029 = vmatprep.subr.bf16.mxu0 0
      %1030 = vmatpush1.bf16.msra.mxu0 0
      %1031 = vmatprep.subr.bf16.mxu0 0
      %1032 = vmatpush1.bf16.msra.mxu0 0
      %1033 = vmatprep.subr.bf16.mxu0 0
      %1034 = vmatpush1.bf16.msra.mxu0 0
      %1035 = vmatprep.subr.bf16.mxu0 0
      %1036 = vmatpush1.bf16.msra.mxu0 0
      %1037 = vmatprep.subr.bf16.mxu0 0
      %1038 = vmatpush1.bf16.msra.mxu0 %v1022
      %1039 = vmatprep.subr.bf16.mxu0 0
      %1040 = vmatpush1.bf16.msra.mxu0 %v1021
      %1041 = vmatprep.subr.bf16.mxu0 0
      %1042 = vmatpush2.bf16.msra.mxu0 0
      %1043 = vmatprep.subr.bf16.mxu0 0
      %1044 = vmatpush2.bf16.msra.mxu0 0
      %1045 = vmatprep.subr.bf16.mxu0 0
      %1046 = vmatpush2.bf16.msra.mxu0 0
      %1047 = vmatprep.subr.bf16.mxu0 0
      %1048 = vmatpush2.bf16.msra.mxu0 0
      %1049 = vmatprep.subr.bf16.mxu0 0
      %1050 = vmatpush2.bf16.msra.mxu0 0
      %1051 = vmatprep.subr.bf16.mxu0 0
      %1052 = vmatpush2.bf16.msra.mxu0 0
      %1053 = vmatprep.subr.bf16.mxu0 0
      %1054 = vmatpush2.bf16.msra.mxu0 0
      %1055 = vmatprep.subr.bf16.mxu0 0
      %1056 = vmatpush2.bf16.msra.mxu0 0
      %1057 = vmatprep.mubr.bf16.mxu0 0
      %1058 = vmatmul.mubr.bf16.gmra.mxu0 %v559
      %v1059 = vpop.f32.mrf.mxu0
      %v1060 = vadd.f32 %v1011, %v1059
      %v1061 = vpop.f32.mrf.mxu0
      %v1062 = vpop.f32.mrf.mxu0
      %v1063 = vadd.f32 %v1011, %v1062
      %v1064 = vpop.f32.mrf.mxu0
      %1065 = vdwg.mxu0
      %s1066 = scalar_lea.vmem %s4, 144
      %v1067 = vld [vmem:[%s1066] sm:$0xf]
      %v1068 = vld [vmem:[%s1066 + $0x4] sm:$0xf]
      %v1069 = vld [vmem:[%s1066 + $0x8] sm:$0xf]
      %v1070 = vld [vmem:[%s1066 + $0xc] sm:$0xf]
      %s1071 = scalar_lea.vmem %s5, 9
      %v1072 = vld [vmem:[%s1071] sm:$0x1]
      %v1074 = vlaneseq
      %v1075 = vshrl.u32 %v1074, 7
      %v1076 = vsub.s32 0, %v1075
      %v1077 = vrot.slane %v1072, %v1076
      %v1083 = vunpack.c.l.b16 %v1067
      %v1084 = vunpack.c.l.b16 %v1068
      %v1085 = vunpack.c.l.b16 %v1069
      %v1086 = vunpack.c.l.b16 %v1070
      %v1087 = vpack.c.b16 %v1084, %v1083
      %v1088 = vpack.c.b16 %v1086, %v1085
      %1091 = vmatprep.subr.bf16.mxu0 0
      %1092 = vmatpush1.bf16.msra.mxu0 0
      %1093 = vmatprep.subr.bf16.mxu0 0
      %1094 = vmatpush1.bf16.msra.mxu0 0
      %1095 = vmatprep.subr.bf16.mxu0 0
      %1096 = vmatpush1.bf16.msra.mxu0 0
      %1097 = vmatprep.subr.bf16.mxu0 0
      %1098 = vmatpush1.bf16.msra.mxu0 0
      %1099 = vmatprep.subr.bf16.mxu0 0
      %1100 = vmatpush1.bf16.msra.mxu0 0
      %1101 = vmatprep.subr.bf16.mxu0 0
      %1102 = vmatpush1.bf16.msra.mxu0 0
      %1103 = vmatprep.subr.bf16.mxu0 0
      %1104 = vmatpush1.bf16.msra.mxu0 %v1088
      %1105 = vmatprep.subr.bf16.mxu0 0
      %1106 = vmatpush1.bf16.msra.mxu0 %v1087
      %1107 = vmatprep.subr.bf16.mxu0 0
      %1108 = vmatpush2.bf16.msra.mxu0 0
      %1109 = vmatprep.subr.bf16.mxu0 0
      %1110 = vmatpush2.bf16.msra.mxu0 0
      %1111 = vmatprep.subr.bf16.mxu0 0
      %1112 = vmatpush2.bf16.msra.mxu0 0
      %1113 = vmatprep.subr.bf16.mxu0 0
      %1114 = vmatpush2.bf16.msra.mxu0 0
      %1115 = vmatprep.subr.bf16.mxu0 0
      %1116 = vmatpush2.bf16.msra.mxu0 0
      %1117 = vmatprep.subr.bf16.mxu0 0
      %1118 = vmatpush2.bf16.msra.mxu0 0
      %1119 = vmatprep.subr.bf16.mxu0 0
      %1120 = vmatpush2.bf16.msra.mxu0 0
      %1121 = vmatprep.subr.bf16.mxu0 0
      %1122 = vmatpush2.bf16.msra.mxu0 0
      %1123 = vmatprep.mubr.bf16.mxu0 0
      %1124 = vmatmul.mubr.bf16.gmra.mxu0 %v559
      %v1125 = vpop.f32.mrf.mxu0
      %v1126 = vadd.f32 %v1077, %v1125
      %v1127 = vpop.f32.mrf.mxu0
      %v1128 = vpop.f32.mrf.mxu0
      %v1129 = vadd.f32 %v1077, %v1128
      %v1130 = vpop.f32.mrf.mxu0
      %1131 = vdwg.mxu0
      %v1133 = vsel %vm740, %v994, 0
      %v1136 = vsel %vm740, %v997, 0
      %v1139 = vsel %vm740, %v1060, 0
      %v1142 = vsel %vm740, %v1063, 0
      %1144 = vmatprep.subr.mxu0 0.0
      %1145 = vmatpush1.xpose.msra.mxu0 0.0
      %1146 = vmatprep.subr.mxu0 0.0
      %1147 = vmatpush1.xpose.msra.mxu0 0.0
      %1148 = vmatprep.subr.mxu0 0.0
      %1149 = vmatpush1.xpose.msra.mxu0 0.0
      %1150 = vmatprep.subr.mxu0 0.0
      %1151 = vmatpush1.xpose.msra.mxu0 0.0
      %1152 = vmatprep.subr.mxu0 0.0
      %1153 = vmatpush1.xpose.msra.mxu0 0.0
      %1154 = vmatprep.subr.mxu0 0.0
      %1155 = vmatpush1.xpose.msra.mxu0 0.0
      %1156 = vmatprep.subr.mxu0 0.0
      %1157 = vmatpush1.xpose.msra.mxu0 0.0
      %1158 = vmatprep.subr.mxu0 0.0
      %1159 = vmatpush1.xpose.msra.mxu0 0.0
      %1160 = vmatprep.subr.mxu0 0.0
      %1161 = vmatpush1.xpose.msra.mxu0 0.0
      %1162 = vmatprep.subr.mxu0 0.0
      %1163 = vmatpush1.xpose.msra.mxu0 0.0
      %1164 = vmatprep.subr.mxu0 0.0
      %1165 = vmatpush1.xpose.msra.mxu0 0.0
      %1166 = vmatprep.subr.mxu0 0.0
      %1167 = vmatpush1.xpose.msra.mxu0 0.0
      %1168 = vmatprep.subr.mxu0 0.0
      %1169 = vmatpush1.xpose.msra.mxu0 0.0
      %1170 = vmatprep.subr.mxu0 0.0
      %1171 = vmatpush1.xpose.msra.mxu0 0.0
      %1172 = vmatprep.subr.mxu0 0.0
      %1173 = vmatpush1.xpose.msra.mxu0 %v1142
      %1174 = vmatprep.subr.mxu0 0.0
      %1175 = vmatpush1.xpose.msra.mxu0 %v1139
      %1176 = vmatprep.subr.mxu0 0.0
      %1177 = vmatpush2.xpose.msra.mxu0 0.0
      %1178 = vmatprep.subr.mxu0 0.0
      %1179 = vmatpush2.xpose.msra.mxu0 0.0
      %1180 = vmatprep.subr.mxu0 0.0
      %1181 = vmatpush2.xpose.msra.mxu0 0.0
      %1182 = vmatprep.subr.mxu0 0.0
      %1183 = vmatpush2.xpose.msra.mxu0 0.0
      %1184 = vmatprep.subr.mxu0 0.0
      %1185 = vmatpush2.xpose.msra.mxu0 0.0
      %1186 = vmatprep.subr.mxu0 0.0
      %1187 = vmatpush2.xpose.msra.mxu0 0.0
      %1188 = vmatprep.subr.mxu0 0.0
      %1189 = vmatpush2.xpose.msra.mxu0 0.0
      %1190 = vmatprep.subr.mxu0 0.0
      %1191 = vmatpush2.xpose.msra.mxu0 0.0
      %1192 = vmatprep.subr.mxu0 0.0
      %1193 = vmatpush2.xpose.msra.mxu0 0.0
      %1194 = vmatprep.subr.mxu0 0.0
      %1195 = vmatpush2.xpose.msra.mxu0 0.0
      %1196 = vmatprep.subr.mxu0 0.0
      %1197 = vmatpush2.xpose.msra.mxu0 0.0
      %1198 = vmatprep.subr.mxu0 0.0
      %1199 = vmatpush2.xpose.msra.mxu0 0.0
      %1200 = vmatprep.subr.mxu0 0.0
      %1201 = vmatpush2.xpose.msra.mxu0 0.0
      %1202 = vmatprep.subr.mxu0 0.0
      %1203 = vmatpush2.xpose.msra.mxu0 0.0
      %1204 = vmatprep.subr.mxu0 0.0
      %1205 = vmatpush2.xpose.msra.mxu0 0.0
      %1206 = vmatprep.subr.mxu0 0.0
      %1207 = vmatpush2.xpose.msra.mxu0 0.0
      %1208 = vmatprep.mubr.f32.mxu0 0.0
      %1209 = vmatmul.mubr.f32.gmra.mxu0 %v1133
      %v1210 = vpop.f32.mrf.mxu0
      %v1211 = vadd.f32 %v738, %v1210
      %v1212 = vpop.f32.mrf.mxu0
      %1213 = vmatprep.mubr.f32.mxu0 0.0
      %1214 = vmatmul.mubr.f32.gmra.mxu0 %v1136
      %v1215 = vpop.f32.mrf.mxu0
      %v1216 = vadd.f32 %v738, %v1215
      %v1217 = vpop.f32.mrf.mxu0
      %1218 = vdwg.mxu0
      %v1219 = vsel %vm828, %v1211, -inf
      %1220 = vmax.xlane.f32.xlu0 %v1219
      %v1221 = vpop.xlane.xlu0 %1220
      %v1222 = vsel %vm828, %v1216, -inf
      %1223 = vmax.xlane.f32.xlu0 %v1222
      %v1224 = vpop.xlane.xlu0 %1223
      %v1225 = vsub.f32 %v1211, %v1221
      %v1226 = vsub.f32 %v1216, %v1224
      %v1227 = vmul.f32 %v1225, 1.442695
      %v1228 = vpow.pop %v1227
      %v1229 = vmul.f32 %v1226, 1.442695
      %v1230 = vpow.pop %v1229
      %v1231 = vsel %vm828, %v1228, 0.0
      %1232 = vadd.xlane.f32.xlu0 %v1231
      %v1233 = vpop.xlane.xlu0 %1232
      %v1234 = vsel %vm828, %v1230, 0.0
      %1235 = vadd.xlane.f32.xlu0 %v1234
      %v1236 = vpop.xlane.xlu0 %1235
      %v1237 = vrcp.pop %v1233
      %v1238 = vrcp.pop %v1236
      %v1239 = vmul.f32 %v1228, %v1237
      %v1240 = vmul.f32 %v1230, %v1238
      %v1242 = vsel %vm828, %v1239, 0
      %v1245 = vsel %vm828, %v1240, 0
      %1247 = vmatprep.subr.mxu0 0.0
      %1248 = vmatpush1.msra.mxu0 0.0
      %1249 = vmatprep.subr.mxu0 0.0
      %1250 = vmatpush1.msra.mxu0 0.0
      %1251 = vmatprep.subr.mxu0 0.0
      %1252 = vmatpush1.msra.mxu0 0.0
      %1253 = vmatprep.subr.mxu0 0.0
      %1254 = vmatpush1.msra.mxu0 0.0
      %1255 = vmatprep.subr.mxu0 0.0
      %1256 = vmatpush1.msra.mxu0 0.0
      %1257 = vmatprep.subr.mxu0 0.0
      %1258 = vmatpush1.msra.mxu0 0.0
      %1259 = vmatprep.subr.mxu0 0.0
      %1260 = vmatpush1.msra.mxu0 0.0
      %1261 = vmatprep.subr.mxu0 0.0
      %1262 = vmatpush1.msra.mxu0 0.0
      %1263 = vmatprep.subr.mxu0 0.0
      %1264 = vmatpush1.msra.mxu0 0.0
      %1265 = vmatprep.subr.mxu0 0.0
      %1266 = vmatpush1.msra.mxu0 0.0
      %1267 = vmatprep.subr.mxu0 0.0
      %1268 = vmatpush1.msra.mxu0 0.0
      %1269 = vmatprep.subr.mxu0 0.0
      %1270 = vmatpush1.msra.mxu0 0.0
      %1271 = vmatprep.subr.mxu0 0.0
      %1272 = vmatpush1.msra.mxu0 0.0
      %1273 = vmatprep.subr.mxu0 0.0
      %1274 = vmatpush1.msra.mxu0 0.0
      %1275 = vmatprep.subr.mxu0 0.0
      %1276 = vmatpush1.msra.mxu0 %v1129
      %1277 = vmatprep.subr.mxu0 0.0
      %1278 = vmatpush1.msra.mxu0 %v1126
      %1279 = vmatprep.subr.mxu0 0.0
      %1280 = vmatpush2.msra.mxu0 0.0
      %1281 = vmatprep.subr.mxu0 0.0
      %1282 = vmatpush2.msra.mxu0 0.0
      %1283 = vmatprep.subr.mxu0 0.0
      %1284 = vmatpush2.msra.mxu0 0.0
      %1285 = vmatprep.subr.mxu0 0.0
      %1286 = vmatpush2.msra.mxu0 0.0
      %1287 = vmatprep.subr.mxu0 0.0
      %1288 = vmatpush2.msra.mxu0 0.0
      %1289 = vmatprep.subr.mxu0 0.0
      %1290 = vmatpush2.msra.mxu0 0.0
      %1291 = vmatprep.subr.mxu0 0.0
      %1292 = vmatpush2.msra.mxu0 0.0
      %1293 = vmatprep.subr.mxu0 0.0
      %1294 = vmatpush2.msra.mxu0 0.0
      %1295 = vmatprep.subr.mxu0 0.0
      %1296 = vmatpush2.msra.mxu0 0.0
      %1297 = vmatprep.subr.mxu0 0.0
      %1298 = vmatpush2.msra.mxu0 0.0
      %1299 = vmatprep.subr.mxu0 0.0
      %1300 = vmatpush2.msra.mxu0 0.0
      %1301 = vmatprep.subr.mxu0 0.0
      %1302 = vmatpush2.msra.mxu0 0.0
      %1303 = vmatprep.subr.mxu0 0.0
      %1304 = vmatpush2.msra.mxu0 0.0
      %1305 = vmatprep.subr.mxu0 0.0
      %1306 = vmatpush2.msra.mxu0 0.0
      %1307 = vmatprep.subr.mxu0 0.0
      %1308 = vmatpush2.msra.mxu0 0.0
      %1309 = vmatprep.subr.mxu0 0.0
      %1310 = vmatpush2.msra.mxu0 0.0
      %1311 = vmatprep.mubr.f32.mxu0 0.0
      %1312 = vmatmul.mubr.f32.gmra.mxu0 %v1242
      %v1313 = vpop.f32.mrf.mxu0
      %v1314 = vadd.f32 0.0, %v1313
      %v1315 = vpop.f32.mrf.mxu0
      %1316 = vmatprep.mubr.f32.mxu0 0.0
      %1317 = vmatmul.mubr.f32.gmra.mxu0 %v1245
      %v1318 = vpop.f32.mrf.mxu0
      %v1319 = vadd.f32 0.0, %v1318
      %v1320 = vpop.f32.mrf.mxu0
      %1321 = vdwg.mxu0
      %v1322 = vpack.c.bf16 %v1319, %v1314
      %s1323 = scalar_lea.vmem %s6, 4
      %v1324 = vld [vmem:[%s1323] sm:$0xf]
      %v1326 = vsel %vm740, %v1322, 0
      %vm1328 = vcmask 1043456
      %v1330 = vsel %vm1328, %v1324, 0
      %1332 = vmatprep.subr.bf16.mxu0 0
      %1333 = vmatpush1.bf16.msra.mxu0 0
      %1334 = vmatprep.subr.bf16.mxu0 0
      %1335 = vmatpush1.bf16.msra.mxu0 0
      %1336 = vmatprep.subr.bf16.mxu0 0
      %1337 = vmatpush1.bf16.msra.mxu0 0
      %1338 = vmatprep.subr.bf16.mxu0 0
      %1339 = vmatpush1.bf16.msra.mxu0 0
      %1340 = vmatprep.subr.bf16.mxu0 0
      %1341 = vmatpush1.bf16.msra.mxu0 0
      %1342 = vmatprep.subr.bf16.mxu0 0
      %1343 = vmatpush1.bf16.msra.mxu0 0
      %1344 = vmatprep.subr.bf16.mxu0 0
      %1345 = vmatpush1.bf16.msra.mxu0 0
      %1346 = vmatprep.subr.bf16.mxu0 0
      %1347 = vmatpush1.bf16.msra.mxu0 %v1330
      %1348 = vmatprep.subr.bf16.mxu0 0
      %1349 = vmatpush2.bf16.msra.mxu0 0
      %1350 = vmatprep.subr.bf16.mxu0 0
      %1351 = vmatpush2.bf16.msra.mxu0 0
      %1352 = vmatprep.subr.bf16.mxu0 0
      %1353 = vmatpush2.bf16.msra.mxu0 0
      %1354 = vmatprep.subr.bf16.mxu0 0
      %1355 = vmatpush2.bf16.msra.mxu0 0
      %1356 = vmatprep.subr.bf16.mxu0 0
      %1357 = vmatpush2.bf16.msra.mxu0 0
      %1358 = vmatprep.subr.bf16.mxu0 0
      %1359 = vmatpush2.bf16.msra.mxu0 0
      %1360 = vmatprep.subr.bf16.mxu0 0
      %1361 = vmatpush2.bf16.msra.mxu0 0
      %1362 = vmatprep.subr.bf16.mxu0 0
      %1363 = vmatpush2.bf16.msra.mxu0 0
      %1364 = vmatprep.mubr.bf16.mxu0 0
      %1365 = vmatmul.mubr.bf16.gmra.mxu0 %v1326
      %v1366 = vpop.f32.mrf.mxu0
      %v1367 = vadd.f32 0.0, %v1366
      %v1368 = vpop.f32.mrf.mxu0
      %v1369 = vpop.f32.mrf.mxu0
      %v1370 = vadd.f32 0.0, %v1369
      %v1371 = vpop.f32.mrf.mxu0
      %1372 = vdwg.mxu0
      %v1374 = vsel %vm740, %v932, 0
      %v1377 = vsel %vm1328, %v933, 0
      %1379 = vmatprep.subr.bf16.mxu0 0
      %1380 = vmatpush1.bf16.msra.mxu0 0
      %1381 = vmatprep.subr.bf16.mxu0 0
      %1382 = vmatpush1.bf16.msra.mxu0 0
      %1383 = vmatprep.subr.bf16.mxu0 0
      %1384 = vmatpush1.bf16.msra.mxu0 0
      %1385 = vmatprep.subr.bf16.mxu0 0
      %1386 = vmatpush1.bf16.msra.mxu0 0
      %1387 = vmatprep.subr.bf16.mxu0 0
      %1388 = vmatpush1.bf16.msra.mxu0 0
      %1389 = vmatprep.subr.bf16.mxu0 0
      %1390 = vmatpush1.bf16.msra.mxu0 0
      %1391 = vmatprep.subr.bf16.mxu0 0
      %1392 = vmatpush1.bf16.msra.mxu0 0
      %1393 = vmatprep.subr.bf16.mxu0 0
      %1394 = vmatpush1.bf16.msra.mxu0 %v1377
      %1395 = vmatprep.subr.bf16.mxu0 0
      %1396 = vmatpush2.bf16.msra.mxu0 0
      %1397 = vmatprep.subr.bf16.mxu0 0
      %1398 = vmatpush2.bf16.msra.mxu0 0
      %1399 = vmatprep.subr.bf16.mxu0 0
      %1400 = vmatpush2.bf16.msra.mxu0 0
      %1401 = vmatprep.subr.bf16.mxu0 0
      %1402 = vmatpush2.bf16.msra.mxu0 0
      %1403 = vmatprep.subr.bf16.mxu0 0
      %1404 = vmatpush2.bf16.msra.mxu0 0
      %1405 = vmatprep.subr.bf16.mxu0 0
      %1406 = vmatpush2.bf16.msra.mxu0 0
      %1407 = vmatprep.subr.bf16.mxu0 0
      %1408 = vmatpush2.bf16.msra.mxu0 0
      %1409 = vmatprep.subr.bf16.mxu0 0
      %1410 = vmatpush2.bf16.msra.mxu0 0
      %1411 = vmatprep.mubr.bf16.mxu0 0
      %1412 = vmatmul.mubr.bf16.gmra.mxu0 %v1374
      %v1413 = vpop.f32.mrf.mxu0
      %v1414 = vadd.f32 %v1367, %v1413
      %v1415 = vpop.f32.mrf.mxu0
      %v1416 = vpop.f32.mrf.mxu0
      %v1417 = vadd.f32 %v1370, %v1416
      %v1418 = vpop.f32.mrf.mxu0
      %1419 = vdwg.mxu0
      %s1420 = scalar_lea.vmem %s4, 32
      %v1421 = vld [vmem:[%s1420] sm:$0xf]
      %v1422 = vld [vmem:[%s1420 + $0x4] sm:$0xf]
      %v1423 = vld [vmem:[%s1420 + $0x8] sm:$0xf]
      %v1424 = vld [vmem:[%s1420 + $0xc] sm:$0xf]
      %s1425 = scalar_lea.vmem %s5, 2
      %v1426 = vld [vmem:[%s1425] sm:$0x1]
      %v1428 = vlaneseq
      %v1429 = vshrl.u32 %v1428, 7
      %v1430 = vsub.s32 0, %v1429
      %v1431 = vrot.slane %v1426, %v1430
      %v1437 = vunpack.c.l.b16 %v1421
      %v1438 = vunpack.c.l.b16 %v1422
      %v1439 = vunpack.c.l.b16 %v1423
      %v1440 = vunpack.c.l.b16 %v1424
      %v1441 = vpack.c.b16 %v1438, %v1437
      %v1442 = vpack.c.b16 %v1440, %v1439
      %1445 = vmatprep.subr.bf16.mxu0 0
      %1446 = vmatpush1.bf16.msra.mxu0 0
      %1447 = vmatprep.subr.bf16.mxu0 0
      %1448 = vmatpush1.bf16.msra.mxu0 0
      %1449 = vmatprep.subr.bf16.mxu0 0
      %1450 = vmatpush1.bf16.msra.mxu0 0
      %1451 = vmatprep.subr.bf16.mxu0 0
      %1452 = vmatpush1.bf16.msra.mxu0 0
      %1453 = vmatprep.subr.bf16.mxu0 0
      %1454 = vmatpush1.bf16.msra.mxu0 0
      %1455 = vmatprep.subr.bf16.mxu0 0
      %1456 = vmatpush1.bf16.msra.mxu0 0
      %1457 = vmatprep.subr.bf16.mxu0 0
      %1458 = vmatpush1.bf16.msra.mxu0 %v1442
      %1459 = vmatprep.subr.bf16.mxu0 0
      %1460 = vmatpush1.bf16.msra.mxu0 %v1441
      %1461 = vmatprep.subr.bf16.mxu0 0
      %1462 = vmatpush2.bf16.msra.mxu0 0
      %1463 = vmatprep.subr.bf16.mxu0 0
      %1464 = vmatpush2.bf16.msra.mxu0 0
      %1465 = vmatprep.subr.bf16.mxu0 0
      %1466 = vmatpush2.bf16.msra.mxu0 0
      %1467 = vmatprep.subr.bf16.mxu0 0
      %1468 = vmatpush2.bf16.msra.mxu0 0
      %1469 = vmatprep.subr.bf16.mxu0 0
      %1470 = vmatpush2.bf16.msra.mxu0 0
      %1471 = vmatprep.subr.bf16.mxu0 0
      %1472 = vmatpush2.bf16.msra.mxu0 0
      %1473 = vmatprep.subr.bf16.mxu0 0
      %1474 = vmatpush2.bf16.msra.mxu0 0
      %1475 = vmatprep.subr.bf16.mxu0 0
      %1476 = vmatpush2.bf16.msra.mxu0 0
      %1477 = vmatprep.mubr.bf16.mxu0 0
      %1478 = vmatmul.mubr.bf16.gmra.mxu0 %v559
      %v1479 = vpop.f32.mrf.mxu0
      %v1480 = vadd.f32 %v1431, %v1479
      %v1481 = vpop.f32.mrf.mxu0
      %v1482 = vpop.f32.mrf.mxu0
      %v1483 = vadd.f32 %v1431, %v1482
      %v1484 = vpop.f32.mrf.mxu0
      %1485 = vdwg.mxu0
      %s1486 = scalar_lea.vmem %s4, 96
      %v1487 = vld [vmem:[%s1486] sm:$0xf]
      %v1488 = vld [vmem:[%s1486 + $0x4] sm:$0xf]
      %v1489 = vld [vmem:[%s1486 + $0x8] sm:$0xf]
      %v1490 = vld [vmem:[%s1486 + $0xc] sm:$0xf]
      %s1491 = scalar_lea.vmem %s5, 6
      %v1492 = vld [vmem:[%s1491] sm:$0x1]
      %v1494 = vlaneseq
      %v1495 = vshrl.u32 %v1494, 7
      %v1496 = vsub.s32 0, %v1495
      %v1497 = vrot.slane %v1492, %v1496
      %v1503 = vunpack.c.l.b16 %v1487
      %v1504 = vunpack.c.l.b16 %v1488
      %v1505 = vunpack.c.l.b16 %v1489
      %v1506 = vunpack.c.l.b16 %v1490
      %v1507 = vpack.c.b16 %v1504, %v1503
      %v1508 = vpack.c.b16 %v1506, %v1505
      %1511 = vmatprep.subr.bf16.mxu0 0
      %1512 = vmatpush1.bf16.msra.mxu0 0
      %1513 = vmatprep.subr.bf16.mxu0 0
      %1514 = vmatpush1.bf16.msra.mxu0 0
      %1515 = vmatprep.subr.bf16.mxu0 0
      %1516 = vmatpush1.bf16.msra.mxu0 0
      %1517 = vmatprep.subr.bf16.mxu0 0
      %1518 = vmatpush1.bf16.msra.mxu0 0
      %1519 = vmatprep.subr.bf16.mxu0 0
      %1520 = vmatpush1.bf16.msra.mxu0 0
      %1521 = vmatprep.subr.bf16.mxu0 0
      %1522 = vmatpush1.bf16.msra.mxu0 0
      %1523 = vmatprep.subr.bf16.mxu0 0
      %1524 = vmatpush1.bf16.msra.mxu0 %v1508
      %1525 = vmatprep.subr.bf16.mxu0 0
      %1526 = vmatpush1.bf16.msra.mxu0 %v1507
      %1527 = vmatprep.subr.bf16.mxu0 0
      %1528 = vmatpush2.bf16.msra.mxu0 0
      %1529 = vmatprep.subr.bf16.mxu0 0
      %1530 = vmatpush2.bf16.msra.mxu0 0
      %1531 = vmatprep.subr.bf16.mxu0 0
      %1532 = vmatpush2.bf16.msra.mxu0 0
      %1533 = vmatprep.subr.bf16.mxu0 0
      %1534 = vmatpush2.bf16.msra.mxu0 0
      %1535 = vmatprep.subr.bf16.mxu0 0
      %1536 = vmatpush2.bf16.msra.mxu0 0
      %1537 = vmatprep.subr.bf16.mxu0 0
      %1538 = vmatpush2.bf16.msra.mxu0 0
      %1539 = vmatprep.subr.bf16.mxu0 0
      %1540 = vmatpush2.bf16.msra.mxu0 0
      %1541 = vmatprep.subr.bf16.mxu0 0
      %1542 = vmatpush2.bf16.msra.mxu0 0
      %1543 = vmatprep.mubr.bf16.mxu0 0
      %1544 = vmatmul.mubr.bf16.gmra.mxu0 %v559
      %v1545 = vpop.f32.mrf.mxu0
      %v1546 = vadd.f32 %v1497, %v1545
      %v1547 = vpop.f32.mrf.mxu0
      %v1548 = vpop.f32.mrf.mxu0
      %v1549 = vadd.f32 %v1497, %v1548
      %v1550 = vpop.f32.mrf.mxu0
      %1551 = vdwg.mxu0
      %s1552 = scalar_lea.vmem %s4, 160
      %v1553 = vld [vmem:[%s1552] sm:$0xf]
      %v1554 = vld [vmem:[%s1552 + $0x4] sm:$0xf]
      %v1555 = vld [vmem:[%s1552 + $0x8] sm:$0xf]
      %v1556 = vld [vmem:[%s1552 + $0xc] sm:$0xf]
      %s1557 = scalar_lea.vmem %s5, 10
      %v1558 = vld [vmem:[%s1557] sm:$0x1]
      %v1560 = vlaneseq
      %v1561 = vshrl.u32 %v1560, 7
      %v1562 = vsub.s32 0, %v1561
      %v1563 = vrot.slane %v1558, %v1562
      %v1569 = vunpack.c.l.b16 %v1553
      %v1570 = vunpack.c.l.b16 %v1554
      %v1571 = vunpack.c.l.b16 %v1555
      %v1572 = vunpack.c.l.b16 %v1556
      %v1573 = vpack.c.b16 %v1570, %v1569
      %v1574 = vpack.c.b16 %v1572, %v1571
      %1577 = vmatprep.subr.bf16.mxu0 0
      %1578 = vmatpush1.bf16.msra.mxu0 0
      %1579 = vmatprep.subr.bf16.mxu0 0
      %1580 = vmatpush1.bf16.msra.mxu0 0
      %1581 = vmatprep.subr.bf16.mxu0 0
      %1582 = vmatpush1.bf16.msra.mxu0 0
      %1583 = vmatprep.subr.bf16.mxu0 0
      %1584 = vmatpush1.bf16.msra.mxu0 0
      %1585 = vmatprep.subr.bf16.mxu0 0
      %1586 = vmatpush1.bf16.msra.mxu0 0
      %1587 = vmatprep.subr.bf16.mxu0 0
      %1588 = vmatpush1.bf16.msra.mxu0 0
      %1589 = vmatprep.subr.bf16.mxu0 0
      %1590 = vmatpush1.bf16.msra.mxu0 %v1574
      %1591 = vmatprep.subr.bf16.mxu0 0
      %1592 = vmatpush1.bf16.msra.mxu0 %v1573
      %1593 = vmatprep.subr.bf16.mxu0 0
      %1594 = vmatpush2.bf16.msra.mxu0 0
      %1595 = vmatprep.subr.bf16.mxu0 0
      %1596 = vmatpush2.bf16.msra.mxu0 0
      %1597 = vmatprep.subr.bf16.mxu0 0
      %1598 = vmatpush2.bf16.msra.mxu0 0
      %1599 = vmatprep.subr.bf16.mxu0 0
      %1600 = vmatpush2.bf16.msra.mxu0 0
      %1601 = vmatprep.subr.bf16.mxu0 0
      %1602 = vmatpush2.bf16.msra.mxu0 0
      %1603 = vmatprep.subr.bf16.mxu0 0
      %1604 = vmatpush2.bf16.msra.mxu0 0
      %1605 = vmatprep.subr.bf16.mxu0 0
      %1606 = vmatpush2.bf16.msra.mxu0 0
      %1607 = vmatprep.subr.bf16.mxu0 0
      %1608 = vmatpush2.bf16.msra.mxu0 0
      %1609 = vmatprep.mubr.bf16.mxu0 0
      %1610 = vmatmul.mubr.bf16.gmra.mxu0 %v559
      %v1611 = vpop.f32.mrf.mxu0
      %v1612 = vadd.f32 %v1563, %v1611
      %v1613 = vpop.f32.mrf.mxu0
      %v1614 = vpop.f32.mrf.mxu0
      %v1615 = vadd.f32 %v1563, %v1614
      %v1616 = vpop.f32.mrf.mxu0
      %1617 = vdwg.mxu0
      %v1619 = vsel %vm740, %v1480, 0
      %v1622 = vsel %vm740, %v1483, 0
      %v1625 = vsel %vm740, %v1546, 0
      %v1628 = vsel %vm740, %v1549, 0
      %1630 = vmatprep.subr.mxu0 0.0
      %1631 = vmatpush1.xpose.msra.mxu0 0.0
      %1632 = vmatprep.subr.mxu0 0.0
      %1633 = vmatpush1.xpose.msra.mxu0 0.0
      %1634 = vmatprep.subr.mxu0 0.0
      %1635 = vmatpush1.xpose.msra.mxu0 0.0
      %1636 = vmatprep.subr.mxu0 0.0
      %1637 = vmatpush1.xpose.msra.mxu0 0.0
      %1638 = vmatprep.subr.mxu0 0.0
      %1639 = vmatpush1.xpose.msra.mxu0 0.0
      %1640 = vmatprep.subr.mxu0 0.0
      %1641 = vmatpush1.xpose.msra.mxu0 0.0
      %1642 = vmatprep.subr.mxu0 0.0
      %1643 = vmatpush1.xpose.msra.mxu0 0.0
      %1644 = vmatprep.subr.mxu0 0.0
      %1645 = vmatpush1.xpose.msra.mxu0 0.0
      %1646 = vmatprep.subr.mxu0 0.0
      %1647 = vmatpush1.xpose.msra.mxu0 0.0
      %1648 = vmatprep.subr.mxu0 0.0
      %1649 = vmatpush1.xpose.msra.mxu0 0.0
      %1650 = vmatprep.subr.mxu0 0.0
      %1651 = vmatpush1.xpose.msra.mxu0 0.0
      %1652 = vmatprep.subr.mxu0 0.0
      %1653 = vmatpush1.xpose.msra.mxu0 0.0
      %1654 = vmatprep.subr.mxu0 0.0
      %1655 = vmatpush1.xpose.msra.mxu0 0.0
      %1656 = vmatprep.subr.mxu0 0.0
      %1657 = vmatpush1.xpose.msra.mxu0 0.0
      %1658 = vmatprep.subr.mxu0 0.0
      %1659 = vmatpush1.xpose.msra.mxu0 %v1628
      %1660 = vmatprep.subr.mxu0 0.0
      %1661 = vmatpush1.xpose.msra.mxu0 %v1625
      %1662 = vmatprep.subr.mxu0 0.0
      %1663 = vmatpush2.xpose.msra.mxu0 0.0
      %1664 = vmatprep.subr.mxu0 0.0
      %1665 = vmatpush2.xpose.msra.mxu0 0.0
      %1666 = vmatprep.subr.mxu0 0.0
      %1667 = vmatpush2.xpose.msra.mxu0 0.0
      %1668 = vmatprep.subr.mxu0 0.0
      %1669 = vmatpush2.xpose.msra.mxu0 0.0
      %1670 = vmatprep.subr.mxu0 0.0
      %1671 = vmatpush2.xpose.msra.mxu0 0.0
      %1672 = vmatprep.subr.mxu0 0.0
      %1673 = vmatpush2.xpose.msra.mxu0 0.0
      %1674 = vmatprep.subr.mxu0 0.0
      %1675 = vmatpush2.xpose.msra.mxu0 0.0
      %1676 = vmatprep.subr.mxu0 0.0
      %1677 = vmatpush2.xpose.msra.mxu0 0.0
      %1678 = vmatprep.subr.mxu0 0.0
      %1679 = vmatpush2.xpose.msra.mxu0 0.0
      %1680 = vmatprep.subr.mxu0 0.0
      %1681 = vmatpush2.xpose.msra.mxu0 0.0
      %1682 = vmatprep.subr.mxu0 0.0
      %1683 = vmatpush2.xpose.msra.mxu0 0.0
      %1684 = vmatprep.subr.mxu0 0.0
      %1685 = vmatpush2.xpose.msra.mxu0 0.0
      %1686 = vmatprep.subr.mxu0 0.0
      %1687 = vmatpush2.xpose.msra.mxu0 0.0
      %1688 = vmatprep.subr.mxu0 0.0
      %1689 = vmatpush2.xpose.msra.mxu0 0.0
      %1690 = vmatprep.subr.mxu0 0.0
      %1691 = vmatpush2.xpose.msra.mxu0 0.0
      %1692 = vmatprep.subr.mxu0 0.0
      %1693 = vmatpush2.xpose.msra.mxu0 0.0
      %1694 = vmatprep.mubr.f32.mxu0 0.0
      %1695 = vmatmul.mubr.f32.gmra.mxu0 %v1619
      %v1696 = vpop.f32.mrf.mxu0
      %v1697 = vadd.f32 %v738, %v1696
      %v1698 = vpop.f32.mrf.mxu0
      %1699 = vmatprep.mubr.f32.mxu0 0.0
      %1700 = vmatmul.mubr.f32.gmra.mxu0 %v1622
      %v1701 = vpop.f32.mrf.mxu0
      %v1702 = vadd.f32 %v738, %v1701
      %v1703 = vpop.f32.mrf.mxu0
      %1704 = vdwg.mxu0
      %v1705 = vsel %vm828, %v1697, -inf
      %1706 = vmax.xlane.f32.xlu0 %v1705
      %v1707 = vpop.xlane.xlu0 %1706
      %v1708 = vsel %vm828, %v1702, -inf
      %1709 = vmax.xlane.f32.xlu0 %v1708
      %v1710 = vpop.xlane.xlu0 %1709
      %v1711 = vsub.f32 %v1697, %v1707
      %v1712 = vsub.f32 %v1702, %v1710
      %v1713 = vmul.f32 %v1711, 1.442695
      %v1714 = vpow.pop %v1713
      %v1715 = vmul.f32 %v1712, 1.442695
      %v1716 = vpow.pop %v1715
      %v1717 = vsel %vm828, %v1714, 0.0
      %1718 = vadd.xlane.f32.xlu0 %v1717
      %v1719 = vpop.xlane.xlu0 %1718
      %v1720 = vsel %vm828, %v1716, 0.0
      %1721 = vadd.xlane.f32.xlu0 %v1720
      %v1722 = vpop.xlane.xlu0 %1721
      %v1723 = vrcp.pop %v1719
      %v1724 = vrcp.pop %v1722
      %v1725 = vmul.f32 %v1714, %v1723
      %v1726 = vmul.f32 %v1716, %v1724
      %v1728 = vsel %vm828, %v1725, 0
      %v1731 = vsel %vm828, %v1726, 0
      %1733 = vmatprep.subr.mxu0 0.0
      %1734 = vmatpush1.msra.mxu0 0.0
      %1735 = vmatprep.subr.mxu0 0.0
      %1736 = vmatpush1.msra.mxu0 0.0
      %1737 = vmatprep.subr.mxu0 0.0
      %1738 = vmatpush1.msra.mxu0 0.0
      %1739 = vmatprep.subr.mxu0 0.0
      %1740 = vmatpush1.msra.mxu0 0.0
      %1741 = vmatprep.subr.mxu0 0.0
      %1742 = vmatpush1.msra.mxu0 0.0
      %1743 = vmatprep.subr.mxu0 0.0
      %1744 = vmatpush1.msra.mxu0 0.0
      %1745 = vmatprep.subr.mxu0 0.0
      %1746 = vmatpush1.msra.mxu0 0.0
      %1747 = vmatprep.subr.mxu0 0.0
      %1748 = vmatpush1.msra.mxu0 0.0
      %1749 = vmatprep.subr.mxu0 0.0
      %1750 = vmatpush1.msra.mxu0 0.0
      %1751 = vmatprep.subr.mxu0 0.0
      %1752 = vmatpush1.msra.mxu0 0.0
      %1753 = vmatprep.subr.mxu0 0.0
      %1754 = vmatpush1.msra.mxu0 0.0
      %1755 = vmatprep.subr.mxu0 0.0
      %1756 = vmatpush1.msra.mxu0 0.0
      %1757 = vmatprep.subr.mxu0 0.0
      %1758 = vmatpush1.msra.mxu0 0.0
      %1759 = vmatprep.subr.mxu0 0.0
      %1760 = vmatpush1.msra.mxu0 0.0
      %1761 = vmatprep.subr.mxu0 0.0
      %1762 = vmatpush1.msra.mxu0 %v1615
      %1763 = vmatprep.subr.mxu0 0.0
      %1764 = vmatpush1.msra.mxu0 %v1612
      %1765 = vmatprep.subr.mxu0 0.0
      %1766 = vmatpush2.msra.mxu0 0.0
      %1767 = vmatprep.subr.mxu0 0.0
      %1768 = vmatpush2.msra.mxu0 0.0
      %1769 = vmatprep.subr.mxu0 0.0
      %1770 = vmatpush2.msra.mxu0 0.0
      %1771 = vmatprep.subr.mxu0 0.0
      %1772 = vmatpush2.msra.mxu0 0.0
      %1773 = vmatprep.subr.mxu0 0.0
      %1774 = vmatpush2.msra.mxu0 0.0
      %1775 = vmatprep.subr.mxu0 0.0
      %1776 = vmatpush2.msra.mxu0 0.0
      %1777 = vmatprep.subr.mxu0 0.0
      %1778 = vmatpush2.msra.mxu0 0.0
      %1779 = vmatprep.subr.mxu0 0.0
      %1780 = vmatpush2.msra.mxu0 0.0
      %1781 = vmatprep.subr.mxu0 0.0
      %1782 = vmatpush2.msra.mxu0 0.0
      %1783 = vmatprep.subr.mxu0 0.0
      %1784 = vmatpush2.msra.mxu0 0.0
      %1785 = vmatprep.subr.mxu0 0.0
      %1786 = vmatpush2.msra.mxu0 0.0
      %1787 = vmatprep.subr.mxu0 0.0
      %1788 = vmatpush2.msra.mxu0 0.0
      %1789 = vmatprep.subr.mxu0 0.0
      %1790 = vmatpush2.msra.mxu0 0.0
      %1791 = vmatprep.subr.mxu0 0.0
      %1792 = vmatpush2.msra.mxu0 0.0
      %1793 = vmatprep.subr.mxu0 0.0
      %1794 = vmatpush2.msra.mxu0 0.0
      %1795 = vmatprep.subr.mxu0 0.0
      %1796 = vmatpush2.msra.mxu0 0.0
      %1797 = vmatprep.mubr.f32.mxu0 0.0
      %1798 = vmatmul.mubr.f32.gmra.mxu0 %v1728
      %v1799 = vpop.f32.mrf.mxu0
      %v1800 = vadd.f32 0.0, %v1799
      %v1801 = vpop.f32.mrf.mxu0
      %1802 = vmatprep.mubr.f32.mxu0 0.0
      %1803 = vmatmul.mubr.f32.gmra.mxu0 %v1731
      %v1804 = vpop.f32.mrf.mxu0
      %v1805 = vadd.f32 0.0, %v1804
      %v1806 = vpop.f32.mrf.mxu0
      %1807 = vdwg.mxu0
      %v1808 = vpack.c.bf16 %v1805, %v1800
      %s1809 = scalar_lea.vmem %s6, 8
      %v1810 = vld [vmem:[%s1809] sm:$0xf]
      %v1812 = vsel %vm740, %v1808, 0
      %v1815 = vsel %vm1328, %v1810, 0
      %1817 = vmatprep.subr.bf16.mxu0 0
      %1818 = vmatpush1.bf16.msra.mxu0 0
      %1819 = vmatprep.subr.bf16.mxu0 0
      %1820 = vmatpush1.bf16.msra.mxu0 0
      %1821 = vmatprep.subr.bf16.mxu0 0
      %1822 = vmatpush1.bf16.msra.mxu0 0
      %1823 = vmatprep.subr.bf16.mxu0 0
      %1824 = vmatpush1.bf16.msra.mxu0 0
      %1825 = vmatprep.subr.bf16.mxu0 0
      %1826 = vmatpush1.bf16.msra.mxu0 0
      %1827 = vmatprep.subr.bf16.mxu0 0
      %1828 = vmatpush1.bf16.msra.mxu0 0
      %1829 = vmatprep.subr.bf16.mxu0 0
      %1830 = vmatpush1.bf16.msra.mxu0 0
      %1831 = vmatprep.subr.bf16.mxu0 0
      %1832 = vmatpush1.bf16.msra.mxu0 %v1815
      %1833 = vmatprep.subr.bf16.mxu0 0
      %1834 = vmatpush2.bf16.msra.mxu0 0
      %1835 = vmatprep.subr.bf16.mxu0 0
      %1836 = vmatpush2.bf16.msra.mxu0 0
      %1837 = vmatprep.subr.bf16.mxu0 0
      %1838 = vmatpush2.bf16.msra.mxu0 0
      %1839 = vmatprep.subr.bf16.mxu0 0
      %1840 = vmatpush2.bf16.msra.mxu0 0
      %1841 = vmatprep.subr.bf16.mxu0 0
      %1842 = vmatpush2.bf16.msra.mxu0 0
      %1843 = vmatprep.subr.bf16.mxu0 0
      %1844 = vmatpush2.bf16.msra.mxu0 0
      %1845 = vmatprep.subr.bf16.mxu0 0
      %1846 = vmatpush2.bf16.msra.mxu0 0
      %1847 = vmatprep.subr.bf16.mxu0 0
      %1848 = vmatpush2.bf16.msra.mxu0 0
      %1849 = vmatprep.mubr.bf16.mxu0 0
      %1850 = vmatmul.mubr.bf16.gmra.mxu0 %v1812
      %v1851 = vpop.f32.mrf.mxu0
      %v1852 = vadd.f32 0.0, %v1851
      %v1853 = vpop.f32.mrf.mxu0
      %v1854 = vpop.f32.mrf.mxu0
      %v1855 = vadd.f32 0.0, %v1854
      %v1856 = vpop.f32.mrf.mxu0
      %1857 = vdwg.mxu0
      %v1858 = vadd.f32 %v1414, %v1852
      %v1859 = vadd.f32 %v1417, %v1855
      %s1860 = scalar_lea.vmem %s4, 48
      %v1861 = vld [vmem:[%s1860] sm:$0xf]
      %v1862 = vld [vmem:[%s1860 + $0x4] sm:$0xf]
      %v1863 = vld [vmem:[%s1860 + $0x8] sm:$0xf]
      %v1864 = vld [vmem:[%s1860 + $0xc] sm:$0xf]
      %s1865 = scalar_lea.vmem %s5, 3
      %v1866 = vld [vmem:[%s1865] sm:$0x1]
      %v1868 = vlaneseq
      %v1869 = vshrl.u32 %v1868, 7
      %v1870 = vsub.s32 0, %v1869
      %v1871 = vrot.slane %v1866, %v1870
      %v1877 = vunpack.c.l.b16 %v1861
      %v1878 = vunpack.c.l.b16 %v1862
      %v1879 = vunpack.c.l.b16 %v1863
      %v1880 = vunpack.c.l.b16 %v1864
      %v1881 = vpack.c.b16 %v1878, %v1877
      %v1882 = vpack.c.b16 %v1880, %v1879
      %1885 = vmatprep.subr.bf16.mxu0 0
      %1886 = vmatpush1.bf16.msra.mxu0 0
      %1887 = vmatprep.subr.bf16.mxu0 0
      %1888 = vmatpush1.bf16.msra.mxu0 0
      %1889 = vmatprep.subr.bf16.mxu0 0
      %1890 = vmatpush1.bf16.msra.mxu0 0
      %1891 = vmatprep.subr.bf16.mxu0 0
      %1892 = vmatpush1.bf16.msra.mxu0 0
      %1893 = vmatprep.subr.bf16.mxu0 0
      %1894 = vmatpush1.bf16.msra.mxu0 0
      %1895 = vmatprep.subr.bf16.mxu0 0
      %1896 = vmatpush1.bf16.msra.mxu0 0
      %1897 = vmatprep.subr.bf16.mxu0 0
      %1898 = vmatpush1.bf16.msra.mxu0 %v1882
      %1899 = vmatprep.subr.bf16.mxu0 0
      %1900 = vmatpush1.bf16.msra.mxu0 %v1881
      %1901 = vmatprep.subr.bf16.mxu0 0
      %1902 = vmatpush2.bf16.msra.mxu0 0
      %1903 = vmatprep.subr.bf16.mxu0 0
      %1904 = vmatpush2.bf16.msra.mxu0 0
      %1905 = vmatprep.subr.bf16.mxu0 0
      %1906 = vmatpush2.bf16.msra.mxu0 0
      %1907 = vmatprep.subr.bf16.mxu0 0
      %1908 = vmatpush2.bf16.msra.mxu0 0
      %1909 = vmatprep.subr.bf16.mxu0 0
      %1910 = vmatpush2.bf16.msra.mxu0 0
      %1911 = vmatprep.subr.bf16.mxu0 0
      %1912 = vmatpush2.bf16.msra.mxu0 0
      %1913 = vmatprep.subr.bf16.mxu0 0
      %1914 = vmatpush2.bf16.msra.mxu0 0
      %1915 = vmatprep.subr.bf16.mxu0 0
      %1916 = vmatpush2.bf16.msra.mxu0 0
      %1917 = vmatprep.mubr.bf16.mxu0 0
      %1918 = vmatmul.mubr.bf16.gmra.mxu0 %v559
      %v1919 = vpop.f32.mrf.mxu0
      %v1920 = vadd.f32 %v1871, %v1919
      %v1921 = vpop.f32.mrf.mxu0
      %v1922 = vpop.f32.mrf.mxu0
      %v1923 = vadd.f32 %v1871, %v1922
      %v1924 = vpop.f32.mrf.mxu0
      %1925 = vdwg.mxu0
      %s1926 = scalar_lea.vmem %s4, 112
      %v1927 = vld [vmem:[%s1926] sm:$0xf]
      %v1928 = vld [vmem:[%s1926 + $0x4] sm:$0xf]
      %v1929 = vld [vmem:[%s1926 + $0x8] sm:$0xf]
      %v1930 = vld [vmem:[%s1926 + $0xc] sm:$0xf]
      %s1931 = scalar_lea.vmem %s5, 7
      %v1932 = vld [vmem:[%s1931] sm:$0x1]
      %v1934 = vlaneseq
      %v1935 = vshrl.u32 %v1934, 7
      %v1936 = vsub.s32 0, %v1935
      %v1937 = vrot.slane %v1932, %v1936
      %v1943 = vunpack.c.l.b16 %v1927
      %v1944 = vunpack.c.l.b16 %v1928
      %v1945 = vunpack.c.l.b16 %v1929
      %v1946 = vunpack.c.l.b16 %v1930
      %v1947 = vpack.c.b16 %v1944, %v1943
      %v1948 = vpack.c.b16 %v1946, %v1945
      %1951 = vmatprep.subr.bf16.mxu0 0
      %1952 = vmatpush1.bf16.msra.mxu0 0
      %1953 = vmatprep.subr.bf16.mxu0 0
      %1954 = vmatpush1.bf16.msra.mxu0 0
      %1955 = vmatprep.subr.bf16.mxu0 0
      %1956 = vmatpush1.bf16.msra.mxu0 0
      %1957 = vmatprep.subr.bf16.mxu0 0
      %1958 = vmatpush1.bf16.msra.mxu0 0
      %1959 = vmatprep.subr.bf16.mxu0 0
      %1960 = vmatpush1.bf16.msra.mxu0 0
      %1961 = vmatprep.subr.bf16.mxu0 0
      %1962 = vmatpush1.bf16.msra.mxu0 0
      %1963 = vmatprep.subr.bf16.mxu0 0
      %1964 = vmatpush1.bf16.msra.mxu0 %v1948
      %1965 = vmatprep.subr.bf16.mxu0 0
      %1966 = vmatpush1.bf16.msra.mxu0 %v1947
      %1967 = vmatprep.subr.bf16.mxu0 0
      %1968 = vmatpush2.bf16.msra.mxu0 0
      %1969 = vmatprep.subr.bf16.mxu0 0
      %1970 = vmatpush2.bf16.msra.mxu0 0
      %1971 = vmatprep.subr.bf16.mxu0 0
      %1972 = vmatpush2.bf16.msra.mxu0 0
      %1973 = vmatprep.subr.bf16.mxu0 0
      %1974 = vmatpush2.bf16.msra.mxu0 0
      %1975 = vmatprep.subr.bf16.mxu0 0
      %1976 = vmatpush2.bf16.msra.mxu0 0
      %1977 = vmatprep.subr.bf16.mxu0 0
      %1978 = vmatpush2.bf16.msra.mxu0 0
      %1979 = vmatprep.subr.bf16.mxu0 0
      %1980 = vmatpush2.bf16.msra.mxu0 0
      %1981 = vmatprep.subr.bf16.mxu0 0
      %1982 = vmatpush2.bf16.msra.mxu0 0
      %1983 = vmatprep.mubr.bf16.mxu0 0
      %1984 = vmatmul.mubr.bf16.gmra.mxu0 %v559
      %v1985 = vpop.f32.mrf.mxu0
      %v1986 = vadd.f32 %v1937, %v1985
      %v1987 = vpop.f32.mrf.mxu0
      %v1988 = vpop.f32.mrf.mxu0
      %v1989 = vadd.f32 %v1937, %v1988
      %v1990 = vpop.f32.mrf.mxu0
      %1991 = vdwg.mxu0
      %s1992 = scalar_lea.vmem %s4, 176
      %v1993 = vld [vmem:[%s1992] sm:$0xf]
      %v1994 = vld [vmem:[%s1992 + $0x4] sm:$0xf]
      %v1995 = vld [vmem:[%s1992 + $0x8] sm:$0xf]
      %v1996 = vld [vmem:[%s1992 + $0xc] sm:$0xf]
      %s1997 = scalar_lea.vmem %s5, 11
      %v1998 = vld [vmem:[%s1997] sm:$0x1]
      %v2000 = vlaneseq
      %v2001 = vshrl.u32 %v2000, 7
      %v2002 = vsub.s32 0, %v2001
      %v2003 = vrot.slane %v1998, %v2002
      %v2009 = vunpack.c.l.b16 %v1993
      %v2010 = vunpack.c.l.b16 %v1994
      %v2011 = vunpack.c.l.b16 %v1995
      %v2012 = vunpack.c.l.b16 %v1996
      %v2013 = vpack.c.b16 %v2010, %v2009
      %v2014 = vpack.c.b16 %v2012, %v2011
      %2017 = vmatprep.subr.bf16.mxu0 0
      %2018 = vmatpush1.bf16.msra.mxu0 0
      %2019 = vmatprep.subr.bf16.mxu0 0
      %2020 = vmatpush1.bf16.msra.mxu0 0
      %2021 = vmatprep.subr.bf16.mxu0 0
      %2022 = vmatpush1.bf16.msra.mxu0 0
      %2023 = vmatprep.subr.bf16.mxu0 0
      %2024 = vmatpush1.bf16.msra.mxu0 0
      %2025 = vmatprep.subr.bf16.mxu0 0
      %2026 = vmatpush1.bf16.msra.mxu0 0
      %2027 = vmatprep.subr.bf16.mxu0 0
      %2028 = vmatpush1.bf16.msra.mxu0 0
      %2029 = vmatprep.subr.bf16.mxu0 0
      %2030 = vmatpush1.bf16.msra.mxu0 %v2014
      %2031 = vmatprep.subr.bf16.mxu0 0
      %2032 = vmatpush1.bf16.msra.mxu0 %v2013
      %2033 = vmatprep.subr.bf16.mxu0 0
      %2034 = vmatpush2.bf16.msra.mxu0 0
      %2035 = vmatprep.subr.bf16.mxu0 0
      %2036 = vmatpush2.bf16.msra.mxu0 0
      %2037 = vmatprep.subr.bf16.mxu0 0
      %2038 = vmatpush2.bf16.msra.mxu0 0
      %2039 = vmatprep.subr.bf16.mxu0 0
      %2040 = vmatpush2.bf16.msra.mxu0 0
      %2041 = vmatprep.subr.bf16.mxu0 0
      %2042 = vmatpush2.bf16.msra.mxu0 0
      %2043 = vmatprep.subr.bf16.mxu0 0
      %2044 = vmatpush2.bf16.msra.mxu0 0
      %2045 = vmatprep.subr.bf16.mxu0 0
      %2046 = vmatpush2.bf16.msra.mxu0 0
      %2047 = vmatprep.subr.bf16.mxu0 0
      %2048 = vmatpush2.bf16.msra.mxu0 0
      %2049 = vmatprep.mubr.bf16.mxu0 0
      %2050 = vmatmul.mubr.bf16.gmra.mxu0 %v559
      %v2051 = vpop.f32.mrf.mxu0
      %v2052 = vadd.f32 %v2003, %v2051
      %v2053 = vpop.f32.mrf.mxu0
      %v2054 = vpop.f32.mrf.mxu0
      %v2055 = vadd.f32 %v2003, %v2054
      %v2056 = vpop.f32.mrf.mxu0
      %2057 = vdwg.mxu0
      %v2059 = vsel %vm740, %v1920, 0
      %v2062 = vsel %vm740, %v1923, 0
      %v2065 = vsel %vm740, %v1986, 0
      %v2068 = vsel %vm740, %v1989, 0
      %2070 = vmatprep.subr.mxu0 0.0
      %2071 = vmatpush1.xpose.msra.mxu0 0.0
      %2072 = vmatprep.subr.mxu0 0.0
      %2073 = vmatpush1.xpose.msra.mxu0 0.0
      %2074 = vmatprep.subr.mxu0 0.0
      %2075 = vmatpush1.xpose.msra.mxu0 0.0
      %2076 = vmatprep.subr.mxu0 0.0
      %2077 = vmatpush1.xpose.msra.mxu0 0.0
      %2078 = vmatprep.subr.mxu0 0.0
      %2079 = vmatpush1.xpose.msra.mxu0 0.0
      %2080 = vmatprep.subr.mxu0 0.0
      %2081 = vmatpush1.xpose.msra.mxu0 0.0
      %2082 = vmatprep.subr.mxu0 0.0
      %2083 = vmatpush1.xpose.msra.mxu0 0.0
      %2084 = vmatprep.subr.mxu0 0.0
      %2085 = vmatpush1.xpose.msra.mxu0 0.0
      %2086 = vmatprep.subr.mxu0 0.0
      %2087 = vmatpush1.xpose.msra.mxu0 0.0
      %2088 = vmatprep.subr.mxu0 0.0
      %2089 = vmatpush1.xpose.msra.mxu0 0.0
      %2090 = vmatprep.subr.mxu0 0.0
      %2091 = vmatpush1.xpose.msra.mxu0 0.0
      %2092 = vmatprep.subr.mxu0 0.0
      %2093 = vmatpush1.xpose.msra.mxu0 0.0
      %2094 = vmatprep.subr.mxu0 0.0
      %2095 = vmatpush1.xpose.msra.mxu0 0.0
      %2096 = vmatprep.subr.mxu0 0.0
      %2097 = vmatpush1.xpose.msra.mxu0 0.0
      %2098 = vmatprep.subr.mxu0 0.0
      %2099 = vmatpush1.xpose.msra.mxu0 %v2068
      %2100 = vmatprep.subr.mxu0 0.0
      %2101 = vmatpush1.xpose.msra.mxu0 %v2065
      %2102 = vmatprep.subr.mxu0 0.0
      %2103 = vmatpush2.xpose.msra.mxu0 0.0
      %2104 = vmatprep.subr.mxu0 0.0
      %2105 = vmatpush2.xpose.msra.mxu0 0.0
      %2106 = vmatprep.subr.mxu0 0.0
      %2107 = vmatpush2.xpose.msra.mxu0 0.0
      %2108 = vmatprep.subr.mxu0 0.0
      %2109 = vmatpush2.xpose.msra.mxu0 0.0
      %2110 = vmatprep.subr.mxu0 0.0
      %2111 = vmatpush2.xpose.msra.mxu0 0.0
      %2112 = vmatprep.subr.mxu0 0.0
      %2113 = vmatpush2.xpose.msra.mxu0 0.0
      %2114 = vmatprep.subr.mxu0 0.0
      %2115 = vmatpush2.xpose.msra.mxu0 0.0
      %2116 = vmatprep.subr.mxu0 0.0
      %2117 = vmatpush2.xpose.msra.mxu0 0.0
      %2118 = vmatprep.subr.mxu0 0.0
      %2119 = vmatpush2.xpose.msra.mxu0 0.0
      %2120 = vmatprep.subr.mxu0 0.0
      %2121 = vmatpush2.xpose.msra.mxu0 0.0
      %2122 = vmatprep.subr.mxu0 0.0
      %2123 = vmatpush2.xpose.msra.mxu0 0.0
      %2124 = vmatprep.subr.mxu0 0.0
      %2125 = vmatpush2.xpose.msra.mxu0 0.0
      %2126 = vmatprep.subr.mxu0 0.0
      %2127 = vmatpush2.xpose.msra.mxu0 0.0
      %2128 = vmatprep.subr.mxu0 0.0
      %2129 = vmatpush2.xpose.msra.mxu0 0.0
      %2130 = vmatprep.subr.mxu0 0.0
      %2131 = vmatpush2.xpose.msra.mxu0 0.0
      %2132 = vmatprep.subr.mxu0 0.0
      %2133 = vmatpush2.xpose.msra.mxu0 0.0
      %2134 = vmatprep.mubr.f32.mxu0 0.0
      %2135 = vmatmul.mubr.f32.gmra.mxu0 %v2059
      %v2136 = vpop.f32.mrf.mxu0
      %v2137 = vadd.f32 %v738, %v2136
      %v2138 = vpop.f32.mrf.mxu0
      %2139 = vmatprep.mubr.f32.mxu0 0.0
      %2140 = vmatmul.mubr.f32.gmra.mxu0 %v2062
      %v2141 = vpop.f32.mrf.mxu0
      %v2142 = vadd.f32 %v738, %v2141
      %v2143 = vpop.f32.mrf.mxu0
      %2144 = vdwg.mxu0
      %v2145 = vsel %vm828, %v2137, -inf
      %2146 = vmax.xlane.f32.xlu0 %v2145
      %v2147 = vpop.xlane.xlu0 %2146
      %v2148 = vsel %vm828, %v2142, -inf
      %2149 = vmax.xlane.f32.xlu0 %v2148
      %v2150 = vpop.xlane.xlu0 %2149
      %v2151 = vsub.f32 %v2137, %v2147
      %v2152 = vsub.f32 %v2142, %v2150
      %v2153 = vmul.f32 %v2151, 1.442695
      %v2154 = vpow.pop %v2153
      %v2155 = vmul.f32 %v2152, 1.442695
      %v2156 = vpow.pop %v2155
      %v2157 = vsel %vm828, %v2154, 0.0
      %2158 = vadd.xlane.f32.xlu0 %v2157
      %v2159 = vpop.xlane.xlu0 %2158
      %v2160 = vsel %vm828, %v2156, 0.0
      %2161 = vadd.xlane.f32.xlu0 %v2160
      %v2162 = vpop.xlane.xlu0 %2161
      %v2163 = vrcp.pop %v2159
      %v2164 = vrcp.pop %v2162
      %v2165 = vmul.f32 %v2154, %v2163
      %v2166 = vmul.f32 %v2156, %v2164
      %v2168 = vsel %vm828, %v2165, 0
      %v2171 = vsel %vm828, %v2166, 0
      %2173 = vmatprep.subr.mxu0 0.0
      %2174 = vmatpush1.msra.mxu0 0.0
      %2175 = vmatprep.subr.mxu0 0.0
      %2176 = vmatpush1.msra.mxu0 0.0
      %2177 = vmatprep.subr.mxu0 0.0
      %2178 = vmatpush1.msra.mxu0 0.0
      %2179 = vmatprep.subr.mxu0 0.0
      %2180 = vmatpush1.msra.mxu0 0.0
      %2181 = vmatprep.subr.mxu0 0.0
      %2182 = vmatpush1.msra.mxu0 0.0
      %2183 = vmatprep.subr.mxu0 0.0
      %2184 = vmatpush1.msra.mxu0 0.0
      %2185 = vmatprep.subr.mxu0 0.0
      %2186 = vmatpush1.msra.mxu0 0.0
      %2187 = vmatprep.subr.mxu0 0.0
      %2188 = vmatpush1.msra.mxu0 0.0
      %2189 = vmatprep.subr.mxu0 0.0
      %2190 = vmatpush1.msra.mxu0 0.0
      %2191 = vmatprep.subr.mxu0 0.0
      %2192 = vmatpush1.msra.mxu0 0.0
      %2193 = vmatprep.subr.mxu0 0.0
      %2194 = vmatpush1.msra.mxu0 0.0
      %2195 = vmatprep.subr.mxu0 0.0
      %2196 = vmatpush1.msra.mxu0 0.0
      %2197 = vmatprep.subr.mxu0 0.0
      %2198 = vmatpush1.msra.mxu0 0.0
      %2199 = vmatprep.subr.mxu0 0.0
      %2200 = vmatpush1.msra.mxu0 0.0
      %2201 = vmatprep.subr.mxu0 0.0
      %2202 = vmatpush1.msra.mxu0 %v2055
      %2203 = vmatprep.subr.mxu0 0.0
      %2204 = vmatpush1.msra.mxu0 %v2052
      %2205 = vmatprep.subr.mxu0 0.0
      %2206 = vmatpush2.msra.mxu0 0.0
      %2207 = vmatprep.subr.mxu0 0.0
      %2208 = vmatpush2.msra.mxu0 0.0
      %2209 = vmatprep.subr.mxu0 0.0
      %2210 = vmatpush2.msra.mxu0 0.0
      %2211 = vmatprep.subr.mxu0 0.0
      %2212 = vmatpush2.msra.mxu0 0.0
      %2213 = vmatprep.subr.mxu0 0.0
      %2214 = vmatpush2.msra.mxu0 0.0
      %2215 = vmatprep.subr.mxu0 0.0
      %2216 = vmatpush2.msra.mxu0 0.0
      %2217 = vmatprep.subr.mxu0 0.0
      %2218 = vmatpush2.msra.mxu0 0.0
      %2219 = vmatprep.subr.mxu0 0.0
      %2220 = vmatpush2.msra.mxu0 0.0
      %2221 = vmatprep.subr.mxu0 0.0
      %2222 = vmatpush2.msra.mxu0 0.0
      %2223 = vmatprep.subr.mxu0 0.0
      %2224 = vmatpush2.msra.mxu0 0.0
      %2225 = vmatprep.subr.mxu0 0.0
      %2226 = vmatpush2.msra.mxu0 0.0
      %2227 = vmatprep.subr.mxu0 0.0
      %2228 = vmatpush2.msra.mxu0 0.0
      %2229 = vmatprep.subr.mxu0 0.0
      %2230 = vmatpush2.msra.mxu0 0.0
      %2231 = vmatprep.subr.mxu0 0.0
      %2232 = vmatpush2.msra.mxu0 0.0
      %2233 = vmatprep.subr.mxu0 0.0
      %2234 = vmatpush2.msra.mxu0 0.0
      %2235 = vmatprep.subr.mxu0 0.0
      %2236 = vmatpush2.msra.mxu0 0.0
      %2237 = vmatprep.mubr.f32.mxu0 0.0
      %2238 = vmatmul.mubr.f32.gmra.mxu0 %v2168
      %v2239 = vpop.f32.mrf.mxu0
      %v2240 = vadd.f32 0.0, %v2239
      %v2241 = vpop.f32.mrf.mxu0
      %2242 = vmatprep.mubr.f32.mxu0 0.0
      %2243 = vmatmul.mubr.f32.gmra.mxu0 %v2171
      %v2244 = vpop.f32.mrf.mxu0
      %v2245 = vadd.f32 0.0, %v2244
      %v2246 = vpop.f32.mrf.mxu0
      %2247 = vdwg.mxu0
      %v2248 = vpack.c.bf16 %v2245, %v2240
      %s2249 = scalar_lea.vmem %s6, 12
      %v2250 = vld [vmem:[%s2249] sm:$0xf]
      %v2252 = vsel %vm740, %v2248, 0
      %v2255 = vsel %vm1328, %v2250, 0
      %2257 = vmatprep.subr.bf16.mxu0 0
      %2258 = vmatpush1.bf16.msra.mxu0 0
      %2259 = vmatprep.subr.bf16.mxu0 0
      %2260 = vmatpush1.bf16.msra.mxu0 0
      %2261 = vmatprep.subr.bf16.mxu0 0
      %2262 = vmatpush1.bf16.msra.mxu0 0
      %2263 = vmatprep.subr.bf16.mxu0 0
      %2264 = vmatpush1.bf16.msra.mxu0 0
      %2265 = vmatprep.subr.bf16.mxu0 0
      %2266 = vmatpush1.bf16.msra.mxu0 0
      %2267 = vmatprep.subr.bf16.mxu0 0
      %2268 = vmatpush1.bf16.msra.mxu0 0
      %2269 = vmatprep.subr.bf16.mxu0 0
      %2270 = vmatpush1.bf16.msra.mxu0 0
      %2271 = vmatprep.subr.bf16.mxu0 0
      %2272 = vmatpush1.bf16.msra.mxu0 %v2255
      %2273 = vmatprep.subr.bf16.mxu0 0
      %2274 = vmatpush2.bf16.msra.mxu0 0
      %2275 = vmatprep.subr.bf16.mxu0 0
      %2276 = vmatpush2.bf16.msra.mxu0 0
      %2277 = vmatprep.subr.bf16.mxu0 0
      %2278 = vmatpush2.bf16.msra.mxu0 0
      %2279 = vmatprep.subr.bf16.mxu0 0
      %2280 = vmatpush2.bf16.msra.mxu0 0
      %2281 = vmatprep.subr.bf16.mxu0 0
      %2282 = vmatpush2.bf16.msra.mxu0 0
      %2283 = vmatprep.subr.bf16.mxu0 0
      %2284 = vmatpush2.bf16.msra.mxu0 0
      %2285 = vmatprep.subr.bf16.mxu0 0
      %2286 = vmatpush2.bf16.msra.mxu0 0
      %2287 = vmatprep.subr.bf16.mxu0 0
      %2288 = vmatpush2.bf16.msra.mxu0 0
      %2289 = vmatprep.mubr.bf16.mxu0 0
      %2290 = vmatmul.mubr.bf16.gmra.mxu0 %v2252
      %v2291 = vpop.f32.mrf.mxu0
      %v2292 = vadd.f32 0.0, %v2291
      %v2293 = vpop.f32.mrf.mxu0
      %v2294 = vpop.f32.mrf.mxu0
      %v2295 = vadd.f32 0.0, %v2294
      %v2296 = vpop.f32.mrf.mxu0
      %2297 = vdwg.mxu0
      %v2298 = vadd.f32 %v1858, %v2292
      %v2299 = vadd.f32 %v1859, %v2295
      %v2300 = vld [vmem:[%s7] sm:$0x1]
      %v2302 = vlaneseq
      %v2303 = vshrl.u32 %v2302, 7
      %v2304 = vsub.s32 0, %v2303
      %v2305 = vrot.slane %v2300, %v2304
      %v2307 = vadd.f32 %v2298, %v2305
      %v2308 = vadd.f32 %v2299, %v2305
      %v2309 = vadd.f32 %v483, %v2307
      %v2310 = vadd.f32 %v484, %v2308
      %v2311 = vld [vmem:[%s8] sm:$0x1]
      %v2312 = vld [vmem:[%s9] sm:$0x1]
      %v2313 = vsel %vm490, %v2309, 0.0
      %2314 = vadd.xlane.f32.xlu0 %v2313
      %v2315 = vpop.xlane.xlu0 %2314
      %v2316 = vsel %vm490, %v2310, 0.0
      %2317 = vadd.xlane.f32.xlu0 %v2316
      %v2318 = vpop.xlane.xlu0 %2317
      %v2319 = vmul.f32 %v2315, %v497
      %v2320 = vmul.f32 %v2318, %v497
      %v2321 = vsub.f32 %v2309, %v2319
      %v2322 = vsub.f32 %v2310, %v2320
      %v2323 = vmul.f32 %v2321, %v2321
      %v2324 = vmul.f32 %v2322, %v2322
      %v2325 = vsel %vm490, %v2323, 0.0
      %2326 = vadd.xlane.f32.xlu0 %v2325
      %v2327 = vpop.xlane.xlu0 %2326
      %v2328 = vsel %vm490, %v2324, 0.0
      %2329 = vadd.xlane.f32.xlu0 %v2328
      %v2330 = vpop.xlane.xlu0 %2329
      %v2331 = vmul.f32 %v2327, %v497
      %v2332 = vmul.f32 %v2330, %v497
      %v2333 = vadd.f32 %v2331, 1e-05
      %v2334 = vadd.f32 %v2332, 1e-05
      %v2335 = vrsqrt.pop %v2333
      %v2336 = vrsqrt.pop %v2334
      %v2337 = vmul.f32 %v2321, %v2335
      %v2338 = vmul.f32 %v2322, %v2336
      %v2340 = vlaneseq
      %v2341 = vshrl.u32 %v2340, 7
      %v2342 = vsub.s32 0, %v2341
      %v2343 = vrot.slane %v2311, %v2342
      %v2345 = vmul.f32 %v2337, %v2343
      %v2346 = vmul.f32 %v2338, %v2343
      %v2348 = vlaneseq
      %v2349 = vshrl.u32 %v2348, 7
      %v2350 = vsub.s32 0, %v2349
      %v2351 = vrot.slane %v2312, %v2350
      %v2353 = vadd.f32 %v2345, %v2351
      %v2354 = vadd.f32 %v2346, %v2351
      %v2355 = vpack.c.bf16 %v2354, %v2353
      %v2356 = vld [vmem:[%s10] sm:$0xf]
      %v2357 = vld [vmem:[%s10 + $0x4] sm:$0xf]
      %v2358 = vld [vmem:[%s10 + $0x8] sm:$0xf]
      %v2359 = vld [vmem:[%s10 + $0xc] sm:$0xf]
      %v2360 = vld [vmem:[%s11] sm:$0x1]
      %v2362 = vlaneseq
      %v2363 = vshrl.u32 %v2362, 7
      %v2364 = vsub.s32 0, %v2363
      %v2365 = vrot.slane %v2360, %v2364
      %v2371 = vunpack.c.l.b16 %v2356
      %v2372 = vunpack.c.l.b16 %v2357
      %v2373 = vunpack.c.l.b16 %v2358
      %v2374 = vunpack.c.l.b16 %v2359
      %v2375 = vpack.c.b16 %v2372, %v2371
      %v2376 = vpack.c.b16 %v2374, %v2373
      %v2380 = vsel %vm490, %v2355, 0
      %2382 = vmatprep.subr.bf16.mxu0 0
      %2383 = vmatpush1.bf16.msra.mxu0 0
      %2384 = vmatprep.subr.bf16.mxu0 0
      %2385 = vmatpush1.bf16.msra.mxu0 0
      %2386 = vmatprep.subr.bf16.mxu0 0
      %2387 = vmatpush1.bf16.msra.mxu0 0
      %2388 = vmatprep.subr.bf16.mxu0 0
      %2389 = vmatpush1.bf16.msra.mxu0 0
      %2390 = vmatprep.subr.bf16.mxu0 0
      %2391 = vmatpush1.bf16.msra.mxu0 0
      %2392 = vmatprep.subr.bf16.mxu0 0
      %2393 = vmatpush1.bf16.msra.mxu0 0
      %2394 = vmatprep.subr.bf16.mxu0 0
      %2395 = vmatpush1.bf16.msra.mxu0 %v2376
      %2396 = vmatprep.subr.bf16.mxu0 0
      %2397 = vmatpush1.bf16.msra.mxu0 %v2375
      %2398 = vmatprep.subr.bf16.mxu0 0
      %2399 = vmatpush2.bf16.msra.mxu0 0
      %2400 = vmatprep.subr.bf16.mxu0 0
      %2401 = vmatpush2.bf16.msra.mxu0 0
      %2402 = vmatprep.subr.bf16.mxu0 0
      %2403 = vmatpush2.bf16.msra.mxu0 0
      %2404 = vmatprep.subr.bf16.mxu0 0
      %2405 = vmatpush2.bf16.msra.mxu0 0
      %2406 = vmatprep.subr.bf16.mxu0 0
      %2407 = vmatpush2.bf16.msra.mxu0 0
      %2408 = vmatprep.subr.bf16.mxu0 0
      %2409 = vmatpush2.bf16.msra.mxu0 0
      %2410 = vmatprep.subr.bf16.mxu0 0
      %2411 = vmatpush2.bf16.msra.mxu0 0
      %2412 = vmatprep.subr.bf16.mxu0 0
      %2413 = vmatpush2.bf16.msra.mxu0 0
      %2414 = vmatprep.mubr.bf16.mxu0 0
      %2415 = vmatmul.mubr.bf16.gmra.mxu0 %v2380
      %v2416 = vpop.f32.mrf.mxu0
      %v2417 = vadd.f32 %v2365, %v2416
      %v2418 = vpop.f32.mrf.mxu0
      %v2419 = vpop.f32.mrf.mxu0
      %v2420 = vadd.f32 %v2365, %v2419
      %v2421 = vpop.f32.mrf.mxu0
      %2422 = vdwg.mxu0
      %v2423 = vmax.f32 %v2417, 0.0
      %v2424 = vmax.f32 %v2420, 0.0
      %v2425 = vpack.c.bf16 %v2424, %v2423
      %v2426 = vld [vmem:[%s12] sm:$0xf]
      %v2427 = vld [vmem:[%s12 + $0x4] sm:$0xf]
      %v2428 = vld [vmem:[%s12 + $0x8] sm:$0xf]
      %v2429 = vld [vmem:[%s12 + $0xc] sm:$0xf]
      %v2430 = vld [vmem:[%s12 + $0x10] sm:$0xf]
      %v2431 = vld [vmem:[%s12 + $0x14] sm:$0xf]
      %v2432 = vld [vmem:[%s12 + $0x18] sm:$0xf]
      %v2433 = vld [vmem:[%s12 + $0x1c] sm:$0xf]
      %v2434 = vld [vmem:[%s12 + $0x20] sm:$0xf]
      %v2435 = vld [vmem:[%s12 + $0x24] sm:$0xf]
      %v2436 = vld [vmem:[%s12 + $0x28] sm:$0xf]
      %v2437 = vld [vmem:[%s12 + $0x2c] sm:$0xf]
      %v2438 = vld [vmem:[%s12 + $0x30] sm:$0xf]
      %v2439 = vld [vmem:[%s12 + $0x34] sm:$0xf]
      %v2440 = vld [vmem:[%s12 + $0x38] sm:$0xf]
      %v2441 = vld [vmem:[%s12 + $0x3c] sm:$0xf]
      %v2442 = vld [vmem:[%s13] sm:$0x1]
      %v2444 = vlaneseq
      %v2445 = vshrl.u32 %v2444, 7
      %v2446 = vsub.s32 0, %v2445
      %v2447 = vrot.slane %v2442, %v2446
      %v2465 = vunpack.c.l.b16 %v2426
      %v2466 = vunpack.c.l.b16 %v2427
      %v2467 = vunpack.c.l.b16 %v2428
      %v2468 = vunpack.c.l.b16 %v2429
      %v2469 = vunpack.c.l.b16 %v2430
      %v2470 = vunpack.c.l.b16 %v2431
      %v2471 = vunpack.c.l.b16 %v2432
      %v2472 = vunpack.c.l.b16 %v2433
      %v2473 = vunpack.c.l.b16 %v2434
      %v2474 = vunpack.c.l.b16 %v2435
      %v2475 = vunpack.c.l.b16 %v2436
      %v2476 = vunpack.c.l.b16 %v2437
      %v2477 = vunpack.c.l.b16 %v2438
      %v2478 = vunpack.c.l.b16 %v2439
      %v2479 = vunpack.c.l.b16 %v2440
      %v2480 = vunpack.c.l.b16 %v2441
      %v2481 = vpack.c.b16 %v2466, %v2465
      %v2482 = vpack.c.b16 %v2468, %v2467
      %v2483 = vpack.c.b16 %v2470, %v2469
      %v2484 = vpack.c.b16 %v2472, %v2471
      %v2485 = vpack.c.b16 %v2474, %v2473
      %v2486 = vpack.c.b16 %v2476, %v2475
      %v2487 = vpack.c.b16 %v2478, %v2477
      %v2488 = vpack.c.b16 %v2480, %v2479
      %2497 = vmatprep.subr.bf16.mxu0 0
      %2498 = vmatpush1.bf16.msra.mxu0 %v2488
      %2499 = vmatprep.subr.bf16.mxu0 0
      %2500 = vmatpush1.bf16.msra.mxu0 %v2487
      %2501 = vmatprep.subr.bf16.mxu0 0
      %2502 = vmatpush1.bf16.msra.mxu0 %v2486
      %2503 = vmatprep.subr.bf16.mxu0 0
      %2504 = vmatpush1.bf16.msra.mxu0 %v2485
      %2505 = vmatprep.subr.bf16.mxu0 0
      %2506 = vmatpush1.bf16.msra.mxu0 %v2484
      %2507 = vmatprep.subr.bf16.mxu0 0
      %2508 = vmatpush1.bf16.msra.mxu0 %v2483
      %2509 = vmatprep.subr.bf16.mxu0 0
      %2510 = vmatpush1.bf16.msra.mxu0 %v2482
      %2511 = vmatprep.subr.bf16.mxu0 0
      %2512 = vmatpush1.bf16.msra.mxu0 %v2481
      %2513 = vmatprep.subr.bf16.mxu0 0
      %2514 = vmatpush2.bf16.msra.mxu0 0
      %2515 = vmatprep.subr.bf16.mxu0 0
      %2516 = vmatpush2.bf16.msra.mxu0 0
      %2517 = vmatprep.subr.bf16.mxu0 0
      %2518 = vmatpush2.bf16.msra.mxu0 0
      %2519 = vmatprep.subr.bf16.mxu0 0
      %2520 = vmatpush2.bf16.msra.mxu0 0
      %2521 = vmatprep.subr.bf16.mxu0 0
      %2522 = vmatpush2.bf16.msra.mxu0 0
      %2523 = vmatprep.subr.bf16.mxu0 0
      %2524 = vmatpush2.bf16.msra.mxu0 0
      %2525 = vmatprep.subr.bf16.mxu0 0
      %2526 = vmatpush2.bf16.msra.mxu0 0
      %2527 = vmatprep.subr.bf16.mxu0 0
      %2528 = vmatpush2.bf16.msra.mxu0 0
      %2529 = vmatprep.mubr.bf16.mxu0 0
      %2530 = vmatmul.mubr.bf16.gmra.mxu0 %v2425
      %v2531 = vpop.f32.mrf.mxu0
      %v2532 = vadd.f32 %v2447, %v2531
      %v2533 = vpop.f32.mrf.mxu0
      %v2534 = vpop.f32.mrf.mxu0
      %v2535 = vadd.f32 %v2447, %v2534
      %v2536 = vpop.f32.mrf.mxu0
      %2537 = vdwg.mxu0
      %v2538 = vadd.f32 %v2309, %v2532
      %v2539 = vadd.f32 %v2310, %v2535
      %2540 = vst.msk [vmem:[%s481] sm:$0xff] %vm490, %v2538
      %2541 = vst.msk [vmem:[%s481 + $0x8] sm:$0xff] %vm490, %v2539
      %p2542 = scmp.lt.s32.totalorder %s25, 1
      %s2543 = scalar_select %p2542, %s25, 1
      %s2544 = smul.addr %s2543, 2
      %s2545 = smul.addr %s2544, 8
      %s2546 = scalar_lea.vmem %s14, %s2545
      // Predicated region
      $region77: #{tcr_epitope_transformer.6} parent=75 // pred_check
        %p2547 = pneg %p347
      $region78: #{tcr_epitope_transformer.6} parent=75 // pred_check_branch
        %2549 = sbr.rel (%p2547) target = $region80
      $region79: #{tcr_epitope_transformer.6} parent=75 // pred_region
        _
      $region80: #{tcr_epitope_transformer.6} parent=75 // pred_fallthru
        _
    $region76: #{tcr_epitope_transformer.6} parent=5 // pred_fallthru
      _
    %p2550 = scmp.le.s32.totalorder 2, %s20
    // Predicated region
    $region81: #{tcr_epitope_transformer.6} parent=5 // pred_check
      %p2551 = pneg %p2550
    $region82: #{tcr_epitope_transformer.6} parent=5 // pred_check_branch
      %2553 = sbr.rel (%p2551) target = $region84
    $region83: #{tcr_epitope_transformer.6} parent=5 // pred_region
      %s2554 = ssub.s32 %s20, 2
      // Predicated region
      $region85: #{tcr_epitope_transformer.6} parent=83 // pred_check
        %p2555 = pneg %p353
      $region86: #{tcr_epitope_transformer.6} parent=83 // pred_check_branch
        %2557 = sbr.rel (%p2555) target = $region88
      $region87: #{tcr_epitope_transformer.6} parent=83 // pred_region
        %p2558 = scmp.lt.s32.totalorder %s26, 1
        %s2559 = scalar_select %p2558, %s26, 1
        %s2560 = smul.addr %s2559, 2
        %s2561 = smul.addr %s2560, 8
        %s2562 = scalar_lea.vmem %s14, %s2561
      $region88: #{tcr_epitope_transformer.6} parent=83 // pred_fallthru
        _
    $region84: #{tcr_epitope_transformer.6} parent=5 // pred_fallthru
      _
  $region6: #{tcr_epitope_transformer.6} parent=0 // loop_footer
    %s24 = sadd.s32 1, %s20
  $region7: #{tcr_epitope_transformer.6} parent=0 // loop_footer_branch
    %19 = sbr.rel target = $region3
  $region8: #{tcr_epitope_transformer.6} parent=0 // loop_exit
    _

</llo_original>
